<compile_context>
chip_gen: v7x
topology: tpu7x:2x2x1
jax: 0.10.0
libtpu: 0.0.40
codegen_flags: <defaults>
</compile_context>

<pallas_src>
import functools
import numpy as np
import jax
import jax.numpy as jnp
from jax import lax
from jax.experimental import pallas as pl
from jax.experimental.pallas import tpu as pltpu

_HI = lax.Precision.HIGHEST


def _round_up(n, m):
    return (n + m - 1) // m * m


# ---------------------------------------------------------------------------
# Pallas kernel
# ---------------------------------------------------------------------------
def _convlstm_fc_kernel(xg1_ref, g1h_ref, g2a_ref, g2b_ref, b2_ref,
                        g3_ref, b3_ref, wfct_ref, bfc_ref, out_ref):
    T = xg1_ref.shape[0]
    PG = g1h_ref.shape[0]          # padded flattened state width (= round_up(P*nf, 128))

    def dot_bf16(a, b):            # bf16 MXU matmul, f32 accumulation
        return jnp.dot(a.astype(jnp.bfloat16), b, preferred_element_type=jnp.float32)

    # Loop-invariant operands, loaded once (hoisted out of the recurrence).
    g1h = g1h_ref[...]
    g2a = g2a_ref[...]
    g2b = g2b_ref[...]
    b2 = b2_ref[...]

    def lstm(pre, c):
        # pre: (1, 4*PG) f32 gate pre-activations, 128-aligned blocks [i | f | o | g].
        i = jax.nn.sigmoid(pre[:, 0 * PG:1 * PG])
        f = jax.nn.sigmoid(pre[:, 1 * PG:2 * PG])
        o = jax.nn.sigmoid(pre[:, 2 * PG:3 * PG])
        g = jnp.tanh(pre[:, 3 * PG:4 * PG])
        c_new = f * c + i * g
        h_new = o * jnp.tanh(c_new)
        return h_new, c_new

    def body(t, carry):
        h1, c1, h2, c2 = carry
        pre1 = xg1_ref[t] + dot_bf16(h1, g1h)            # x-part + bias precomputed
        h1, c1 = lstm(pre1, c1)
        pre2 = b2 + dot_bf16(h1, g2a) + dot_bf16(h2, g2b)
        h2, c2 = lstm(pre2, c2)
        return h1, c1, h2, c2

    z = jnp.zeros((1, PG), jnp.float32)
    _, _, h2, _ = lax.fori_loop(0, T, body, (z, z, z, z), unroll=True)

    # output CNN: Conv3d kernel (1,3,3), pad (0,1,1) == 2-D 3x3 conv nf -> 1, then ReLU.
    cnn = jnp.maximum(dot_bf16(h2, g3_ref[...]) + b3_ref[...], 0.0)
    # FC over the flattened grid, lane-dense (1, OC) output, final ReLU.
    y = jnp.maximum(dot_bf16(cnn, wfct_ref[...]) + bfc_ref[...], 0.0)
    out_ref[...] = y


# ---------------------------------------------------------------------------
# Wrapper glue: shift structure + weight folding (PyTorch layouts)
# ---------------------------------------------------------------------------
def _shift_tensor(H, W):
    """S[k, p, q] = 1 iff pixel q is the zero-padded 3x3 neighbour of p under tap
    k = ky*3 + kx (cross-correlation convention, matching PyTorch Conv2d)."""
    P = H * W
    S = np.zeros((9, P, P), np.float32)
    for ky in range(3):
        for kx in range(3):
            k = ky * 3 + kx
            for y in range(H):
                for x in range(W):
                    yy, xx = y + ky - 1, x + kx - 1
                    if 0 <= yy < H and 0 <= xx < W:
                        S[k, y * W + x, yy * W + xx] = 1.0
    return S


def _fold_gate_weight(w, S, nf, PG):
    """Fold a gate conv weight slice (4*nf, C, 3, 3) with the shift structure S into a
    dense matrix (P*C, 4*PG): row = q*C + c, col = gate*PG + p*nf + m (zero padded)."""
    O, C = w.shape[0], w.shape[1]
    P = S.shape[1]
    wk = jnp.transpose(w.reshape(O, C, 9), (2, 1, 0)).reshape(9, C, 4, nf)   # (k,c,g,m)
    G = jnp.einsum('kpq,kcgm->qcgpm', jnp.asarray(S), wk, precision=_HI)
    G = G.reshape(P * C, 4, P * nf)
    Gp = jnp.zeros((P * C, 4, PG), jnp.float32).at[:, :, :P * nf].set(G)
    return Gp.reshape(P * C, 4 * PG)


def _pad_rows(G, rows):
    return jnp.zeros((rows, G.shape[1]), G.dtype).at[:G.shape[0]].set(G)


def _gate_bias_row(b, nf, P, PG):
    b = b.reshape(4, nf)
    row = jnp.zeros((4, PG), jnp.float32)
    row = row.at[:, :P * nf].set(jnp.tile(b[:, None, :], (1, P, 1)).reshape(4, P * nf))
    return row.reshape(1, 4 * PG)


def init_params(key, nf, in_chan, grid_shape):
    P = grid_shape[0] * grid_shape[1]
    ks = jax.random.split(key, 8)
    s = 0.1
    return dict(
        conv1_w=s * jax.random.normal(ks[0], (4 * nf, in_chan + nf, 3, 3), jnp.float32),
        conv1_b=s * jax.random.normal(ks[1], (4 * nf,), jnp.float32),
        conv2_w=s * jax.random.normal(ks[2], (4 * nf, 2 * nf, 3, 3), jnp.float32),
        conv2_b=s * jax.random.normal(ks[3], (4 * nf,), jnp.float32),
        conv3_w=s * jax.random.normal(ks[4], (1, nf, 1, 3, 3), jnp.float32),
        conv3_b=s * jax.random.normal(ks[5], (1,), jnp.float32),
        fc_w=s * jax.random.normal(ks[6], (P, P), jnp.float32),
        fc_b=s * jax.random.normal(ks[7], (P,), jnp.float32),
    )


def vanilla_convlstm_fc(x, params, nf, grid_shape):
    """x: (b, t, c, h, w).  As in the PyTorch module, the FC's .view(-1) requires b == 1
    and (h, w) == grid_shape.  Returns (1, 1, 1, gh, gw)."""
    b, T, Cin, H, W = x.shape
    assert b == 1 and (H, W) == tuple(grid_shape)
    P = H * W
    PN = P * nf
    PG = _round_up(PN, 128)        # padded flattened state width (lane aligned)
    GW = 4 * PG                    # gate pre-activation width (>= 256)
    OC = _round_up(P, 128)         # padded (lane-dense) output width

    S = _shift_tensor(H, W)
    bf16 = jnp.bfloat16

    # --- fold the two ConvLSTM cells' conv weights into dense row-matmul operators ---
    w1 = params['conv1_w']
    g1x = _fold_gate_weight(w1[:, :Cin], S, nf, PG)                    # (P*Cin, GW)
    g1h = _pad_rows(_fold_gate_weight(w1[:, Cin:], S, nf, PG), PG)     # (PG, GW)
    b1r = _gate_bias_row(params['conv1_b'], nf, P, PG)                 # (1, GW)
    w2 = params['conv2_w']
    g2a = _pad_rows(_fold_gate_weight(w2[:, :nf], S, nf, PG), PG)      # (PG, GW)
    g2b = _pad_rows(_fold_gate_weight(w2[:, nf:], S, nf, PG), PG)      # (PG, GW)
    b2r = _gate_bias_row(params['conv2_b'], nf, P, PG)                 # (1, GW)

    # Non-recurrent x contribution to cell-1 gates (+ bias), precomputed for all T steps.
    x_rows = jnp.transpose(x[0], (0, 2, 3, 1)).reshape(T, P * Cin).astype(jnp.float32)
    xg1 = (jnp.dot(x_rows, g1x, precision=_HI) + b1r).reshape(T, 1, GW)

    # --- output CNN: Conv3d kernel (1,3,3), pad (0,1,1) == 2-D 3x3 conv, nf -> 1 ---
    w3 = params['conv3_w'][:, :, 0]                                    # (1, nf, 3, 3)
    w3k = jnp.transpose(w3.reshape(1, nf, 9)[0], (1, 0))               # (9, nf)
    g3 = jnp.einsum('kpq,km->qmp', jnp.asarray(S), w3k, precision=_HI).reshape(PN, P)
    g3 = jnp.zeros((PG, OC), jnp.float32).at[:PN, :P].set(g3)
    b3r = jnp.zeros((1, OC), jnp.float32).at[0, :P].set(params['conv3_b'][0])

    # --- FC (P -> P), transposed so the kernel output is lane-dense (1, OC) ---
    wfct = jnp.zeros((OC, OC), jnp.float32).at[:P, :P].set(params['fc_w'].T)
    bfcr = jnp.zeros((1, OC), jnp.float32).at[0, :P].set(params['fc_b'])

    args = (xg1, g1h.astype(bf16), g2a.astype(bf16), g2b.astype(bf16), b2r,
            g3.astype(bf16), b3r, wfct.astype(bf16), bfcr)

    flops = int(T * (2 * 3 * PG * GW + 12 * GW) + 2 * (PG * OC + OC * OC))
    transcendentals = int(T * 10 * PG)
    bytes_accessed = int(sum(int(a.size) * a.dtype.itemsize for a in args) + OC * 4)

    vmem = pl.BlockSpec(memory_space=pltpu.MemorySpace.VMEM)
    out = pl.pallas_call(
        _convlstm_fc_kernel,
        out_shape=jax.ShapeDtypeStruct((1, OC), jnp.float32),
        in_specs=[vmem] * len(args),
        out_specs=vmem,
        cost_estimate=pl.CostEstimate(flops=flops, transcendentals=transcendentals,
                                      bytes_accessed=bytes_accessed),
    )(*args)

    return out[0, :P].reshape(1, 1, 1, grid_shape[0], -1)
    # TODO(synk): future_seq > 1 raises NotImplementedError in the original module; not implemented.


# ---------------------------------------------------------------------------
# Pure-JAX reference (mirrors the PyTorch forward) for a correctness check
# ---------------------------------------------------------------------------
def _ref_forward(x, params, nf, grid_shape):
    b, T, Cin, H, W = x.shape
    dn = ('NCHW', 'OIHW', 'NCHW')

    def conv2d(inp, w, bias):
        o = lax.conv_general_dilated(inp, w, (1, 1), 'SAME', dimension_numbers=dn,
                                     precision=_HI)
        return o + bias[None, :, None, None]

    def cell(x_t, h, c, w, bias):
        conv = conv2d(jnp.concatenate([x_t, h], axis=1), w, bias)
        i, f, o, g = jnp.split(conv, 4, axis=1)
        i, f, o, g = jax.nn.sigmoid(i), jax.nn.sigmoid(f), jax.nn.sigmoid(o), jnp.tanh(g)
        c = f * c + i * g
        h = o * jnp.tanh(c)
        return h, c

    h1 = jnp.zeros((b, nf, H, W), jnp.float32)
    c1, h2, c2 = jnp.zeros_like(h1), jnp.zeros_like(h1), jnp.zeros_like(h1)
    for t in range(T):
        h1, c1 = cell(x[:, t], h1, c1, params['conv1_w'], params['conv1_b'])
        h2, c2 = cell(h1, h2, c2, params['conv2_w'], params['conv2_b'])
    cnn = jax.nn.relu(conv2d(h2, params['conv3_w'][:, :, 0], params['conv3_b']))
    y = params['fc_w'] @ cnn.reshape(-1) + params['fc_b']
    return jax.nn.relu(y).reshape(1, 1, 1, grid_shape[0], -1)


if __name__ == "__main__":
    nf, in_chan, grid_shape, T = 8, 4, (5, 5), 8
    key = jax.random.PRNGKey(0)
    kp, kx = jax.random.split(key)
    params = init_params(kp, nf, in_chan, grid_shape)
    x = jax.random.normal(kx, (1, T, in_chan, grid_shape[0], grid_shape[1]), jnp.float32)

    fwd = jax.jit(functools.partial(vanilla_convlstm_fc, nf=nf, grid_shape=grid_shape))
    out = jax.block_until_ready(fwd(x, params))
    ref = _ref_forward(x, params, nf, grid_shape)
    # bf16 matmul inputs (f32 accumulation) over an 8-step recurrence -> relaxed tolerance.
    np.testing.assert_allclose(np.asarray(out), np.asarray(ref), rtol=3e-2, atol=3e-2)
    print("KERNEL_OK")
</pallas_src>

<mosaic_0001>
module attributes {stable_mosaic.version = 11 : i64} {
  func.func @_convlstm_fc_kernel(%arg0: memref<8x1x1024xf32, #tpu.memory_space<vmem>>, %arg1: memref<256x1024xbf16, #tpu.memory_space<vmem>>, %arg2: memref<256x1024xbf16, #tpu.memory_space<vmem>>, %arg3: memref<256x1024xbf16, #tpu.memory_space<vmem>>, %arg4: memref<1x1024xf32, #tpu.memory_space<vmem>>, %arg5: memref<256x128xbf16, #tpu.memory_space<vmem>>, %arg6: memref<1x128xf32, #tpu.memory_space<vmem>>, %arg7: memref<128x128xbf16, #tpu.memory_space<vmem>>, %arg8: memref<1x128xf32, #tpu.memory_space<vmem>>, %arg9: memref<1x128xf32, #tpu.memory_space<vmem>>) attributes {dimension_semantics = [], scalar_prefetch = 0 : i64, scratch_operands = 0 : i64, tpu.core_type = #tpu.core_type<tc>} {
    %c0 = arith.constant 0 : index
    %c0_0 = arith.constant 0 : index
    %0 = vector.load %arg1[%c0, %c0_0] : memref<256x1024xbf16, #tpu.memory_space<vmem>>, vector<256x1024xbf16>
    %c0_1 = arith.constant 0 : index
    %c0_2 = arith.constant 0 : index
    %1 = vector.load %arg2[%c0_1, %c0_2] : memref<256x1024xbf16, #tpu.memory_space<vmem>>, vector<256x1024xbf16>
    %c0_3 = arith.constant 0 : index
    %c0_4 = arith.constant 0 : index
    %2 = vector.load %arg3[%c0_3, %c0_4] : memref<256x1024xbf16, #tpu.memory_space<vmem>>, vector<256x1024xbf16>
    %c0_5 = arith.constant 0 : index
    %c0_6 = arith.constant 0 : index
    %3 = vector.load %arg4[%c0_5, %c0_6] : memref<1x1024xf32, #tpu.memory_space<vmem>>, vector<1x1024xf32>
    %cst = arith.constant 0.000000e+00 : f32
    %4 = vector.broadcast %cst : f32 to vector<1x256xf32>
    %c0_i32 = arith.constant 0 : i32
    %5 = arith.index_cast %c0_i32 : i32 to index
    %c0_7 = arith.constant 0 : index
    %c0_8 = arith.constant 0 : index
    %6 = vector.load %arg0[%5, %c0_7, %c0_8] : memref<8x1x1024xf32, #tpu.memory_space<vmem>>, vector<1x1x1024xf32>
    %7 = vector.shape_cast %6 : vector<1x1x1024xf32> to vector<1x1024xf32>
    %8 = arith.truncf %4 : vector<1x256xf32> to vector<1x256xbf16>
    %cst_9 = arith.constant dense<0.000000e+00> : vector<1x1024xf32>
    %9 = tpu.matmul %8, %0, %cst_9 {dimension_numbers = #tpu.dot_dimension_numbers<[1], [0], [0], [1], [0, 0, 1, 1], [], []>} : vector<1x256xbf16>, vector<256x1024xbf16>, vector<1x1024xf32> -> vector<1x1024xf32>
    %10 = arith.addf %7, %9 : vector<1x1024xf32>
    %11 = vector.extract_strided_slice %10 {offsets = [0, 0], sizes = [1, 256], strides = [1, 1]} : vector<1x1024xf32> to vector<1x256xf32>
    %12 = arith.negf %11 : vector<1x256xf32>
    %13 = math.exp %12 : vector<1x256xf32>
    %cst_10 = arith.constant 1.000000e+00 : f32
    %14 = vector.broadcast %cst_10 : f32 to vector<1x256xf32>
    %15 = arith.addf %14, %13 : vector<1x256xf32>
    %16 = arith.divf %14, %15 : vector<1x256xf32>
    %17 = vector.extract_strided_slice %10 {offsets = [0, 256], sizes = [1, 256], strides = [1, 1]} : vector<1x1024xf32> to vector<1x256xf32>
    %18 = arith.negf %17 : vector<1x256xf32>
    %19 = math.exp %18 : vector<1x256xf32>
    %cst_11 = arith.constant 1.000000e+00 : f32
    %20 = vector.broadcast %cst_11 : f32 to vector<1x256xf32>
    %21 = arith.addf %20, %19 : vector<1x256xf32>
    %22 = arith.divf %20, %21 : vector<1x256xf32>
    %23 = vector.extract_strided_slice %10 {offsets = [0, 512], sizes = [1, 256], strides = [1, 1]} : vector<1x1024xf32> to vector<1x256xf32>
    %24 = arith.negf %23 : vector<1x256xf32>
    %25 = math.exp %24 : vector<1x256xf32>
    %cst_12 = arith.constant 1.000000e+00 : f32
    %26 = vector.broadcast %cst_12 : f32 to vector<1x256xf32>
    %27 = arith.addf %26, %25 : vector<1x256xf32>
    %28 = arith.divf %26, %27 : vector<1x256xf32>
    %29 = vector.extract_strided_slice %10 {offsets = [0, 768], sizes = [1, 256], strides = [1, 1]} : vector<1x1024xf32> to vector<1x256xf32>
    %30 = math.tanh %29 : vector<1x256xf32>
    %31 = arith.mulf %22, %4 : vector<1x256xf32>
    %32 = arith.mulf %16, %30 : vector<1x256xf32>
    %33 = arith.addf %31, %32 : vector<1x256xf32>
    %34 = math.tanh %33 : vector<1x256xf32>
    %35 = arith.mulf %28, %34 : vector<1x256xf32>
    %36 = arith.truncf %35 : vector<1x256xf32> to vector<1x256xbf16>
    %cst_13 = arith.constant dense<0.000000e+00> : vector<1x1024xf32>
    %37 = tpu.matmul %36, %1, %cst_13 {dimension_numbers = #tpu.dot_dimension_numbers<[1], [0], [0], [1], [0, 0, 1, 1], [], []>} : vector<1x256xbf16>, vector<256x1024xbf16>, vector<1x1024xf32> -> vector<1x1024xf32>
    %38 = arith.addf %3, %37 : vector<1x1024xf32>
    %39 = arith.truncf %4 : vector<1x256xf32> to vector<1x256xbf16>
    %cst_14 = arith.constant dense<0.000000e+00> : vector<1x1024xf32>
    %40 = tpu.matmul %39, %2, %cst_14 {dimension_numbers = #tpu.dot_dimension_numbers<[1], [0], [0], [1], [0, 0, 1, 1], [], []>} : vector<1x256xbf16>, vector<256x1024xbf16>, vector<1x1024xf32> -> vector<1x1024xf32>
    %41 = arith.addf %38, %40 : vector<1x1024xf32>
    %42 = vector.extract_strided_slice %41 {offsets = [0, 0], sizes = [1, 256], strides = [1, 1]} : vector<1x1024xf32> to vector<1x256xf32>
    %43 = arith.negf %42 : vector<1x256xf32>
    %44 = math.exp %43 : vector<1x256xf32>
    %cst_15 = arith.constant 1.000000e+00 : f32
    %45 = vector.broadcast %cst_15 : f32 to vector<1x256xf32>
    %46 = arith.addf %45, %44 : vector<1x256xf32>
    %47 = arith.divf %45, %46 : vector<1x256xf32>
    %48 = vector.extract_strided_slice %41 {offsets = [0, 256], sizes = [1, 256], strides = [1, 1]} : vector<1x1024xf32> to vector<1x256xf32>
    %49 = arith.negf %48 : vector<1x256xf32>
    %50 = math.exp %49 : vector<1x256xf32>
    %cst_16 = arith.constant 1.000000e+00 : f32
    %51 = vector.broadcast %cst_16 : f32 to vector<1x256xf32>
    %52 = arith.addf %51, %50 : vector<1x256xf32>
    %53 = arith.divf %51, %52 : vector<1x256xf32>
    %54 = vector.extract_strided_slice %41 {offsets = [0, 512], sizes = [1, 256], strides = [1, 1]} : vector<1x1024xf32> to vector<1x256xf32>
    %55 = arith.negf %54 : vector<1x256xf32>
    %56 = math.exp %55 : vector<1x256xf32>
    %cst_17 = arith.constant 1.000000e+00 : f32
    %57 = vector.broadcast %cst_17 : f32 to vector<1x256xf32>
    %58 = arith.addf %57, %56 : vector<1x256xf32>
    %59 = arith.divf %57, %58 : vector<1x256xf32>
    %60 = vector.extract_strided_slice %41 {offsets = [0, 768], sizes = [1, 256], strides = [1, 1]} : vector<1x1024xf32> to vector<1x256xf32>
    %61 = math.tanh %60 : vector<1x256xf32>
    %62 = arith.mulf %53, %4 : vector<1x256xf32>
    %63 = arith.mulf %47, %61 : vector<1x256xf32>
    %64 = arith.addf %62, %63 : vector<1x256xf32>
    %65 = math.tanh %64 : vector<1x256xf32>
    %66 = arith.mulf %59, %65 : vector<1x256xf32>
    %c1_i32 = arith.constant 1 : i32
    %67 = arith.index_cast %c1_i32 : i32 to index
    %c0_18 = arith.constant 0 : index
    %c0_19 = arith.constant 0 : index
    %68 = vector.load %arg0[%67, %c0_18, %c0_19] : memref<8x1x1024xf32, #tpu.memory_space<vmem>>, vector<1x1x1024xf32>
    %69 = vector.shape_cast %68 : vector<1x1x1024xf32> to vector<1x1024xf32>
    %70 = arith.truncf %35 : vector<1x256xf32> to vector<1x256xbf16>
    %cst_20 = arith.constant dense<0.000000e+00> : vector<1x1024xf32>
    %71 = tpu.matmul %70, %0, %cst_20 {dimension_numbers = #tpu.dot_dimension_numbers<[1], [0], [0], [1], [0, 0, 1, 1], [], []>} : vector<1x256xbf16>, vector<256x1024xbf16>, vector<1x1024xf32> -> vector<1x1024xf32>
    %72 = arith.addf %69, %71 : vector<1x1024xf32>
    %73 = vector.extract_strided_slice %72 {offsets = [0, 0], sizes = [1, 256], strides = [1, 1]} : vector<1x1024xf32> to vector<1x256xf32>
    %74 = arith.negf %73 : vector<1x256xf32>
    %75 = math.exp %74 : vector<1x256xf32>
    %cst_21 = arith.constant 1.000000e+00 : f32
    %76 = vector.broadcast %cst_21 : f32 to vector<1x256xf32>
    %77 = arith.addf %76, %75 : vector<1x256xf32>
    %78 = arith.divf %76, %77 : vector<1x256xf32>
    %79 = vector.extract_strided_slice %72 {offsets = [0, 256], sizes = [1, 256], strides = [1, 1]} : vector<1x1024xf32> to vector<1x256xf32>
    %80 = arith.negf %79 : vector<1x256xf32>
    %81 = math.exp %80 : vector<1x256xf32>
    %cst_22 = arith.constant 1.000000e+00 : f32
    %82 = vector.broadcast %cst_22 : f32 to vector<1x256xf32>
    %83 = arith.addf %82, %81 : vector<1x256xf32>
    %84 = arith.divf %82, %83 : vector<1x256xf32>
    %85 = vector.extract_strided_slice %72 {offsets = [0, 512], sizes = [1, 256], strides = [1, 1]} : vector<1x1024xf32> to vector<1x256xf32>
    %86 = arith.negf %85 : vector<1x256xf32>
    %87 = math.exp %86 : vector<1x256xf32>
    %cst_23 = arith.constant 1.000000e+00 : f32
    %88 = vector.broadcast %cst_23 : f32 to vector<1x256xf32>
    %89 = arith.addf %88, %87 : vector<1x256xf32>
    %90 = arith.divf %88, %89 : vector<1x256xf32>
    %91 = vector.extract_strided_slice %72 {offsets = [0, 768], sizes = [1, 256], strides = [1, 1]} : vector<1x1024xf32> to vector<1x256xf32>
    %92 = math.tanh %91 : vector<1x256xf32>
    %93 = arith.mulf %84, %33 : vector<1x256xf32>
    %94 = arith.mulf %78, %92 : vector<1x256xf32>
    %95 = arith.addf %93, %94 : vector<1x256xf32>
    %96 = math.tanh %95 : vector<1x256xf32>
    %97 = arith.mulf %90, %96 : vector<1x256xf32>
    %98 = arith.truncf %97 : vector<1x256xf32> to vector<1x256xbf16>
    %cst_24 = arith.constant dense<0.000000e+00> : vector<1x1024xf32>
    %99 = tpu.matmul %98, %1, %cst_24 {dimension_numbers = #tpu.dot_dimension_numbers<[1], [0], [0], [1], [0, 0, 1, 1], [], []>} : vector<1x256xbf16>, vector<256x1024xbf16>, vector<1x1024xf32> -> vector<1x1024xf32>
    %100 = arith.addf %3, %99 : vector<1x1024xf32>
    %101 = arith.truncf %66 : vector<1x256xf32> to vector<1x256xbf16>
    %cst_25 = arith.constant dense<0.000000e+00> : vector<1x1024xf32>
    %102 = tpu.matmul %101, %2, %cst_25 {dimension_numbers = #tpu.dot_dimension_numbers<[1], [0], [0], [1], [0, 0, 1, 1], [], []>} : vector<1x256xbf16>, vector<256x1024xbf16>, vector<1x1024xf32> -> vector<1x1024xf32>
    %103 = arith.addf %100, %102 : vector<1x1024xf32>
    %104 = vector.extract_strided_slice %103 {offsets = [0, 0], sizes = [1, 256], strides = [1, 1]} : vector<1x1024xf32> to vector<1x256xf32>
    %105 = arith.negf %104 : vector<1x256xf32>
    %106 = math.exp %105 : vector<1x256xf32>
    %cst_26 = arith.constant 1.000000e+00 : f32
    %107 = vector.broadcast %cst_26 : f32 to vector<1x256xf32>
    %108 = arith.addf %107, %106 : vector<1x256xf32>
    %109 = arith.divf %107, %108 : vector<1x256xf32>
    %110 = vector.extract_strided_slice %103 {offsets = [0, 256], sizes = [1, 256], strides = [1, 1]} : vector<1x1024xf32> to vector<1x256xf32>
    %111 = arith.negf %110 : vector<1x256xf32>
    %112 = math.exp %111 : vector<1x256xf32>
    %cst_27 = arith.constant 1.000000e+00 : f32
    %113 = vector.broadcast %cst_27 : f32 to vector<1x256xf32>
    %114 = arith.addf %113, %112 : vector<1x256xf32>
    %115 = arith.divf %113, %114 : vector<1x256xf32>
    %116 = vector.extract_strided_slice %103 {offsets = [0, 512], sizes = [1, 256], strides = [1, 1]} : vector<1x1024xf32> to vector<1x256xf32>
    %117 = arith.negf %116 : vector<1x256xf32>
    %118 = math.exp %117 : vector<1x256xf32>
    %cst_28 = arith.constant 1.000000e+00 : f32
    %119 = vector.broadcast %cst_28 : f32 to vector<1x256xf32>
    %120 = arith.addf %119, %118 : vector<1x256xf32>
    %121 = arith.divf %119, %120 : vector<1x256xf32>
    %122 = vector.extract_strided_slice %103 {offsets = [0, 768], sizes = [1, 256], strides = [1, 1]} : vector<1x1024xf32> to vector<1x256xf32>
    %123 = math.tanh %122 : vector<1x256xf32>
    %124 = arith.mulf %115, %64 : vector<1x256xf32>
    %125 = arith.mulf %109, %123 : vector<1x256xf32>
    %126 = arith.addf %124, %125 : vector<1x256xf32>
    %127 = math.tanh %126 : vector<1x256xf32>
    %128 = arith.mulf %121, %127 : vector<1x256xf32>
    %c2_i32 = arith.constant 2 : i32
    %129 = arith.index_cast %c2_i32 : i32 to index
    %c0_29 = arith.constant 0 : index
    %c0_30 = arith.constant 0 : index
    %130 = vector.load %arg0[%129, %c0_29, %c0_30] : memref<8x1x1024xf32, #tpu.memory_space<vmem>>, vector<1x1x1024xf32>
    %131 = vector.shape_cast %130 : vector<1x1x1024xf32> to vector<1x1024xf32>
    %132 = arith.truncf %97 : vector<1x256xf32> to vector<1x256xbf16>
    %cst_31 = arith.constant dense<0.000000e+00> : vector<1x1024xf32>
    %133 = tpu.matmul %132, %0, %cst_31 {dimension_numbers = #tpu.dot_dimension_numbers<[1], [0], [0], [1], [0, 0, 1, 1], [], []>} : vector<1x256xbf16>, vector<256x1024xbf16>, vector<1x1024xf32> -> vector<1x1024xf32>
    %134 = arith.addf %131, %133 : vector<1x1024xf32>
    %135 = vector.extract_strided_slice %134 {offsets = [0, 0], sizes = [1, 256], strides = [1, 1]} : vector<1x1024xf32> to vector<1x256xf32>
    %136 = arith.negf %135 : vector<1x256xf32>
    %137 = math.exp %136 : vector<1x256xf32>
    %cst_32 = arith.constant 1.000000e+00 : f32
    %138 = vector.broadcast %cst_32 : f32 to vector<1x256xf32>
    %139 = arith.addf %138, %137 : vector<1x256xf32>
    %140 = arith.divf %138, %139 : vector<1x256xf32>
    %141 = vector.extract_strided_slice %134 {offsets = [0, 256], sizes = [1, 256], strides = [1, 1]} : vector<1x1024xf32> to vector<1x256xf32>
    %142 = arith.negf %141 : vector<1x256xf32>
    %143 = math.exp %142 : vector<1x256xf32>
    %cst_33 = arith.constant 1.000000e+00 : f32
    %144 = vector.broadcast %cst_33 : f32 to vector<1x256xf32>
    %145 = arith.addf %144, %143 : vector<1x256xf32>
    %146 = arith.divf %144, %145 : vector<1x256xf32>
    %147 = vector.extract_strided_slice %134 {offsets = [0, 512], sizes = [1, 256], strides = [1, 1]} : vector<1x1024xf32> to vector<1x256xf32>
    %148 = arith.negf %147 : vector<1x256xf32>
    %149 = math.exp %148 : vector<1x256xf32>
    %cst_34 = arith.constant 1.000000e+00 : f32
    %150 = vector.broadcast %cst_34 : f32 to vector<1x256xf32>
    %151 = arith.addf %150, %149 : vector<1x256xf32>
    %152 = arith.divf %150, %151 : vector<1x256xf32>
    %153 = vector.extract_strided_slice %134 {offsets = [0, 768], sizes = [1, 256], strides = [1, 1]} : vector<1x1024xf32> to vector<1x256xf32>
    %154 = math.tanh %153 : vector<1x256xf32>
    %155 = arith.mulf %146, %95 : vector<1x256xf32>
    %156 = arith.mulf %140, %154 : vector<1x256xf32>
    %157 = arith.addf %155, %156 : vector<1x256xf32>
    %158 = math.tanh %157 : vector<1x256xf32>
    %159 = arith.mulf %152, %158 : vector<1x256xf32>
    %160 = arith.truncf %159 : vector<1x256xf32> to vector<1x256xbf16>
    %cst_35 = arith.constant dense<0.000000e+00> : vector<1x1024xf32>
    %161 = tpu.matmul %160, %1, %cst_35 {dimension_numbers = #tpu.dot_dimension_numbers<[1], [0], [0], [1], [0, 0, 1, 1], [], []>} : vector<1x256xbf16>, vector<256x1024xbf16>, vector<1x1024xf32> -> vector<1x1024xf32>
    %162 = arith.addf %3, %161 : vector<1x1024xf32>
    %163 = arith.truncf %128 : vector<1x256xf32> to vector<1x256xbf16>
    %cst_36 = arith.constant dense<0.000000e+00> : vector<1x1024xf32>
    %164 = tpu.matmul %163, %2, %cst_36 {dimension_numbers = #tpu.dot_dimension_numbers<[1], [0], [0], [1], [0, 0, 1, 1], [], []>} : vector<1x256xbf16>, vector<256x1024xbf16>, vector<1x1024xf32> -> vector<1x1024xf32>
    %165 = arith.addf %162, %164 : vector<1x1024xf32>
    %166 = vector.extract_strided_slice %165 {offsets = [0, 0], sizes = [1, 256], strides = [1, 1]} : vector<1x1024xf32> to vector<1x256xf32>
    %167 = arith.negf %166 : vector<1x256xf32>
    %168 = math.exp %167 : vector<1x256xf32>
    %cst_37 = arith.constant 1.000000e+00 : f32
    %169 = vector.broadcast %cst_37 : f32 to vector<1x256xf32>
    %170 = arith.addf %169, %168 : vector<1x256xf32>
    %171 = arith.divf %169, %170 : vector<1x256xf32>
    %172 = vector.extract_strided_slice %165 {offsets = [0, 256], sizes = [1, 256], strides = [1, 1]} : vector<1x1024xf32> to vector<1x256xf32>
    %173 = arith.negf %172 : vector<1x256xf32>
    %174 = math.exp %173 : vector<1x256xf32>
    %cst_38 = arith.constant 1.000000e+00 : f32
    %175 = vector.broadcast %cst_38 : f32 to vector<1x256xf32>
    %176 = arith.addf %175, %174 : vector<1x256xf32>
    %177 = arith.divf %175, %176 : vector<1x256xf32>
    %178 = vector.extract_strided_slice %165 {offsets = [0, 512], sizes = [1, 256], strides = [1, 1]} : vector<1x1024xf32> to vector<1x256xf32>
    %179 = arith.negf %178 : vector<1x256xf32>
    %180 = math.exp %179 : vector<1x256xf32>
    %cst_39 = arith.constant 1.000000e+00 : f32
    %181 = vector.broadcast %cst_39 : f32 to vector<1x256xf32>
    %182 = arith.addf %181, %180 : vector<1x256xf32>
    %183 = arith.divf %181, %182 : vector<1x256xf32>
    %184 = vector.extract_strided_slice %165 {offsets = [0, 768], sizes = [1, 256], strides = [1, 1]} : vector<1x1024xf32> to vector<1x256xf32>
    %185 = math.tanh %184 : vector<1x256xf32>
    %186 = arith.mulf %177, %126 : vector<1x256xf32>
    %187 = arith.mulf %171, %185 : vector<1x256xf32>
    %188 = arith.addf %186, %187 : vector<1x256xf32>
    %189 = math.tanh %188 : vector<1x256xf32>
    %190 = arith.mulf %183, %189 : vector<1x256xf32>
    %c3_i32 = arith.constant 3 : i32
    %191 = arith.index_cast %c3_i32 : i32 to index
    %c0_40 = arith.constant 0 : index
    %c0_41 = arith.constant 0 : index
    %192 = vector.load %arg0[%191, %c0_40, %c0_41] : memref<8x1x1024xf32, #tpu.memory_space<vmem>>, vector<1x1x1024xf32>
    %193 = vector.shape_cast %192 : vector<1x1x1024xf32> to vector<1x1024xf32>
    %194 = arith.truncf %159 : vector<1x256xf32> to vector<1x256xbf16>
    %cst_42 = arith.constant dense<0.000000e+00> : vector<1x1024xf32>
    %195 = tpu.matmul %194, %0, %cst_42 {dimension_numbers = #tpu.dot_dimension_numbers<[1], [0], [0], [1], [0, 0, 1, 1], [], []>} : vector<1x256xbf16>, vector<256x1024xbf16>, vector<1x1024xf32> -> vector<1x1024xf32>
    %196 = arith.addf %193, %195 : vector<1x1024xf32>
    %197 = vector.extract_strided_slice %196 {offsets = [0, 0], sizes = [1, 256], strides = [1, 1]} : vector<1x1024xf32> to vector<1x256xf32>
    %198 = arith.negf %197 : vector<1x256xf32>
    %199 = math.exp %198 : vector<1x256xf32>
    %cst_43 = arith.constant 1.000000e+00 : f32
    %200 = vector.broadcast %cst_43 : f32 to vector<1x256xf32>
    %201 = arith.addf %200, %199 : vector<1x256xf32>
    %202 = arith.divf %200, %201 : vector<1x256xf32>
    %203 = vector.extract_strided_slice %196 {offsets = [0, 256], sizes = [1, 256], strides = [1, 1]} : vector<1x1024xf32> to vector<1x256xf32>
    %204 = arith.negf %203 : vector<1x256xf32>
    %205 = math.exp %204 : vector<1x256xf32>
    %cst_44 = arith.constant 1.000000e+00 : f32
    %206 = vector.broadcast %cst_44 : f32 to vector<1x256xf32>
    %207 = arith.addf %206, %205 : vector<1x256xf32>
    %208 = arith.divf %206, %207 : vector<1x256xf32>
    %209 = vector.extract_strided_slice %196 {offsets = [0, 512], sizes = [1, 256], strides = [1, 1]} : vector<1x1024xf32> to vector<1x256xf32>
    %210 = arith.negf %209 : vector<1x256xf32>
    %211 = math.exp %210 : vector<1x256xf32>
    %cst_45 = arith.constant 1.000000e+00 : f32
    %212 = vector.broadcast %cst_45 : f32 to vector<1x256xf32>
    %213 = arith.addf %212, %211 : vector<1x256xf32>
    %214 = arith.divf %212, %213 : vector<1x256xf32>
    %215 = vector.extract_strided_slice %196 {offsets = [0, 768], sizes = [1, 256], strides = [1, 1]} : vector<1x1024xf32> to vector<1x256xf32>
    %216 = math.tanh %215 : vector<1x256xf32>
    %217 = arith.mulf %208, %157 : vector<1x256xf32>
    %218 = arith.mulf %202, %216 : vector<1x256xf32>
    %219 = arith.addf %217, %218 : vector<1x256xf32>
    %220 = math.tanh %219 : vector<1x256xf32>
    %221 = arith.mulf %214, %220 : vector<1x256xf32>
    %222 = arith.truncf %221 : vector<1x256xf32> to vector<1x256xbf16>
    %cst_46 = arith.constant dense<0.000000e+00> : vector<1x1024xf32>
    %223 = tpu.matmul %222, %1, %cst_46 {dimension_numbers = #tpu.dot_dimension_numbers<[1], [0], [0], [1], [0, 0, 1, 1], [], []>} : vector<1x256xbf16>, vector<256x1024xbf16>, vector<1x1024xf32> -> vector<1x1024xf32>
    %224 = arith.addf %3, %223 : vector<1x1024xf32>
    %225 = arith.truncf %190 : vector<1x256xf32> to vector<1x256xbf16>
    %cst_47 = arith.constant dense<0.000000e+00> : vector<1x1024xf32>
    %226 = tpu.matmul %225, %2, %cst_47 {dimension_numbers = #tpu.dot_dimension_numbers<[1], [0], [0], [1], [0, 0, 1, 1], [], []>} : vector<1x256xbf16>, vector<256x1024xbf16>, vector<1x1024xf32> -> vector<1x1024xf32>
    %227 = arith.addf %224, %226 : vector<1x1024xf32>
    %228 = vector.extract_strided_slice %227 {offsets = [0, 0], sizes = [1, 256], strides = [1, 1]} : vector<1x1024xf32> to vector<1x256xf32>
    %229 = arith.negf %228 : vector<1x256xf32>
    %230 = math.exp %229 : vector<1x256xf32>
    %cst_48 = arith.constant 1.000000e+00 : f32
    %231 = vector.broadcast %cst_48 : f32 to vector<1x256xf32>
    %232 = arith.addf %231, %230 : vector<1x256xf32>
    %233 = arith.divf %231, %232 : vector<1x256xf32>
    %234 = vector.extract_strided_slice %227 {offsets = [0, 256], sizes = [1, 256], strides = [1, 1]} : vector<1x1024xf32> to vector<1x256xf32>
    %235 = arith.negf %234 : vector<1x256xf32>
    %236 = math.exp %235 : vector<1x256xf32>
    %cst_49 = arith.constant 1.000000e+00 : f32
    %237 = vector.broadcast %cst_49 : f32 to vector<1x256xf32>
    %238 = arith.addf %237, %236 : vector<1x256xf32>
    %239 = arith.divf %237, %238 : vector<1x256xf32>
    %240 = vector.extract_strided_slice %227 {offsets = [0, 512], sizes = [1, 256], strides = [1, 1]} : vector<1x1024xf32> to vector<1x256xf32>
    %241 = arith.negf %240 : vector<1x256xf32>
    %242 = math.exp %241 : vector<1x256xf32>
    %cst_50 = arith.constant 1.000000e+00 : f32
    %243 = vector.broadcast %cst_50 : f32 to vector<1x256xf32>
    %244 = arith.addf %243, %242 : vector<1x256xf32>
    %245 = arith.divf %243, %244 : vector<1x256xf32>
    %246 = vector.extract_strided_slice %227 {offsets = [0, 768], sizes = [1, 256], strides = [1, 1]} : vector<1x1024xf32> to vector<1x256xf32>
    %247 = math.tanh %246 : vector<1x256xf32>
    %248 = arith.mulf %239, %188 : vector<1x256xf32>
    %249 = arith.mulf %233, %247 : vector<1x256xf32>
    %250 = arith.addf %248, %249 : vector<1x256xf32>
    %251 = math.tanh %250 : vector<1x256xf32>
    %252 = arith.mulf %245, %251 : vector<1x256xf32>
    %c4_i32 = arith.constant 4 : i32
    %253 = arith.index_cast %c4_i32 : i32 to index
    %c0_51 = arith.constant 0 : index
    %c0_52 = arith.constant 0 : index
    %254 = vector.load %arg0[%253, %c0_51, %c0_52] : memref<8x1x1024xf32, #tpu.memory_space<vmem>>, vector<1x1x1024xf32>
    %255 = vector.shape_cast %254 : vector<1x1x1024xf32> to vector<1x1024xf32>
    %256 = arith.truncf %221 : vector<1x256xf32> to vector<1x256xbf16>
    %cst_53 = arith.constant dense<0.000000e+00> : vector<1x1024xf32>
    %257 = tpu.matmul %256, %0, %cst_53 {dimension_numbers = #tpu.dot_dimension_numbers<[1], [0], [0], [1], [0, 0, 1, 1], [], []>} : vector<1x256xbf16>, vector<256x1024xbf16>, vector<1x1024xf32> -> vector<1x1024xf32>
    %258 = arith.addf %255, %257 : vector<1x1024xf32>
    %259 = vector.extract_strided_slice %258 {offsets = [0, 0], sizes = [1, 256], strides = [1, 1]} : vector<1x1024xf32> to vector<1x256xf32>
    %260 = arith.negf %259 : vector<1x256xf32>
    %261 = math.exp %260 : vector<1x256xf32>
    %cst_54 = arith.constant 1.000000e+00 : f32
    %262 = vector.broadcast %cst_54 : f32 to vector<1x256xf32>
    %263 = arith.addf %262, %261 : vector<1x256xf32>
    %264 = arith.divf %262, %263 : vector<1x256xf32>
    %265 = vector.extract_strided_slice %258 {offsets = [0, 256], sizes = [1, 256], strides = [1, 1]} : vector<1x1024xf32> to vector<1x256xf32>
    %266 = arith.negf %265 : vector<1x256xf32>
    %267 = math.exp %266 : vector<1x256xf32>
    %cst_55 = arith.constant 1.000000e+00 : f32
    %268 = vector.broadcast %cst_55 : f32 to vector<1x256xf32>
    %269 = arith.addf %268, %267 : vector<1x256xf32>
    %270 = arith.divf %268, %269 : vector<1x256xf32>
    %271 = vector.extract_strided_slice %258 {offsets = [0, 512], sizes = [1, 256], strides = [1, 1]} : vector<1x1024xf32> to vector<1x256xf32>
    %272 = arith.negf %271 : vector<1x256xf32>
    %273 = math.exp %272 : vector<1x256xf32>
    %cst_56 = arith.constant 1.000000e+00 : f32
    %274 = vector.broadcast %cst_56 : f32 to vector<1x256xf32>
    %275 = arith.addf %274, %273 : vector<1x256xf32>
    %276 = arith.divf %274, %275 : vector<1x256xf32>
    %277 = vector.extract_strided_slice %258 {offsets = [0, 768], sizes = [1, 256], strides = [1, 1]} : vector<1x1024xf32> to vector<1x256xf32>
    %278 = math.tanh %277 : vector<1x256xf32>
    %279 = arith.mulf %270, %219 : vector<1x256xf32>
    %280 = arith.mulf %264, %278 : vector<1x256xf32>
    %281 = arith.addf %279, %280 : vector<1x256xf32>
    %282 = math.tanh %281 : vector<1x256xf32>
    %283 = arith.mulf %276, %282 : vector<1x256xf32>
    %284 = arith.truncf %283 : vector<1x256xf32> to vector<1x256xbf16>
    %cst_57 = arith.constant dense<0.000000e+00> : vector<1x1024xf32>
    %285 = tpu.matmul %284, %1, %cst_57 {dimension_numbers = #tpu.dot_dimension_numbers<[1], [0], [0], [1], [0, 0, 1, 1], [], []>} : vector<1x256xbf16>, vector<256x1024xbf16>, vector<1x1024xf32> -> vector<1x1024xf32>
    %286 = arith.addf %3, %285 : vector<1x1024xf32>
    %287 = arith.truncf %252 : vector<1x256xf32> to vector<1x256xbf16>
    %cst_58 = arith.constant dense<0.000000e+00> : vector<1x1024xf32>
    %288 = tpu.matmul %287, %2, %cst_58 {dimension_numbers = #tpu.dot_dimension_numbers<[1], [0], [0], [1], [0, 0, 1, 1], [], []>} : vector<1x256xbf16>, vector<256x1024xbf16>, vector<1x1024xf32> -> vector<1x1024xf32>
    %289 = arith.addf %286, %288 : vector<1x1024xf32>
    %290 = vector.extract_strided_slice %289 {offsets = [0, 0], sizes = [1, 256], strides = [1, 1]} : vector<1x1024xf32> to vector<1x256xf32>
    %291 = arith.negf %290 : vector<1x256xf32>
    %292 = math.exp %291 : vector<1x256xf32>
    %cst_59 = arith.constant 1.000000e+00 : f32
    %293 = vector.broadcast %cst_59 : f32 to vector<1x256xf32>
    %294 = arith.addf %293, %292 : vector<1x256xf32>
    %295 = arith.divf %293, %294 : vector<1x256xf32>
    %296 = vector.extract_strided_slice %289 {offsets = [0, 256], sizes = [1, 256], strides = [1, 1]} : vector<1x1024xf32> to vector<1x256xf32>
    %297 = arith.negf %296 : vector<1x256xf32>
    %298 = math.exp %297 : vector<1x256xf32>
    %cst_60 = arith.constant 1.000000e+00 : f32
    %299 = vector.broadcast %cst_60 : f32 to vector<1x256xf32>
    %300 = arith.addf %299, %298 : vector<1x256xf32>
    %301 = arith.divf %299, %300 : vector<1x256xf32>
    %302 = vector.extract_strided_slice %289 {offsets = [0, 512], sizes = [1, 256], strides = [1, 1]} : vector<1x1024xf32> to vector<1x256xf32>
    %303 = arith.negf %302 : vector<1x256xf32>
    %304 = math.exp %303 : vector<1x256xf32>
    %cst_61 = arith.constant 1.000000e+00 : f32
    %305 = vector.broadcast %cst_61 : f32 to vector<1x256xf32>
    %306 = arith.addf %305, %304 : vector<1x256xf32>
    %307 = arith.divf %305, %306 : vector<1x256xf32>
    %308 = vector.extract_strided_slice %289 {offsets = [0, 768], sizes = [1, 256], strides = [1, 1]} : vector<1x1024xf32> to vector<1x256xf32>
    %309 = math.tanh %308 : vector<1x256xf32>
    %310 = arith.mulf %301, %250 : vector<1x256xf32>
    %311 = arith.mulf %295, %309 : vector<1x256xf32>
    %312 = arith.addf %310, %311 : vector<1x256xf32>
    %313 = math.tanh %312 : vector<1x256xf32>
    %314 = arith.mulf %307, %313 : vector<1x256xf32>
    %c5_i32 = arith.constant 5 : i32
    %315 = arith.index_cast %c5_i32 : i32 to index
    %c0_62 = arith.constant 0 : index
    %c0_63 = arith.constant 0 : index
    %316 = vector.load %arg0[%315, %c0_62, %c0_63] : memref<8x1x1024xf32, #tpu.memory_space<vmem>>, vector<1x1x1024xf32>
    %317 = vector.shape_cast %316 : vector<1x1x1024xf32> to vector<1x1024xf32>
    %318 = arith.truncf %283 : vector<1x256xf32> to vector<1x256xbf16>
    %cst_64 = arith.constant dense<0.000000e+00> : vector<1x1024xf32>
    %319 = tpu.matmul %318, %0, %cst_64 {dimension_numbers = #tpu.dot_dimension_numbers<[1], [0], [0], [1], [0, 0, 1, 1], [], []>} : vector<1x256xbf16>, vector<256x1024xbf16>, vector<1x1024xf32> -> vector<1x1024xf32>
    %320 = arith.addf %317, %319 : vector<1x1024xf32>
    %321 = vector.extract_strided_slice %320 {offsets = [0, 0], sizes = [1, 256], strides = [1, 1]} : vector<1x1024xf32> to vector<1x256xf32>
    %322 = arith.negf %321 : vector<1x256xf32>
    %323 = math.exp %322 : vector<1x256xf32>
    %cst_65 = arith.constant 1.000000e+00 : f32
    %324 = vector.broadcast %cst_65 : f32 to vector<1x256xf32>
    %325 = arith.addf %324, %323 : vector<1x256xf32>
    %326 = arith.divf %324, %325 : vector<1x256xf32>
    %327 = vector.extract_strided_slice %320 {offsets = [0, 256], sizes = [1, 256], strides = [1, 1]} : vector<1x1024xf32> to vector<1x256xf32>
    %328 = arith.negf %327 : vector<1x256xf32>
    %329 = math.exp %328 : vector<1x256xf32>
    %cst_66 = arith.constant 1.000000e+00 : f32
    %330 = vector.broadcast %cst_66 : f32 to vector<1x256xf32>
    %331 = arith.addf %330, %329 : vector<1x256xf32>
    %332 = arith.divf %330, %331 : vector<1x256xf32>
    %333 = vector.extract_strided_slice %320 {offsets = [0, 512], sizes = [1, 256], strides = [1, 1]} : vector<1x1024xf32> to vector<1x256xf32>
    %334 = arith.negf %333 : vector<1x256xf32>
    %335 = math.exp %334 : vector<1x256xf32>
    %cst_67 = arith.constant 1.000000e+00 : f32
    %336 = vector.broadcast %cst_67 : f32 to vector<1x256xf32>
    %337 = arith.addf %336, %335 : vector<1x256xf32>
    %338 = arith.divf %336, %337 : vector<1x256xf32>
    %339 = vector.extract_strided_slice %320 {offsets = [0, 768], sizes = [1, 256], strides = [1, 1]} : vector<1x1024xf32> to vector<1x256xf32>
    %340 = math.tanh %339 : vector<1x256xf32>
    %341 = arith.mulf %332, %281 : vector<1x256xf32>
    %342 = arith.mulf %326, %340 : vector<1x256xf32>
    %343 = arith.addf %341, %342 : vector<1x256xf32>
    %344 = math.tanh %343 : vector<1x256xf32>
    %345 = arith.mulf %338, %344 : vector<1x256xf32>
    %346 = arith.truncf %345 : vector<1x256xf32> to vector<1x256xbf16>
    %cst_68 = arith.constant dense<0.000000e+00> : vector<1x1024xf32>
    %347 = tpu.matmul %346, %1, %cst_68 {dimension_numbers = #tpu.dot_dimension_numbers<[1], [0], [0], [1], [0, 0, 1, 1], [], []>} : vector<1x256xbf16>, vector<256x1024xbf16>, vector<1x1024xf32> -> vector<1x1024xf32>
    %348 = arith.addf %3, %347 : vector<1x1024xf32>
    %349 = arith.truncf %314 : vector<1x256xf32> to vector<1x256xbf16>
    %cst_69 = arith.constant dense<0.000000e+00> : vector<1x1024xf32>
    %350 = tpu.matmul %349, %2, %cst_69 {dimension_numbers = #tpu.dot_dimension_numbers<[1], [0], [0], [1], [0, 0, 1, 1], [], []>} : vector<1x256xbf16>, vector<256x1024xbf16>, vector<1x1024xf32> -> vector<1x1024xf32>
    %351 = arith.addf %348, %350 : vector<1x1024xf32>
    %352 = vector.extract_strided_slice %351 {offsets = [0, 0], sizes = [1, 256], strides = [1, 1]} : vector<1x1024xf32> to vector<1x256xf32>
    %353 = arith.negf %352 : vector<1x256xf32>
    %354 = math.exp %353 : vector<1x256xf32>
    %cst_70 = arith.constant 1.000000e+00 : f32
    %355 = vector.broadcast %cst_70 : f32 to vector<1x256xf32>
    %356 = arith.addf %355, %354 : vector<1x256xf32>
    %357 = arith.divf %355, %356 : vector<1x256xf32>
    %358 = vector.extract_strided_slice %351 {offsets = [0, 256], sizes = [1, 256], strides = [1, 1]} : vector<1x1024xf32> to vector<1x256xf32>
    %359 = arith.negf %358 : vector<1x256xf32>
    %360 = math.exp %359 : vector<1x256xf32>
    %cst_71 = arith.constant 1.000000e+00 : f32
    %361 = vector.broadcast %cst_71 : f32 to vector<1x256xf32>
    %362 = arith.addf %361, %360 : vector<1x256xf32>
    %363 = arith.divf %361, %362 : vector<1x256xf32>
    %364 = vector.extract_strided_slice %351 {offsets = [0, 512], sizes = [1, 256], strides = [1, 1]} : vector<1x1024xf32> to vector<1x256xf32>
    %365 = arith.negf %364 : vector<1x256xf32>
    %366 = math.exp %365 : vector<1x256xf32>
    %cst_72 = arith.constant 1.000000e+00 : f32
    %367 = vector.broadcast %cst_72 : f32 to vector<1x256xf32>
    %368 = arith.addf %367, %366 : vector<1x256xf32>
    %369 = arith.divf %367, %368 : vector<1x256xf32>
    %370 = vector.extract_strided_slice %351 {offsets = [0, 768], sizes = [1, 256], strides = [1, 1]} : vector<1x1024xf32> to vector<1x256xf32>
    %371 = math.tanh %370 : vector<1x256xf32>
    %372 = arith.mulf %363, %312 : vector<1x256xf32>
    %373 = arith.mulf %357, %371 : vector<1x256xf32>
    %374 = arith.addf %372, %373 : vector<1x256xf32>
    %375 = math.tanh %374 : vector<1x256xf32>
    %376 = arith.mulf %369, %375 : vector<1x256xf32>
    %c6_i32 = arith.constant 6 : i32
    %377 = arith.index_cast %c6_i32 : i32 to index
    %c0_73 = arith.constant 0 : index
    %c0_74 = arith.constant 0 : index
    %378 = vector.load %arg0[%377, %c0_73, %c0_74] : memref<8x1x1024xf32, #tpu.memory_space<vmem>>, vector<1x1x1024xf32>
    %379 = vector.shape_cast %378 : vector<1x1x1024xf32> to vector<1x1024xf32>
    %380 = arith.truncf %345 : vector<1x256xf32> to vector<1x256xbf16>
    %cst_75 = arith.constant dense<0.000000e+00> : vector<1x1024xf32>
    %381 = tpu.matmul %380, %0, %cst_75 {dimension_numbers = #tpu.dot_dimension_numbers<[1], [0], [0], [1], [0, 0, 1, 1], [], []>} : vector<1x256xbf16>, vector<256x1024xbf16>, vector<1x1024xf32> -> vector<1x1024xf32>
    %382 = arith.addf %379, %381 : vector<1x1024xf32>
    %383 = vector.extract_strided_slice %382 {offsets = [0, 0], sizes = [1, 256], strides = [1, 1]} : vector<1x1024xf32> to vector<1x256xf32>
    %384 = arith.negf %383 : vector<1x256xf32>
    %385 = math.exp %384 : vector<1x256xf32>
    %cst_76 = arith.constant 1.000000e+00 : f32
    %386 = vector.broadcast %cst_76 : f32 to vector<1x256xf32>
    %387 = arith.addf %386, %385 : vector<1x256xf32>
    %388 = arith.divf %386, %387 : vector<1x256xf32>
    %389 = vector.extract_strided_slice %382 {offsets = [0, 256], sizes = [1, 256], strides = [1, 1]} : vector<1x1024xf32> to vector<1x256xf32>
    %390 = arith.negf %389 : vector<1x256xf32>
    %391 = math.exp %390 : vector<1x256xf32>
    %cst_77 = arith.constant 1.000000e+00 : f32
    %392 = vector.broadcast %cst_77 : f32 to vector<1x256xf32>
    %393 = arith.addf %392, %391 : vector<1x256xf32>
    %394 = arith.divf %392, %393 : vector<1x256xf32>
    %395 = vector.extract_strided_slice %382 {offsets = [0, 512], sizes = [1, 256], strides = [1, 1]} : vector<1x1024xf32> to vector<1x256xf32>
    %396 = arith.negf %395 : vector<1x256xf32>
    %397 = math.exp %396 : vector<1x256xf32>
    %cst_78 = arith.constant 1.000000e+00 : f32
    %398 = vector.broadcast %cst_78 : f32 to vector<1x256xf32>
    %399 = arith.addf %398, %397 : vector<1x256xf32>
    %400 = arith.divf %398, %399 : vector<1x256xf32>
    %401 = vector.extract_strided_slice %382 {offsets = [0, 768], sizes = [1, 256], strides = [1, 1]} : vector<1x1024xf32> to vector<1x256xf32>
    %402 = math.tanh %401 : vector<1x256xf32>
    %403 = arith.mulf %394, %343 : vector<1x256xf32>
    %404 = arith.mulf %388, %402 : vector<1x256xf32>
    %405 = arith.addf %403, %404 : vector<1x256xf32>
    %406 = math.tanh %405 : vector<1x256xf32>
    %407 = arith.mulf %400, %406 : vector<1x256xf32>
    %408 = arith.truncf %407 : vector<1x256xf32> to vector<1x256xbf16>
    %cst_79 = arith.constant dense<0.000000e+00> : vector<1x1024xf32>
    %409 = tpu.matmul %408, %1, %cst_79 {dimension_numbers = #tpu.dot_dimension_numbers<[1], [0], [0], [1], [0, 0, 1, 1], [], []>} : vector<1x256xbf16>, vector<256x1024xbf16>, vector<1x1024xf32> -> vector<1x1024xf32>
    %410 = arith.addf %3, %409 : vector<1x1024xf32>
    %411 = arith.truncf %376 : vector<1x256xf32> to vector<1x256xbf16>
    %cst_80 = arith.constant dense<0.000000e+00> : vector<1x1024xf32>
    %412 = tpu.matmul %411, %2, %cst_80 {dimension_numbers = #tpu.dot_dimension_numbers<[1], [0], [0], [1], [0, 0, 1, 1], [], []>} : vector<1x256xbf16>, vector<256x1024xbf16>, vector<1x1024xf32> -> vector<1x1024xf32>
    %413 = arith.addf %410, %412 : vector<1x1024xf32>
    %414 = vector.extract_strided_slice %413 {offsets = [0, 0], sizes = [1, 256], strides = [1, 1]} : vector<1x1024xf32> to vector<1x256xf32>
    %415 = arith.negf %414 : vector<1x256xf32>
    %416 = math.exp %415 : vector<1x256xf32>
    %cst_81 = arith.constant 1.000000e+00 : f32
    %417 = vector.broadcast %cst_81 : f32 to vector<1x256xf32>
    %418 = arith.addf %417, %416 : vector<1x256xf32>
    %419 = arith.divf %417, %418 : vector<1x256xf32>
    %420 = vector.extract_strided_slice %413 {offsets = [0, 256], sizes = [1, 256], strides = [1, 1]} : vector<1x1024xf32> to vector<1x256xf32>
    %421 = arith.negf %420 : vector<1x256xf32>
    %422 = math.exp %421 : vector<1x256xf32>
    %cst_82 = arith.constant 1.000000e+00 : f32
    %423 = vector.broadcast %cst_82 : f32 to vector<1x256xf32>
    %424 = arith.addf %423, %422 : vector<1x256xf32>
    %425 = arith.divf %423, %424 : vector<1x256xf32>
    %426 = vector.extract_strided_slice %413 {offsets = [0, 512], sizes = [1, 256], strides = [1, 1]} : vector<1x1024xf32> to vector<1x256xf32>
    %427 = arith.negf %426 : vector<1x256xf32>
    %428 = math.exp %427 : vector<1x256xf32>
    %cst_83 = arith.constant 1.000000e+00 : f32
    %429 = vector.broadcast %cst_83 : f32 to vector<1x256xf32>
    %430 = arith.addf %429, %428 : vector<1x256xf32>
    %431 = arith.divf %429, %430 : vector<1x256xf32>
    %432 = vector.extract_strided_slice %413 {offsets = [0, 768], sizes = [1, 256], strides = [1, 1]} : vector<1x1024xf32> to vector<1x256xf32>
    %433 = math.tanh %432 : vector<1x256xf32>
    %434 = arith.mulf %425, %374 : vector<1x256xf32>
    %435 = arith.mulf %419, %433 : vector<1x256xf32>
    %436 = arith.addf %434, %435 : vector<1x256xf32>
    %437 = math.tanh %436 : vector<1x256xf32>
    %438 = arith.mulf %431, %437 : vector<1x256xf32>
    %c7_i32 = arith.constant 7 : i32
    %439 = arith.index_cast %c7_i32 : i32 to index
    %c0_84 = arith.constant 0 : index
    %c0_85 = arith.constant 0 : index
    %440 = vector.load %arg0[%439, %c0_84, %c0_85] : memref<8x1x1024xf32, #tpu.memory_space<vmem>>, vector<1x1x1024xf32>
    %441 = vector.shape_cast %440 : vector<1x1x1024xf32> to vector<1x1024xf32>
    %442 = arith.truncf %407 : vector<1x256xf32> to vector<1x256xbf16>
    %cst_86 = arith.constant dense<0.000000e+00> : vector<1x1024xf32>
    %443 = tpu.matmul %442, %0, %cst_86 {dimension_numbers = #tpu.dot_dimension_numbers<[1], [0], [0], [1], [0, 0, 1, 1], [], []>} : vector<1x256xbf16>, vector<256x1024xbf16>, vector<1x1024xf32> -> vector<1x1024xf32>
    %444 = arith.addf %441, %443 : vector<1x1024xf32>
    %445 = vector.extract_strided_slice %444 {offsets = [0, 0], sizes = [1, 256], strides = [1, 1]} : vector<1x1024xf32> to vector<1x256xf32>
    %446 = arith.negf %445 : vector<1x256xf32>
    %447 = math.exp %446 : vector<1x256xf32>
    %cst_87 = arith.constant 1.000000e+00 : f32
    %448 = vector.broadcast %cst_87 : f32 to vector<1x256xf32>
    %449 = arith.addf %448, %447 : vector<1x256xf32>
    %450 = arith.divf %448, %449 : vector<1x256xf32>
    %451 = vector.extract_strided_slice %444 {offsets = [0, 256], sizes = [1, 256], strides = [1, 1]} : vector<1x1024xf32> to vector<1x256xf32>
    %452 = arith.negf %451 : vector<1x256xf32>
    %453 = math.exp %452 : vector<1x256xf32>
    %cst_88 = arith.constant 1.000000e+00 : f32
    %454 = vector.broadcast %cst_88 : f32 to vector<1x256xf32>
    %455 = arith.addf %454, %453 : vector<1x256xf32>
    %456 = arith.divf %454, %455 : vector<1x256xf32>
    %457 = vector.extract_strided_slice %444 {offsets = [0, 512], sizes = [1, 256], strides = [1, 1]} : vector<1x1024xf32> to vector<1x256xf32>
    %458 = arith.negf %457 : vector<1x256xf32>
    %459 = math.exp %458 : vector<1x256xf32>
    %cst_89 = arith.constant 1.000000e+00 : f32
    %460 = vector.broadcast %cst_89 : f32 to vector<1x256xf32>
    %461 = arith.addf %460, %459 : vector<1x256xf32>
    %462 = arith.divf %460, %461 : vector<1x256xf32>
    %463 = vector.extract_strided_slice %444 {offsets = [0, 768], sizes = [1, 256], strides = [1, 1]} : vector<1x1024xf32> to vector<1x256xf32>
    %464 = math.tanh %463 : vector<1x256xf32>
    %465 = arith.mulf %456, %405 : vector<1x256xf32>
    %466 = arith.mulf %450, %464 : vector<1x256xf32>
    %467 = arith.addf %465, %466 : vector<1x256xf32>
    %468 = math.tanh %467 : vector<1x256xf32>
    %469 = arith.mulf %462, %468 : vector<1x256xf32>
    %470 = arith.truncf %469 : vector<1x256xf32> to vector<1x256xbf16>
    %cst_90 = arith.constant dense<0.000000e+00> : vector<1x1024xf32>
    %471 = tpu.matmul %470, %1, %cst_90 {dimension_numbers = #tpu.dot_dimension_numbers<[1], [0], [0], [1], [0, 0, 1, 1], [], []>} : vector<1x256xbf16>, vector<256x1024xbf16>, vector<1x1024xf32> -> vector<1x1024xf32>
    %472 = arith.addf %3, %471 : vector<1x1024xf32>
    %473 = arith.truncf %438 : vector<1x256xf32> to vector<1x256xbf16>
    %cst_91 = arith.constant dense<0.000000e+00> : vector<1x1024xf32>
    %474 = tpu.matmul %473, %2, %cst_91 {dimension_numbers = #tpu.dot_dimension_numbers<[1], [0], [0], [1], [0, 0, 1, 1], [], []>} : vector<1x256xbf16>, vector<256x1024xbf16>, vector<1x1024xf32> -> vector<1x1024xf32>
    %475 = arith.addf %472, %474 : vector<1x1024xf32>
    %476 = vector.extract_strided_slice %475 {offsets = [0, 0], sizes = [1, 256], strides = [1, 1]} : vector<1x1024xf32> to vector<1x256xf32>
    %477 = arith.negf %476 : vector<1x256xf32>
    %478 = math.exp %477 : vector<1x256xf32>
    %cst_92 = arith.constant 1.000000e+00 : f32
    %479 = vector.broadcast %cst_92 : f32 to vector<1x256xf32>
    %480 = arith.addf %479, %478 : vector<1x256xf32>
    %481 = arith.divf %479, %480 : vector<1x256xf32>
    %482 = vector.extract_strided_slice %475 {offsets = [0, 256], sizes = [1, 256], strides = [1, 1]} : vector<1x1024xf32> to vector<1x256xf32>
    %483 = arith.negf %482 : vector<1x256xf32>
    %484 = math.exp %483 : vector<1x256xf32>
    %cst_93 = arith.constant 1.000000e+00 : f32
    %485 = vector.broadcast %cst_93 : f32 to vector<1x256xf32>
    %486 = arith.addf %485, %484 : vector<1x256xf32>
    %487 = arith.divf %485, %486 : vector<1x256xf32>
    %488 = vector.extract_strided_slice %475 {offsets = [0, 512], sizes = [1, 256], strides = [1, 1]} : vector<1x1024xf32> to vector<1x256xf32>
    %489 = arith.negf %488 : vector<1x256xf32>
    %490 = math.exp %489 : vector<1x256xf32>
    %cst_94 = arith.constant 1.000000e+00 : f32
    %491 = vector.broadcast %cst_94 : f32 to vector<1x256xf32>
    %492 = arith.addf %491, %490 : vector<1x256xf32>
    %493 = arith.divf %491, %492 : vector<1x256xf32>
    %494 = vector.extract_strided_slice %475 {offsets = [0, 768], sizes = [1, 256], strides = [1, 1]} : vector<1x1024xf32> to vector<1x256xf32>
    %495 = math.tanh %494 : vector<1x256xf32>
    %496 = arith.mulf %487, %436 : vector<1x256xf32>
    %497 = arith.mulf %481, %495 : vector<1x256xf32>
    %498 = arith.addf %496, %497 : vector<1x256xf32>
    %499 = math.tanh %498 : vector<1x256xf32>
    %500 = arith.mulf %493, %499 : vector<1x256xf32>
    %c8_i32 = arith.constant 8 : i32
    %c0_95 = arith.constant 0 : index
    %c0_96 = arith.constant 0 : index
    %501 = vector.load %arg5[%c0_95, %c0_96] : memref<256x128xbf16, #tpu.memory_space<vmem>>, vector<256x128xbf16>
    %502 = arith.truncf %500 : vector<1x256xf32> to vector<1x256xbf16>
    %cst_97 = arith.constant dense<0.000000e+00> : vector<1x128xf32>
    %503 = tpu.matmul %502, %501, %cst_97 {dimension_numbers = #tpu.dot_dimension_numbers<[1], [0], [0], [1], [0, 0, 1, 1], [], []>} : vector<1x256xbf16>, vector<256x128xbf16>, vector<1x128xf32> -> vector<1x128xf32>
    %c0_98 = arith.constant 0 : index
    %c0_99 = arith.constant 0 : index
    %504 = vector.load %arg6[%c0_98, %c0_99] : memref<1x128xf32, #tpu.memory_space<vmem>>, vector<1x128xf32>
    %505 = arith.addf %503, %504 : vector<1x128xf32>
    %cst_100 = arith.constant 0.000000e+00 : f32
    %506 = vector.broadcast %cst_100 : f32 to vector<1x128xf32>
    %507 = arith.maximumf %505, %506 : vector<1x128xf32>
    %c0_101 = arith.constant 0 : index
    %c0_102 = arith.constant 0 : index
    %508 = vector.load %arg7[%c0_101, %c0_102] : memref<128x128xbf16, #tpu.memory_space<vmem>>, vector<128x128xbf16>
    %509 = arith.truncf %507 : vector<1x128xf32> to vector<1x128xbf16>
    %cst_103 = arith.constant dense<0.000000e+00> : vector<1x128xf32>
    %510 = tpu.matmul %509, %508, %cst_103 {dimension_numbers = #tpu.dot_dimension_numbers<[1], [0], [0], [1], [0, 0, 1, 1], [], []>} : vector<1x128xbf16>, vector<128x128xbf16>, vector<1x128xf32> -> vector<1x128xf32>
    %c0_104 = arith.constant 0 : index
    %c0_105 = arith.constant 0 : index
    %511 = vector.load %arg8[%c0_104, %c0_105] : memref<1x128xf32, #tpu.memory_space<vmem>>, vector<1x128xf32>
    %512 = arith.addf %510, %511 : vector<1x128xf32>
    %cst_106 = arith.constant 0.000000e+00 : f32
    %513 = vector.broadcast %cst_106 : f32 to vector<1x128xf32>
    %514 = arith.maximumf %512, %513 : vector<1x128xf32>
    %c0_107 = arith.constant 0 : index
    %c0_108 = arith.constant 0 : index
    %515 = vector.load %arg9[%c0_107, %c0_108] : memref<1x128xf32, #tpu.memory_space<vmem>>, vector<1x128xf32>
    tpu.vector_store %arg9[%c0_107, %c0_108], %514 {strides = array<i32>} : memref<1x128xf32, #tpu.memory_space<vmem>>, vector<1x128xf32>,
    return
  }
}

</mosaic_0001>

<llo_original>
// kernel: squeeze.5
$region0: #{squeeze.5}
  %s0 = inlined_call_operand.vmem [shape: f32[8,3,3], index: 0, kind: input, shape index: {}]
  %s1 = inlined_call_operand.vmem [shape: f32[8,9], index: 1, kind: output, shape index: {}]
  $region1: #{squeeze.5} parent=0
    #allocation0 [shape = 'u8[12288]{0}', space=vmem, size = 0x3000, scoped, tag = 'scoped mem for input reshape']
    %s3 = sshllo.u32 0, 4
    %s4 = smul.addr 4, 2
    %s5 = scalar_lea.vmem %s0, %s4
    %v6 = vld [vmem:[%s5] sm:%s3]
    %s7 = scalar_lea.vmem [#allocation0], 16
    %8 = vst [vmem:[%s7] sm:%s3] %v6
    %s9 = scalar_lea.vmem %s0, 4
    %v10 = vld [vmem:[%s9] sm:%s3]
    %s11 = scalar_lea.vmem [#allocation0], 8
    %12 = vst [vmem:[%s11] sm:%s3] %v10
    %v13 = vld [vmem:[%s0] sm:%s3]
    %14 = vst [vmem:[#allocation0] sm:%s3] %v13
    %v15 = vld [vmem:[#allocation0] sm:$0x7]
    %vm16 = vcmask 64512
    %17 = vst.msk [vmem:[%s1] sm:$0x7] %vm16, %v15
    %s18 = scalar_lea.vmem [#allocation0], 8
    %v19 = vld [vmem:[%s18] sm:$0x7]
    %vm20 = vcmask 64512
    %s21 = scalar_lea.vmem %s1, 3
    %22 = vst.msk [vmem:[%s21] sm:$0x7] %vm20, %v19
    %s23 = scalar_lea.vmem [#allocation0], 16
    %v24 = vld [vmem:[%s23] sm:$0x7]
    %vm25 = vcmask 64512
    %s26 = scalar_lea.vmem %s1, 6
    %27 = vst.msk [vmem:[%s26] sm:$0x7] %vm25, %v24

// kernel: squeeze.0
$region0: #{squeeze.0}
  %s0 = inlined_call_operand.vmem [shape: f32[25], index: 0, kind: input, shape index: {}]
  %s1 = inlined_call_operand.hbm [shape: f32[1,1,1,5,5], index: 1, kind: output, shape index: {}]
  $region1: #{squeeze.0} parent=0
    #allocation0 [shape = 'u8[2560]{0}', space=vmem, size = 0xc00, scoped, tag = 'operand span for operand 1']
    #allocation1 [shape = 's32[1]{0}', space=sflag, size = 0x4, scoped, tag = 'scoped memory for squeeze.0']
    #allocation2 [shape = 'u8[20480]{0}', space=vmem, size = 0x5000, scoped, tag = 'scoped mem for output reshape']
    #allocation3 [shape = 'u8[4096]{0}', space=vmem, size = 0x1000, scoped, tag = 'scoped mem for input reshape']
    %2 = vsyncpa [#allocation1], 0
    %s4 = sshllo.u32 0, 1
    %v5 = vld [vmem:[%s0] sm:%s4]
    %6 = vst [vmem:[#allocation3] sm:%s4] %v5
    %v7 = vld [vmem:[#allocation3] sm:$0x1]
    %vm8 = vcmask 39936
    %9 = vst.msk [vmem:[#allocation2] sm:$0x1] %vm8, %v7
    %v10 = vld [vmem:[#allocation3] sm:$0x1]
    %11 = vrot.lane.b32.xlu0 %v10, 123
    %v12 = vpop.permute.xlu0 %11
    %vm13 = vcmask 39936
    %s14 = scalar_lea.vmem [#allocation2], 8
    %15 = vst.msk [vmem:[%s14] sm:$0x1] %vm13, %v12
    %v16 = vld [vmem:[#allocation3] sm:$0x1]
    %17 = vrot.lane.b32.xlu0 %v16, 118
    %v18 = vpop.permute.xlu0 %17
    %vm19 = vcmask 39936
    %s20 = scalar_lea.vmem [#allocation2], 16
    %21 = vst.msk [vmem:[%s20] sm:$0x1] %vm19, %v18
    %v22 = vld [vmem:[#allocation3] sm:$0x1]
    %23 = vrot.lane.b32.xlu0 %v22, 113
    %v24 = vpop.permute.xlu0 %23
    %vm25 = vcmask 39936
    %s26 = scalar_lea.vmem [#allocation2], 24
    %27 = vst.msk [vmem:[%s26] sm:$0x1] %vm25, %v24
    %v28 = vld [vmem:[#allocation3] sm:$0x1]
    %29 = vrot.lane.b32.xlu0 %v28, 108
    %v30 = vpop.permute.xlu0 %29
    %vm31 = vcmask 39936
    %s32 = scalar_lea.vmem [#allocation2], 32
    %33 = vst.msk [vmem:[%s32] sm:$0x1] %vm31, %v30
    %s35 = sshllo.u32 0, 1
    %v37 = vld [vmem:[#allocation2] sm:%s35]
    %s38 = sshllo.u32 0, 1
    %39 = vst [vmem:[#allocation0] sm:%s38] %v37
    %s40 = scalar_lea.vmem [#allocation2], 8
    %v41 = vld [vmem:[%s40] sm:%s35]
    %s42 = sshllo.u32 0, 1
    %s43 = scalar_lea.vmem [#allocation0], 1
    %44 = vst [vmem:[%s43] sm:%s42] %v41
    %s45 = scalar_lea.vmem [#allocation2], 16
    %v46 = vld [vmem:[%s45] sm:%s35]
    %s47 = sshllo.u32 0, 1
    %s48 = smul.addr 1, 2
    %s49 = scalar_lea.vmem [#allocation0], %s48
    %50 = vst [vmem:[%s49] sm:%s47] %v46
    %s51 = scalar_lea.vmem [#allocation2], 24
    %v52 = vld [vmem:[%s51] sm:%s35]
    %s53 = sshllo.u32 0, 1
    %s54 = smul.addr 1, 3
    %s55 = scalar_lea.vmem [#allocation0], %s54
    %56 = vst [vmem:[%s55] sm:%s53] %v52
    %s57 = scalar_lea.vmem [#allocation2], 32
    %v58 = vld [vmem:[%s57] sm:%s35]
    %s59 = sshllo.u32 0, 1
    %s60 = smul.addr 1, 4
    %s61 = scalar_lea.vmem [#allocation0], %s60
    %62 = vst [vmem:[%s61] sm:%s59] %v58
    %s64 = ssub.s32 80, 80
    %65 = vsyncadd [#allocation1], %s64
    %s67 = sshll.u32 [#allocation0], 4
    %s68 = int_to_ptr.vmem [resolvable:$true] %s67
    %70 = dma.vmem_to_hbm [thread:$0]  %s68, 80, %s1, [#allocation1]
    %71 = dma.done [#allocation1], 80
    %72 = vsyncpa [#allocation1], 1

// kernel: vanilla_convlstm_fc.1
$region0: #{vanilla_convlstm_fc.1}
  #allocation0 [shape = 'u32[]', space=smem, size = 0x4, offset = 0x4, fixed_abs, tag = 'smem constant byte address 0x4 - core index']
  #allocation1 [shape = 'u32[144,128]{1,0:T(1,128)}', space=vmem, size = 0x12000, scoped, tag = 'internal scratch']
  %s0 = inlined_call_operand.vmem [shape: f32[8,1,1024], index: 0, kind: input, shape index: {}]
  %s1 = inlined_call_operand.vmem [shape: bf16[256,1024], index: 1, kind: input, shape index: {}]
  %s2 = inlined_call_operand.vmem [shape: bf16[256,1024], index: 2, kind: input, shape index: {}]
  %s3 = inlined_call_operand.vmem [shape: bf16[256,1024], index: 3, kind: input, shape index: {}]
  %s4 = inlined_call_operand.vmem [shape: f32[1,1024], index: 4, kind: input, shape index: {}]
  %s5 = inlined_call_operand.vmem [shape: bf16[256,128], index: 5, kind: input, shape index: {}]
  %s6 = inlined_call_operand.vmem [shape: f32[1,128], index: 6, kind: input, shape index: {}]
  %s7 = inlined_call_operand.vmem [shape: bf16[128,128], index: 7, kind: input, shape index: {}]
  %s8 = inlined_call_operand.vmem [shape: f32[1,128], index: 8, kind: input, shape index: {}]
  %s9 = inlined_call_operand.vmem [shape: f32[1,128], index: 9, kind: output, shape index: {}]
  %s10 = sld [smem:[#allocation0]]
  $region46: #{vanilla_convlstm_fc.1} parent=0
    _
  %s12 = ssub.s32 1, %s10
  %s13 = scalar_select 0, %s12, %s10
  // Predicated region
  $region2: #{vanilla_convlstm_fc.1} parent=0 // pred_check
    _
  $region3: #{vanilla_convlstm_fc.1} parent=0 // pred_check_branch
    %15 = sbr.rel (0) target = $region5
  $region4: #{vanilla_convlstm_fc.1} parent=0 // pred_region
    _
  $region5: #{vanilla_convlstm_fc.1} parent=0 // pred_fallthru
    _
  // Predicated region
  $region6: #{vanilla_convlstm_fc.1} parent=0 // pred_check
    _
  $region7: #{vanilla_convlstm_fc.1} parent=0 // pred_check_branch
    %17 = sbr.rel (0) target = $region9
  $region8: #{vanilla_convlstm_fc.1} parent=0 // pred_region
    _
  $region9: #{vanilla_convlstm_fc.1} parent=0 // pred_fallthru
    _
  // Predicated region
  $region10: #{vanilla_convlstm_fc.1} parent=0 // pred_check
    _
  $region11: #{vanilla_convlstm_fc.1} parent=0 // pred_check_branch
    %19 = sbr.rel (0) target = $region13
  $region12: #{vanilla_convlstm_fc.1} parent=0 // pred_region
    _
  $region13: #{vanilla_convlstm_fc.1} parent=0 // pred_fallthru
    _
  // Predicated region
  $region14: #{vanilla_convlstm_fc.1} parent=0 // pred_check
    _
  $region15: #{vanilla_convlstm_fc.1} parent=0 // pred_check_branch
    %21 = sbr.rel (0) target = $region17
  $region16: #{vanilla_convlstm_fc.1} parent=0 // pred_region
    _
  $region17: #{vanilla_convlstm_fc.1} parent=0 // pred_fallthru
    _
  // Predicated region
  $region18: #{vanilla_convlstm_fc.1} parent=0 // pred_check
    _
  $region19: #{vanilla_convlstm_fc.1} parent=0 // pred_check_branch
    %23 = sbr.rel (0) target = $region21
  $region20: #{vanilla_convlstm_fc.1} parent=0 // pred_region
    _
  $region21: #{vanilla_convlstm_fc.1} parent=0 // pred_fallthru
    _
  // Predicated region
  $region22: #{vanilla_convlstm_fc.1} parent=0 // pred_check
    _
  $region23: #{vanilla_convlstm_fc.1} parent=0 // pred_check_branch
    %25 = sbr.rel (0) target = $region25
  $region24: #{vanilla_convlstm_fc.1} parent=0 // pred_region
    _
  $region25: #{vanilla_convlstm_fc.1} parent=0 // pred_fallthru
    _
  // Predicated region
  $region26: #{vanilla_convlstm_fc.1} parent=0 // pred_check
    _
  $region27: #{vanilla_convlstm_fc.1} parent=0 // pred_check_branch
    %27 = sbr.rel (0) target = $region29
  $region28: #{vanilla_convlstm_fc.1} parent=0 // pred_region
    _
  $region29: #{vanilla_convlstm_fc.1} parent=0 // pred_fallthru
    _
  // Predicated region
  $region30: #{vanilla_convlstm_fc.1} parent=0 // pred_check
    _
  $region31: #{vanilla_convlstm_fc.1} parent=0 // pred_check_branch
    %29 = sbr.rel (0) target = $region33
  $region32: #{vanilla_convlstm_fc.1} parent=0 // pred_region
    _
  $region33: #{vanilla_convlstm_fc.1} parent=0 // pred_fallthru
    _
  // Predicated region
  $region34: #{vanilla_convlstm_fc.1} parent=0 // pred_check
    _
  $region35: #{vanilla_convlstm_fc.1} parent=0 // pred_check_branch
    %31 = sbr.rel (0) target = $region37
  $region36: #{vanilla_convlstm_fc.1} parent=0 // pred_region
    _
  $region37: #{vanilla_convlstm_fc.1} parent=0 // pred_fallthru
    _
  %v33 = vld [vmem:[%s1] sm:$0xff]
  %v34 = vld [vmem:[%s1 + $0x8] sm:$0xff]
  %v35 = vld [vmem:[%s1 + $0x10] sm:$0xff]
  %v36 = vld [vmem:[%s1 + $0x18] sm:$0xff]
  %v37 = vld [vmem:[%s1 + $0x20] sm:$0xff]
  %v38 = vld [vmem:[%s1 + $0x28] sm:$0xff]
  %v39 = vld [vmem:[%s1 + $0x30] sm:$0xff]
  %v40 = vld [vmem:[%s1 + $0x38] sm:$0xff]
  %v41 = vld [vmem:[%s1 + $0x40] sm:$0xff]
  %v42 = vld [vmem:[%s1 + $0x48] sm:$0xff]
  %v43 = vld [vmem:[%s1 + $0x50] sm:$0xff]
  %v44 = vld [vmem:[%s1 + $0x58] sm:$0xff]
  %v45 = vld [vmem:[%s1 + $0x60] sm:$0xff]
  %v46 = vld [vmem:[%s1 + $0x68] sm:$0xff]
  %v47 = vld [vmem:[%s1 + $0x70] sm:$0xff]
  %v48 = vld [vmem:[%s1 + $0x78] sm:$0xff]
  %v49 = vld [vmem:[%s1 + $0x80] sm:$0xff]
  %v50 = vld [vmem:[%s1 + $0x88] sm:$0xff]
  %v51 = vld [vmem:[%s1 + $0x90] sm:$0xff]
  %v52 = vld [vmem:[%s1 + $0x98] sm:$0xff]
  %v53 = vld [vmem:[%s1 + $0xa0] sm:$0xff]
  %v54 = vld [vmem:[%s1 + $0xa8] sm:$0xff]
  %v55 = vld [vmem:[%s1 + $0xb0] sm:$0xff]
  %v56 = vld [vmem:[%s1 + $0xb8] sm:$0xff]
  %v57 = vld [vmem:[%s1 + $0xc0] sm:$0xff]
  %v58 = vld [vmem:[%s1 + $0xc8] sm:$0xff]
  %v59 = vld [vmem:[%s1 + $0xd0] sm:$0xff]
  %v60 = vld [vmem:[%s1 + $0xd8] sm:$0xff]
  %v61 = vld [vmem:[%s1 + $0xe0] sm:$0xff]
  %v62 = vld [vmem:[%s1 + $0xe8] sm:$0xff]
  %v63 = vld [vmem:[%s1 + $0xf0] sm:$0xff]
  %v64 = vld [vmem:[%s1 + $0xf8] sm:$0xff]
  %v65 = vld [vmem:[%s1 + $0x100] sm:$0xff]
  %v66 = vld [vmem:[%s1 + $0x108] sm:$0xff]
  %v67 = vld [vmem:[%s1 + $0x110] sm:$0xff]
  %v68 = vld [vmem:[%s1 + $0x118] sm:$0xff]
  %v69 = vld [vmem:[%s1 + $0x120] sm:$0xff]
  %v70 = vld [vmem:[%s1 + $0x128] sm:$0xff]
  %v71 = vld [vmem:[%s1 + $0x130] sm:$0xff]
  %v72 = vld [vmem:[%s1 + $0x138] sm:$0xff]
  %v73 = vld [vmem:[%s1 + $0x140] sm:$0xff]
  %v74 = vld [vmem:[%s1 + $0x148] sm:$0xff]
  %v75 = vld [vmem:[%s1 + $0x150] sm:$0xff]
  %v76 = vld [vmem:[%s1 + $0x158] sm:$0xff]
  %v77 = vld [vmem:[%s1 + $0x160] sm:$0xff]
  %v78 = vld [vmem:[%s1 + $0x168] sm:$0xff]
  %v79 = vld [vmem:[%s1 + $0x170] sm:$0xff]
  %v80 = vld [vmem:[%s1 + $0x178] sm:$0xff]
  %v81 = vld [vmem:[%s1 + $0x180] sm:$0xff]
  %v82 = vld [vmem:[%s1 + $0x188] sm:$0xff]
  %v83 = vld [vmem:[%s1 + $0x190] sm:$0xff]
  %v84 = vld [vmem:[%s1 + $0x198] sm:$0xff]
  %v85 = vld [vmem:[%s1 + $0x1a0] sm:$0xff]
  %v86 = vld [vmem:[%s1 + $0x1a8] sm:$0xff]
  %v87 = vld [vmem:[%s1 + $0x1b0] sm:$0xff]
  %v88 = vld [vmem:[%s1 + $0x1b8] sm:$0xff]
  %v89 = vld [vmem:[%s1 + $0x1c0] sm:$0xff]
  %v90 = vld [vmem:[%s1 + $0x1c8] sm:$0xff]
  %v91 = vld [vmem:[%s1 + $0x1d0] sm:$0xff]
  %v92 = vld [vmem:[%s1 + $0x1d8] sm:$0xff]
  %v93 = vld [vmem:[%s1 + $0x1e0] sm:$0xff]
  %v94 = vld [vmem:[%s1 + $0x1e8] sm:$0xff]
  %v95 = vld [vmem:[%s1 + $0x1f0] sm:$0xff]
  %v96 = vld [vmem:[%s1 + $0x1f8] sm:$0xff]
  %v97 = vld [vmem:[%s1 + $0x200] sm:$0xff]
  %v98 = vld [vmem:[%s1 + $0x208] sm:$0xff]
  %v99 = vld [vmem:[%s1 + $0x210] sm:$0xff]
  %v100 = vld [vmem:[%s1 + $0x218] sm:$0xff]
  %v101 = vld [vmem:[%s1 + $0x220] sm:$0xff]
  %v102 = vld [vmem:[%s1 + $0x228] sm:$0xff]
  %v103 = vld [vmem:[%s1 + $0x230] sm:$0xff]
  %v104 = vld [vmem:[%s1 + $0x238] sm:$0xff]
  %v105 = vld [vmem:[%s1 + $0x240] sm:$0xff]
  %v106 = vld [vmem:[%s1 + $0x248] sm:$0xff]
  %v107 = vld [vmem:[%s1 + $0x250] sm:$0xff]
  %v108 = vld [vmem:[%s1 + $0x258] sm:$0xff]
  %v109 = vld [vmem:[%s1 + $0x260] sm:$0xff]
  %v110 = vld [vmem:[%s1 + $0x268] sm:$0xff]
  %v111 = vld [vmem:[%s1 + $0x270] sm:$0xff]
  %v112 = vld [vmem:[%s1 + $0x278] sm:$0xff]
  %v113 = vld [vmem:[%s1 + $0x280] sm:$0xff]
  %v114 = vld [vmem:[%s1 + $0x288] sm:$0xff]
  %v115 = vld [vmem:[%s1 + $0x290] sm:$0xff]
  %v116 = vld [vmem:[%s1 + $0x298] sm:$0xff]
  %v117 = vld [vmem:[%s1 + $0x2a0] sm:$0xff]
  %v118 = vld [vmem:[%s1 + $0x2a8] sm:$0xff]
  %v119 = vld [vmem:[%s1 + $0x2b0] sm:$0xff]
  %v120 = vld [vmem:[%s1 + $0x2b8] sm:$0xff]
  %v121 = vld [vmem:[%s1 + $0x2c0] sm:$0xff]
  %v122 = vld [vmem:[%s1 + $0x2c8] sm:$0xff]
  %v123 = vld [vmem:[%s1 + $0x2d0] sm:$0xff]
  %v124 = vld [vmem:[%s1 + $0x2d8] sm:$0xff]
  %v125 = vld [vmem:[%s1 + $0x2e0] sm:$0xff]
  %v126 = vld [vmem:[%s1 + $0x2e8] sm:$0xff]
  %v127 = vld [vmem:[%s1 + $0x2f0] sm:$0xff]
  %v128 = vld [vmem:[%s1 + $0x2f8] sm:$0xff]
  %v129 = vld [vmem:[%s1 + $0x300] sm:$0xff]
  %v130 = vld [vmem:[%s1 + $0x308] sm:$0xff]
  %v131 = vld [vmem:[%s1 + $0x310] sm:$0xff]
  %v132 = vld [vmem:[%s1 + $0x318] sm:$0xff]
  %v133 = vld [vmem:[%s1 + $0x320] sm:$0xff]
  %v134 = vld [vmem:[%s1 + $0x328] sm:$0xff]
  %v135 = vld [vmem:[%s1 + $0x330] sm:$0xff]
  %v136 = vld [vmem:[%s1 + $0x338] sm:$0xff]
  %v137 = vld [vmem:[%s1 + $0x340] sm:$0xff]
  %v138 = vld [vmem:[%s1 + $0x348] sm:$0xff]
  %v139 = vld [vmem:[%s1 + $0x350] sm:$0xff]
  %v140 = vld [vmem:[%s1 + $0x358] sm:$0xff]
  %v141 = vld [vmem:[%s1 + $0x360] sm:$0xff]
  %v142 = vld [vmem:[%s1 + $0x368] sm:$0xff]
  %v143 = vld [vmem:[%s1 + $0x370] sm:$0xff]
  %v144 = vld [vmem:[%s1 + $0x378] sm:$0xff]
  %v145 = vld [vmem:[%s1 + $0x380] sm:$0xff]
  %v146 = vld [vmem:[%s1 + $0x388] sm:$0xff]
  %v147 = vld [vmem:[%s1 + $0x390] sm:$0xff]
  %v148 = vld [vmem:[%s1 + $0x398] sm:$0xff]
  %v149 = vld [vmem:[%s1 + $0x3a0] sm:$0xff]
  %v150 = vld [vmem:[%s1 + $0x3a8] sm:$0xff]
  %v151 = vld [vmem:[%s1 + $0x3b0] sm:$0xff]
  %v152 = vld [vmem:[%s1 + $0x3b8] sm:$0xff]
  %v153 = vld [vmem:[%s1 + $0x3c0] sm:$0xff]
  %v154 = vld [vmem:[%s1 + $0x3c8] sm:$0xff]
  %v155 = vld [vmem:[%s1 + $0x3d0] sm:$0xff]
  %v156 = vld [vmem:[%s1 + $0x3d8] sm:$0xff]
  %v157 = vld [vmem:[%s1 + $0x3e0] sm:$0xff]
  %v158 = vld [vmem:[%s1 + $0x3e8] sm:$0xff]
  %v159 = vld [vmem:[%s1 + $0x3f0] sm:$0xff]
  %v160 = vld [vmem:[%s1 + $0x3f8] sm:$0xff]
  %v161 = vld [vmem:[%s2] sm:$0xff]
  %v162 = vld [vmem:[%s2 + $0x8] sm:$0xff]
  %v163 = vld [vmem:[%s2 + $0x10] sm:$0xff]
  %v164 = vld [vmem:[%s2 + $0x18] sm:$0xff]
  %v165 = vld [vmem:[%s2 + $0x20] sm:$0xff]
  %v166 = vld [vmem:[%s2 + $0x28] sm:$0xff]
  %v167 = vld [vmem:[%s2 + $0x30] sm:$0xff]
  %v168 = vld [vmem:[%s2 + $0x38] sm:$0xff]
  %v169 = vld [vmem:[%s2 + $0x40] sm:$0xff]
  %v170 = vld [vmem:[%s2 + $0x48] sm:$0xff]
  %v171 = vld [vmem:[%s2 + $0x50] sm:$0xff]
  %v172 = vld [vmem:[%s2 + $0x58] sm:$0xff]
  %v173 = vld [vmem:[%s2 + $0x60] sm:$0xff]
  %v174 = vld [vmem:[%s2 + $0x68] sm:$0xff]
  %v175 = vld [vmem:[%s2 + $0x70] sm:$0xff]
  %v176 = vld [vmem:[%s2 + $0x78] sm:$0xff]
  %v177 = vld [vmem:[%s2 + $0x80] sm:$0xff]
  %v178 = vld [vmem:[%s2 + $0x88] sm:$0xff]
  %v179 = vld [vmem:[%s2 + $0x90] sm:$0xff]
  %v180 = vld [vmem:[%s2 + $0x98] sm:$0xff]
  %v181 = vld [vmem:[%s2 + $0xa0] sm:$0xff]
  %v182 = vld [vmem:[%s2 + $0xa8] sm:$0xff]
  %v183 = vld [vmem:[%s2 + $0xb0] sm:$0xff]
  %v184 = vld [vmem:[%s2 + $0xb8] sm:$0xff]
  %v185 = vld [vmem:[%s2 + $0xc0] sm:$0xff]
  %v186 = vld [vmem:[%s2 + $0xc8] sm:$0xff]
  %v187 = vld [vmem:[%s2 + $0xd0] sm:$0xff]
  %v188 = vld [vmem:[%s2 + $0xd8] sm:$0xff]
  %v189 = vld [vmem:[%s2 + $0xe0] sm:$0xff]
  %v190 = vld [vmem:[%s2 + $0xe8] sm:$0xff]
  %v191 = vld [vmem:[%s2 + $0xf0] sm:$0xff]
  %v192 = vld [vmem:[%s2 + $0xf8] sm:$0xff]
  %v193 = vld [vmem:[%s2 + $0x100] sm:$0xff]
  %v194 = vld [vmem:[%s2 + $0x108] sm:$0xff]
  %v195 = vld [vmem:[%s2 + $0x110] sm:$0xff]
  %v196 = vld [vmem:[%s2 + $0x118] sm:$0xff]
  %v197 = vld [vmem:[%s2 + $0x120] sm:$0xff]
  %v198 = vld [vmem:[%s2 + $0x128] sm:$0xff]
  %v199 = vld [vmem:[%s2 + $0x130] sm:$0xff]
  %v200 = vld [vmem:[%s2 + $0x138] sm:$0xff]
  %v201 = vld [vmem:[%s2 + $0x140] sm:$0xff]
  %v202 = vld [vmem:[%s2 + $0x148] sm:$0xff]
  %v203 = vld [vmem:[%s2 + $0x150] sm:$0xff]
  %v204 = vld [vmem:[%s2 + $0x158] sm:$0xff]
  %v205 = vld [vmem:[%s2 + $0x160] sm:$0xff]
  %v206 = vld [vmem:[%s2 + $0x168] sm:$0xff]
  %v207 = vld [vmem:[%s2 + $0x170] sm:$0xff]
  %v208 = vld [vmem:[%s2 + $0x178] sm:$0xff]
  %v209 = vld [vmem:[%s2 + $0x180] sm:$0xff]
  %v210 = vld [vmem:[%s2 + $0x188] sm:$0xff]
  %v211 = vld [vmem:[%s2 + $0x190] sm:$0xff]
  %v212 = vld [vmem:[%s2 + $0x198] sm:$0xff]
  %v213 = vld [vmem:[%s2 + $0x1a0] sm:$0xff]
  %v214 = vld [vmem:[%s2 + $0x1a8] sm:$0xff]
  %v215 = vld [vmem:[%s2 + $0x1b0] sm:$0xff]
  %v216 = vld [vmem:[%s2 + $0x1b8] sm:$0xff]
  %v217 = vld [vmem:[%s2 + $0x1c0] sm:$0xff]
  %v218 = vld [vmem:[%s2 + $0x1c8] sm:$0xff]
  %v219 = vld [vmem:[%s2 + $0x1d0] sm:$0xff]
  %v220 = vld [vmem:[%s2 + $0x1d8] sm:$0xff]
  %v221 = vld [vmem:[%s2 + $0x1e0] sm:$0xff]
  %v222 = vld [vmem:[%s2 + $0x1e8] sm:$0xff]
  %v223 = vld [vmem:[%s2 + $0x1f0] sm:$0xff]
  %v224 = vld [vmem:[%s2 + $0x1f8] sm:$0xff]
  %v225 = vld [vmem:[%s2 + $0x200] sm:$0xff]
  %v226 = vld [vmem:[%s2 + $0x208] sm:$0xff]
  %v227 = vld [vmem:[%s2 + $0x210] sm:$0xff]
  %v228 = vld [vmem:[%s2 + $0x218] sm:$0xff]
  %v229 = vld [vmem:[%s2 + $0x220] sm:$0xff]
  %v230 = vld [vmem:[%s2 + $0x228] sm:$0xff]
  %v231 = vld [vmem:[%s2 + $0x230] sm:$0xff]
  %v232 = vld [vmem:[%s2 + $0x238] sm:$0xff]
  %v233 = vld [vmem:[%s2 + $0x240] sm:$0xff]
  %v234 = vld [vmem:[%s2 + $0x248] sm:$0xff]
  %v235 = vld [vmem:[%s2 + $0x250] sm:$0xff]
  %v236 = vld [vmem:[%s2 + $0x258] sm:$0xff]
  %v237 = vld [vmem:[%s2 + $0x260] sm:$0xff]
  %v238 = vld [vmem:[%s2 + $0x268] sm:$0xff]
  %v239 = vld [vmem:[%s2 + $0x270] sm:$0xff]
  %v240 = vld [vmem:[%s2 + $0x278] sm:$0xff]
  %v241 = vld [vmem:[%s2 + $0x280] sm:$0xff]
  %v242 = vld [vmem:[%s2 + $0x288] sm:$0xff]
  %v243 = vld [vmem:[%s2 + $0x290] sm:$0xff]
  %v244 = vld [vmem:[%s2 + $0x298] sm:$0xff]
  %v245 = vld [vmem:[%s2 + $0x2a0] sm:$0xff]
  %v246 = vld [vmem:[%s2 + $0x2a8] sm:$0xff]
  %v247 = vld [vmem:[%s2 + $0x2b0] sm:$0xff]
  %v248 = vld [vmem:[%s2 + $0x2b8] sm:$0xff]
  %v249 = vld [vmem:[%s2 + $0x2c0] sm:$0xff]
  %v250 = vld [vmem:[%s2 + $0x2c8] sm:$0xff]
  %v251 = vld [vmem:[%s2 + $0x2d0] sm:$0xff]
  %v252 = vld [vmem:[%s2 + $0x2d8] sm:$0xff]
  %v253 = vld [vmem:[%s2 + $0x2e0] sm:$0xff]
  %v254 = vld [vmem:[%s2 + $0x2e8] sm:$0xff]
  %v255 = vld [vmem:[%s2 + $0x2f0] sm:$0xff]
  %v256 = vld [vmem:[%s2 + $0x2f8] sm:$0xff]
  %v257 = vld [vmem:[%s2 + $0x300] sm:$0xff]
  %v258 = vld [vmem:[%s2 + $0x308] sm:$0xff]
  %v259 = vld [vmem:[%s2 + $0x310] sm:$0xff]
  %v260 = vld [vmem:[%s2 + $0x318] sm:$0xff]
  %v261 = vld [vmem:[%s2 + $0x320] sm:$0xff]
  %v262 = vld [vmem:[%s2 + $0x328] sm:$0xff]
  %v263 = vld [vmem:[%s2 + $0x330] sm:$0xff]
  %v264 = vld [vmem:[%s2 + $0x338] sm:$0xff]
  %v265 = vld [vmem:[%s2 + $0x340] sm:$0xff]
  %v266 = vld [vmem:[%s2 + $0x348] sm:$0xff]
  %v267 = vld [vmem:[%s2 + $0x350] sm:$0xff]
  %v268 = vld [vmem:[%s2 + $0x358] sm:$0xff]
  %v269 = vld [vmem:[%s2 + $0x360] sm:$0xff]
  %v270 = vld [vmem:[%s2 + $0x368] sm:$0xff]
  %v271 = vld [vmem:[%s2 + $0x370] sm:$0xff]
  %v272 = vld [vmem:[%s2 + $0x378] sm:$0xff]
  %v273 = vld [vmem:[%s2 + $0x380] sm:$0xff]
  %v274 = vld [vmem:[%s2 + $0x388] sm:$0xff]
  %v275 = vld [vmem:[%s2 + $0x390] sm:$0xff]
  %v276 = vld [vmem:[%s2 + $0x398] sm:$0xff]
  %v277 = vld [vmem:[%s2 + $0x3a0] sm:$0xff]
  %v278 = vld [vmem:[%s2 + $0x3a8] sm:$0xff]
  %v279 = vld [vmem:[%s2 + $0x3b0] sm:$0xff]
  %v280 = vld [vmem:[%s2 + $0x3b8] sm:$0xff]
  %v281 = vld [vmem:[%s2 + $0x3c0] sm:$0xff]
  %v282 = vld [vmem:[%s2 + $0x3c8] sm:$0xff]
  %v283 = vld [vmem:[%s2 + $0x3d0] sm:$0xff]
  %v284 = vld [vmem:[%s2 + $0x3d8] sm:$0xff]
  %v285 = vld [vmem:[%s2 + $0x3e0] sm:$0xff]
  %v286 = vld [vmem:[%s2 + $0x3e8] sm:$0xff]
  %v287 = vld [vmem:[%s2 + $0x3f0] sm:$0xff]
  %v288 = vld [vmem:[%s2 + $0x3f8] sm:$0xff]
  %v289 = vld [vmem:[%s3] sm:$0xff]
  %v290 = vld [vmem:[%s3 + $0x8] sm:$0xff]
  %v291 = vld [vmem:[%s3 + $0x10] sm:$0xff]
  %v292 = vld [vmem:[%s3 + $0x18] sm:$0xff]
  %v293 = vld [vmem:[%s3 + $0x20] sm:$0xff]
  %v294 = vld [vmem:[%s3 + $0x28] sm:$0xff]
  %v295 = vld [vmem:[%s3 + $0x30] sm:$0xff]
  %v296 = vld [vmem:[%s3 + $0x38] sm:$0xff]
  %v297 = vld [vmem:[%s3 + $0x40] sm:$0xff]
  %v298 = vld [vmem:[%s3 + $0x48] sm:$0xff]
  %v299 = vld [vmem:[%s3 + $0x50] sm:$0xff]
  %v300 = vld [vmem:[%s3 + $0x58] sm:$0xff]
  %v301 = vld [vmem:[%s3 + $0x60] sm:$0xff]
  %v302 = vld [vmem:[%s3 + $0x68] sm:$0xff]
  %v303 = vld [vmem:[%s3 + $0x70] sm:$0xff]
  %v304 = vld [vmem:[%s3 + $0x78] sm:$0xff]
  %v305 = vld [vmem:[%s3 + $0x80] sm:$0xff]
  %v306 = vld [vmem:[%s3 + $0x88] sm:$0xff]
  %v307 = vld [vmem:[%s3 + $0x90] sm:$0xff]
  %v308 = vld [vmem:[%s3 + $0x98] sm:$0xff]
  %v309 = vld [vmem:[%s3 + $0xa0] sm:$0xff]
  %v310 = vld [vmem:[%s3 + $0xa8] sm:$0xff]
  %v311 = vld [vmem:[%s3 + $0xb0] sm:$0xff]
  %v312 = vld [vmem:[%s3 + $0xb8] sm:$0xff]
  %v313 = vld [vmem:[%s3 + $0xc0] sm:$0xff]
  %v314 = vld [vmem:[%s3 + $0xc8] sm:$0xff]
  %v315 = vld [vmem:[%s3 + $0xd0] sm:$0xff]
  %v316 = vld [vmem:[%s3 + $0xd8] sm:$0xff]
  %v317 = vld [vmem:[%s3 + $0xe0] sm:$0xff]
  %v318 = vld [vmem:[%s3 + $0xe8] sm:$0xff]
  %v319 = vld [vmem:[%s3 + $0xf0] sm:$0xff]
  %v320 = vld [vmem:[%s3 + $0xf8] sm:$0xff]
  %v321 = vld [vmem:[%s3 + $0x100] sm:$0xff]
  %v322 = vld [vmem:[%s3 + $0x108] sm:$0xff]
  %v323 = vld [vmem:[%s3 + $0x110] sm:$0xff]
  %v324 = vld [vmem:[%s3 + $0x118] sm:$0xff]
  %v325 = vld [vmem:[%s3 + $0x120] sm:$0xff]
  %v326 = vld [vmem:[%s3 + $0x128] sm:$0xff]
  %v327 = vld [vmem:[%s3 + $0x130] sm:$0xff]
  %v328 = vld [vmem:[%s3 + $0x138] sm:$0xff]
  %v329 = vld [vmem:[%s3 + $0x140] sm:$0xff]
  %v330 = vld [vmem:[%s3 + $0x148] sm:$0xff]
  %v331 = vld [vmem:[%s3 + $0x150] sm:$0xff]
  %v332 = vld [vmem:[%s3 + $0x158] sm:$0xff]
  %v333 = vld [vmem:[%s3 + $0x160] sm:$0xff]
  %v334 = vld [vmem:[%s3 + $0x168] sm:$0xff]
  %v335 = vld [vmem:[%s3 + $0x170] sm:$0xff]
  %v336 = vld [vmem:[%s3 + $0x178] sm:$0xff]
  %v337 = vld [vmem:[%s3 + $0x180] sm:$0xff]
  %v338 = vld [vmem:[%s3 + $0x188] sm:$0xff]
  %v339 = vld [vmem:[%s3 + $0x190] sm:$0xff]
  %v340 = vld [vmem:[%s3 + $0x198] sm:$0xff]
  %v341 = vld [vmem:[%s3 + $0x1a0] sm:$0xff]
  %v342 = vld [vmem:[%s3 + $0x1a8] sm:$0xff]
  %v343 = vld [vmem:[%s3 + $0x1b0] sm:$0xff]
  %v344 = vld [vmem:[%s3 + $0x1b8] sm:$0xff]
  %v345 = vld [vmem:[%s3 + $0x1c0] sm:$0xff]
  %v346 = vld [vmem:[%s3 + $0x1c8] sm:$0xff]
  %v347 = vld [vmem:[%s3 + $0x1d0] sm:$0xff]
  %v348 = vld [vmem:[%s3 + $0x1d8] sm:$0xff]
  %v349 = vld [vmem:[%s3 + $0x1e0] sm:$0xff]
  %v350 = vld [vmem:[%s3 + $0x1e8] sm:$0xff]
  %v351 = vld [vmem:[%s3 + $0x1f0] sm:$0xff]
  %v352 = vld [vmem:[%s3 + $0x1f8] sm:$0xff]
  %v353 = vld [vmem:[%s3 + $0x200] sm:$0xff]
  %v354 = vld [vmem:[%s3 + $0x208] sm:$0xff]
  %v355 = vld [vmem:[%s3 + $0x210] sm:$0xff]
  %v356 = vld [vmem:[%s3 + $0x218] sm:$0xff]
  %v357 = vld [vmem:[%s3 + $0x220] sm:$0xff]
  %v358 = vld [vmem:[%s3 + $0x228] sm:$0xff]
  %v359 = vld [vmem:[%s3 + $0x230] sm:$0xff]
  %v360 = vld [vmem:[%s3 + $0x238] sm:$0xff]
  %v361 = vld [vmem:[%s3 + $0x240] sm:$0xff]
  %v362 = vld [vmem:[%s3 + $0x248] sm:$0xff]
  %v363 = vld [vmem:[%s3 + $0x250] sm:$0xff]
  %v364 = vld [vmem:[%s3 + $0x258] sm:$0xff]
  %v365 = vld [vmem:[%s3 + $0x260] sm:$0xff]
  %v366 = vld [vmem:[%s3 + $0x268] sm:$0xff]
  %v367 = vld [vmem:[%s3 + $0x270] sm:$0xff]
  %v368 = vld [vmem:[%s3 + $0x278] sm:$0xff]
  %v369 = vld [vmem:[%s3 + $0x280] sm:$0xff]
  %v370 = vld [vmem:[%s3 + $0x288] sm:$0xff]
  %v371 = vld [vmem:[%s3 + $0x290] sm:$0xff]
  %v372 = vld [vmem:[%s3 + $0x298] sm:$0xff]
  %v373 = vld [vmem:[%s3 + $0x2a0] sm:$0xff]
  %v374 = vld [vmem:[%s3 + $0x2a8] sm:$0xff]
  %v375 = vld [vmem:[%s3 + $0x2b0] sm:$0xff]
  %v376 = vld [vmem:[%s3 + $0x2b8] sm:$0xff]
  %v377 = vld [vmem:[%s3 + $0x2c0] sm:$0xff]
  %v378 = vld [vmem:[%s3 + $0x2c8] sm:$0xff]
  %v379 = vld [vmem:[%s3 + $0x2d0] sm:$0xff]
  %v380 = vld [vmem:[%s3 + $0x2d8] sm:$0xff]
  %v381 = vld [vmem:[%s3 + $0x2e0] sm:$0xff]
  %v382 = vld [vmem:[%s3 + $0x2e8] sm:$0xff]
  %v383 = vld [vmem:[%s3 + $0x2f0] sm:$0xff]
  %v384 = vld [vmem:[%s3 + $0x2f8] sm:$0xff]
  %v385 = vld [vmem:[%s3 + $0x300] sm:$0xff]
  %v386 = vld [vmem:[%s3 + $0x308] sm:$0xff]
  %v387 = vld [vmem:[%s3 + $0x310] sm:$0xff]
  %v388 = vld [vmem:[%s3 + $0x318] sm:$0xff]
  %v389 = vld [vmem:[%s3 + $0x320] sm:$0xff]
  %v390 = vld [vmem:[%s3 + $0x328] sm:$0xff]
  %v391 = vld [vmem:[%s3 + $0x330] sm:$0xff]
  %v392 = vld [vmem:[%s3 + $0x338] sm:$0xff]
  %v393 = vld [vmem:[%s3 + $0x340] sm:$0xff]
  %v394 = vld [vmem:[%s3 + $0x348] sm:$0xff]
  %v395 = vld [vmem:[%s3 + $0x350] sm:$0xff]
  %v396 = vld [vmem:[%s3 + $0x358] sm:$0xff]
  %v397 = vld [vmem:[%s3 + $0x360] sm:$0xff]
  %v398 = vld [vmem:[%s3 + $0x368] sm:$0xff]
  %v399 = vld [vmem:[%s3 + $0x370] sm:$0xff]
  %v400 = vld [vmem:[%s3 + $0x378] sm:$0xff]
  %v401 = vld [vmem:[%s3 + $0x380] sm:$0xff]
  %v402 = vld [vmem:[%s3 + $0x388] sm:$0xff]
  %v403 = vld [vmem:[%s3 + $0x390] sm:$0xff]
  %v404 = vld [vmem:[%s3 + $0x398] sm:$0xff]
  %v405 = vld [vmem:[%s3 + $0x3a0] sm:$0xff]
  %v406 = vld [vmem:[%s3 + $0x3a8] sm:$0xff]
  %v407 = vld [vmem:[%s3 + $0x3b0] sm:$0xff]
  %v408 = vld [vmem:[%s3 + $0x3b8] sm:$0xff]
  %v409 = vld [vmem:[%s3 + $0x3c0] sm:$0xff]
  %v410 = vld [vmem:[%s3 + $0x3c8] sm:$0xff]
  %v411 = vld [vmem:[%s3 + $0x3d0] sm:$0xff]
  %v412 = vld [vmem:[%s3 + $0x3d8] sm:$0xff]
  %v413 = vld [vmem:[%s3 + $0x3e0] sm:$0xff]
  %v414 = vld [vmem:[%s3 + $0x3e8] sm:$0xff]
  %v415 = vld [vmem:[%s3 + $0x3f0] sm:$0xff]
  %v416 = vld [vmem:[%s3 + $0x3f8] sm:$0xff]
  %v417 = vld [vmem:[%s4] sm:$0xff]
  %v418 = vld [vmem:[%s0] sm:$0xff]
  %v547 = vunpack.c.l.b16 %v33
  %v548 = vunpack.c.h.b16 %v33
  %v549 = vunpack.c.l.b16 %v34
  %v550 = vunpack.c.h.b16 %v34
  %v551 = vunpack.c.l.b16 %v35
  %v552 = vunpack.c.h.b16 %v35
  %v553 = vunpack.c.l.b16 %v36
  %v554 = vunpack.c.h.b16 %v36
  %v555 = vunpack.c.l.b16 %v37
  %v556 = vunpack.c.h.b16 %v37
  %v557 = vunpack.c.l.b16 %v38
  %v558 = vunpack.c.h.b16 %v38
  %v559 = vunpack.c.l.b16 %v39
  %v560 = vunpack.c.h.b16 %v39
  %v561 = vunpack.c.l.b16 %v40
  %v562 = vunpack.c.h.b16 %v40
  %v563 = vunpack.c.l.b16 %v41
  %v564 = vunpack.c.h.b16 %v41
  %v565 = vunpack.c.l.b16 %v42
  %v566 = vunpack.c.h.b16 %v42
  %v567 = vunpack.c.l.b16 %v43
  %v568 = vunpack.c.h.b16 %v43
  %v569 = vunpack.c.l.b16 %v44
  %v570 = vunpack.c.h.b16 %v44
  %v571 = vunpack.c.l.b16 %v45
  %v572 = vunpack.c.h.b16 %v45
  %v573 = vunpack.c.l.b16 %v46
  %v574 = vunpack.c.h.b16 %v46
  %v575 = vunpack.c.l.b16 %v47
  %v576 = vunpack.c.h.b16 %v47
  %v577 = vunpack.c.l.b16 %v48
  %v578 = vunpack.c.h.b16 %v48
  %v579 = vunpack.c.l.b16 %v49
  %v580 = vunpack.c.h.b16 %v49
  %v581 = vunpack.c.l.b16 %v50
  %v582 = vunpack.c.h.b16 %v50
  %v583 = vunpack.c.l.b16 %v51
  %v584 = vunpack.c.h.b16 %v51
  %v585 = vunpack.c.l.b16 %v52
  %v586 = vunpack.c.h.b16 %v52
  %v587 = vunpack.c.l.b16 %v53
  %v588 = vunpack.c.h.b16 %v53
  %v589 = vunpack.c.l.b16 %v54
  %v590 = vunpack.c.h.b16 %v54
  %v591 = vunpack.c.l.b16 %v55
  %v592 = vunpack.c.h.b16 %v55
  %v593 = vunpack.c.l.b16 %v56
  %v594 = vunpack.c.h.b16 %v56
  %v595 = vunpack.c.l.b16 %v57
  %v596 = vunpack.c.h.b16 %v57
  %v597 = vunpack.c.l.b16 %v58
  %v598 = vunpack.c.h.b16 %v58
  %v599 = vunpack.c.l.b16 %v59
  %v600 = vunpack.c.h.b16 %v59
  %v601 = vunpack.c.l.b16 %v60
  %v602 = vunpack.c.h.b16 %v60
  %v603 = vunpack.c.l.b16 %v61
  %v604 = vunpack.c.h.b16 %v61
  %v605 = vunpack.c.l.b16 %v62
  %v606 = vunpack.c.h.b16 %v62
  %v607 = vunpack.c.l.b16 %v63
  %v608 = vunpack.c.h.b16 %v63
  %v609 = vunpack.c.l.b16 %v64
  %v610 = vunpack.c.h.b16 %v64
  %v611 = vunpack.c.l.b16 %v65
  %v612 = vunpack.c.h.b16 %v65
  %v613 = vunpack.c.l.b16 %v66
  %v614 = vunpack.c.h.b16 %v66
  %v615 = vunpack.c.l.b16 %v67
  %v616 = vunpack.c.h.b16 %v67
  %v617 = vunpack.c.l.b16 %v68
  %v618 = vunpack.c.h.b16 %v68
  %v619 = vunpack.c.l.b16 %v69
  %v620 = vunpack.c.h.b16 %v69
  %v621 = vunpack.c.l.b16 %v70
  %v622 = vunpack.c.h.b16 %v70
  %v623 = vunpack.c.l.b16 %v71
  %v624 = vunpack.c.h.b16 %v71
  %v625 = vunpack.c.l.b16 %v72
  %v626 = vunpack.c.h.b16 %v72
  %v627 = vunpack.c.l.b16 %v73
  %v628 = vunpack.c.h.b16 %v73
  %v629 = vunpack.c.l.b16 %v74
  %v630 = vunpack.c.h.b16 %v74
  %v631 = vunpack.c.l.b16 %v75
  %v632 = vunpack.c.h.b16 %v75
  %v633 = vunpack.c.l.b16 %v76
  %v634 = vunpack.c.h.b16 %v76
  %v635 = vunpack.c.l.b16 %v77
  %v636 = vunpack.c.h.b16 %v77
  %v637 = vunpack.c.l.b16 %v78
  %v638 = vunpack.c.h.b16 %v78
  %v639 = vunpack.c.l.b16 %v79
  %v640 = vunpack.c.h.b16 %v79
  %v641 = vunpack.c.l.b16 %v80
  %v642 = vunpack.c.h.b16 %v80
  %v643 = vunpack.c.l.b16 %v81
  %v644 = vunpack.c.h.b16 %v81
  %v645 = vunpack.c.l.b16 %v82
  %v646 = vunpack.c.h.b16 %v82
  %v647 = vunpack.c.l.b16 %v83
  %v648 = vunpack.c.h.b16 %v83
  %v649 = vunpack.c.l.b16 %v84
  %v650 = vunpack.c.h.b16 %v84
  %v651 = vunpack.c.l.b16 %v85
  %v652 = vunpack.c.h.b16 %v85
  %v653 = vunpack.c.l.b16 %v86
  %v654 = vunpack.c.h.b16 %v86
  %v655 = vunpack.c.l.b16 %v87
  %v656 = vunpack.c.h.b16 %v87
  %v657 = vunpack.c.l.b16 %v88
  %v658 = vunpack.c.h.b16 %v88
  %v659 = vunpack.c.l.b16 %v89
  %v660 = vunpack.c.h.b16 %v89
  %v661 = vunpack.c.l.b16 %v90
  %v662 = vunpack.c.h.b16 %v90
  %v663 = vunpack.c.l.b16 %v91
  %v664 = vunpack.c.h.b16 %v91
  %v665 = vunpack.c.l.b16 %v92
  %v666 = vunpack.c.h.b16 %v92
  %v667 = vunpack.c.l.b16 %v93
  %v668 = vunpack.c.h.b16 %v93
  %v669 = vunpack.c.l.b16 %v94
  %v670 = vunpack.c.h.b16 %v94
  %v671 = vunpack.c.l.b16 %v95
  %v672 = vunpack.c.h.b16 %v95
  %v673 = vunpack.c.l.b16 %v96
  %v674 = vunpack.c.h.b16 %v96
  %v675 = vunpack.c.l.b16 %v97
  %v676 = vunpack.c.h.b16 %v97
  %v677 = vunpack.c.l.b16 %v98
  %v678 = vunpack.c.h.b16 %v98
  %v679 = vunpack.c.l.b16 %v99
  %v680 = vunpack.c.h.b16 %v99
  %v681 = vunpack.c.l.b16 %v100
  %v682 = vunpack.c.h.b16 %v100
  %v683 = vunpack.c.l.b16 %v101
  %v684 = vunpack.c.h.b16 %v101
  %v685 = vunpack.c.l.b16 %v102
  %v686 = vunpack.c.h.b16 %v102
  %v687 = vunpack.c.l.b16 %v103
  %v688 = vunpack.c.h.b16 %v103
  %v689 = vunpack.c.l.b16 %v104
  %v690 = vunpack.c.h.b16 %v104
  %v691 = vunpack.c.l.b16 %v105
  %v692 = vunpack.c.h.b16 %v105
  %v693 = vunpack.c.l.b16 %v106
  %v694 = vunpack.c.h.b16 %v106
  %v695 = vunpack.c.l.b16 %v107
  %v696 = vunpack.c.h.b16 %v107
  %v697 = vunpack.c.l.b16 %v108
  %v698 = vunpack.c.h.b16 %v108
  %v699 = vunpack.c.l.b16 %v109
  %v700 = vunpack.c.h.b16 %v109
  %v701 = vunpack.c.l.b16 %v110
  %v702 = vunpack.c.h.b16 %v110
  %v703 = vunpack.c.l.b16 %v111
  %v704 = vunpack.c.h.b16 %v111
  %v705 = vunpack.c.l.b16 %v112
  %v706 = vunpack.c.h.b16 %v112
  %v707 = vunpack.c.l.b16 %v113
  %v708 = vunpack.c.h.b16 %v113
  %v709 = vunpack.c.l.b16 %v114
  %v710 = vunpack.c.h.b16 %v114
  %v711 = vunpack.c.l.b16 %v115
  %v712 = vunpack.c.h.b16 %v115
  %v713 = vunpack.c.l.b16 %v116
  %v714 = vunpack.c.h.b16 %v116
  %v715 = vunpack.c.l.b16 %v117
  %v716 = vunpack.c.h.b16 %v117
  %v717 = vunpack.c.l.b16 %v118
  %v718 = vunpack.c.h.b16 %v118
  %v719 = vunpack.c.l.b16 %v119
  %v720 = vunpack.c.h.b16 %v119
  %v721 = vunpack.c.l.b16 %v120
  %v722 = vunpack.c.h.b16 %v120
  %v723 = vunpack.c.l.b16 %v121
  %v724 = vunpack.c.h.b16 %v121
  %v725 = vunpack.c.l.b16 %v122
  %v726 = vunpack.c.h.b16 %v122
  %v727 = vunpack.c.l.b16 %v123
  %v728 = vunpack.c.h.b16 %v123
  %v729 = vunpack.c.l.b16 %v124
  %v730 = vunpack.c.h.b16 %v124
  %v731 = vunpack.c.l.b16 %v125
  %v732 = vunpack.c.h.b16 %v125
  %v733 = vunpack.c.l.b16 %v126
  %v734 = vunpack.c.h.b16 %v126
  %v735 = vunpack.c.l.b16 %v127
  %v736 = vunpack.c.h.b16 %v127
  %v737 = vunpack.c.l.b16 %v128
  %v738 = vunpack.c.h.b16 %v128
  %v739 = vunpack.c.l.b16 %v129
  %v740 = vunpack.c.h.b16 %v129
  %v741 = vunpack.c.l.b16 %v130
  %v742 = vunpack.c.h.b16 %v130
  %v743 = vunpack.c.l.b16 %v131
  %v744 = vunpack.c.h.b16 %v131
  %v745 = vunpack.c.l.b16 %v132
  %v746 = vunpack.c.h.b16 %v132
  %v747 = vunpack.c.l.b16 %v133
  %v748 = vunpack.c.h.b16 %v133
  %v749 = vunpack.c.l.b16 %v134
  %v750 = vunpack.c.h.b16 %v134
  %v751 = vunpack.c.l.b16 %v135
  %v752 = vunpack.c.h.b16 %v135
  %v753 = vunpack.c.l.b16 %v136
  %v754 = vunpack.c.h.b16 %v136
  %v755 = vunpack.c.l.b16 %v137
  %v756 = vunpack.c.h.b16 %v137
  %v757 = vunpack.c.l.b16 %v138
  %v758 = vunpack.c.h.b16 %v138
  %v759 = vunpack.c.l.b16 %v139
  %v760 = vunpack.c.h.b16 %v139
  %v761 = vunpack.c.l.b16 %v140
  %v762 = vunpack.c.h.b16 %v140
  %v763 = vunpack.c.l.b16 %v141
  %v764 = vunpack.c.h.b16 %v141
  %v765 = vunpack.c.l.b16 %v142
  %v766 = vunpack.c.h.b16 %v142
  %v767 = vunpack.c.l.b16 %v143
  %v768 = vunpack.c.h.b16 %v143
  %v769 = vunpack.c.l.b16 %v144
  %v770 = vunpack.c.h.b16 %v144
  %v771 = vunpack.c.l.b16 %v145
  %v772 = vunpack.c.h.b16 %v145
  %v773 = vunpack.c.l.b16 %v146
  %v774 = vunpack.c.h.b16 %v146
  %v775 = vunpack.c.l.b16 %v147
  %v776 = vunpack.c.h.b16 %v147
  %v777 = vunpack.c.l.b16 %v148
  %v778 = vunpack.c.h.b16 %v148
  %v779 = vunpack.c.l.b16 %v149
  %v780 = vunpack.c.h.b16 %v149
  %v781 = vunpack.c.l.b16 %v150
  %v782 = vunpack.c.h.b16 %v150
  %v783 = vunpack.c.l.b16 %v151
  %v784 = vunpack.c.h.b16 %v151
  %v785 = vunpack.c.l.b16 %v152
  %v786 = vunpack.c.h.b16 %v152
  %v787 = vunpack.c.l.b16 %v153
  %v788 = vunpack.c.h.b16 %v153
  %v789 = vunpack.c.l.b16 %v154
  %v790 = vunpack.c.h.b16 %v154
  %v791 = vunpack.c.l.b16 %v155
  %v792 = vunpack.c.h.b16 %v155
  %v793 = vunpack.c.l.b16 %v156
  %v794 = vunpack.c.h.b16 %v156
  %v795 = vunpack.c.l.b16 %v157
  %v796 = vunpack.c.h.b16 %v157
  %v797 = vunpack.c.l.b16 %v158
  %v798 = vunpack.c.h.b16 %v158
  %v799 = vunpack.c.l.b16 %v159
  %v800 = vunpack.c.h.b16 %v159
  %v801 = vunpack.c.l.b16 %v160
  %v802 = vunpack.c.h.b16 %v160
  %v803 = vpack.c.b16 %v555, %v547
  %v804 = vpack.c.b16 %v556, %v548
  %v805 = vpack.c.b16 %v557, %v549
  %v806 = vpack.c.b16 %v558, %v550
  %v807 = vpack.c.b16 %v559, %v551
  %v808 = vpack.c.b16 %v560, %v552
  %v809 = vpack.c.b16 %v561, %v553
  %v810 = vpack.c.b16 %v562, %v554
  %v811 = vpack.c.b16 %v571, %v563
  %v812 = vpack.c.b16 %v572, %v564
  %v813 = vpack.c.b16 %v573, %v565
  %v814 = vpack.c.b16 %v574, %v566
  %v815 = vpack.c.b16 %v575, %v567
  %v816 = vpack.c.b16 %v576, %v568
  %v817 = vpack.c.b16 %v577, %v569
  %v818 = vpack.c.b16 %v578, %v570
  %v819 = vpack.c.b16 %v587, %v579
  %v820 = vpack.c.b16 %v588, %v580
  %v821 = vpack.c.b16 %v589, %v581
  %v822 = vpack.c.b16 %v590, %v582
  %v823 = vpack.c.b16 %v591, %v583
  %v824 = vpack.c.b16 %v592, %v584
  %v825 = vpack.c.b16 %v593, %v585
  %v826 = vpack.c.b16 %v594, %v586
  %v827 = vpack.c.b16 %v603, %v595
  %v828 = vpack.c.b16 %v604, %v596
  %v829 = vpack.c.b16 %v605, %v597
  %v830 = vpack.c.b16 %v606, %v598
  %v831 = vpack.c.b16 %v607, %v599
  %v832 = vpack.c.b16 %v608, %v600
  %v833 = vpack.c.b16 %v609, %v601
  %v834 = vpack.c.b16 %v610, %v602
  %v835 = vpack.c.b16 %v619, %v611
  %v836 = vpack.c.b16 %v620, %v612
  %v837 = vpack.c.b16 %v621, %v613
  %v838 = vpack.c.b16 %v622, %v614
  %v839 = vpack.c.b16 %v623, %v615
  %v840 = vpack.c.b16 %v624, %v616
  %v841 = vpack.c.b16 %v625, %v617
  %v842 = vpack.c.b16 %v626, %v618
  %v843 = vpack.c.b16 %v635, %v627
  %v844 = vpack.c.b16 %v636, %v628
  %v845 = vpack.c.b16 %v637, %v629
  %v846 = vpack.c.b16 %v638, %v630
  %v847 = vpack.c.b16 %v639, %v631
  %v848 = vpack.c.b16 %v640, %v632
  %v849 = vpack.c.b16 %v641, %v633
  %v850 = vpack.c.b16 %v642, %v634
  %v851 = vpack.c.b16 %v651, %v643
  %v852 = vpack.c.b16 %v652, %v644
  %v853 = vpack.c.b16 %v653, %v645
  %v854 = vpack.c.b16 %v654, %v646
  %v855 = vpack.c.b16 %v655, %v647
  %v856 = vpack.c.b16 %v656, %v648
  %v857 = vpack.c.b16 %v657, %v649
  %v858 = vpack.c.b16 %v658, %v650
  %v859 = vpack.c.b16 %v667, %v659
  %v860 = vpack.c.b16 %v668, %v660
  %v861 = vpack.c.b16 %v669, %v661
  %v862 = vpack.c.b16 %v670, %v662
  %v863 = vpack.c.b16 %v671, %v663
  %v864 = vpack.c.b16 %v672, %v664
  %v865 = vpack.c.b16 %v673, %v665
  %v866 = vpack.c.b16 %v674, %v666
  %v867 = vpack.c.b16 %v683, %v675
  %v868 = vpack.c.b16 %v684, %v676
  %v869 = vpack.c.b16 %v685, %v677
  %v870 = vpack.c.b16 %v686, %v678
  %v871 = vpack.c.b16 %v687, %v679
  %v872 = vpack.c.b16 %v688, %v680
  %v873 = vpack.c.b16 %v689, %v681
  %v874 = vpack.c.b16 %v690, %v682
  %v875 = vpack.c.b16 %v699, %v691
  %v876 = vpack.c.b16 %v700, %v692
  %v877 = vpack.c.b16 %v701, %v693
  %v878 = vpack.c.b16 %v702, %v694
  %v879 = vpack.c.b16 %v703, %v695
  %v880 = vpack.c.b16 %v704, %v696
  %v881 = vpack.c.b16 %v705, %v697
  %v882 = vpack.c.b16 %v706, %v698
  %v883 = vpack.c.b16 %v715, %v707
  %v884 = vpack.c.b16 %v716, %v708
  %v885 = vpack.c.b16 %v717, %v709
  %v886 = vpack.c.b16 %v718, %v710
  %v887 = vpack.c.b16 %v719, %v711
  %v888 = vpack.c.b16 %v720, %v712
  %v889 = vpack.c.b16 %v721, %v713
  %v890 = vpack.c.b16 %v722, %v714
  %v891 = vpack.c.b16 %v731, %v723
  %v892 = vpack.c.b16 %v732, %v724
  %v893 = vpack.c.b16 %v733, %v725
  %v894 = vpack.c.b16 %v734, %v726
  %v895 = vpack.c.b16 %v735, %v727
  %v896 = vpack.c.b16 %v736, %v728
  %v897 = vpack.c.b16 %v737, %v729
  %v898 = vpack.c.b16 %v738, %v730
  %v899 = vpack.c.b16 %v747, %v739
  %v900 = vpack.c.b16 %v748, %v740
  %v901 = vpack.c.b16 %v749, %v741
  %v902 = vpack.c.b16 %v750, %v742
  %v903 = vpack.c.b16 %v751, %v743
  %v904 = vpack.c.b16 %v752, %v744
  %v905 = vpack.c.b16 %v753, %v745
  %v906 = vpack.c.b16 %v754, %v746
  %v907 = vpack.c.b16 %v763, %v755
  %v908 = vpack.c.b16 %v764, %v756
  %v909 = vpack.c.b16 %v765, %v757
  %v910 = vpack.c.b16 %v766, %v758
  %v911 = vpack.c.b16 %v767, %v759
  %v912 = vpack.c.b16 %v768, %v760
  %v913 = vpack.c.b16 %v769, %v761
  %v914 = vpack.c.b16 %v770, %v762
  %v915 = vpack.c.b16 %v779, %v771
  %v916 = vpack.c.b16 %v780, %v772
  %v917 = vpack.c.b16 %v781, %v773
  %v918 = vpack.c.b16 %v782, %v774
  %v919 = vpack.c.b16 %v783, %v775
  %v920 = vpack.c.b16 %v784, %v776
  %v921 = vpack.c.b16 %v785, %v777
  %v922 = vpack.c.b16 %v786, %v778
  %v923 = vpack.c.b16 %v795, %v787
  %v924 = vpack.c.b16 %v796, %v788
  %v925 = vpack.c.b16 %v797, %v789
  %v926 = vpack.c.b16 %v798, %v790
  %v927 = vpack.c.b16 %v799, %v791
  %v928 = vpack.c.b16 %v800, %v792
  %v929 = vpack.c.b16 %v801, %v793
  %v930 = vpack.c.b16 %v802, %v794
  %1059 = vmatprep.subr.bf16.mxu0 %v804
  %1060 = vmatpush1.bf16.msra.mxu0 %v803
  %1061 = vmatprep.subr.bf16.mxu0 %v812
  %1062 = vmatpush1.bf16.msra.mxu0 %v811
  %1063 = vmatprep.subr.bf16.mxu0 %v820
  %1064 = vmatpush1.bf16.msra.mxu0 %v819
  %1065 = vmatprep.subr.bf16.mxu0 %v828
  %1066 = vmatpush1.bf16.msra.mxu0 %v827
  %1067 = vmatprep.subr.bf16.mxu0 %v836
  %1068 = vmatpush1.bf16.msra.mxu0 %v835
  %1069 = vmatprep.subr.bf16.mxu0 %v844
  %1070 = vmatpush1.bf16.msra.mxu0 %v843
  %1071 = vmatprep.subr.bf16.mxu0 %v852
  %1072 = vmatpush1.bf16.msra.mxu0 %v851
  %1073 = vmatprep.subr.bf16.mxu0 %v860
  %1074 = vmatpush1.bf16.msra.mxu0 %v859
  %1075 = vmatprep.subr.bf16.mxu0 %v868
  %1076 = vmatpush1.bf16.msra.mxu0 %v867
  %1077 = vmatprep.subr.bf16.mxu0 %v876
  %1078 = vmatpush1.bf16.msra.mxu0 %v875
  %1079 = vmatprep.subr.bf16.mxu0 %v884
  %1080 = vmatpush1.bf16.msra.mxu0 %v883
  %1081 = vmatprep.subr.bf16.mxu0 %v892
  %1082 = vmatpush1.bf16.msra.mxu0 %v891
  %1083 = vmatprep.subr.bf16.mxu0 %v900
  %1084 = vmatpush1.bf16.msra.mxu0 %v899
  %1085 = vmatprep.subr.bf16.mxu0 %v908
  %1086 = vmatpush1.bf16.msra.mxu0 %v907
  %1087 = vmatprep.subr.bf16.mxu0 %v916
  %1088 = vmatpush1.bf16.msra.mxu0 %v915
  %1089 = vmatprep.subr.bf16.mxu0 %v924
  %1090 = vmatpush1.bf16.msra.mxu0 %v923
  %1091 = vmatprep.mubr.bf16.mxu0 0
  %1092 = vmatmul.mubr.bf16.gmra.mrb[0].mxu0 0
  %v1093 = vpop.f32.mrb[0].mxu0
  %v1094 = vadd.f32 0.0, %v1093
  %v1095 = vpop.f32.mrb[0].mxu0
  %v1096 = vadd.f32 0.0, %v1095
  %v1097 = vpop.f32.mrb[0].mxu0
  %v1098 = vpop.f32.mrb[0].mxu0
  %1099 = vdwg.mxu0
  %1100 = vmatprep.subr.bf16.mxu0 %v806
  %1101 = vmatpush1.bf16.msra.mxu0 %v805
  %1102 = vmatprep.subr.bf16.mxu0 %v814
  %1103 = vmatpush1.bf16.msra.mxu0 %v813
  %1104 = vmatprep.subr.bf16.mxu0 %v822
  %1105 = vmatpush1.bf16.msra.mxu0 %v821
  %1106 = vmatprep.subr.bf16.mxu0 %v830
  %1107 = vmatpush1.bf16.msra.mxu0 %v829
  %1108 = vmatprep.subr.bf16.mxu0 %v838
  %1109 = vmatpush1.bf16.msra.mxu0 %v837
  %1110 = vmatprep.subr.bf16.mxu0 %v846
  %1111 = vmatpush1.bf16.msra.mxu0 %v845
  %1112 = vmatprep.subr.bf16.mxu0 %v854
  %1113 = vmatpush1.bf16.msra.mxu0 %v853
  %1114 = vmatprep.subr.bf16.mxu0 %v862
  %1115 = vmatpush1.bf16.msra.mxu0 %v861
  %1116 = vmatprep.subr.bf16.mxu0 %v870
  %1117 = vmatpush1.bf16.msra.mxu0 %v869
  %1118 = vmatprep.subr.bf16.mxu0 %v878
  %1119 = vmatpush1.bf16.msra.mxu0 %v877
  %1120 = vmatprep.subr.bf16.mxu0 %v886
  %1121 = vmatpush1.bf16.msra.mxu0 %v885
  %1122 = vmatprep.subr.bf16.mxu0 %v894
  %1123 = vmatpush1.bf16.msra.mxu0 %v893
  %1124 = vmatprep.subr.bf16.mxu0 %v902
  %1125 = vmatpush1.bf16.msra.mxu0 %v901
  %1126 = vmatprep.subr.bf16.mxu0 %v910
  %1127 = vmatpush1.bf16.msra.mxu0 %v909
  %1128 = vmatprep.subr.bf16.mxu0 %v918
  %1129 = vmatpush1.bf16.msra.mxu0 %v917
  %1130 = vmatprep.subr.bf16.mxu0 %v926
  %1131 = vmatpush1.bf16.msra.mxu0 %v925
  %1132 = vmatprep.mubr.bf16.mxu0 0
  %1133 = vmatmul.mubr.bf16.gmra.mrb[0].mxu0 0
  %v1134 = vpop.f32.mrb[0].mxu0
  %v1135 = vadd.f32 0.0, %v1134
  %v1136 = vpop.f32.mrb[0].mxu0
  %v1137 = vadd.f32 0.0, %v1136
  %v1138 = vpop.f32.mrb[0].mxu0
  %v1139 = vpop.f32.mrb[0].mxu0
  %1140 = vdwg.mxu0
  %1141 = vmatprep.subr.bf16.mxu0 %v808
  %1142 = vmatpush1.bf16.msra.mxu0 %v807
  %1143 = vmatprep.subr.bf16.mxu0 %v816
  %1144 = vmatpush1.bf16.msra.mxu0 %v815
  %1145 = vmatprep.subr.bf16.mxu0 %v824
  %1146 = vmatpush1.bf16.msra.mxu0 %v823
  %1147 = vmatprep.subr.bf16.mxu0 %v832
  %1148 = vmatpush1.bf16.msra.mxu0 %v831
  %1149 = vmatprep.subr.bf16.mxu0 %v840
  %1150 = vmatpush1.bf16.msra.mxu0 %v839
  %1151 = vmatprep.subr.bf16.mxu0 %v848
  %1152 = vmatpush1.bf16.msra.mxu0 %v847
  %1153 = vmatprep.subr.bf16.mxu0 %v856
  %1154 = vmatpush1.bf16.msra.mxu0 %v855
  %1155 = vmatprep.subr.bf16.mxu0 %v864
  %1156 = vmatpush1.bf16.msra.mxu0 %v863
  %1157 = vmatprep.subr.bf16.mxu0 %v872
  %1158 = vmatpush1.bf16.msra.mxu0 %v871
  %1159 = vmatprep.subr.bf16.mxu0 %v880
  %1160 = vmatpush1.bf16.msra.mxu0 %v879
  %1161 = vmatprep.subr.bf16.mxu0 %v888
  %1162 = vmatpush1.bf16.msra.mxu0 %v887
  %1163 = vmatprep.subr.bf16.mxu0 %v896
  %1164 = vmatpush1.bf16.msra.mxu0 %v895
  %1165 = vmatprep.subr.bf16.mxu0 %v904
  %1166 = vmatpush1.bf16.msra.mxu0 %v903
  %1167 = vmatprep.subr.bf16.mxu0 %v912
  %1168 = vmatpush1.bf16.msra.mxu0 %v911
  %1169 = vmatprep.subr.bf16.mxu0 %v920
  %1170 = vmatpush1.bf16.msra.mxu0 %v919
  %1171 = vmatprep.subr.bf16.mxu0 %v928
  %1172 = vmatpush1.bf16.msra.mxu0 %v927
  %1173 = vmatprep.mubr.bf16.mxu0 0
  %1174 = vmatmul.mubr.bf16.gmra.mrb[0].mxu0 0
  %v1175 = vpop.f32.mrb[0].mxu0
  %v1176 = vadd.f32 0.0, %v1175
  %v1177 = vpop.f32.mrb[0].mxu0
  %v1178 = vadd.f32 0.0, %v1177
  %v1179 = vpop.f32.mrb[0].mxu0
  %v1180 = vpop.f32.mrb[0].mxu0
  %1181 = vdwg.mxu0
  %1182 = vmatprep.subr.bf16.mxu0 %v810
  %1183 = vmatpush1.bf16.msra.mxu0 %v809
  %1184 = vmatprep.subr.bf16.mxu0 %v818
  %1185 = vmatpush1.bf16.msra.mxu0 %v817
  %1186 = vmatprep.subr.bf16.mxu0 %v826
  %1187 = vmatpush1.bf16.msra.mxu0 %v825
  %1188 = vmatprep.subr.bf16.mxu0 %v834
  %1189 = vmatpush1.bf16.msra.mxu0 %v833
  %1190 = vmatprep.subr.bf16.mxu0 %v842
  %1191 = vmatpush1.bf16.msra.mxu0 %v841
  %1192 = vmatprep.subr.bf16.mxu0 %v850
  %1193 = vmatpush1.bf16.msra.mxu0 %v849
  %1194 = vmatprep.subr.bf16.mxu0 %v858
  %1195 = vmatpush1.bf16.msra.mxu0 %v857
  %1196 = vmatprep.subr.bf16.mxu0 %v866
  %1197 = vmatpush1.bf16.msra.mxu0 %v865
  %1198 = vmatprep.subr.bf16.mxu0 %v874
  %1199 = vmatpush1.bf16.msra.mxu0 %v873
  %1200 = vmatprep.subr.bf16.mxu0 %v882
  %1201 = vmatpush1.bf16.msra.mxu0 %v881
  %1202 = vmatprep.subr.bf16.mxu0 %v890
  %1203 = vmatpush1.bf16.msra.mxu0 %v889
  %1204 = vmatprep.subr.bf16.mxu0 %v898
  %1205 = vmatpush1.bf16.msra.mxu0 %v897
  %1206 = vmatprep.subr.bf16.mxu0 %v906
  %1207 = vmatpush1.bf16.msra.mxu0 %v905
  %1208 = vmatprep.subr.bf16.mxu0 %v914
  %1209 = vmatpush1.bf16.msra.mxu0 %v913
  %1210 = vmatprep.subr.bf16.mxu0 %v922
  %1211 = vmatpush1.bf16.msra.mxu0 %v921
  %1212 = vmatprep.subr.bf16.mxu0 %v930
  %1213 = vmatpush1.bf16.msra.mxu0 %v929
  %1214 = vmatprep.mubr.bf16.mxu0 0
  %1215 = vmatmul.mubr.bf16.gmra.mrb[0].mxu0 0
  %v1216 = vpop.f32.mrb[0].mxu0
  %v1217 = vadd.f32 0.0, %v1216
  %v1218 = vpop.f32.mrb[0].mxu0
  %v1219 = vadd.f32 0.0, %v1218
  %v1220 = vpop.f32.mrb[0].mxu0
  %v1221 = vpop.f32.mrb[0].mxu0
  %1222 = vdwg.mxu0
  %v1231 = vcombine.low %v1094, %v1096
  %v1232 = vcombine.low %v1135, %v1137
  %v1233 = vcombine.low %v1176, %v1178
  %v1234 = vcombine.low %v1217, %v1219
  %v1236 = vunpack.c.l.s4 1966171168
  %v1237 = vunpack.c.0.s8 %v1236
  %v1238 = vlaneseq
  %v1239 = vshrl.u32 %v1238, 7
  %v1240 = vsub.s32 %v1237, %v1239
  %v1241 = vrot.slane %v1231, %v1240
  %v1243 = vunpack.c.l.s4 1966171168
  %v1244 = vunpack.c.0.s8 %v1243
  %v1245 = vlaneseq
  %v1246 = vshrl.u32 %v1245, 7
  %v1247 = vsub.s32 %v1244, %v1246
  %v1248 = vrot.slane %v1232, %v1247
  %v1250 = vunpack.c.l.s4 1966171168
  %v1251 = vunpack.c.0.s8 %v1250
  %v1252 = vlaneseq
  %v1253 = vshrl.u32 %v1252, 7
  %v1254 = vsub.s32 %v1251, %v1253
  %v1255 = vrot.slane %v1233, %v1254
  %v1257 = vunpack.c.l.s4 1966171168
  %v1258 = vunpack.c.0.s8 %v1257
  %v1259 = vlaneseq
  %v1260 = vshrl.u32 %v1259, 7
  %v1261 = vsub.s32 %v1258, %v1260
  %v1262 = vrot.slane %v1234, %v1261
  %v1263 = vcombine.low %v1241, %v1248
  %v1264 = vcombine.low %v1255, %v1262
  %v1266 = vunpack.c.l.s4 1966171168
  %v1267 = vunpack.c.0.s8 %v1266
  %v1268 = vlaneseq
  %v1269 = vshrl.u32 %v1268, 7
  %v1270 = vsub.s32 %v1267, %v1269
  %v1271 = vrot.slane %v1263, %v1270
  %v1273 = vunpack.c.l.s4 1966171168
  %v1274 = vunpack.c.0.s8 %v1273
  %v1275 = vlaneseq
  %v1276 = vshrl.u32 %v1275, 7
  %v1277 = vsub.s32 %v1274, %v1276
  %v1278 = vrot.slane %v1264, %v1277
  %v1279 = vcombine.low %v1271, %v1278
  %v1281 = vadd.f32 %v418, %v1279
  %v1282 = vxor.u32 %v1281, 2147483648
  %v1283 = vmul.f32 %v1282, 1.442695
  %v1284 = vpow.pop %v1283
  %v1285 = vadd.f32 %v1284, 1.0
  %v1286 = vrcp.pop %v1285
  %v1287 = vmul.f32 1.0, %v1286
  %v1289 = vrot.slane %v1281, 2
  %v1291 = vxor.u32 %v1289, 2147483648
  %v1292 = vmul.f32 %v1291, 1.442695
  %v1293 = vpow.pop %v1292
  %v1294 = vadd.f32 %v1293, 1.0
  %v1295 = vrcp.pop %v1294
  %v1296 = vmul.f32 1.0, %v1295
  %v1297 = vrot.slane %v1281, 4
  %v1299 = vxor.u32 %v1297, 2147483648
  %v1300 = vmul.f32 %v1299, 1.442695
  %v1301 = vpow.pop %v1300
  %v1302 = vadd.f32 %v1301, 1.0
  %v1303 = vrcp.pop %v1302
  %v1304 = vmul.f32 1.0, %v1303
  %v1305 = vrot.slane %v1281, 6
  %v1307 = vtanh.pop %v1305
  %v1308 = vmul.f32 %v1296, 0.0
  %v1309 = vmul.f32 %v1287, %v1307
  %v1310 = vadd.f32 %v1308, %v1309
  %v1311 = vtanh.pop %v1310
  %v1312 = vmul.f32 %v1304, %v1311
  %v1314 = vlaneseq
  %v1315 = vshrl.u32 %v1314, 7
  %v1316 = vsub.s32 0, %v1315
  %v1317 = vrot.slane %v1312, %v1316
  %v1318 = vlaneseq
  %v1319 = vshrl.u32 %v1318, 7
  %v1320 = vsub.s32 1, %v1319
  %v1321 = vrot.slane %v1312, %v1320
  %v1324 = vpack.c.bf16 %v1317, %v1317
  %v1325 = vpack.c.bf16 %v1321, %v1321
  %v1454 = vunpack.c.l.b16 %v161
  %v1455 = vunpack.c.h.b16 %v161
  %v1456 = vunpack.c.l.b16 %v162
  %v1457 = vunpack.c.h.b16 %v162
  %v1458 = vunpack.c.l.b16 %v163
  %v1459 = vunpack.c.h.b16 %v163
  %v1460 = vunpack.c.l.b16 %v164
  %v1461 = vunpack.c.h.b16 %v164
  %v1462 = vunpack.c.l.b16 %v165
  %v1463 = vunpack.c.h.b16 %v165
  %v1464 = vunpack.c.l.b16 %v166
  %v1465 = vunpack.c.h.b16 %v166
  %v1466 = vunpack.c.l.b16 %v167
  %v1467 = vunpack.c.h.b16 %v167
  %v1468 = vunpack.c.l.b16 %v168
  %v1469 = vunpack.c.h.b16 %v168
  %v1470 = vunpack.c.l.b16 %v169
  %v1471 = vunpack.c.h.b16 %v169
  %v1472 = vunpack.c.l.b16 %v170
  %v1473 = vunpack.c.h.b16 %v170
  %v1474 = vunpack.c.l.b16 %v171
  %v1475 = vunpack.c.h.b16 %v171
  %v1476 = vunpack.c.l.b16 %v172
  %v1477 = vunpack.c.h.b16 %v172
  %v1478 = vunpack.c.l.b16 %v173
  %v1479 = vunpack.c.h.b16 %v173
  %v1480 = vunpack.c.l.b16 %v174
  %v1481 = vunpack.c.h.b16 %v174
  %v1482 = vunpack.c.l.b16 %v175
  %v1483 = vunpack.c.h.b16 %v175
  %v1484 = vunpack.c.l.b16 %v176
  %v1485 = vunpack.c.h.b16 %v176
  %v1486 = vunpack.c.l.b16 %v177
  %v1487 = vunpack.c.h.b16 %v177
  %v1488 = vunpack.c.l.b16 %v178
  %v1489 = vunpack.c.h.b16 %v178
  %v1490 = vunpack.c.l.b16 %v179
  %v1491 = vunpack.c.h.b16 %v179
  %v1492 = vunpack.c.l.b16 %v180
  %v1493 = vunpack.c.h.b16 %v180
  %v1494 = vunpack.c.l.b16 %v181
  %v1495 = vunpack.c.h.b16 %v181
  %v1496 = vunpack.c.l.b16 %v182
  %v1497 = vunpack.c.h.b16 %v182
  %v1498 = vunpack.c.l.b16 %v183
  %v1499 = vunpack.c.h.b16 %v183
  %v1500 = vunpack.c.l.b16 %v184
  %v1501 = vunpack.c.h.b16 %v184
  %v1502 = vunpack.c.l.b16 %v185
  %v1503 = vunpack.c.h.b16 %v185
  %v1504 = vunpack.c.l.b16 %v186
  %v1505 = vunpack.c.h.b16 %v186
  %v1506 = vunpack.c.l.b16 %v187
  %v1507 = vunpack.c.h.b16 %v187
  %v1508 = vunpack.c.l.b16 %v188
  %v1509 = vunpack.c.h.b16 %v188
  %v1510 = vunpack.c.l.b16 %v189
  %v1511 = vunpack.c.h.b16 %v189
  %v1512 = vunpack.c.l.b16 %v190
  %v1513 = vunpack.c.h.b16 %v190
  %v1514 = vunpack.c.l.b16 %v191
  %v1515 = vunpack.c.h.b16 %v191
  %v1516 = vunpack.c.l.b16 %v192
  %v1517 = vunpack.c.h.b16 %v192
  %v1518 = vunpack.c.l.b16 %v193
  %v1519 = vunpack.c.h.b16 %v193
  %v1520 = vunpack.c.l.b16 %v194
  %v1521 = vunpack.c.h.b16 %v194
  %v1522 = vunpack.c.l.b16 %v195
  %v1523 = vunpack.c.h.b16 %v195
  %v1524 = vunpack.c.l.b16 %v196
  %v1525 = vunpack.c.h.b16 %v196
  %v1526 = vunpack.c.l.b16 %v197
  %v1527 = vunpack.c.h.b16 %v197
  %v1528 = vunpack.c.l.b16 %v198
  %v1529 = vunpack.c.h.b16 %v198
  %v1530 = vunpack.c.l.b16 %v199
  %v1531 = vunpack.c.h.b16 %v199
  %v1532 = vunpack.c.l.b16 %v200
  %v1533 = vunpack.c.h.b16 %v200
  %v1534 = vunpack.c.l.b16 %v201
  %v1535 = vunpack.c.h.b16 %v201
  %v1536 = vunpack.c.l.b16 %v202
  %v1537 = vunpack.c.h.b16 %v202
  %v1538 = vunpack.c.l.b16 %v203
  %v1539 = vunpack.c.h.b16 %v203
  %v1540 = vunpack.c.l.b16 %v204
  %v1541 = vunpack.c.h.b16 %v204
  %v1542 = vunpack.c.l.b16 %v205
  %v1543 = vunpack.c.h.b16 %v205
  %v1544 = vunpack.c.l.b16 %v206
  %v1545 = vunpack.c.h.b16 %v206
  %v1546 = vunpack.c.l.b16 %v207
  %v1547 = vunpack.c.h.b16 %v207
  %v1548 = vunpack.c.l.b16 %v208
  %v1549 = vunpack.c.h.b16 %v208
  %v1550 = vunpack.c.l.b16 %v209
  %v1551 = vunpack.c.h.b16 %v209
  %v1552 = vunpack.c.l.b16 %v210
  %v1553 = vunpack.c.h.b16 %v210
  %v1554 = vunpack.c.l.b16 %v211
  %v1555 = vunpack.c.h.b16 %v211
  %v1556 = vunpack.c.l.b16 %v212
  %v1557 = vunpack.c.h.b16 %v212
  %v1558 = vunpack.c.l.b16 %v213
  %v1559 = vunpack.c.h.b16 %v213
  %v1560 = vunpack.c.l.b16 %v214
  %v1561 = vunpack.c.h.b16 %v214
  %v1562 = vunpack.c.l.b16 %v215
  %v1563 = vunpack.c.h.b16 %v215
  %v1564 = vunpack.c.l.b16 %v216
  %v1565 = vunpack.c.h.b16 %v216
  %v1566 = vunpack.c.l.b16 %v217
  %v1567 = vunpack.c.h.b16 %v217
  %v1568 = vunpack.c.l.b16 %v218
  %v1569 = vunpack.c.h.b16 %v218
  %v1570 = vunpack.c.l.b16 %v219
  %v1571 = vunpack.c.h.b16 %v219
  %v1572 = vunpack.c.l.b16 %v220
  %v1573 = vunpack.c.h.b16 %v220
  %v1574 = vunpack.c.l.b16 %v221
  %v1575 = vunpack.c.h.b16 %v221
  %v1576 = vunpack.c.l.b16 %v222
  %v1577 = vunpack.c.h.b16 %v222
  %v1578 = vunpack.c.l.b16 %v223
  %v1579 = vunpack.c.h.b16 %v223
  %v1580 = vunpack.c.l.b16 %v224
  %v1581 = vunpack.c.h.b16 %v224
  %v1582 = vunpack.c.l.b16 %v225
  %v1583 = vunpack.c.h.b16 %v225
  %v1584 = vunpack.c.l.b16 %v226
  %v1585 = vunpack.c.h.b16 %v226
  %v1586 = vunpack.c.l.b16 %v227
  %v1587 = vunpack.c.h.b16 %v227
  %v1588 = vunpack.c.l.b16 %v228
  %v1589 = vunpack.c.h.b16 %v228
  %v1590 = vunpack.c.l.b16 %v229
  %v1591 = vunpack.c.h.b16 %v229
  %v1592 = vunpack.c.l.b16 %v230
  %v1593 = vunpack.c.h.b16 %v230
  %v1594 = vunpack.c.l.b16 %v231
  %v1595 = vunpack.c.h.b16 %v231
  %v1596 = vunpack.c.l.b16 %v232
  %v1597 = vunpack.c.h.b16 %v232
  %v1598 = vunpack.c.l.b16 %v233
  %v1599 = vunpack.c.h.b16 %v233
  %v1600 = vunpack.c.l.b16 %v234
  %v1601 = vunpack.c.h.b16 %v234
  %v1602 = vunpack.c.l.b16 %v235
  %v1603 = vunpack.c.h.b16 %v235
  %v1604 = vunpack.c.l.b16 %v236
  %v1605 = vunpack.c.h.b16 %v236
  %v1606 = vunpack.c.l.b16 %v237
  %v1607 = vunpack.c.h.b16 %v237
  %v1608 = vunpack.c.l.b16 %v238
  %v1609 = vunpack.c.h.b16 %v238
  %v1610 = vunpack.c.l.b16 %v239
  %v1611 = vunpack.c.h.b16 %v239
  %v1612 = vunpack.c.l.b16 %v240
  %v1613 = vunpack.c.h.b16 %v240
  %v1614 = vunpack.c.l.b16 %v241
  %v1615 = vunpack.c.h.b16 %v241
  %v1616 = vunpack.c.l.b16 %v242
  %v1617 = vunpack.c.h.b16 %v242
  %v1618 = vunpack.c.l.b16 %v243
  %v1619 = vunpack.c.h.b16 %v243
  %v1620 = vunpack.c.l.b16 %v244
  %v1621 = vunpack.c.h.b16 %v244
  %v1622 = vunpack.c.l.b16 %v245
  %v1623 = vunpack.c.h.b16 %v245
  %v1624 = vunpack.c.l.b16 %v246
  %v1625 = vunpack.c.h.b16 %v246
  %v1626 = vunpack.c.l.b16 %v247
  %v1627 = vunpack.c.h.b16 %v247
  %v1628 = vunpack.c.l.b16 %v248
  %v1629 = vunpack.c.h.b16 %v248
  %v1630 = vunpack.c.l.b16 %v249
  %v1631 = vunpack.c.h.b16 %v249
  %v1632 = vunpack.c.l.b16 %v250
  %v1633 = vunpack.c.h.b16 %v250
  %v1634 = vunpack.c.l.b16 %v251
  %v1635 = vunpack.c.h.b16 %v251
  %v1636 = vunpack.c.l.b16 %v252
  %v1637 = vunpack.c.h.b16 %v252
  %v1638 = vunpack.c.l.b16 %v253
  %v1639 = vunpack.c.h.b16 %v253
  %v1640 = vunpack.c.l.b16 %v254
  %v1641 = vunpack.c.h.b16 %v254
  %v1642 = vunpack.c.l.b16 %v255
  %v1643 = vunpack.c.h.b16 %v255
  %v1644 = vunpack.c.l.b16 %v256
  %v1645 = vunpack.c.h.b16 %v256
  %v1646 = vunpack.c.l.b16 %v257
  %v1647 = vunpack.c.h.b16 %v257
  %v1648 = vunpack.c.l.b16 %v258
  %v1649 = vunpack.c.h.b16 %v258
  %v1650 = vunpack.c.l.b16 %v259
  %v1651 = vunpack.c.h.b16 %v259
  %v1652 = vunpack.c.l.b16 %v260
  %v1653 = vunpack.c.h.b16 %v260
  %v1654 = vunpack.c.l.b16 %v261
  %v1655 = vunpack.c.h.b16 %v261
  %v1656 = vunpack.c.l.b16 %v262
  %v1657 = vunpack.c.h.b16 %v262
  %v1658 = vunpack.c.l.b16 %v263
  %v1659 = vunpack.c.h.b16 %v263
  %v1660 = vunpack.c.l.b16 %v264
  %v1661 = vunpack.c.h.b16 %v264
  %v1662 = vunpack.c.l.b16 %v265
  %v1663 = vunpack.c.h.b16 %v265
  %v1664 = vunpack.c.l.b16 %v266
  %v1665 = vunpack.c.h.b16 %v266
  %v1666 = vunpack.c.l.b16 %v267
  %v1667 = vunpack.c.h.b16 %v267
  %v1668 = vunpack.c.l.b16 %v268
  %v1669 = vunpack.c.h.b16 %v268
  %v1670 = vunpack.c.l.b16 %v269
  %v1671 = vunpack.c.h.b16 %v269
  %v1672 = vunpack.c.l.b16 %v270
  %v1673 = vunpack.c.h.b16 %v270
  %v1674 = vunpack.c.l.b16 %v271
  %v1675 = vunpack.c.h.b16 %v271
  %v1676 = vunpack.c.l.b16 %v272
  %v1677 = vunpack.c.h.b16 %v272
  %v1678 = vunpack.c.l.b16 %v273
  %v1679 = vunpack.c.h.b16 %v273
  %v1680 = vunpack.c.l.b16 %v274
  %v1681 = vunpack.c.h.b16 %v274
  %v1682 = vunpack.c.l.b16 %v275
  %v1683 = vunpack.c.h.b16 %v275
  %v1684 = vunpack.c.l.b16 %v276
  %v1685 = vunpack.c.h.b16 %v276
  %v1686 = vunpack.c.l.b16 %v277
  %v1687 = vunpack.c.h.b16 %v277
  %v1688 = vunpack.c.l.b16 %v278
  %v1689 = vunpack.c.h.b16 %v278
  %v1690 = vunpack.c.l.b16 %v279
  %v1691 = vunpack.c.h.b16 %v279
  %v1692 = vunpack.c.l.b16 %v280
  %v1693 = vunpack.c.h.b16 %v280
  %v1694 = vunpack.c.l.b16 %v281
  %v1695 = vunpack.c.h.b16 %v281
  %v1696 = vunpack.c.l.b16 %v282
  %v1697 = vunpack.c.h.b16 %v282
  %v1698 = vunpack.c.l.b16 %v283
  %v1699 = vunpack.c.h.b16 %v283
  %v1700 = vunpack.c.l.b16 %v284
  %v1701 = vunpack.c.h.b16 %v284
  %v1702 = vunpack.c.l.b16 %v285
  %v1703 = vunpack.c.h.b16 %v285
  %v1704 = vunpack.c.l.b16 %v286
  %v1705 = vunpack.c.h.b16 %v286
  %v1706 = vunpack.c.l.b16 %v287
  %v1707 = vunpack.c.h.b16 %v287
  %v1708 = vunpack.c.l.b16 %v288
  %v1709 = vunpack.c.h.b16 %v288
  %v1710 = vpack.c.b16 %v1462, %v1454
  %v1711 = vpack.c.b16 %v1463, %v1455
  %v1712 = vpack.c.b16 %v1464, %v1456
  %v1713 = vpack.c.b16 %v1465, %v1457
  %v1714 = vpack.c.b16 %v1466, %v1458
  %v1715 = vpack.c.b16 %v1467, %v1459
  %v1716 = vpack.c.b16 %v1468, %v1460
  %v1717 = vpack.c.b16 %v1469, %v1461
  %v1718 = vpack.c.b16 %v1478, %v1470
  %v1719 = vpack.c.b16 %v1479, %v1471
  %v1720 = vpack.c.b16 %v1480, %v1472
  %v1721 = vpack.c.b16 %v1481, %v1473
  %v1722 = vpack.c.b16 %v1482, %v1474
  %v1723 = vpack.c.b16 %v1483, %v1475
  %v1724 = vpack.c.b16 %v1484, %v1476
  %v1725 = vpack.c.b16 %v1485, %v1477
  %v1726 = vpack.c.b16 %v1494, %v1486
  %v1727 = vpack.c.b16 %v1495, %v1487
  %v1728 = vpack.c.b16 %v1496, %v1488
  %v1729 = vpack.c.b16 %v1497, %v1489
  %v1730 = vpack.c.b16 %v1498, %v1490
  %v1731 = vpack.c.b16 %v1499, %v1491
  %v1732 = vpack.c.b16 %v1500, %v1492
  %v1733 = vpack.c.b16 %v1501, %v1493
  %v1734 = vpack.c.b16 %v1510, %v1502
  %v1735 = vpack.c.b16 %v1511, %v1503
  %v1736 = vpack.c.b16 %v1512, %v1504
  %v1737 = vpack.c.b16 %v1513, %v1505
  %v1738 = vpack.c.b16 %v1514, %v1506
  %v1739 = vpack.c.b16 %v1515, %v1507
  %v1740 = vpack.c.b16 %v1516, %v1508
  %v1741 = vpack.c.b16 %v1517, %v1509
  %v1742 = vpack.c.b16 %v1526, %v1518
  %v1743 = vpack.c.b16 %v1527, %v1519
  %v1744 = vpack.c.b16 %v1528, %v1520
  %v1745 = vpack.c.b16 %v1529, %v1521
  %v1746 = vpack.c.b16 %v1530, %v1522
  %v1747 = vpack.c.b16 %v1531, %v1523
  %v1748 = vpack.c.b16 %v1532, %v1524
  %v1749 = vpack.c.b16 %v1533, %v1525
  %v1750 = vpack.c.b16 %v1542, %v1534
  %v1751 = vpack.c.b16 %v1543, %v1535
  %v1752 = vpack.c.b16 %v1544, %v1536
  %v1753 = vpack.c.b16 %v1545, %v1537
  %v1754 = vpack.c.b16 %v1546, %v1538
  %v1755 = vpack.c.b16 %v1547, %v1539
  %v1756 = vpack.c.b16 %v1548, %v1540
  %v1757 = vpack.c.b16 %v1549, %v1541
  %v1758 = vpack.c.b16 %v1558, %v1550
  %v1759 = vpack.c.b16 %v1559, %v1551
  %v1760 = vpack.c.b16 %v1560, %v1552
  %v1761 = vpack.c.b16 %v1561, %v1553
  %v1762 = vpack.c.b16 %v1562, %v1554
  %v1763 = vpack.c.b16 %v1563, %v1555
  %v1764 = vpack.c.b16 %v1564, %v1556
  %v1765 = vpack.c.b16 %v1565, %v1557
  %v1766 = vpack.c.b16 %v1574, %v1566
  %v1767 = vpack.c.b16 %v1575, %v1567
  %v1768 = vpack.c.b16 %v1576, %v1568
  %v1769 = vpack.c.b16 %v1577, %v1569
  %v1770 = vpack.c.b16 %v1578, %v1570
  %v1771 = vpack.c.b16 %v1579, %v1571
  %v1772 = vpack.c.b16 %v1580, %v1572
  %v1773 = vpack.c.b16 %v1581, %v1573
  %v1774 = vpack.c.b16 %v1590, %v1582
  %v1775 = vpack.c.b16 %v1591, %v1583
  %v1776 = vpack.c.b16 %v1592, %v1584
  %v1777 = vpack.c.b16 %v1593, %v1585
  %v1778 = vpack.c.b16 %v1594, %v1586
  %v1779 = vpack.c.b16 %v1595, %v1587
  %v1780 = vpack.c.b16 %v1596, %v1588
  %v1781 = vpack.c.b16 %v1597, %v1589
  %v1782 = vpack.c.b16 %v1606, %v1598
  %v1783 = vpack.c.b16 %v1607, %v1599
  %v1784 = vpack.c.b16 %v1608, %v1600
  %v1785 = vpack.c.b16 %v1609, %v1601
  %v1786 = vpack.c.b16 %v1610, %v1602
  %v1787 = vpack.c.b16 %v1611, %v1603
  %v1788 = vpack.c.b16 %v1612, %v1604
  %v1789 = vpack.c.b16 %v1613, %v1605
  %v1790 = vpack.c.b16 %v1622, %v1614
  %v1791 = vpack.c.b16 %v1623, %v1615
  %v1792 = vpack.c.b16 %v1624, %v1616
  %v1793 = vpack.c.b16 %v1625, %v1617
  %v1794 = vpack.c.b16 %v1626, %v1618
  %v1795 = vpack.c.b16 %v1627, %v1619
  %v1796 = vpack.c.b16 %v1628, %v1620
  %v1797 = vpack.c.b16 %v1629, %v1621
  %v1798 = vpack.c.b16 %v1638, %v1630
  %v1799 = vpack.c.b16 %v1639, %v1631
  %v1800 = vpack.c.b16 %v1640, %v1632
  %v1801 = vpack.c.b16 %v1641, %v1633
  %v1802 = vpack.c.b16 %v1642, %v1634
  %v1803 = vpack.c.b16 %v1643, %v1635
  %v1804 = vpack.c.b16 %v1644, %v1636
  %v1805 = vpack.c.b16 %v1645, %v1637
  %v1806 = vpack.c.b16 %v1654, %v1646
  %v1807 = vpack.c.b16 %v1655, %v1647
  %v1808 = vpack.c.b16 %v1656, %v1648
  %v1809 = vpack.c.b16 %v1657, %v1649
  %v1810 = vpack.c.b16 %v1658, %v1650
  %v1811 = vpack.c.b16 %v1659, %v1651
  %v1812 = vpack.c.b16 %v1660, %v1652
  %v1813 = vpack.c.b16 %v1661, %v1653
  %v1814 = vpack.c.b16 %v1670, %v1662
  %v1815 = vpack.c.b16 %v1671, %v1663
  %v1816 = vpack.c.b16 %v1672, %v1664
  %v1817 = vpack.c.b16 %v1673, %v1665
  %v1818 = vpack.c.b16 %v1674, %v1666
  %v1819 = vpack.c.b16 %v1675, %v1667
  %v1820 = vpack.c.b16 %v1676, %v1668
  %v1821 = vpack.c.b16 %v1677, %v1669
  %v1822 = vpack.c.b16 %v1686, %v1678
  %v1823 = vpack.c.b16 %v1687, %v1679
  %v1824 = vpack.c.b16 %v1688, %v1680
  %v1825 = vpack.c.b16 %v1689, %v1681
  %v1826 = vpack.c.b16 %v1690, %v1682
  %v1827 = vpack.c.b16 %v1691, %v1683
  %v1828 = vpack.c.b16 %v1692, %v1684
  %v1829 = vpack.c.b16 %v1693, %v1685
  %v1830 = vpack.c.b16 %v1702, %v1694
  %v1831 = vpack.c.b16 %v1703, %v1695
  %v1832 = vpack.c.b16 %v1704, %v1696
  %v1833 = vpack.c.b16 %v1705, %v1697
  %v1834 = vpack.c.b16 %v1706, %v1698
  %v1835 = vpack.c.b16 %v1707, %v1699
  %v1836 = vpack.c.b16 %v1708, %v1700
  %v1837 = vpack.c.b16 %v1709, %v1701
  %1966 = vmatprep.subr.bf16.mxu0 %v1711
  %1967 = vmatpush1.bf16.msra.mxu0 %v1710
  %1968 = vmatprep.subr.bf16.mxu0 %v1719
  %1969 = vmatpush1.bf16.msra.mxu0 %v1718
  %1970 = vmatprep.subr.bf16.mxu0 %v1727
  %1971 = vmatpush1.bf16.msra.mxu0 %v1726
  %1972 = vmatprep.subr.bf16.mxu0 %v1735
  %1973 = vmatpush1.bf16.msra.mxu0 %v1734
  %1974 = vmatprep.subr.bf16.mxu0 %v1743
  %1975 = vmatpush1.bf16.msra.mxu0 %v1742
  %1976 = vmatprep.subr.bf16.mxu0 %v1751
  %1977 = vmatpush1.bf16.msra.mxu0 %v1750
  %1978 = vmatprep.subr.bf16.mxu0 %v1759
  %1979 = vmatpush1.bf16.msra.mxu0 %v1758
  %1980 = vmatprep.subr.bf16.mxu0 %v1767
  %1981 = vmatpush1.bf16.msra.mxu0 %v1766
  %1982 = vmatprep.subr.bf16.mxu0 %v1775
  %1983 = vmatpush1.bf16.msra.mxu0 %v1774
  %1984 = vmatprep.subr.bf16.mxu0 %v1783
  %1985 = vmatpush1.bf16.msra.mxu0 %v1782
  %1986 = vmatprep.subr.bf16.mxu0 %v1791
  %1987 = vmatpush1.bf16.msra.mxu0 %v1790
  %1988 = vmatprep.subr.bf16.mxu0 %v1799
  %1989 = vmatpush1.bf16.msra.mxu0 %v1798
  %1990 = vmatprep.subr.bf16.mxu0 %v1807
  %1991 = vmatpush1.bf16.msra.mxu0 %v1806
  %1992 = vmatprep.subr.bf16.mxu0 %v1815
  %1993 = vmatpush1.bf16.msra.mxu0 %v1814
  %1994 = vmatprep.subr.bf16.mxu0 %v1823
  %1995 = vmatpush1.bf16.msra.mxu0 %v1822
  %1996 = vmatprep.subr.bf16.mxu0 %v1831
  %1997 = vmatpush1.bf16.msra.mxu0 %v1830
  %1998 = vmatprep.mubr.bf16.mxu0 %v1325
  %1999 = vmatmul.mubr.bf16.gmra.mrb[0].mxu0 %v1324
  %v2000 = vpop.f32.mrb[0].mxu0
  %v2001 = vadd.f32 0.0, %v2000
  %v2002 = vpop.f32.mrb[0].mxu0
  %v2003 = vadd.f32 0.0, %v2002
  %v2004 = vpop.f32.mrb[0].mxu0
  %v2005 = vpop.f32.mrb[0].mxu0
  %2006 = vdwg.mxu0
  %2007 = vmatprep.subr.bf16.mxu0 %v1713
  %2008 = vmatpush1.bf16.msra.mxu0 %v1712
  %2009 = vmatprep.subr.bf16.mxu0 %v1721
  %2010 = vmatpush1.bf16.msra.mxu0 %v1720
  %2011 = vmatprep.subr.bf16.mxu0 %v1729
  %2012 = vmatpush1.bf16.msra.mxu0 %v1728
  %2013 = vmatprep.subr.bf16.mxu0 %v1737
  %2014 = vmatpush1.bf16.msra.mxu0 %v1736
  %2015 = vmatprep.subr.bf16.mxu0 %v1745
  %2016 = vmatpush1.bf16.msra.mxu0 %v1744
  %2017 = vmatprep.subr.bf16.mxu0 %v1753
  %2018 = vmatpush1.bf16.msra.mxu0 %v1752
  %2019 = vmatprep.subr.bf16.mxu0 %v1761
  %2020 = vmatpush1.bf16.msra.mxu0 %v1760
  %2021 = vmatprep.subr.bf16.mxu0 %v1769
  %2022 = vmatpush1.bf16.msra.mxu0 %v1768
  %2023 = vmatprep.subr.bf16.mxu0 %v1777
  %2024 = vmatpush1.bf16.msra.mxu0 %v1776
  %2025 = vmatprep.subr.bf16.mxu0 %v1785
  %2026 = vmatpush1.bf16.msra.mxu0 %v1784
  %2027 = vmatprep.subr.bf16.mxu0 %v1793
  %2028 = vmatpush1.bf16.msra.mxu0 %v1792
  %2029 = vmatprep.subr.bf16.mxu0 %v1801
  %2030 = vmatpush1.bf16.msra.mxu0 %v1800
  %2031 = vmatprep.subr.bf16.mxu0 %v1809
  %2032 = vmatpush1.bf16.msra.mxu0 %v1808
  %2033 = vmatprep.subr.bf16.mxu0 %v1817
  %2034 = vmatpush1.bf16.msra.mxu0 %v1816
  %2035 = vmatprep.subr.bf16.mxu0 %v1825
  %2036 = vmatpush1.bf16.msra.mxu0 %v1824
  %2037 = vmatprep.subr.bf16.mxu0 %v1833
  %2038 = vmatpush1.bf16.msra.mxu0 %v1832
  %2039 = vmatprep.mubr.bf16.mxu0 %v1325
  %2040 = vmatmul.mubr.bf16.gmra.mrb[0].mxu0 %v1324
  %v2041 = vpop.f32.mrb[0].mxu0
  %v2042 = vadd.f32 0.0, %v2041
  %v2043 = vpop.f32.mrb[0].mxu0
  %v2044 = vadd.f32 0.0, %v2043
  %v2045 = vpop.f32.mrb[0].mxu0
  %v2046 = vpop.f32.mrb[0].mxu0
  %2047 = vdwg.mxu0
  %2048 = vmatprep.subr.bf16.mxu0 %v1715
  %2049 = vmatpush1.bf16.msra.mxu0 %v1714
  %2050 = vmatprep.subr.bf16.mxu0 %v1723
  %2051 = vmatpush1.bf16.msra.mxu0 %v1722
  %2052 = vmatprep.subr.bf16.mxu0 %v1731
  %2053 = vmatpush1.bf16.msra.mxu0 %v1730
  %2054 = vmatprep.subr.bf16.mxu0 %v1739
  %2055 = vmatpush1.bf16.msra.mxu0 %v1738
  %2056 = vmatprep.subr.bf16.mxu0 %v1747
  %2057 = vmatpush1.bf16.msra.mxu0 %v1746
  %2058 = vmatprep.subr.bf16.mxu0 %v1755
  %2059 = vmatpush1.bf16.msra.mxu0 %v1754
  %2060 = vmatprep.subr.bf16.mxu0 %v1763
  %2061 = vmatpush1.bf16.msra.mxu0 %v1762
  %2062 = vmatprep.subr.bf16.mxu0 %v1771
  %2063 = vmatpush1.bf16.msra.mxu0 %v1770
  %2064 = vmatprep.subr.bf16.mxu0 %v1779
  %2065 = vmatpush1.bf16.msra.mxu0 %v1778
  %2066 = vmatprep.subr.bf16.mxu0 %v1787
  %2067 = vmatpush1.bf16.msra.mxu0 %v1786
  %2068 = vmatprep.subr.bf16.mxu0 %v1795
  %2069 = vmatpush1.bf16.msra.mxu0 %v1794
  %2070 = vmatprep.subr.bf16.mxu0 %v1803
  %2071 = vmatpush1.bf16.msra.mxu0 %v1802
  %2072 = vmatprep.subr.bf16.mxu0 %v1811
  %2073 = vmatpush1.bf16.msra.mxu0 %v1810
  %2074 = vmatprep.subr.bf16.mxu0 %v1819
  %2075 = vmatpush1.bf16.msra.mxu0 %v1818
  %2076 = vmatprep.subr.bf16.mxu0 %v1827
  %2077 = vmatpush1.bf16.msra.mxu0 %v1826
  %2078 = vmatprep.subr.bf16.mxu0 %v1835
  %2079 = vmatpush1.bf16.msra.mxu0 %v1834
  %2080 = vmatprep.mubr.bf16.mxu0 %v1325
  %2081 = vmatmul.mubr.bf16.gmra.mrb[0].mxu0 %v1324
  %v2082 = vpop.f32.mrb[0].mxu0
  %v2083 = vadd.f32 0.0, %v2082
  %v2084 = vpop.f32.mrb[0].mxu0
  %v2085 = vadd.f32 0.0, %v2084
  %v2086 = vpop.f32.mrb[0].mxu0
  %v2087 = vpop.f32.mrb[0].mxu0
  %2088 = vdwg.mxu0
  %2089 = vmatprep.subr.bf16.mxu0 %v1717
  %2090 = vmatpush1.bf16.msra.mxu0 %v1716
  %2091 = vmatprep.subr.bf16.mxu0 %v1725
  %2092 = vmatpush1.bf16.msra.mxu0 %v1724
  %2093 = vmatprep.subr.bf16.mxu0 %v1733
  %2094 = vmatpush1.bf16.msra.mxu0 %v1732
  %2095 = vmatprep.subr.bf16.mxu0 %v1741
  %2096 = vmatpush1.bf16.msra.mxu0 %v1740
  %2097 = vmatprep.subr.bf16.mxu0 %v1749
  %2098 = vmatpush1.bf16.msra.mxu0 %v1748
  %2099 = vmatprep.subr.bf16.mxu0 %v1757
  %2100 = vmatpush1.bf16.msra.mxu0 %v1756
  %2101 = vmatprep.subr.bf16.mxu0 %v1765
  %2102 = vmatpush1.bf16.msra.mxu0 %v1764
  %2103 = vmatprep.subr.bf16.mxu0 %v1773
  %2104 = vmatpush1.bf16.msra.mxu0 %v1772
  %2105 = vmatprep.subr.bf16.mxu0 %v1781
  %2106 = vmatpush1.bf16.msra.mxu0 %v1780
  %2107 = vmatprep.subr.bf16.mxu0 %v1789
  %2108 = vmatpush1.bf16.msra.mxu0 %v1788
  %2109 = vmatprep.subr.bf16.mxu0 %v1797
  %2110 = vmatpush1.bf16.msra.mxu0 %v1796
  %2111 = vmatprep.subr.bf16.mxu0 %v1805
  %2112 = vmatpush1.bf16.msra.mxu0 %v1804
  %2113 = vmatprep.subr.bf16.mxu0 %v1813
  %2114 = vmatpush1.bf16.msra.mxu0 %v1812
  %2115 = vmatprep.subr.bf16.mxu0 %v1821
  %2116 = vmatpush1.bf16.msra.mxu0 %v1820
  %2117 = vmatprep.subr.bf16.mxu0 %v1829
  %2118 = vmatpush1.bf16.msra.mxu0 %v1828
  %2119 = vmatprep.subr.bf16.mxu0 %v1837
  %2120 = vmatpush1.bf16.msra.mxu0 %v1836
  %2121 = vmatprep.mubr.bf16.mxu0 %v1325
  %2122 = vmatmul.mubr.bf16.gmra.mrb[0].mxu0 %v1324
  %v2123 = vpop.f32.mrb[0].mxu0
  %v2124 = vadd.f32 0.0, %v2123
  %v2125 = vpop.f32.mrb[0].mxu0
  %v2126 = vadd.f32 0.0, %v2125
  %v2127 = vpop.f32.mrb[0].mxu0
  %v2128 = vpop.f32.mrb[0].mxu0
  %2129 = vdwg.mxu0
  %v2138 = vcombine.low %v2001, %v2003
  %v2139 = vcombine.low %v2042, %v2044
  %v2140 = vcombine.low %v2083, %v2085
  %v2141 = vcombine.low %v2124, %v2126
  %v2143 = vunpack.c.l.s4 1966171168
  %v2144 = vunpack.c.0.s8 %v2143
  %v2145 = vlaneseq
  %v2146 = vshrl.u32 %v2145, 7
  %v2147 = vsub.s32 %v2144, %v2146
  %v2148 = vrot.slane %v2138, %v2147
  %v2150 = vunpack.c.l.s4 1966171168
  %v2151 = vunpack.c.0.s8 %v2150
  %v2152 = vlaneseq
  %v2153 = vshrl.u32 %v2152, 7
  %v2154 = vsub.s32 %v2151, %v2153
  %v2155 = vrot.slane %v2139, %v2154
  %v2157 = vunpack.c.l.s4 1966171168
  %v2158 = vunpack.c.0.s8 %v2157
  %v2159 = vlaneseq
  %v2160 = vshrl.u32 %v2159, 7
  %v2161 = vsub.s32 %v2158, %v2160
  %v2162 = vrot.slane %v2140, %v2161
  %v2164 = vunpack.c.l.s4 1966171168
  %v2165 = vunpack.c.0.s8 %v2164
  %v2166 = vlaneseq
  %v2167 = vshrl.u32 %v2166, 7
  %v2168 = vsub.s32 %v2165, %v2167
  %v2169 = vrot.slane %v2141, %v2168
  %v2170 = vcombine.low %v2148, %v2155
  %v2171 = vcombine.low %v2162, %v2169
  %v2173 = vunpack.c.l.s4 1966171168
  %v2174 = vunpack.c.0.s8 %v2173
  %v2175 = vlaneseq
  %v2176 = vshrl.u32 %v2175, 7
  %v2177 = vsub.s32 %v2174, %v2176
  %v2178 = vrot.slane %v2170, %v2177
  %v2180 = vunpack.c.l.s4 1966171168
  %v2181 = vunpack.c.0.s8 %v2180
  %v2182 = vlaneseq
  %v2183 = vshrl.u32 %v2182, 7
  %v2184 = vsub.s32 %v2181, %v2183
  %v2185 = vrot.slane %v2171, %v2184
  %v2186 = vcombine.low %v2178, %v2185
  %v2188 = vadd.f32 %v417, %v2186
  %v2317 = vunpack.c.l.b16 %v289
  %v2318 = vunpack.c.h.b16 %v289
  %v2319 = vunpack.c.l.b16 %v290
  %v2320 = vunpack.c.h.b16 %v290
  %v2321 = vunpack.c.l.b16 %v291
  %v2322 = vunpack.c.h.b16 %v291
  %v2323 = vunpack.c.l.b16 %v292
  %v2324 = vunpack.c.h.b16 %v292
  %v2325 = vunpack.c.l.b16 %v293
  %v2326 = vunpack.c.h.b16 %v293
  %v2327 = vunpack.c.l.b16 %v294
  %v2328 = vunpack.c.h.b16 %v294
  %v2329 = vunpack.c.l.b16 %v295
  %v2330 = vunpack.c.h.b16 %v295
  %v2331 = vunpack.c.l.b16 %v296
  %v2332 = vunpack.c.h.b16 %v296
  %v2333 = vunpack.c.l.b16 %v297
  %v2334 = vunpack.c.h.b16 %v297
  %v2335 = vunpack.c.l.b16 %v298
  %v2336 = vunpack.c.h.b16 %v298
  %v2337 = vunpack.c.l.b16 %v299
  %v2338 = vunpack.c.h.b16 %v299
  %v2339 = vunpack.c.l.b16 %v300
  %v2340 = vunpack.c.h.b16 %v300
  %v2341 = vunpack.c.l.b16 %v301
  %v2342 = vunpack.c.h.b16 %v301
  %v2343 = vunpack.c.l.b16 %v302
  %v2344 = vunpack.c.h.b16 %v302
  %v2345 = vunpack.c.l.b16 %v303
  %v2346 = vunpack.c.h.b16 %v303
  %v2347 = vunpack.c.l.b16 %v304
  %v2348 = vunpack.c.h.b16 %v304
  %v2349 = vunpack.c.l.b16 %v305
  %v2350 = vunpack.c.h.b16 %v305
  %v2351 = vunpack.c.l.b16 %v306
  %v2352 = vunpack.c.h.b16 %v306
  %v2353 = vunpack.c.l.b16 %v307
  %v2354 = vunpack.c.h.b16 %v307
  %v2355 = vunpack.c.l.b16 %v308
  %v2356 = vunpack.c.h.b16 %v308
  %v2357 = vunpack.c.l.b16 %v309
  %v2358 = vunpack.c.h.b16 %v309
  %v2359 = vunpack.c.l.b16 %v310
  %v2360 = vunpack.c.h.b16 %v310
  %v2361 = vunpack.c.l.b16 %v311
  %v2362 = vunpack.c.h.b16 %v311
  %v2363 = vunpack.c.l.b16 %v312
  %v2364 = vunpack.c.h.b16 %v312
  %v2365 = vunpack.c.l.b16 %v313
  %v2366 = vunpack.c.h.b16 %v313
  %v2367 = vunpack.c.l.b16 %v314
  %v2368 = vunpack.c.h.b16 %v314
  %v2369 = vunpack.c.l.b16 %v315
  %v2370 = vunpack.c.h.b16 %v315
  %v2371 = vunpack.c.l.b16 %v316
  %v2372 = vunpack.c.h.b16 %v316
  %v2373 = vunpack.c.l.b16 %v317
  %v2374 = vunpack.c.h.b16 %v317
  %v2375 = vunpack.c.l.b16 %v318
  %v2376 = vunpack.c.h.b16 %v318
  %v2377 = vunpack.c.l.b16 %v319
  %v2378 = vunpack.c.h.b16 %v319
  %v2379 = vunpack.c.l.b16 %v320
  %v2380 = vunpack.c.h.b16 %v320
  %v2381 = vunpack.c.l.b16 %v321
  %v2382 = vunpack.c.h.b16 %v321
  %v2383 = vunpack.c.l.b16 %v322
  %v2384 = vunpack.c.h.b16 %v322
  %v2385 = vunpack.c.l.b16 %v323
  %v2386 = vunpack.c.h.b16 %v323
  %v2387 = vunpack.c.l.b16 %v324
  %v2388 = vunpack.c.h.b16 %v324
  %v2389 = vunpack.c.l.b16 %v325
  %v2390 = vunpack.c.h.b16 %v325
  %v2391 = vunpack.c.l.b16 %v326
  %v2392 = vunpack.c.h.b16 %v326
  %v2393 = vunpack.c.l.b16 %v327
  %v2394 = vunpack.c.h.b16 %v327
  %v2395 = vunpack.c.l.b16 %v328
  %v2396 = vunpack.c.h.b16 %v328
  %v2397 = vunpack.c.l.b16 %v329
  %v2398 = vunpack.c.h.b16 %v329
  %v2399 = vunpack.c.l.b16 %v330
  %v2400 = vunpack.c.h.b16 %v330
  %v2401 = vunpack.c.l.b16 %v331
  %v2402 = vunpack.c.h.b16 %v331
  %v2403 = vunpack.c.l.b16 %v332
  %v2404 = vunpack.c.h.b16 %v332
  %v2405 = vunpack.c.l.b16 %v333
  %v2406 = vunpack.c.h.b16 %v333
  %v2407 = vunpack.c.l.b16 %v334
  %v2408 = vunpack.c.h.b16 %v334
  %v2409 = vunpack.c.l.b16 %v335
  %v2410 = vunpack.c.h.b16 %v335
  %v2411 = vunpack.c.l.b16 %v336
  %v2412 = vunpack.c.h.b16 %v336
  %v2413 = vunpack.c.l.b16 %v337
  %v2414 = vunpack.c.h.b16 %v337
  %v2415 = vunpack.c.l.b16 %v338
  %v2416 = vunpack.c.h.b16 %v338
  %v2417 = vunpack.c.l.b16 %v339
  %v2418 = vunpack.c.h.b16 %v339
  %v2419 = vunpack.c.l.b16 %v340
  %v2420 = vunpack.c.h.b16 %v340
  %v2421 = vunpack.c.l.b16 %v341
  %v2422 = vunpack.c.h.b16 %v341
  %v2423 = vunpack.c.l.b16 %v342
  %v2424 = vunpack.c.h.b16 %v342
  %v2425 = vunpack.c.l.b16 %v343
  %v2426 = vunpack.c.h.b16 %v343
  %v2427 = vunpack.c.l.b16 %v344
  %v2428 = vunpack.c.h.b16 %v344
  %v2429 = vunpack.c.l.b16 %v345
  %v2430 = vunpack.c.h.b16 %v345
  %v2431 = vunpack.c.l.b16 %v346
  %v2432 = vunpack.c.h.b16 %v346
  %v2433 = vunpack.c.l.b16 %v347
  %v2434 = vunpack.c.h.b16 %v347
  %v2435 = vunpack.c.l.b16 %v348
  %v2436 = vunpack.c.h.b16 %v348
  %v2437 = vunpack.c.l.b16 %v349
  %v2438 = vunpack.c.h.b16 %v349
  %v2439 = vunpack.c.l.b16 %v350
  %v2440 = vunpack.c.h.b16 %v350
  %v2441 = vunpack.c.l.b16 %v351
  %v2442 = vunpack.c.h.b16 %v351
  %v2443 = vunpack.c.l.b16 %v352
  %v2444 = vunpack.c.h.b16 %v352
  %v2445 = vunpack.c.l.b16 %v353
  %v2446 = vunpack.c.h.b16 %v353
  %v2447 = vunpack.c.l.b16 %v354
  %v2448 = vunpack.c.h.b16 %v354
  %v2449 = vunpack.c.l.b16 %v355
  %v2450 = vunpack.c.h.b16 %v355
  %v2451 = vunpack.c.l.b16 %v356
  %v2452 = vunpack.c.h.b16 %v356
  %v2453 = vunpack.c.l.b16 %v357
  %v2454 = vunpack.c.h.b16 %v357
  %v2455 = vunpack.c.l.b16 %v358
  %v2456 = vunpack.c.h.b16 %v358
  %v2457 = vunpack.c.l.b16 %v359
  %v2458 = vunpack.c.h.b16 %v359
  %v2459 = vunpack.c.l.b16 %v360
  %v2460 = vunpack.c.h.b16 %v360
  %v2461 = vunpack.c.l.b16 %v361
  %v2462 = vunpack.c.h.b16 %v361
  %v2463 = vunpack.c.l.b16 %v362
  %v2464 = vunpack.c.h.b16 %v362
  %v2465 = vunpack.c.l.b16 %v363
  %v2466 = vunpack.c.h.b16 %v363
  %v2467 = vunpack.c.l.b16 %v364
  %v2468 = vunpack.c.h.b16 %v364
  %v2469 = vunpack.c.l.b16 %v365
  %v2470 = vunpack.c.h.b16 %v365
  %v2471 = vunpack.c.l.b16 %v366
  %v2472 = vunpack.c.h.b16 %v366
  %v2473 = vunpack.c.l.b16 %v367
  %v2474 = vunpack.c.h.b16 %v367
  %v2475 = vunpack.c.l.b16 %v368
  %v2476 = vunpack.c.h.b16 %v368
  %v2477 = vunpack.c.l.b16 %v369
  %v2478 = vunpack.c.h.b16 %v369
  %v2479 = vunpack.c.l.b16 %v370
  %v2480 = vunpack.c.h.b16 %v370
  %v2481 = vunpack.c.l.b16 %v371
  %v2482 = vunpack.c.h.b16 %v371
  %v2483 = vunpack.c.l.b16 %v372
  %v2484 = vunpack.c.h.b16 %v372
  %v2485 = vunpack.c.l.b16 %v373
  %v2486 = vunpack.c.h.b16 %v373
  %v2487 = vunpack.c.l.b16 %v374
  %v2488 = vunpack.c.h.b16 %v374
  %v2489 = vunpack.c.l.b16 %v375
  %v2490 = vunpack.c.h.b16 %v375
  %v2491 = vunpack.c.l.b16 %v376
  %v2492 = vunpack.c.h.b16 %v376
  %v2493 = vunpack.c.l.b16 %v377
  %v2494 = vunpack.c.h.b16 %v377
  %v2495 = vunpack.c.l.b16 %v378
  %v2496 = vunpack.c.h.b16 %v378
  %v2497 = vunpack.c.l.b16 %v379
  %v2498 = vunpack.c.h.b16 %v379
  %v2499 = vunpack.c.l.b16 %v380
  %v2500 = vunpack.c.h.b16 %v380
  %v2501 = vunpack.c.l.b16 %v381
  %v2502 = vunpack.c.h.b16 %v381
  %v2503 = vunpack.c.l.b16 %v382
  %v2504 = vunpack.c.h.b16 %v382
  %v2505 = vunpack.c.l.b16 %v383
  %v2506 = vunpack.c.h.b16 %v383
  %v2507 = vunpack.c.l.b16 %v384
  %v2508 = vunpack.c.h.b16 %v384
  %v2509 = vunpack.c.l.b16 %v385
  %v2510 = vunpack.c.h.b16 %v385
  %v2511 = vunpack.c.l.b16 %v386
  %v2512 = vunpack.c.h.b16 %v386
  %v2513 = vunpack.c.l.b16 %v387
  %v2514 = vunpack.c.h.b16 %v387
  %v2515 = vunpack.c.l.b16 %v388
  %v2516 = vunpack.c.h.b16 %v388
  %v2517 = vunpack.c.l.b16 %v389
  %v2518 = vunpack.c.h.b16 %v389
  %v2519 = vunpack.c.l.b16 %v390
  %v2520 = vunpack.c.h.b16 %v390
  %v2521 = vunpack.c.l.b16 %v391
  %v2522 = vunpack.c.h.b16 %v391
  %v2523 = vunpack.c.l.b16 %v392
  %v2524 = vunpack.c.h.b16 %v392
  %v2525 = vunpack.c.l.b16 %v393
  %v2526 = vunpack.c.h.b16 %v393
  %v2527 = vunpack.c.l.b16 %v394
  %v2528 = vunpack.c.h.b16 %v394
  %v2529 = vunpack.c.l.b16 %v395
  %v2530 = vunpack.c.h.b16 %v395
  %v2531 = vunpack.c.l.b16 %v396
  %v2532 = vunpack.c.h.b16 %v396
  %v2533 = vunpack.c.l.b16 %v397
  %v2534 = vunpack.c.h.b16 %v397
  %v2535 = vunpack.c.l.b16 %v398
  %v2536 = vunpack.c.h.b16 %v398
  %v2537 = vunpack.c.l.b16 %v399
  %v2538 = vunpack.c.h.b16 %v399
  %v2539 = vunpack.c.l.b16 %v400
  %v2540 = vunpack.c.h.b16 %v400
  %v2541 = vunpack.c.l.b16 %v401
  %v2542 = vunpack.c.h.b16 %v401
  %v2543 = vunpack.c.l.b16 %v402
  %v2544 = vunpack.c.h.b16 %v402
  %v2545 = vunpack.c.l.b16 %v403
  %v2546 = vunpack.c.h.b16 %v403
  %v2547 = vunpack.c.l.b16 %v404
  %v2548 = vunpack.c.h.b16 %v404
  %v2549 = vunpack.c.l.b16 %v405
  %v2550 = vunpack.c.h.b16 %v405
  %v2551 = vunpack.c.l.b16 %v406
  %v2552 = vunpack.c.h.b16 %v406
  %v2553 = vunpack.c.l.b16 %v407
  %v2554 = vunpack.c.h.b16 %v407
  %v2555 = vunpack.c.l.b16 %v408
  %v2556 = vunpack.c.h.b16 %v408
  %v2557 = vunpack.c.l.b16 %v409
  %v2558 = vunpack.c.h.b16 %v409
  %v2559 = vunpack.c.l.b16 %v410
  %v2560 = vunpack.c.h.b16 %v410
  %v2561 = vunpack.c.l.b16 %v411
  %v2562 = vunpack.c.h.b16 %v411
  %v2563 = vunpack.c.l.b16 %v412
  %v2564 = vunpack.c.h.b16 %v412
  %v2565 = vunpack.c.l.b16 %v413
  %v2566 = vunpack.c.h.b16 %v413
  %v2567 = vunpack.c.l.b16 %v414
  %v2568 = vunpack.c.h.b16 %v414
  %v2569 = vunpack.c.l.b16 %v415
  %v2570 = vunpack.c.h.b16 %v415
  %v2571 = vunpack.c.l.b16 %v416
  %v2572 = vunpack.c.h.b16 %v416
  %v2573 = vpack.c.b16 %v2325, %v2317
  %v2574 = vpack.c.b16 %v2326, %v2318
  %v2575 = vpack.c.b16 %v2327, %v2319
  %v2576 = vpack.c.b16 %v2328, %v2320
  %v2577 = vpack.c.b16 %v2329, %v2321
  %v2578 = vpack.c.b16 %v2330, %v2322
  %v2579 = vpack.c.b16 %v2331, %v2323
  %v2580 = vpack.c.b16 %v2332, %v2324
  %v2581 = vpack.c.b16 %v2341, %v2333
  %v2582 = vpack.c.b16 %v2342, %v2334
  %v2583 = vpack.c.b16 %v2343, %v2335
  %v2584 = vpack.c.b16 %v2344, %v2336
  %v2585 = vpack.c.b16 %v2345, %v2337
  %v2586 = vpack.c.b16 %v2346, %v2338
  %v2587 = vpack.c.b16 %v2347, %v2339
  %v2588 = vpack.c.b16 %v2348, %v2340
  %v2589 = vpack.c.b16 %v2357, %v2349
  %v2590 = vpack.c.b16 %v2358, %v2350
  %v2591 = vpack.c.b16 %v2359, %v2351
  %v2592 = vpack.c.b16 %v2360, %v2352
  %v2593 = vpack.c.b16 %v2361, %v2353
  %v2594 = vpack.c.b16 %v2362, %v2354
  %v2595 = vpack.c.b16 %v2363, %v2355
  %v2596 = vpack.c.b16 %v2364, %v2356
  %v2597 = vpack.c.b16 %v2373, %v2365
  %v2598 = vpack.c.b16 %v2374, %v2366
  %v2599 = vpack.c.b16 %v2375, %v2367
  %v2600 = vpack.c.b16 %v2376, %v2368
  %v2601 = vpack.c.b16 %v2377, %v2369
  %v2602 = vpack.c.b16 %v2378, %v2370
  %v2603 = vpack.c.b16 %v2379, %v2371
  %v2604 = vpack.c.b16 %v2380, %v2372
  %v2605 = vpack.c.b16 %v2389, %v2381
  %v2606 = vpack.c.b16 %v2390, %v2382
  %v2607 = vpack.c.b16 %v2391, %v2383
  %v2608 = vpack.c.b16 %v2392, %v2384
  %v2609 = vpack.c.b16 %v2393, %v2385
  %v2610 = vpack.c.b16 %v2394, %v2386
  %v2611 = vpack.c.b16 %v2395, %v2387
  %v2612 = vpack.c.b16 %v2396, %v2388
  %v2613 = vpack.c.b16 %v2405, %v2397
  %v2614 = vpack.c.b16 %v2406, %v2398
  %v2615 = vpack.c.b16 %v2407, %v2399
  %v2616 = vpack.c.b16 %v2408, %v2400
  %v2617 = vpack.c.b16 %v2409, %v2401
  %v2618 = vpack.c.b16 %v2410, %v2402
  %v2619 = vpack.c.b16 %v2411, %v2403
  %v2620 = vpack.c.b16 %v2412, %v2404
  %v2621 = vpack.c.b16 %v2421, %v2413
  %v2622 = vpack.c.b16 %v2422, %v2414
  %v2623 = vpack.c.b16 %v2423, %v2415
  %v2624 = vpack.c.b16 %v2424, %v2416
  %v2625 = vpack.c.b16 %v2425, %v2417
  %v2626 = vpack.c.b16 %v2426, %v2418
  %v2627 = vpack.c.b16 %v2427, %v2419
  %v2628 = vpack.c.b16 %v2428, %v2420
  %v2629 = vpack.c.b16 %v2437, %v2429
  %v2630 = vpack.c.b16 %v2438, %v2430
  %v2631 = vpack.c.b16 %v2439, %v2431
  %v2632 = vpack.c.b16 %v2440, %v2432
  %v2633 = vpack.c.b16 %v2441, %v2433
  %v2634 = vpack.c.b16 %v2442, %v2434
  %v2635 = vpack.c.b16 %v2443, %v2435
  %v2636 = vpack.c.b16 %v2444, %v2436
  %v2637 = vpack.c.b16 %v2453, %v2445
  %v2638 = vpack.c.b16 %v2454, %v2446
  %v2639 = vpack.c.b16 %v2455, %v2447
  %v2640 = vpack.c.b16 %v2456, %v2448
  %v2641 = vpack.c.b16 %v2457, %v2449
  %v2642 = vpack.c.b16 %v2458, %v2450
  %v2643 = vpack.c.b16 %v2459, %v2451
  %v2644 = vpack.c.b16 %v2460, %v2452
  %v2645 = vpack.c.b16 %v2469, %v2461
  %v2646 = vpack.c.b16 %v2470, %v2462
  %v2647 = vpack.c.b16 %v2471, %v2463
  %v2648 = vpack.c.b16 %v2472, %v2464
  %v2649 = vpack.c.b16 %v2473, %v2465
  %v2650 = vpack.c.b16 %v2474, %v2466
  %v2651 = vpack.c.b16 %v2475, %v2467
  %v2652 = vpack.c.b16 %v2476, %v2468
  %v2653 = vpack.c.b16 %v2485, %v2477
  %v2654 = vpack.c.b16 %v2486, %v2478
  %v2655 = vpack.c.b16 %v2487, %v2479
  %v2656 = vpack.c.b16 %v2488, %v2480
  %v2657 = vpack.c.b16 %v2489, %v2481
  %v2658 = vpack.c.b16 %v2490, %v2482
  %v2659 = vpack.c.b16 %v2491, %v2483
  %v2660 = vpack.c.b16 %v2492, %v2484
  %v2661 = vpack.c.b16 %v2501, %v2493
  %v2662 = vpack.c.b16 %v2502, %v2494
  %v2663 = vpack.c.b16 %v2503, %v2495
  %v2664 = vpack.c.b16 %v2504, %v2496
  %v2665 = vpack.c.b16 %v2505, %v2497
  %v2666 = vpack.c.b16 %v2506, %v2498
  %v2667 = vpack.c.b16 %v2507, %v2499
  %v2668 = vpack.c.b16 %v2508, %v2500
  %v2669 = vpack.c.b16 %v2517, %v2509
  %v2670 = vpack.c.b16 %v2518, %v2510
  %v2671 = vpack.c.b16 %v2519, %v2511
  %v2672 = vpack.c.b16 %v2520, %v2512
  %v2673 = vpack.c.b16 %v2521, %v2513
  %v2674 = vpack.c.b16 %v2522, %v2514
  %v2675 = vpack.c.b16 %v2523, %v2515
  %v2676 = vpack.c.b16 %v2524, %v2516
  %v2677 = vpack.c.b16 %v2533, %v2525
  %v2678 = vpack.c.b16 %v2534, %v2526
  %v2679 = vpack.c.b16 %v2535, %v2527
  %v2680 = vpack.c.b16 %v2536, %v2528
  %v2681 = vpack.c.b16 %v2537, %v2529
  %v2682 = vpack.c.b16 %v2538, %v2530
  %v2683 = vpack.c.b16 %v2539, %v2531
  %v2684 = vpack.c.b16 %v2540, %v2532
  %v2685 = vpack.c.b16 %v2549, %v2541
  %v2686 = vpack.c.b16 %v2550, %v2542
  %v2687 = vpack.c.b16 %v2551, %v2543
  %v2688 = vpack.c.b16 %v2552, %v2544
  %v2689 = vpack.c.b16 %v2553, %v2545
  %v2690 = vpack.c.b16 %v2554, %v2546
  %v2691 = vpack.c.b16 %v2555, %v2547
  %v2692 = vpack.c.b16 %v2556, %v2548
  %v2693 = vpack.c.b16 %v2565, %v2557
  %v2694 = vpack.c.b16 %v2566, %v2558
  %v2695 = vpack.c.b16 %v2567, %v2559
  %v2696 = vpack.c.b16 %v2568, %v2560
  %v2697 = vpack.c.b16 %v2569, %v2561
  %v2698 = vpack.c.b16 %v2570, %v2562
  %v2699 = vpack.c.b16 %v2571, %v2563
  %v2700 = vpack.c.b16 %v2572, %v2564
  %2829 = vmatprep.subr.bf16.mxu0 %v2574
  %2830 = vmatpush1.bf16.msra.mxu0 %v2573
  %2831 = vmatprep.subr.bf16.mxu0 %v2582
  %2832 = vmatpush1.bf16.msra.mxu0 %v2581
  %2833 = vmatprep.subr.bf16.mxu0 %v2590
  %2834 = vmatpush1.bf16.msra.mxu0 %v2589
  %2835 = vmatprep.subr.bf16.mxu0 %v2598
  %2836 = vmatpush1.bf16.msra.mxu0 %v2597
  %2837 = vmatprep.subr.bf16.mxu0 %v2606
  %2838 = vmatpush1.bf16.msra.mxu0 %v2605
  %2839 = vmatprep.subr.bf16.mxu0 %v2614
  %2840 = vmatpush1.bf16.msra.mxu0 %v2613
  %2841 = vmatprep.subr.bf16.mxu0 %v2622
  %2842 = vmatpush1.bf16.msra.mxu0 %v2621
  %2843 = vmatprep.subr.bf16.mxu0 %v2630
  %2844 = vmatpush1.bf16.msra.mxu0 %v2629
  %2845 = vmatprep.subr.bf16.mxu0 %v2638
  %2846 = vmatpush1.bf16.msra.mxu0 %v2637
  %2847 = vmatprep.subr.bf16.mxu0 %v2646
  %2848 = vmatpush1.bf16.msra.mxu0 %v2645
  %2849 = vmatprep.subr.bf16.mxu0 %v2654
  %2850 = vmatpush1.bf16.msra.mxu0 %v2653
  %2851 = vmatprep.subr.bf16.mxu0 %v2662
  %2852 = vmatpush1.bf16.msra.mxu0 %v2661
  %2853 = vmatprep.subr.bf16.mxu0 %v2670
  %2854 = vmatpush1.bf16.msra.mxu0 %v2669
  %2855 = vmatprep.subr.bf16.mxu0 %v2678
  %2856 = vmatpush1.bf16.msra.mxu0 %v2677
  %2857 = vmatprep.subr.bf16.mxu0 %v2686
  %2858 = vmatpush1.bf16.msra.mxu0 %v2685
  %2859 = vmatprep.subr.bf16.mxu0 %v2694
  %2860 = vmatpush1.bf16.msra.mxu0 %v2693
  %2861 = vmatprep.mubr.bf16.mxu0 0
  %2862 = vmatmul.mubr.bf16.gmra.mrb[0].mxu0 0
  %v2863 = vpop.f32.mrb[0].mxu0
  %v2864 = vadd.f32 0.0, %v2863
  %v2865 = vpop.f32.mrb[0].mxu0
  %v2866 = vadd.f32 0.0, %v2865
  %v2867 = vpop.f32.mrb[0].mxu0
  %v2868 = vpop.f32.mrb[0].mxu0
  %2869 = vdwg.mxu0
  %2870 = vmatprep.subr.bf16.mxu0 %v2576
  %2871 = vmatpush1.bf16.msra.mxu0 %v2575
  %2872 = vmatprep.subr.bf16.mxu0 %v2584
  %2873 = vmatpush1.bf16.msra.mxu0 %v2583
  %2874 = vmatprep.subr.bf16.mxu0 %v2592
  %2875 = vmatpush1.bf16.msra.mxu0 %v2591
  %2876 = vmatprep.subr.bf16.mxu0 %v2600
  %2877 = vmatpush1.bf16.msra.mxu0 %v2599
  %2878 = vmatprep.subr.bf16.mxu0 %v2608
  %2879 = vmatpush1.bf16.msra.mxu0 %v2607
  %2880 = vmatprep.subr.bf16.mxu0 %v2616
  %2881 = vmatpush1.bf16.msra.mxu0 %v2615
  %2882 = vmatprep.subr.bf16.mxu0 %v2624
  %2883 = vmatpush1.bf16.msra.mxu0 %v2623
  %2884 = vmatprep.subr.bf16.mxu0 %v2632
  %2885 = vmatpush1.bf16.msra.mxu0 %v2631
  %2886 = vmatprep.subr.bf16.mxu0 %v2640
  %2887 = vmatpush1.bf16.msra.mxu0 %v2639
  %2888 = vmatprep.subr.bf16.mxu0 %v2648
  %2889 = vmatpush1.bf16.msra.mxu0 %v2647
  %2890 = vmatprep.subr.bf16.mxu0 %v2656
  %2891 = vmatpush1.bf16.msra.mxu0 %v2655
  %2892 = vmatprep.subr.bf16.mxu0 %v2664
  %2893 = vmatpush1.bf16.msra.mxu0 %v2663
  %2894 = vmatprep.subr.bf16.mxu0 %v2672
  %2895 = vmatpush1.bf16.msra.mxu0 %v2671
  %2896 = vmatprep.subr.bf16.mxu0 %v2680
  %2897 = vmatpush1.bf16.msra.mxu0 %v2679
  %2898 = vmatprep.subr.bf16.mxu0 %v2688
  %2899 = vmatpush1.bf16.msra.mxu0 %v2687
  %2900 = vmatprep.subr.bf16.mxu0 %v2696
  %2901 = vmatpush1.bf16.msra.mxu0 %v2695
  %2902 = vmatprep.mubr.bf16.mxu0 0
  %2903 = vmatmul.mubr.bf16.gmra.mrb[0].mxu0 0
  %v2904 = vpop.f32.mrb[0].mxu0
  %v2905 = vadd.f32 0.0, %v2904
  %v2906 = vpop.f32.mrb[0].mxu0
  %v2907 = vadd.f32 0.0, %v2906
  %v2908 = vpop.f32.mrb[0].mxu0
  %v2909 = vpop.f32.mrb[0].mxu0
  %2910 = vdwg.mxu0
  %2911 = vmatprep.subr.bf16.mxu0 %v2578
  %2912 = vmatpush1.bf16.msra.mxu0 %v2577
  %2913 = vmatprep.subr.bf16.mxu0 %v2586
  %2914 = vmatpush1.bf16.msra.mxu0 %v2585
  %2915 = vmatprep.subr.bf16.mxu0 %v2594
  %2916 = vmatpush1.bf16.msra.mxu0 %v2593
  %2917 = vmatprep.subr.bf16.mxu0 %v2602
  %2918 = vmatpush1.bf16.msra.mxu0 %v2601
  %2919 = vmatprep.subr.bf16.mxu0 %v2610
  %2920 = vmatpush1.bf16.msra.mxu0 %v2609
  %2921 = vmatprep.subr.bf16.mxu0 %v2618
  %2922 = vmatpush1.bf16.msra.mxu0 %v2617
  %2923 = vmatprep.subr.bf16.mxu0 %v2626
  %2924 = vmatpush1.bf16.msra.mxu0 %v2625
  %2925 = vmatprep.subr.bf16.mxu0 %v2634
  %2926 = vmatpush1.bf16.msra.mxu0 %v2633
  %2927 = vmatprep.subr.bf16.mxu0 %v2642
  %2928 = vmatpush1.bf16.msra.mxu0 %v2641
  %2929 = vmatprep.subr.bf16.mxu0 %v2650
  %2930 = vmatpush1.bf16.msra.mxu0 %v2649
  %2931 = vmatprep.subr.bf16.mxu0 %v2658
  %2932 = vmatpush1.bf16.msra.mxu0 %v2657
  %2933 = vmatprep.subr.bf16.mxu0 %v2666
  %2934 = vmatpush1.bf16.msra.mxu0 %v2665
  %2935 = vmatprep.subr.bf16.mxu0 %v2674
  %2936 = vmatpush1.bf16.msra.mxu0 %v2673
  %2937 = vmatprep.subr.bf16.mxu0 %v2682
  %2938 = vmatpush1.bf16.msra.mxu0 %v2681
  %2939 = vmatprep.subr.bf16.mxu0 %v2690
  %2940 = vmatpush1.bf16.msra.mxu0 %v2689
  %2941 = vmatprep.subr.bf16.mxu0 %v2698
  %2942 = vmatpush1.bf16.msra.mxu0 %v2697
  %2943 = vmatprep.mubr.bf16.mxu0 0
  %2944 = vmatmul.mubr.bf16.gmra.mrb[0].mxu0 0
  %v2945 = vpop.f32.mrb[0].mxu0
  %v2946 = vadd.f32 0.0, %v2945
  %v2947 = vpop.f32.mrb[0].mxu0
  %v2948 = vadd.f32 0.0, %v2947
  %v2949 = vpop.f32.mrb[0].mxu0
  %v2950 = vpop.f32.mrb[0].mxu0
  %2951 = vdwg.mxu0
  %2952 = vmatprep.subr.bf16.mxu0 %v2580
  %2953 = vmatpush1.bf16.msra.mxu0 %v2579
  %2954 = vmatprep.subr.bf16.mxu0 %v2588
  %2955 = vmatpush1.bf16.msra.mxu0 %v2587
  %2956 = vmatprep.subr.bf16.mxu0 %v2596
  %2957 = vmatpush1.bf16.msra.mxu0 %v2595
  %2958 = vmatprep.subr.bf16.mxu0 %v2604
  %2959 = vmatpush1.bf16.msra.mxu0 %v2603
  %2960 = vmatprep.subr.bf16.mxu0 %v2612
  %2961 = vmatpush1.bf16.msra.mxu0 %v2611
  %2962 = vmatprep.subr.bf16.mxu0 %v2620
  %2963 = vmatpush1.bf16.msra.mxu0 %v2619
  %2964 = vmatprep.subr.bf16.mxu0 %v2628
  %2965 = vmatpush1.bf16.msra.mxu0 %v2627
  %2966 = vmatprep.subr.bf16.mxu0 %v2636
  %2967 = vmatpush1.bf16.msra.mxu0 %v2635
  %2968 = vmatprep.subr.bf16.mxu0 %v2644
  %2969 = vmatpush1.bf16.msra.mxu0 %v2643
  %2970 = vmatprep.subr.bf16.mxu0 %v2652
  %2971 = vmatpush1.bf16.msra.mxu0 %v2651
  %2972 = vmatprep.subr.bf16.mxu0 %v2660
  %2973 = vmatpush1.bf16.msra.mxu0 %v2659
  %2974 = vmatprep.subr.bf16.mxu0 %v2668
  %2975 = vmatpush1.bf16.msra.mxu0 %v2667
  %2976 = vmatprep.subr.bf16.mxu0 %v2676
  %2977 = vmatpush1.bf16.msra.mxu0 %v2675
  %2978 = vmatprep.subr.bf16.mxu0 %v2684
  %2979 = vmatpush1.bf16.msra.mxu0 %v2683
  %2980 = vmatprep.subr.bf16.mxu0 %v2692
  %2981 = vmatpush1.bf16.msra.mxu0 %v2691
  %2982 = vmatprep.subr.bf16.mxu0 %v2700
  %2983 = vmatpush1.bf16.msra.mxu0 %v2699
  %2984 = vmatprep.mubr.bf16.mxu0 0
  %2985 = vmatmul.mubr.bf16.gmra.mrb[0].mxu0 0
  %v2986 = vpop.f32.mrb[0].mxu0
  %v2987 = vadd.f32 0.0, %v2986
  %v2988 = vpop.f32.mrb[0].mxu0
  %v2989 = vadd.f32 0.0, %v2988
  %v2990 = vpop.f32.mrb[0].mxu0
  %v2991 = vpop.f32.mrb[0].mxu0
  %2992 = vdwg.mxu0
  %v3001 = vcombine.low %v2864, %v2866
  %v3002 = vcombine.low %v2905, %v2907
  %v3003 = vcombine.low %v2946, %v2948
  %v3004 = vcombine.low %v2987, %v2989
  %v3006 = vunpack.c.l.s4 1966171168
  %v3007 = vunpack.c.0.s8 %v3006
  %v3008 = vlaneseq
  %v3009 = vshrl.u32 %v3008, 7
  %v3010 = vsub.s32 %v3007, %v3009
  %v3011 = vrot.slane %v3001, %v3010
  %v3013 = vunpack.c.l.s4 1966171168
  %v3014 = vunpack.c.0.s8 %v3013
  %v3015 = vlaneseq
  %v3016 = vshrl.u32 %v3015, 7
  %v3017 = vsub.s32 %v3014, %v3016
  %v3018 = vrot.slane %v3002, %v3017
  %v3020 = vunpack.c.l.s4 1966171168
  %v3021 = vunpack.c.0.s8 %v3020
  %v3022 = vlaneseq
  %v3023 = vshrl.u32 %v3022, 7
  %v3024 = vsub.s32 %v3021, %v3023
  %v3025 = vrot.slane %v3003, %v3024
  %v3027 = vunpack.c.l.s4 1966171168
  %v3028 = vunpack.c.0.s8 %v3027
  %v3029 = vlaneseq
  %v3030 = vshrl.u32 %v3029, 7
  %v3031 = vsub.s32 %v3028, %v3030
  %v3032 = vrot.slane %v3004, %v3031
  %v3033 = vcombine.low %v3011, %v3018
  %v3034 = vcombine.low %v3025, %v3032
  %v3036 = vunpack.c.l.s4 1966171168
  %v3037 = vunpack.c.0.s8 %v3036
  %v3038 = vlaneseq
  %v3039 = vshrl.u32 %v3038, 7
  %v3040 = vsub.s32 %v3037, %v3039
  %v3041 = vrot.slane %v3033, %v3040
  %v3043 = vunpack.c.l.s4 1966171168
  %v3044 = vunpack.c.0.s8 %v3043
  %v3045 = vlaneseq
  %v3046 = vshrl.u32 %v3045, 7
  %v3047 = vsub.s32 %v3044, %v3046
  %v3048 = vrot.slane %v3034, %v3047
  %v3049 = vcombine.low %v3041, %v3048
  %v3051 = vadd.f32 %v2188, %v3049
  %v3052 = vxor.u32 %v3051, 2147483648
  %v3053 = vmul.f32 %v3052, 1.442695
  %v3054 = vpow.pop %v3053
  %v3055 = vadd.f32 %v3054, 1.0
  %v3056 = vrcp.pop %v3055
  %v3057 = vmul.f32 1.0, %v3056
  %v3059 = vrot.slane %v3051, 2
  %v3061 = vxor.u32 %v3059, 2147483648
  %v3062 = vmul.f32 %v3061, 1.442695
  %v3063 = vpow.pop %v3062
  %v3064 = vadd.f32 %v3063, 1.0
  %v3065 = vrcp.pop %v3064
  %v3066 = vmul.f32 1.0, %v3065
  %v3067 = vrot.slane %v3051, 4
  %v3069 = vxor.u32 %v3067, 2147483648
  %v3070 = vmul.f32 %v3069, 1.442695
  %v3071 = vpow.pop %v3070
  %v3072 = vadd.f32 %v3071, 1.0
  %v3073 = vrcp.pop %v3072
  %v3074 = vmul.f32 1.0, %v3073
  %v3075 = vrot.slane %v3051, 6
  %v3077 = vtanh.pop %v3075
  %v3078 = vmul.f32 %v3066, 0.0
  %v3079 = vmul.f32 %v3057, %v3077
  %v3080 = vadd.f32 %v3078, %v3079
  %v3081 = vtanh.pop %v3080
  %v3082 = vmul.f32 %v3074, %v3081
  %s3083 = scalar_lea.vmem %s0, 8
  %v3084 = vld [vmem:[%s3083] sm:$0xff]
  %3085 = vmatprep.subr.bf16.mxu0 %v804
  %3086 = vmatpush1.bf16.msra.mxu0 %v803
  %3087 = vmatprep.subr.bf16.mxu0 %v812
  %3088 = vmatpush1.bf16.msra.mxu0 %v811
  %3089 = vmatprep.subr.bf16.mxu0 %v820
  %3090 = vmatpush1.bf16.msra.mxu0 %v819
  %3091 = vmatprep.subr.bf16.mxu0 %v828
  %3092 = vmatpush1.bf16.msra.mxu0 %v827
  %3093 = vmatprep.subr.bf16.mxu0 %v836
  %3094 = vmatpush1.bf16.msra.mxu0 %v835
  %3095 = vmatprep.subr.bf16.mxu0 %v844
  %3096 = vmatpush1.bf16.msra.mxu0 %v843
  %3097 = vmatprep.subr.bf16.mxu0 %v852
  %3098 = vmatpush1.bf16.msra.mxu0 %v851
  %3099 = vmatprep.subr.bf16.mxu0 %v860
  %3100 = vmatpush1.bf16.msra.mxu0 %v859
  %3101 = vmatprep.subr.bf16.mxu0 %v868
  %3102 = vmatpush1.bf16.msra.mxu0 %v867
  %3103 = vmatprep.subr.bf16.mxu0 %v876
  %3104 = vmatpush1.bf16.msra.mxu0 %v875
  %3105 = vmatprep.subr.bf16.mxu0 %v884
  %3106 = vmatpush1.bf16.msra.mxu0 %v883
  %3107 = vmatprep.subr.bf16.mxu0 %v892
  %3108 = vmatpush1.bf16.msra.mxu0 %v891
  %3109 = vmatprep.subr.bf16.mxu0 %v900
  %3110 = vmatpush1.bf16.msra.mxu0 %v899
  %3111 = vmatprep.subr.bf16.mxu0 %v908
  %3112 = vmatpush1.bf16.msra.mxu0 %v907
  %3113 = vmatprep.subr.bf16.mxu0 %v916
  %3114 = vmatpush1.bf16.msra.mxu0 %v915
  %3115 = vmatprep.subr.bf16.mxu0 %v924
  %3116 = vmatpush1.bf16.msra.mxu0 %v923
  %3117 = vmatprep.mubr.bf16.mxu0 %v1325
  %3118 = vmatmul.mubr.bf16.gmra.mrb[0].mxu0 %v1324
  %v3119 = vpop.f32.mrb[0].mxu0
  %v3120 = vadd.f32 0.0, %v3119
  %v3121 = vpop.f32.mrb[0].mxu0
  %v3122 = vadd.f32 0.0, %v3121
  %v3123 = vpop.f32.mrb[0].mxu0
  %v3124 = vpop.f32.mrb[0].mxu0
  %3125 = vdwg.mxu0
  %3126 = vmatprep.subr.bf16.mxu0 %v806
  %3127 = vmatpush1.bf16.msra.mxu0 %v805
  %3128 = vmatprep.subr.bf16.mxu0 %v814
  %3129 = vmatpush1.bf16.msra.mxu0 %v813
  %3130 = vmatprep.subr.bf16.mxu0 %v822
  %3131 = vmatpush1.bf16.msra.mxu0 %v821
  %3132 = vmatprep.subr.bf16.mxu0 %v830
  %3133 = vmatpush1.bf16.msra.mxu0 %v829
  %3134 = vmatprep.subr.bf16.mxu0 %v838
  %3135 = vmatpush1.bf16.msra.mxu0 %v837
  %3136 = vmatprep.subr.bf16.mxu0 %v846
  %3137 = vmatpush1.bf16.msra.mxu0 %v845
  %3138 = vmatprep.subr.bf16.mxu0 %v854
  %3139 = vmatpush1.bf16.msra.mxu0 %v853
  %3140 = vmatprep.subr.bf16.mxu0 %v862
  %3141 = vmatpush1.bf16.msra.mxu0 %v861
  %3142 = vmatprep.subr.bf16.mxu0 %v870
  %3143 = vmatpush1.bf16.msra.mxu0 %v869
  %3144 = vmatprep.subr.bf16.mxu0 %v878
  %3145 = vmatpush1.bf16.msra.mxu0 %v877
  %3146 = vmatprep.subr.bf16.mxu0 %v886
  %3147 = vmatpush1.bf16.msra.mxu0 %v885
  %3148 = vmatprep.subr.bf16.mxu0 %v894
  %3149 = vmatpush1.bf16.msra.mxu0 %v893
  %3150 = vmatprep.subr.bf16.mxu0 %v902
  %3151 = vmatpush1.bf16.msra.mxu0 %v901
  %3152 = vmatprep.subr.bf16.mxu0 %v910
  %3153 = vmatpush1.bf16.msra.mxu0 %v909
  %3154 = vmatprep.subr.bf16.mxu0 %v918
  %3155 = vmatpush1.bf16.msra.mxu0 %v917
  %3156 = vmatprep.subr.bf16.mxu0 %v926
  %3157 = vmatpush1.bf16.msra.mxu0 %v925
  %3158 = vmatprep.mubr.bf16.mxu0 %v1325
  %3159 = vmatmul.mubr.bf16.gmra.mrb[0].mxu0 %v1324
  %v3160 = vpop.f32.mrb[0].mxu0
  %v3161 = vadd.f32 0.0, %v3160
  %v3162 = vpop.f32.mrb[0].mxu0
  %v3163 = vadd.f32 0.0, %v3162
  %v3164 = vpop.f32.mrb[0].mxu0
  %v3165 = vpop.f32.mrb[0].mxu0
  %3166 = vdwg.mxu0
  %3167 = vmatprep.subr.bf16.mxu0 %v808
  %3168 = vmatpush1.bf16.msra.mxu0 %v807
  %3169 = vmatprep.subr.bf16.mxu0 %v816
  %3170 = vmatpush1.bf16.msra.mxu0 %v815
  %3171 = vmatprep.subr.bf16.mxu0 %v824
  %3172 = vmatpush1.bf16.msra.mxu0 %v823
  %3173 = vmatprep.subr.bf16.mxu0 %v832
  %3174 = vmatpush1.bf16.msra.mxu0 %v831
  %3175 = vmatprep.subr.bf16.mxu0 %v840
  %3176 = vmatpush1.bf16.msra.mxu0 %v839
  %3177 = vmatprep.subr.bf16.mxu0 %v848
  %3178 = vmatpush1.bf16.msra.mxu0 %v847
  %3179 = vmatprep.subr.bf16.mxu0 %v856
  %3180 = vmatpush1.bf16.msra.mxu0 %v855
  %3181 = vmatprep.subr.bf16.mxu0 %v864
  %3182 = vmatpush1.bf16.msra.mxu0 %v863
  %3183 = vmatprep.subr.bf16.mxu0 %v872
  %3184 = vmatpush1.bf16.msra.mxu0 %v871
  %3185 = vmatprep.subr.bf16.mxu0 %v880
  %3186 = vmatpush1.bf16.msra.mxu0 %v879
  %3187 = vmatprep.subr.bf16.mxu0 %v888
  %3188 = vmatpush1.bf16.msra.mxu0 %v887
  %3189 = vmatprep.subr.bf16.mxu0 %v896
  %3190 = vmatpush1.bf16.msra.mxu0 %v895
  %3191 = vmatprep.subr.bf16.mxu0 %v904
  %3192 = vmatpush1.bf16.msra.mxu0 %v903
  %3193 = vmatprep.subr.bf16.mxu0 %v912
  %3194 = vmatpush1.bf16.msra.mxu0 %v911
  %3195 = vmatprep.subr.bf16.mxu0 %v920
  %3196 = vmatpush1.bf16.msra.mxu0 %v919
  %3197 = vmatprep.subr.bf16.mxu0 %v928
  %3198 = vmatpush1.bf16.msra.mxu0 %v927
  %3199 = vmatprep.mubr.bf16.mxu0 %v1325
  %3200 = vmatmul.mubr.bf16.gmra.mrb[0].mxu0 %v1324
  %v3201 = vpop.f32.mrb[0].mxu0
  %v3202 = vadd.f32 0.0, %v3201
  %v3203 = vpop.f32.mrb[0].mxu0
  %v3204 = vadd.f32 0.0, %v3203
  %v3205 = vpop.f32.mrb[0].mxu0
  %v3206 = vpop.f32.mrb[0].mxu0
  %3207 = vdwg.mxu0
  %3208 = vmatprep.subr.bf16.mxu0 %v810
  %3209 = vmatpush1.bf16.msra.mxu0 %v809
  %3210 = vmatprep.subr.bf16.mxu0 %v818
  %3211 = vmatpush1.bf16.msra.mxu0 %v817
  %3212 = vmatprep.subr.bf16.mxu0 %v826
  %3213 = vmatpush1.bf16.msra.mxu0 %v825
  %3214 = vmatprep.subr.bf16.mxu0 %v834
  %3215 = vmatpush1.bf16.msra.mxu0 %v833
  %3216 = vmatprep.subr.bf16.mxu0 %v842
  %3217 = vmatpush1.bf16.msra.mxu0 %v841
  %3218 = vmatprep.subr.bf16.mxu0 %v850
  %3219 = vmatpush1.bf16.msra.mxu0 %v849
  %3220 = vmatprep.subr.bf16.mxu0 %v858
  %3221 = vmatpush1.bf16.msra.mxu0 %v857
  %3222 = vmatprep.subr.bf16.mxu0 %v866
  %3223 = vmatpush1.bf16.msra.mxu0 %v865
  %3224 = vmatprep.subr.bf16.mxu0 %v874
  %3225 = vmatpush1.bf16.msra.mxu0 %v873
  %3226 = vmatprep.subr.bf16.mxu0 %v882
  %3227 = vmatpush1.bf16.msra.mxu0 %v881
  %3228 = vmatprep.subr.bf16.mxu0 %v890
  %3229 = vmatpush1.bf16.msra.mxu0 %v889
  %3230 = vmatprep.subr.bf16.mxu0 %v898
  %3231 = vmatpush1.bf16.msra.mxu0 %v897
  %3232 = vmatprep.subr.bf16.mxu0 %v906
  %3233 = vmatpush1.bf16.msra.mxu0 %v905
  %3234 = vmatprep.subr.bf16.mxu0 %v914
  %3235 = vmatpush1.bf16.msra.mxu0 %v913
  %3236 = vmatprep.subr.bf16.mxu0 %v922
  %3237 = vmatpush1.bf16.msra.mxu0 %v921
  %3238 = vmatprep.subr.bf16.mxu0 %v930
  %3239 = vmatpush1.bf16.msra.mxu0 %v929
  %3240 = vmatprep.mubr.bf16.mxu0 %v1325
  %3241 = vmatmul.mubr.bf16.gmra.mrb[0].mxu0 %v1324
  %v3242 = vpop.f32.mrb[0].mxu0
  %v3243 = vadd.f32 0.0, %v3242
  %v3244 = vpop.f32.mrb[0].mxu0
  %v3245 = vadd.f32 0.0, %v3244
  %v3246 = vpop.f32.mrb[0].mxu0
  %v3247 = vpop.f32.mrb[0].mxu0
  %3248 = vdwg.mxu0
  %v3257 = vcombine.low %v3120, %v3122
  %v3258 = vcombine.low %v3161, %v3163
  %v3259 = vcombine.low %v3202, %v3204
  %v3260 = vcombine.low %v3243, %v3245
  %v3262 = vunpack.c.l.s4 1966171168
  %v3263 = vunpack.c.0.s8 %v3262
  %v3264 = vlaneseq
  %v3265 = vshrl.u32 %v3264, 7
  %v3266 = vsub.s32 %v3263, %v3265
  %v3267 = vrot.slane %v3257, %v3266
  %v3269 = vunpack.c.l.s4 1966171168
  %v3270 = vunpack.c.0.s8 %v3269
  %v3271 = vlaneseq
  %v3272 = vshrl.u32 %v3271, 7
  %v3273 = vsub.s32 %v3270, %v3272
  %v3274 = vrot.slane %v3258, %v3273
  %v3276 = vunpack.c.l.s4 1966171168
  %v3277 = vunpack.c.0.s8 %v3276
  %v3278 = vlaneseq
  %v3279 = vshrl.u32 %v3278, 7
  %v3280 = vsub.s32 %v3277, %v3279
  %v3281 = vrot.slane %v3259, %v3280
  %v3283 = vunpack.c.l.s4 1966171168
  %v3284 = vunpack.c.0.s8 %v3283
  %v3285 = vlaneseq
  %v3286 = vshrl.u32 %v3285, 7
  %v3287 = vsub.s32 %v3284, %v3286
  %v3288 = vrot.slane %v3260, %v3287
  %v3289 = vcombine.low %v3267, %v3274
  %v3290 = vcombine.low %v3281, %v3288
  %v3292 = vunpack.c.l.s4 1966171168
  %v3293 = vunpack.c.0.s8 %v3292
  %v3294 = vlaneseq
  %v3295 = vshrl.u32 %v3294, 7
  %v3296 = vsub.s32 %v3293, %v3295
  %v3297 = vrot.slane %v3289, %v3296
  %v3299 = vunpack.c.l.s4 1966171168
  %v3300 = vunpack.c.0.s8 %v3299
  %v3301 = vlaneseq
  %v3302 = vshrl.u32 %v3301, 7
  %v3303 = vsub.s32 %v3300, %v3302
  %v3304 = vrot.slane %v3290, %v3303
  %v3305 = vcombine.low %v3297, %v3304
  %v3307 = vadd.f32 %v3084, %v3305
  %v3308 = vxor.u32 %v3307, 2147483648
  %v3309 = vmul.f32 %v3308, 1.442695
  %v3310 = vpow.pop %v3309
  %v3311 = vadd.f32 %v3310, 1.0
  %v3312 = vrcp.pop %v3311
  %v3313 = vmul.f32 1.0, %v3312
  %v3315 = vrot.slane %v3307, 2
  %v3317 = vxor.u32 %v3315, 2147483648
  %v3318 = vmul.f32 %v3317, 1.442695
  %v3319 = vpow.pop %v3318
  %v3320 = vadd.f32 %v3319, 1.0
  %v3321 = vrcp.pop %v3320
  %v3322 = vmul.f32 1.0, %v3321
  %v3323 = vrot.slane %v3307, 4
  %v3325 = vxor.u32 %v3323, 2147483648
  %v3326 = vmul.f32 %v3325, 1.442695
  %v3327 = vpow.pop %v3326
  %v3328 = vadd.f32 %v3327, 1.0
  %v3329 = vrcp.pop %v3328
  %v3330 = vmul.f32 1.0, %v3329
  %v3331 = vrot.slane %v3307, 6
  %v3333 = vtanh.pop %v3331
  %v3334 = vmul.f32 %v3322, %v1310
  %v3335 = vmul.f32 %v3313, %v3333
  %v3336 = vadd.f32 %v3334, %v3335
  %v3337 = vtanh.pop %v3336
  %v3338 = vmul.f32 %v3330, %v3337
  %v3340 = vlaneseq
  %v3341 = vshrl.u32 %v3340, 7
  %v3342 = vsub.s32 0, %v3341
  %v3343 = vrot.slane %v3338, %v3342
  %v3344 = vlaneseq
  %v3345 = vshrl.u32 %v3344, 7
  %v3346 = vsub.s32 1, %v3345
  %v3347 = vrot.slane %v3338, %v3346
  %v3350 = vpack.c.bf16 %v3343, %v3343
  %v3351 = vpack.c.bf16 %v3347, %v3347
  %3352 = vmatprep.subr.bf16.mxu0 %v1711
  %3353 = vmatpush1.bf16.msra.mxu0 %v1710
  %3354 = vmatprep.subr.bf16.mxu0 %v1719
  %3355 = vmatpush1.bf16.msra.mxu0 %v1718
  %3356 = vmatprep.subr.bf16.mxu0 %v1727
  %3357 = vmatpush1.bf16.msra.mxu0 %v1726
  %3358 = vmatprep.subr.bf16.mxu0 %v1735
  %3359 = vmatpush1.bf16.msra.mxu0 %v1734
  %3360 = vmatprep.subr.bf16.mxu0 %v1743
  %3361 = vmatpush1.bf16.msra.mxu0 %v1742
  %3362 = vmatprep.subr.bf16.mxu0 %v1751
  %3363 = vmatpush1.bf16.msra.mxu0 %v1750
  %3364 = vmatprep.subr.bf16.mxu0 %v1759
  %3365 = vmatpush1.bf16.msra.mxu0 %v1758
  %3366 = vmatprep.subr.bf16.mxu0 %v1767
  %3367 = vmatpush1.bf16.msra.mxu0 %v1766
  %3368 = vmatprep.subr.bf16.mxu0 %v1775
  %3369 = vmatpush1.bf16.msra.mxu0 %v1774
  %3370 = vmatprep.subr.bf16.mxu0 %v1783
  %3371 = vmatpush1.bf16.msra.mxu0 %v1782
  %3372 = vmatprep.subr.bf16.mxu0 %v1791
  %3373 = vmatpush1.bf16.msra.mxu0 %v1790
  %3374 = vmatprep.subr.bf16.mxu0 %v1799
  %3375 = vmatpush1.bf16.msra.mxu0 %v1798
  %3376 = vmatprep.subr.bf16.mxu0 %v1807
  %3377 = vmatpush1.bf16.msra.mxu0 %v1806
  %3378 = vmatprep.subr.bf16.mxu0 %v1815
  %3379 = vmatpush1.bf16.msra.mxu0 %v1814
  %3380 = vmatprep.subr.bf16.mxu0 %v1823
  %3381 = vmatpush1.bf16.msra.mxu0 %v1822
  %3382 = vmatprep.subr.bf16.mxu0 %v1831
  %3383 = vmatpush1.bf16.msra.mxu0 %v1830
  %3384 = vmatprep.mubr.bf16.mxu0 %v3351
  %3385 = vmatmul.mubr.bf16.gmra.mrb[0].mxu0 %v3350
  %v3386 = vpop.f32.mrb[0].mxu0
  %v3387 = vadd.f32 0.0, %v3386
  %v3388 = vpop.f32.mrb[0].mxu0
  %v3389 = vadd.f32 0.0, %v3388
  %v3390 = vpop.f32.mrb[0].mxu0
  %v3391 = vpop.f32.mrb[0].mxu0
  %3392 = vdwg.mxu0
  %3393 = vmatprep.subr.bf16.mxu0 %v1713
  %3394 = vmatpush1.bf16.msra.mxu0 %v1712
  %3395 = vmatprep.subr.bf16.mxu0 %v1721
  %3396 = vmatpush1.bf16.msra.mxu0 %v1720
  %3397 = vmatprep.subr.bf16.mxu0 %v1729
  %3398 = vmatpush1.bf16.msra.mxu0 %v1728
  %3399 = vmatprep.subr.bf16.mxu0 %v1737
  %3400 = vmatpush1.bf16.msra.mxu0 %v1736
  %3401 = vmatprep.subr.bf16.mxu0 %v1745
  %3402 = vmatpush1.bf16.msra.mxu0 %v1744
  %3403 = vmatprep.subr.bf16.mxu0 %v1753
  %3404 = vmatpush1.bf16.msra.mxu0 %v1752
  %3405 = vmatprep.subr.bf16.mxu0 %v1761
  %3406 = vmatpush1.bf16.msra.mxu0 %v1760
  %3407 = vmatprep.subr.bf16.mxu0 %v1769
  %3408 = vmatpush1.bf16.msra.mxu0 %v1768
  %3409 = vmatprep.subr.bf16.mxu0 %v1777
  %3410 = vmatpush1.bf16.msra.mxu0 %v1776
  %3411 = vmatprep.subr.bf16.mxu0 %v1785
  %3412 = vmatpush1.bf16.msra.mxu0 %v1784
  %3413 = vmatprep.subr.bf16.mxu0 %v1793
  %3414 = vmatpush1.bf16.msra.mxu0 %v1792
  %3415 = vmatprep.subr.bf16.mxu0 %v1801
  %3416 = vmatpush1.bf16.msra.mxu0 %v1800
  %3417 = vmatprep.subr.bf16.mxu0 %v1809
  %3418 = vmatpush1.bf16.msra.mxu0 %v1808
  %3419 = vmatprep.subr.bf16.mxu0 %v1817
  %3420 = vmatpush1.bf16.msra.mxu0 %v1816
  %3421 = vmatprep.subr.bf16.mxu0 %v1825
  %3422 = vmatpush1.bf16.msra.mxu0 %v1824
  %3423 = vmatprep.subr.bf16.mxu0 %v1833
  %3424 = vmatpush1.bf16.msra.mxu0 %v1832
  %3425 = vmatprep.mubr.bf16.mxu0 %v3351
  %3426 = vmatmul.mubr.bf16.gmra.mrb[0].mxu0 %v3350
  %v3427 = vpop.f32.mrb[0].mxu0
  %v3428 = vadd.f32 0.0, %v3427
  %v3429 = vpop.f32.mrb[0].mxu0
  %v3430 = vadd.f32 0.0, %v3429
  %v3431 = vpop.f32.mrb[0].mxu0
  %v3432 = vpop.f32.mrb[0].mxu0
  %3433 = vdwg.mxu0
  %3434 = vmatprep.subr.bf16.mxu0 %v1715
  %3435 = vmatpush1.bf16.msra.mxu0 %v1714
  %3436 = vmatprep.subr.bf16.mxu0 %v1723
  %3437 = vmatpush1.bf16.msra.mxu0 %v1722
  %3438 = vmatprep.subr.bf16.mxu0 %v1731
  %3439 = vmatpush1.bf16.msra.mxu0 %v1730
  %3440 = vmatprep.subr.bf16.mxu0 %v1739
  %3441 = vmatpush1.bf16.msra.mxu0 %v1738
  %3442 = vmatprep.subr.bf16.mxu0 %v1747
  %3443 = vmatpush1.bf16.msra.mxu0 %v1746
  %3444 = vmatprep.subr.bf16.mxu0 %v1755
  %3445 = vmatpush1.bf16.msra.mxu0 %v1754
  %3446 = vmatprep.subr.bf16.mxu0 %v1763
  %3447 = vmatpush1.bf16.msra.mxu0 %v1762
  %3448 = vmatprep.subr.bf16.mxu0 %v1771
  %3449 = vmatpush1.bf16.msra.mxu0 %v1770
  %3450 = vmatprep.subr.bf16.mxu0 %v1779
  %3451 = vmatpush1.bf16.msra.mxu0 %v1778
  %3452 = vmatprep.subr.bf16.mxu0 %v1787
  %3453 = vmatpush1.bf16.msra.mxu0 %v1786
  %3454 = vmatprep.subr.bf16.mxu0 %v1795
  %3455 = vmatpush1.bf16.msra.mxu0 %v1794
  %3456 = vmatprep.subr.bf16.mxu0 %v1803
  %3457 = vmatpush1.bf16.msra.mxu0 %v1802
  %3458 = vmatprep.subr.bf16.mxu0 %v1811
  %3459 = vmatpush1.bf16.msra.mxu0 %v1810
  %3460 = vmatprep.subr.bf16.mxu0 %v1819
  %3461 = vmatpush1.bf16.msra.mxu0 %v1818
  %3462 = vmatprep.subr.bf16.mxu0 %v1827
  %3463 = vmatpush1.bf16.msra.mxu0 %v1826
  %3464 = vmatprep.subr.bf16.mxu0 %v1835
  %3465 = vmatpush1.bf16.msra.mxu0 %v1834
  %3466 = vmatprep.mubr.bf16.mxu0 %v3351
  %3467 = vmatmul.mubr.bf16.gmra.mrb[0].mxu0 %v3350
  %v3468 = vpop.f32.mrb[0].mxu0
  %v3469 = vadd.f32 0.0, %v3468
  %v3470 = vpop.f32.mrb[0].mxu0
  %v3471 = vadd.f32 0.0, %v3470
  %v3472 = vpop.f32.mrb[0].mxu0
  %v3473 = vpop.f32.mrb[0].mxu0
  %3474 = vdwg.mxu0
  %3475 = vmatprep.subr.bf16.mxu0 %v1717
  %3476 = vmatpush1.bf16.msra.mxu0 %v1716
  %3477 = vmatprep.subr.bf16.mxu0 %v1725
  %3478 = vmatpush1.bf16.msra.mxu0 %v1724
  %3479 = vmatprep.subr.bf16.mxu0 %v1733
  %3480 = vmatpush1.bf16.msra.mxu0 %v1732
  %3481 = vmatprep.subr.bf16.mxu0 %v1741
  %3482 = vmatpush1.bf16.msra.mxu0 %v1740
  %3483 = vmatprep.subr.bf16.mxu0 %v1749
  %3484 = vmatpush1.bf16.msra.mxu0 %v1748
  %3485 = vmatprep.subr.bf16.mxu0 %v1757
  %3486 = vmatpush1.bf16.msra.mxu0 %v1756
  %3487 = vmatprep.subr.bf16.mxu0 %v1765
  %3488 = vmatpush1.bf16.msra.mxu0 %v1764
  %3489 = vmatprep.subr.bf16.mxu0 %v1773
  %3490 = vmatpush1.bf16.msra.mxu0 %v1772
  %3491 = vmatprep.subr.bf16.mxu0 %v1781
  %3492 = vmatpush1.bf16.msra.mxu0 %v1780
  %3493 = vmatprep.subr.bf16.mxu0 %v1789
  %3494 = vmatpush1.bf16.msra.mxu0 %v1788
  %3495 = vmatprep.subr.bf16.mxu0 %v1797
  %3496 = vmatpush1.bf16.msra.mxu0 %v1796
  %3497 = vmatprep.subr.bf16.mxu0 %v1805
  %3498 = vmatpush1.bf16.msra.mxu0 %v1804
  %3499 = vmatprep.subr.bf16.mxu0 %v1813
  %3500 = vmatpush1.bf16.msra.mxu0 %v1812
  %3501 = vmatprep.subr.bf16.mxu0 %v1821
  %3502 = vmatpush1.bf16.msra.mxu0 %v1820
  %3503 = vmatprep.subr.bf16.mxu0 %v1829
  %3504 = vmatpush1.bf16.msra.mxu0 %v1828
  %3505 = vmatprep.subr.bf16.mxu0 %v1837
  %3506 = vmatpush1.bf16.msra.mxu0 %v1836
  %3507 = vmatprep.mubr.bf16.mxu0 %v3351
  %3508 = vmatmul.mubr.bf16.gmra.mrb[0].mxu0 %v3350
  %v3509 = vpop.f32.mrb[0].mxu0
  %v3510 = vadd.f32 0.0, %v3509
  %v3511 = vpop.f32.mrb[0].mxu0
  %v3512 = vadd.f32 0.0, %v3511
  %v3513 = vpop.f32.mrb[0].mxu0
  %v3514 = vpop.f32.mrb[0].mxu0
  %3515 = vdwg.mxu0
  %v3524 = vcombine.low %v3387, %v3389
  %v3525 = vcombine.low %v3428, %v3430
  %v3526 = vcombine.low %v3469, %v3471
  %v3527 = vcombine.low %v3510, %v3512
  %v3529 = vunpack.c.l.s4 1966171168
  %v3530 = vunpack.c.0.s8 %v3529
  %v3531 = vlaneseq
  %v3532 = vshrl.u32 %v3531, 7
  %v3533 = vsub.s32 %v3530, %v3532
  %v3534 = vrot.slane %v3524, %v3533
  %v3536 = vunpack.c.l.s4 1966171168
  %v3537 = vunpack.c.0.s8 %v3536
  %v3538 = vlaneseq
  %v3539 = vshrl.u32 %v3538, 7
  %v3540 = vsub.s32 %v3537, %v3539
  %v3541 = vrot.slane %v3525, %v3540
  %v3543 = vunpack.c.l.s4 1966171168
  %v3544 = vunpack.c.0.s8 %v3543
  %v3545 = vlaneseq
  %v3546 = vshrl.u32 %v3545, 7
  %v3547 = vsub.s32 %v3544, %v3546
  %v3548 = vrot.slane %v3526, %v3547
  %v3550 = vunpack.c.l.s4 1966171168
  %v3551 = vunpack.c.0.s8 %v3550
  %v3552 = vlaneseq
  %v3553 = vshrl.u32 %v3552, 7
  %v3554 = vsub.s32 %v3551, %v3553
  %v3555 = vrot.slane %v3527, %v3554
  %v3556 = vcombine.low %v3534, %v3541
  %v3557 = vcombine.low %v3548, %v3555
  %v3559 = vunpack.c.l.s4 1966171168
  %v3560 = vunpack.c.0.s8 %v3559
  %v3561 = vlaneseq
  %v3562 = vshrl.u32 %v3561, 7
  %v3563 = vsub.s32 %v3560, %v3562
  %v3564 = vrot.slane %v3556, %v3563
  %v3566 = vunpack.c.l.s4 1966171168
  %v3567 = vunpack.c.0.s8 %v3566
  %v3568 = vlaneseq
  %v3569 = vshrl.u32 %v3568, 7
  %v3570 = vsub.s32 %v3567, %v3569
  %v3571 = vrot.slane %v3557, %v3570
  %v3572 = vcombine.low %v3564, %v3571
  %v3574 = vadd.f32 %v417, %v3572
  %v3576 = vlaneseq
  %v3577 = vshrl.u32 %v3576, 7
  %v3578 = vsub.s32 0, %v3577
  %v3579 = vrot.slane %v3082, %v3578
  %v3580 = vlaneseq
  %v3581 = vshrl.u32 %v3580, 7
  %v3582 = vsub.s32 1, %v3581
  %v3583 = vrot.slane %v3082, %v3582
  %v3586 = vpack.c.bf16 %v3579, %v3579
  %v3587 = vpack.c.bf16 %v3583, %v3583
  %3588 = vmatprep.subr.bf16.mxu0 %v2574
  %3589 = vmatpush1.bf16.msra.mxu0 %v2573
  %3590 = vmatprep.subr.bf16.mxu0 %v2582
  %3591 = vmatpush1.bf16.msra.mxu0 %v2581
  %3592 = vmatprep.subr.bf16.mxu0 %v2590
  %3593 = vmatpush1.bf16.msra.mxu0 %v2589
  %3594 = vmatprep.subr.bf16.mxu0 %v2598
  %3595 = vmatpush1.bf16.msra.mxu0 %v2597
  %3596 = vmatprep.subr.bf16.mxu0 %v2606
  %3597 = vmatpush1.bf16.msra.mxu0 %v2605
  %3598 = vmatprep.subr.bf16.mxu0 %v2614
  %3599 = vmatpush1.bf16.msra.mxu0 %v2613
  %3600 = vmatprep.subr.bf16.mxu0 %v2622
  %3601 = vmatpush1.bf16.msra.mxu0 %v2621
  %3602 = vmatprep.subr.bf16.mxu0 %v2630
  %3603 = vmatpush1.bf16.msra.mxu0 %v2629
  %3604 = vmatprep.subr.bf16.mxu0 %v2638
  %3605 = vmatpush1.bf16.msra.mxu0 %v2637
  %3606 = vmatprep.subr.bf16.mxu0 %v2646
  %3607 = vmatpush1.bf16.msra.mxu0 %v2645
  %3608 = vmatprep.subr.bf16.mxu0 %v2654
  %3609 = vmatpush1.bf16.msra.mxu0 %v2653
  %3610 = vmatprep.subr.bf16.mxu0 %v2662
  %3611 = vmatpush1.bf16.msra.mxu0 %v2661
  %3612 = vmatprep.subr.bf16.mxu0 %v2670
  %3613 = vmatpush1.bf16.msra.mxu0 %v2669
  %3614 = vmatprep.subr.bf16.mxu0 %v2678
  %3615 = vmatpush1.bf16.msra.mxu0 %v2677
  %3616 = vmatprep.subr.bf16.mxu0 %v2686
  %3617 = vmatpush1.bf16.msra.mxu0 %v2685
  %3618 = vmatprep.subr.bf16.mxu0 %v2694
  %3619 = vmatpush1.bf16.msra.mxu0 %v2693
  %3620 = vmatprep.mubr.bf16.mxu0 %v3587
  %3621 = vmatmul.mubr.bf16.gmra.mrb[0].mxu0 %v3586
  %v3622 = vpop.f32.mrb[0].mxu0
  %v3623 = vadd.f32 0.0, %v3622
  %v3624 = vpop.f32.mrb[0].mxu0
  %v3625 = vadd.f32 0.0, %v3624
  %v3626 = vpop.f32.mrb[0].mxu0
  %v3627 = vpop.f32.mrb[0].mxu0
  %3628 = vdwg.mxu0
  %3629 = vmatprep.subr.bf16.mxu0 %v2576
  %3630 = vmatpush1.bf16.msra.mxu0 %v2575
  %3631 = vmatprep.subr.bf16.mxu0 %v2584
  %3632 = vmatpush1.bf16.msra.mxu0 %v2583
  %3633 = vmatprep.subr.bf16.mxu0 %v2592
  %3634 = vmatpush1.bf16.msra.mxu0 %v2591
  %3635 = vmatprep.subr.bf16.mxu0 %v2600
  %3636 = vmatpush1.bf16.msra.mxu0 %v2599
  %3637 = vmatprep.subr.bf16.mxu0 %v2608
  %3638 = vmatpush1.bf16.msra.mxu0 %v2607
  %3639 = vmatprep.subr.bf16.mxu0 %v2616
  %3640 = vmatpush1.bf16.msra.mxu0 %v2615
  %3641 = vmatprep.subr.bf16.mxu0 %v2624
  %3642 = vmatpush1.bf16.msra.mxu0 %v2623
  %3643 = vmatprep.subr.bf16.mxu0 %v2632
  %3644 = vmatpush1.bf16.msra.mxu0 %v2631
  %3645 = vmatprep.subr.bf16.mxu0 %v2640
  %3646 = vmatpush1.bf16.msra.mxu0 %v2639
  %3647 = vmatprep.subr.bf16.mxu0 %v2648
  %3648 = vmatpush1.bf16.msra.mxu0 %v2647
  %3649 = vmatprep.subr.bf16.mxu0 %v2656
  %3650 = vmatpush1.bf16.msra.mxu0 %v2655
  %3651 = vmatprep.subr.bf16.mxu0 %v2664
  %3652 = vmatpush1.bf16.msra.mxu0 %v2663
  %3653 = vmatprep.subr.bf16.mxu0 %v2672
  %3654 = vmatpush1.bf16.msra.mxu0 %v2671
  %3655 = vmatprep.subr.bf16.mxu0 %v2680
  %3656 = vmatpush1.bf16.msra.mxu0 %v2679
  %3657 = vmatprep.subr.bf16.mxu0 %v2688
  %3658 = vmatpush1.bf16.msra.mxu0 %v2687
  %3659 = vmatprep.subr.bf16.mxu0 %v2696
  %3660 = vmatpush1.bf16.msra.mxu0 %v2695
  %3661 = vmatprep.mubr.bf16.mxu0 %v3587
  %3662 = vmatmul.mubr.bf16.gmra.mrb[0].mxu0 %v3586
  %v3663 = vpop.f32.mrb[0].mxu0
  %v3664 = vadd.f32 0.0, %v3663
  %v3665 = vpop.f32.mrb[0].mxu0
  %v3666 = vadd.f32 0.0, %v3665
  %v3667 = vpop.f32.mrb[0].mxu0
  %v3668 = vpop.f32.mrb[0].mxu0
  %3669 = vdwg.mxu0
  %3670 = vmatprep.subr.bf16.mxu0 %v2578
  %3671 = vmatpush1.bf16.msra.mxu0 %v2577
  %3672 = vmatprep.subr.bf16.mxu0 %v2586
  %3673 = vmatpush1.bf16.msra.mxu0 %v2585
  %3674 = vmatprep.subr.bf16.mxu0 %v2594
  %3675 = vmatpush1.bf16.msra.mxu0 %v2593
  %3676 = vmatprep.subr.bf16.mxu0 %v2602
  %3677 = vmatpush1.bf16.msra.mxu0 %v2601
  %3678 = vmatprep.subr.bf16.mxu0 %v2610
  %3679 = vmatpush1.bf16.msra.mxu0 %v2609
  %3680 = vmatprep.subr.bf16.mxu0 %v2618
  %3681 = vmatpush1.bf16.msra.mxu0 %v2617
  %3682 = vmatprep.subr.bf16.mxu0 %v2626
  %3683 = vmatpush1.bf16.msra.mxu0 %v2625
  %3684 = vmatprep.subr.bf16.mxu0 %v2634
  %3685 = vmatpush1.bf16.msra.mxu0 %v2633
  %3686 = vmatprep.subr.bf16.mxu0 %v2642
  %3687 = vmatpush1.bf16.msra.mxu0 %v2641
  %3688 = vmatprep.subr.bf16.mxu0 %v2650
  %3689 = vmatpush1.bf16.msra.mxu0 %v2649
  %3690 = vmatprep.subr.bf16.mxu0 %v2658
  %3691 = vmatpush1.bf16.msra.mxu0 %v2657
  %3692 = vmatprep.subr.bf16.mxu0 %v2666
  %3693 = vmatpush1.bf16.msra.mxu0 %v2665
  %3694 = vmatprep.subr.bf16.mxu0 %v2674
  %3695 = vmatpush1.bf16.msra.mxu0 %v2673
  %3696 = vmatprep.subr.bf16.mxu0 %v2682
  %3697 = vmatpush1.bf16.msra.mxu0 %v2681
  %3698 = vmatprep.subr.bf16.mxu0 %v2690
  %3699 = vmatpush1.bf16.msra.mxu0 %v2689
  %3700 = vmatprep.subr.bf16.mxu0 %v2698
  %3701 = vmatpush1.bf16.msra.mxu0 %v2697
  %3702 = vmatprep.mubr.bf16.mxu0 %v3587
  %3703 = vmatmul.mubr.bf16.gmra.mrb[0].mxu0 %v3586
  %v3704 = vpop.f32.mrb[0].mxu0
  %v3705 = vadd.f32 0.0, %v3704
  %v3706 = vpop.f32.mrb[0].mxu0
  %v3707 = vadd.f32 0.0, %v3706
  %v3708 = vpop.f32.mrb[0].mxu0
  %v3709 = vpop.f32.mrb[0].mxu0
  %3710 = vdwg.mxu0
  %3711 = vmatprep.subr.bf16.mxu0 %v2580
  %3712 = vmatpush1.bf16.msra.mxu0 %v2579
  %3713 = vmatprep.subr.bf16.mxu0 %v2588
  %3714 = vmatpush1.bf16.msra.mxu0 %v2587
  %3715 = vmatprep.subr.bf16.mxu0 %v2596
  %3716 = vmatpush1.bf16.msra.mxu0 %v2595
  %3717 = vmatprep.subr.bf16.mxu0 %v2604
  %3718 = vmatpush1.bf16.msra.mxu0 %v2603
  %3719 = vmatprep.subr.bf16.mxu0 %v2612
  %3720 = vmatpush1.bf16.msra.mxu0 %v2611
  %3721 = vmatprep.subr.bf16.mxu0 %v2620
  %3722 = vmatpush1.bf16.msra.mxu0 %v2619
  %3723 = vmatprep.subr.bf16.mxu0 %v2628
  %3724 = vmatpush1.bf16.msra.mxu0 %v2627
  %3725 = vmatprep.subr.bf16.mxu0 %v2636
  %3726 = vmatpush1.bf16.msra.mxu0 %v2635
  %3727 = vmatprep.subr.bf16.mxu0 %v2644
  %3728 = vmatpush1.bf16.msra.mxu0 %v2643
  %3729 = vmatprep.subr.bf16.mxu0 %v2652
  %3730 = vmatpush1.bf16.msra.mxu0 %v2651
  %3731 = vmatprep.subr.bf16.mxu0 %v2660
  %3732 = vmatpush1.bf16.msra.mxu0 %v2659
  %3733 = vmatprep.subr.bf16.mxu0 %v2668
  %3734 = vmatpush1.bf16.msra.mxu0 %v2667
  %3735 = vmatprep.subr.bf16.mxu0 %v2676
  %3736 = vmatpush1.bf16.msra.mxu0 %v2675
  %3737 = vmatprep.subr.bf16.mxu0 %v2684
  %3738 = vmatpush1.bf16.msra.mxu0 %v2683
  %3739 = vmatprep.subr.bf16.mxu0 %v2692
  %3740 = vmatpush1.bf16.msra.mxu0 %v2691
  %3741 = vmatprep.subr.bf16.mxu0 %v2700
  %3742 = vmatpush1.bf16.msra.mxu0 %v2699
  %3743 = vmatprep.mubr.bf16.mxu0 %v3587
  %3744 = vmatmul.mubr.bf16.gmra.mrb[0].mxu0 %v3586
  %v3745 = vpop.f32.mrb[0].mxu0
  %v3746 = vadd.f32 0.0, %v3745
  %v3747 = vpop.f32.mrb[0].mxu0
  %v3748 = vadd.f32 0.0, %v3747
  %v3749 = vpop.f32.mrb[0].mxu0
  %v3750 = vpop.f32.mrb[0].mxu0
  %3751 = vdwg.mxu0
  %v3760 = vcombine.low %v3623, %v3625
  %v3761 = vcombine.low %v3664, %v3666
  %v3762 = vcombine.low %v3705, %v3707
  %v3763 = vcombine.low %v3746, %v3748
  %v3765 = vunpack.c.l.s4 1966171168
  %v3766 = vunpack.c.0.s8 %v3765
  %v3767 = vlaneseq
  %v3768 = vshrl.u32 %v3767, 7
  %v3769 = vsub.s32 %v3766, %v3768
  %v3770 = vrot.slane %v3760, %v3769
  %v3772 = vunpack.c.l.s4 1966171168
  %v3773 = vunpack.c.0.s8 %v3772
  %v3774 = vlaneseq
  %v3775 = vshrl.u32 %v3774, 7
  %v3776 = vsub.s32 %v3773, %v3775
  %v3777 = vrot.slane %v3761, %v3776
  %v3779 = vunpack.c.l.s4 1966171168
  %v3780 = vunpack.c.0.s8 %v3779
  %v3781 = vlaneseq
  %v3782 = vshrl.u32 %v3781, 7
  %v3783 = vsub.s32 %v3780, %v3782
  %v3784 = vrot.slane %v3762, %v3783
  %v3786 = vunpack.c.l.s4 1966171168
  %v3787 = vunpack.c.0.s8 %v3786
  %v3788 = vlaneseq
  %v3789 = vshrl.u32 %v3788, 7
  %v3790 = vsub.s32 %v3787, %v3789
  %v3791 = vrot.slane %v3763, %v3790
  %v3792 = vcombine.low %v3770, %v3777
  %v3793 = vcombine.low %v3784, %v3791
  %v3795 = vunpack.c.l.s4 1966171168
  %v3796 = vunpack.c.0.s8 %v3795
  %v3797 = vlaneseq
  %v3798 = vshrl.u32 %v3797, 7
  %v3799 = vsub.s32 %v3796, %v3798
  %v3800 = vrot.slane %v3792, %v3799
  %v3802 = vunpack.c.l.s4 1966171168
  %v3803 = vunpack.c.0.s8 %v3802
  %v3804 = vlaneseq
  %v3805 = vshrl.u32 %v3804, 7
  %v3806 = vsub.s32 %v3803, %v3805
  %v3807 = vrot.slane %v3793, %v3806
  %v3808 = vcombine.low %v3800, %v3807
  %v3810 = vadd.f32 %v3574, %v3808
  %v3811 = vxor.u32 %v3810, 2147483648
  %v3812 = vmul.f32 %v3811, 1.442695
  %v3813 = vpow.pop %v3812
  %v3814 = vadd.f32 %v3813, 1.0
  %v3815 = vrcp.pop %v3814
  %v3816 = vmul.f32 1.0, %v3815
  %v3818 = vrot.slane %v3810, 2
  %v3820 = vxor.u32 %v3818, 2147483648
  %v3821 = vmul.f32 %v3820, 1.442695
  %v3822 = vpow.pop %v3821
  %v3823 = vadd.f32 %v3822, 1.0
  %v3824 = vrcp.pop %v3823
  %v3825 = vmul.f32 1.0, %v3824
  %v3826 = vrot.slane %v3810, 4
  %v3828 = vxor.u32 %v3826, 2147483648
  %v3829 = vmul.f32 %v3828, 1.442695
  %v3830 = vpow.pop %v3829
  %v3831 = vadd.f32 %v3830, 1.0
  %v3832 = vrcp.pop %v3831
  %v3833 = vmul.f32 1.0, %v3832
  %v3834 = vrot.slane %v3810, 6
  %v3836 = vtanh.pop %v3834
  %v3837 = vmul.f32 %v3825, %v3080
  %v3838 = vmul.f32 %v3816, %v3836
  %v3839 = vadd.f32 %v3837, %v3838
  %v3840 = vtanh.pop %v3839
  %v3841 = vmul.f32 %v3833, %v3840
  %s3842 = scalar_lea.vmem %s0, 16
  %v3843 = vld [vmem:[%s3842] sm:$0xff]
  %3844 = vmatprep.subr.bf16.mxu0 %v804
  %3845 = vmatpush1.bf16.msra.mxu0 %v803
  %3846 = vmatprep.subr.bf16.mxu0 %v812
  %3847 = vmatpush1.bf16.msra.mxu0 %v811
  %3848 = vmatprep.subr.bf16.mxu0 %v820
  %3849 = vmatpush1.bf16.msra.mxu0 %v819
  %3850 = vmatprep.subr.bf16.mxu0 %v828
  %3851 = vmatpush1.bf16.msra.mxu0 %v827
  %3852 = vmatprep.subr.bf16.mxu0 %v836
  %3853 = vmatpush1.bf16.msra.mxu0 %v835
  %3854 = vmatprep.subr.bf16.mxu0 %v844
  %3855 = vmatpush1.bf16.msra.mxu0 %v843
  %3856 = vmatprep.subr.bf16.mxu0 %v852
  %3857 = vmatpush1.bf16.msra.mxu0 %v851
  %3858 = vmatprep.subr.bf16.mxu0 %v860
  %3859 = vmatpush1.bf16.msra.mxu0 %v859
  %3860 = vmatprep.subr.bf16.mxu0 %v868
  %3861 = vmatpush1.bf16.msra.mxu0 %v867
  %3862 = vmatprep.subr.bf16.mxu0 %v876
  %3863 = vmatpush1.bf16.msra.mxu0 %v875
  %3864 = vmatprep.subr.bf16.mxu0 %v884
  %3865 = vmatpush1.bf16.msra.mxu0 %v883
  %3866 = vmatprep.subr.bf16.mxu0 %v892
  %3867 = vmatpush1.bf16.msra.mxu0 %v891
  %3868 = vmatprep.subr.bf16.mxu0 %v900
  %3869 = vmatpush1.bf16.msra.mxu0 %v899
  %3870 = vmatprep.subr.bf16.mxu0 %v908
  %3871 = vmatpush1.bf16.msra.mxu0 %v907
  %3872 = vmatprep.subr.bf16.mxu0 %v916
  %3873 = vmatpush1.bf16.msra.mxu0 %v915
  %3874 = vmatprep.subr.bf16.mxu0 %v924
  %3875 = vmatpush1.bf16.msra.mxu0 %v923
  %3876 = vmatprep.mubr.bf16.mxu0 %v3351
  %3877 = vmatmul.mubr.bf16.gmra.mrb[0].mxu0 %v3350
  %v3878 = vpop.f32.mrb[0].mxu0
  %v3879 = vadd.f32 0.0, %v3878
  %v3880 = vpop.f32.mrb[0].mxu0
  %v3881 = vadd.f32 0.0, %v3880
  %v3882 = vpop.f32.mrb[0].mxu0
  %v3883 = vpop.f32.mrb[0].mxu0
  %3884 = vdwg.mxu0
  %3885 = vmatprep.subr.bf16.mxu0 %v806
  %3886 = vmatpush1.bf16.msra.mxu0 %v805
  %3887 = vmatprep.subr.bf16.mxu0 %v814
  %3888 = vmatpush1.bf16.msra.mxu0 %v813
  %3889 = vmatprep.subr.bf16.mxu0 %v822
  %3890 = vmatpush1.bf16.msra.mxu0 %v821
  %3891 = vmatprep.subr.bf16.mxu0 %v830
  %3892 = vmatpush1.bf16.msra.mxu0 %v829
  %3893 = vmatprep.subr.bf16.mxu0 %v838
  %3894 = vmatpush1.bf16.msra.mxu0 %v837
  %3895 = vmatprep.subr.bf16.mxu0 %v846
  %3896 = vmatpush1.bf16.msra.mxu0 %v845
  %3897 = vmatprep.subr.bf16.mxu0 %v854
  %3898 = vmatpush1.bf16.msra.mxu0 %v853
  %3899 = vmatprep.subr.bf16.mxu0 %v862
  %3900 = vmatpush1.bf16.msra.mxu0 %v861
  %3901 = vmatprep.subr.bf16.mxu0 %v870
  %3902 = vmatpush1.bf16.msra.mxu0 %v869
  %3903 = vmatprep.subr.bf16.mxu0 %v878
  %3904 = vmatpush1.bf16.msra.mxu0 %v877
  %3905 = vmatprep.subr.bf16.mxu0 %v886
  %3906 = vmatpush1.bf16.msra.mxu0 %v885
  %3907 = vmatprep.subr.bf16.mxu0 %v894
  %3908 = vmatpush1.bf16.msra.mxu0 %v893
  %3909 = vmatprep.subr.bf16.mxu0 %v902
  %3910 = vmatpush1.bf16.msra.mxu0 %v901
  %3911 = vmatprep.subr.bf16.mxu0 %v910
  %3912 = vmatpush1.bf16.msra.mxu0 %v909
  %3913 = vmatprep.subr.bf16.mxu0 %v918
  %3914 = vmatpush1.bf16.msra.mxu0 %v917
  %3915 = vmatprep.subr.bf16.mxu0 %v926
  %3916 = vmatpush1.bf16.msra.mxu0 %v925
  %3917 = vmatprep.mubr.bf16.mxu0 %v3351
  %3918 = vmatmul.mubr.bf16.gmra.mrb[0].mxu0 %v3350
  %v3919 = vpop.f32.mrb[0].mxu0
  %v3920 = vadd.f32 0.0, %v3919
  %v3921 = vpop.f32.mrb[0].mxu0
  %v3922 = vadd.f32 0.0, %v3921
  %v3923 = vpop.f32.mrb[0].mxu0
  %v3924 = vpop.f32.mrb[0].mxu0
  %3925 = vdwg.mxu0
  %3926 = vmatprep.subr.bf16.mxu0 %v808
  %3927 = vmatpush1.bf16.msra.mxu0 %v807
  %3928 = vmatprep.subr.bf16.mxu0 %v816
  %3929 = vmatpush1.bf16.msra.mxu0 %v815
  %3930 = vmatprep.subr.bf16.mxu0 %v824
  %3931 = vmatpush1.bf16.msra.mxu0 %v823
  %3932 = vmatprep.subr.bf16.mxu0 %v832
  %3933 = vmatpush1.bf16.msra.mxu0 %v831
  %3934 = vmatprep.subr.bf16.mxu0 %v840
  %3935 = vmatpush1.bf16.msra.mxu0 %v839
  %3936 = vmatprep.subr.bf16.mxu0 %v848
  %3937 = vmatpush1.bf16.msra.mxu0 %v847
  %3938 = vmatprep.subr.bf16.mxu0 %v856
  %3939 = vmatpush1.bf16.msra.mxu0 %v855
  %3940 = vmatprep.subr.bf16.mxu0 %v864
  %3941 = vmatpush1.bf16.msra.mxu0 %v863
  %3942 = vmatprep.subr.bf16.mxu0 %v872
  %3943 = vmatpush1.bf16.msra.mxu0 %v871
  %3944 = vmatprep.subr.bf16.mxu0 %v880
  %3945 = vmatpush1.bf16.msra.mxu0 %v879
  %3946 = vmatprep.subr.bf16.mxu0 %v888
  %3947 = vmatpush1.bf16.msra.mxu0 %v887
  %3948 = vmatprep.subr.bf16.mxu0 %v896
  %3949 = vmatpush1.bf16.msra.mxu0 %v895
  %3950 = vmatprep.subr.bf16.mxu0 %v904
  %3951 = vmatpush1.bf16.msra.mxu0 %v903
  %3952 = vmatprep.subr.bf16.mxu0 %v912
  %3953 = vmatpush1.bf16.msra.mxu0 %v911
  %3954 = vmatprep.subr.bf16.mxu0 %v920
  %3955 = vmatpush1.bf16.msra.mxu0 %v919
  %3956 = vmatprep.subr.bf16.mxu0 %v928
  %3957 = vmatpush1.bf16.msra.mxu0 %v927
  %3958 = vmatprep.mubr.bf16.mxu0 %v3351
  %3959 = vmatmul.mubr.bf16.gmra.mrb[0].mxu0 %v3350
  %v3960 = vpop.f32.mrb[0].mxu0
  %v3961 = vadd.f32 0.0, %v3960
  %v3962 = vpop.f32.mrb[0].mxu0
  %v3963 = vadd.f32 0.0, %v3962
  %v3964 = vpop.f32.mrb[0].mxu0
  %v3965 = vpop.f32.mrb[0].mxu0
  %3966 = vdwg.mxu0
  %3967 = vmatprep.subr.bf16.mxu0 %v810
  %3968 = vmatpush1.bf16.msra.mxu0 %v809
  %3969 = vmatprep.subr.bf16.mxu0 %v818
  %3970 = vmatpush1.bf16.msra.mxu0 %v817
  %3971 = vmatprep.subr.bf16.mxu0 %v826
  %3972 = vmatpush1.bf16.msra.mxu0 %v825
  %3973 = vmatprep.subr.bf16.mxu0 %v834
  %3974 = vmatpush1.bf16.msra.mxu0 %v833
  %3975 = vmatprep.subr.bf16.mxu0 %v842
  %3976 = vmatpush1.bf16.msra.mxu0 %v841
  %3977 = vmatprep.subr.bf16.mxu0 %v850
  %3978 = vmatpush1.bf16.msra.mxu0 %v849
  %3979 = vmatprep.subr.bf16.mxu0 %v858
  %3980 = vmatpush1.bf16.msra.mxu0 %v857
  %3981 = vmatprep.subr.bf16.mxu0 %v866
  %3982 = vmatpush1.bf16.msra.mxu0 %v865
  %3983 = vmatprep.subr.bf16.mxu0 %v874
  %3984 = vmatpush1.bf16.msra.mxu0 %v873
  %3985 = vmatprep.subr.bf16.mxu0 %v882
  %3986 = vmatpush1.bf16.msra.mxu0 %v881
  %3987 = vmatprep.subr.bf16.mxu0 %v890
  %3988 = vmatpush1.bf16.msra.mxu0 %v889
  %3989 = vmatprep.subr.bf16.mxu0 %v898
  %3990 = vmatpush1.bf16.msra.mxu0 %v897
  %3991 = vmatprep.subr.bf16.mxu0 %v906
  %3992 = vmatpush1.bf16.msra.mxu0 %v905
  %3993 = vmatprep.subr.bf16.mxu0 %v914
  %3994 = vmatpush1.bf16.msra.mxu0 %v913
  %3995 = vmatprep.subr.bf16.mxu0 %v922
  %3996 = vmatpush1.bf16.msra.mxu0 %v921
  %3997 = vmatprep.subr.bf16.mxu0 %v930
  %3998 = vmatpush1.bf16.msra.mxu0 %v929
  %3999 = vmatprep.mubr.bf16.mxu0 %v3351
  %4000 = vmatmul.mubr.bf16.gmra.mrb[0].mxu0 %v3350
  %v4001 = vpop.f32.mrb[0].mxu0
  %v4002 = vadd.f32 0.0, %v4001
  %v4003 = vpop.f32.mrb[0].mxu0
  %v4004 = vadd.f32 0.0, %v4003
  %v4005 = vpop.f32.mrb[0].mxu0
  %v4006 = vpop.f32.mrb[0].mxu0
  %4007 = vdwg.mxu0
  %v4016 = vcombine.low %v3879, %v3881
  %v4017 = vcombine.low %v3920, %v3922
  %v4018 = vcombine.low %v3961, %v3963
  %v4019 = vcombine.low %v4002, %v4004
  %v4021 = vunpack.c.l.s4 1966171168
  %v4022 = vunpack.c.0.s8 %v4021
  %v4023 = vlaneseq
  %v4024 = vshrl.u32 %v4023, 7
  %v4025 = vsub.s32 %v4022, %v4024
  %v4026 = vrot.slane %v4016, %v4025
  %v4028 = vunpack.c.l.s4 1966171168
  %v4029 = vunpack.c.0.s8 %v4028
  %v4030 = vlaneseq
  %v4031 = vshrl.u32 %v4030, 7
  %v4032 = vsub.s32 %v4029, %v4031
  %v4033 = vrot.slane %v4017, %v4032
  %v4035 = vunpack.c.l.s4 1966171168
  %v4036 = vunpack.c.0.s8 %v4035
  %v4037 = vlaneseq
  %v4038 = vshrl.u32 %v4037, 7
  %v4039 = vsub.s32 %v4036, %v4038
  %v4040 = vrot.slane %v4018, %v4039
  %v4042 = vunpack.c.l.s4 1966171168
  %v4043 = vunpack.c.0.s8 %v4042
  %v4044 = vlaneseq
  %v4045 = vshrl.u32 %v4044, 7
  %v4046 = vsub.s32 %v4043, %v4045
  %v4047 = vrot.slane %v4019, %v4046
  %v4048 = vcombine.low %v4026, %v4033
  %v4049 = vcombine.low %v4040, %v4047
  %v4051 = vunpack.c.l.s4 1966171168
  %v4052 = vunpack.c.0.s8 %v4051
  %v4053 = vlaneseq
  %v4054 = vshrl.u32 %v4053, 7
  %v4055 = vsub.s32 %v4052, %v4054
  %v4056 = vrot.slane %v4048, %v4055
  %v4058 = vunpack.c.l.s4 1966171168
  %v4059 = vunpack.c.0.s8 %v4058
  %v4060 = vlaneseq
  %v4061 = vshrl.u32 %v4060, 7
  %v4062 = vsub.s32 %v4059, %v4061
  %v4063 = vrot.slane %v4049, %v4062
  %v4064 = vcombine.low %v4056, %v4063
  %v4066 = vadd.f32 %v3843, %v4064
  %v4067 = vxor.u32 %v4066, 2147483648
  %v4068 = vmul.f32 %v4067, 1.442695
  %v4069 = vpow.pop %v4068
  %v4070 = vadd.f32 %v4069, 1.0
  %v4071 = vrcp.pop %v4070
  %v4072 = vmul.f32 1.0, %v4071
  %v4074 = vrot.slane %v4066, 2
  %v4076 = vxor.u32 %v4074, 2147483648
  %v4077 = vmul.f32 %v4076, 1.442695
  %v4078 = vpow.pop %v4077
  %v4079 = vadd.f32 %v4078, 1.0
  %v4080 = vrcp.pop %v4079
  %v4081 = vmul.f32 1.0, %v4080
  %v4082 = vrot.slane %v4066, 4
  %v4084 = vxor.u32 %v4082, 2147483648
  %v4085 = vmul.f32 %v4084, 1.442695
  %v4086 = vpow.pop %v4085
  %v4087 = vadd.f32 %v4086, 1.0
  %v4088 = vrcp.pop %v4087
  %v4089 = vmul.f32 1.0, %v4088
  %v4090 = vrot.slane %v4066, 6
  %v4092 = vtanh.pop %v4090
  %v4093 = vmul.f32 %v4081, %v3336
  %v4094 = vmul.f32 %v4072, %v4092
  %v4095 = vadd.f32 %v4093, %v4094
  %v4096 = vtanh.pop %v4095
  %v4097 = vmul.f32 %v4089, %v4096
  %v4099 = vlaneseq
  %v4100 = vshrl.u32 %v4099, 7
  %v4101 = vsub.s32 0, %v4100
  %v4102 = vrot.slane %v4097, %v4101
  %v4103 = vlaneseq
  %v4104 = vshrl.u32 %v4103, 7
  %v4105 = vsub.s32 1, %v4104
  %v4106 = vrot.slane %v4097, %v4105
  %v4109 = vpack.c.bf16 %v4102, %v4102
  %v4110 = vpack.c.bf16 %v4106, %v4106
  %4111 = vmatprep.subr.bf16.mxu0 %v1711
  %4112 = vmatpush1.bf16.msra.mxu0 %v1710
  %4113 = vmatprep.subr.bf16.mxu0 %v1719
  %4114 = vmatpush1.bf16.msra.mxu0 %v1718
  %4115 = vmatprep.subr.bf16.mxu0 %v1727
  %4116 = vmatpush1.bf16.msra.mxu0 %v1726
  %4117 = vmatprep.subr.bf16.mxu0 %v1735
  %4118 = vmatpush1.bf16.msra.mxu0 %v1734
  %4119 = vmatprep.subr.bf16.mxu0 %v1743
  %4120 = vmatpush1.bf16.msra.mxu0 %v1742
  %4121 = vmatprep.subr.bf16.mxu0 %v1751
  %4122 = vmatpush1.bf16.msra.mxu0 %v1750
  %4123 = vmatprep.subr.bf16.mxu0 %v1759
  %4124 = vmatpush1.bf16.msra.mxu0 %v1758
  %4125 = vmatprep.subr.bf16.mxu0 %v1767
  %4126 = vmatpush1.bf16.msra.mxu0 %v1766
  %4127 = vmatprep.subr.bf16.mxu0 %v1775
  %4128 = vmatpush1.bf16.msra.mxu0 %v1774
  %4129 = vmatprep.subr.bf16.mxu0 %v1783
  %4130 = vmatpush1.bf16.msra.mxu0 %v1782
  %4131 = vmatprep.subr.bf16.mxu0 %v1791
  %4132 = vmatpush1.bf16.msra.mxu0 %v1790
  %4133 = vmatprep.subr.bf16.mxu0 %v1799
  %4134 = vmatpush1.bf16.msra.mxu0 %v1798
  %4135 = vmatprep.subr.bf16.mxu0 %v1807
  %4136 = vmatpush1.bf16.msra.mxu0 %v1806
  %4137 = vmatprep.subr.bf16.mxu0 %v1815
  %4138 = vmatpush1.bf16.msra.mxu0 %v1814
  %4139 = vmatprep.subr.bf16.mxu0 %v1823
  %4140 = vmatpush1.bf16.msra.mxu0 %v1822
  %4141 = vmatprep.subr.bf16.mxu0 %v1831
  %4142 = vmatpush1.bf16.msra.mxu0 %v1830
  %4143 = vmatprep.mubr.bf16.mxu0 %v4110
  %4144 = vmatmul.mubr.bf16.gmra.mrb[0].mxu0 %v4109
  %v4145 = vpop.f32.mrb[0].mxu0
  %v4146 = vadd.f32 0.0, %v4145
  %v4147 = vpop.f32.mrb[0].mxu0
  %v4148 = vadd.f32 0.0, %v4147
  %v4149 = vpop.f32.mrb[0].mxu0
  %v4150 = vpop.f32.mrb[0].mxu0
  %4151 = vdwg.mxu0
  %4152 = vmatprep.subr.bf16.mxu0 %v1713
  %4153 = vmatpush1.bf16.msra.mxu0 %v1712
  %4154 = vmatprep.subr.bf16.mxu0 %v1721
  %4155 = vmatpush1.bf16.msra.mxu0 %v1720
  %4156 = vmatprep.subr.bf16.mxu0 %v1729
  %4157 = vmatpush1.bf16.msra.mxu0 %v1728
  %4158 = vmatprep.subr.bf16.mxu0 %v1737
  %4159 = vmatpush1.bf16.msra.mxu0 %v1736
  %4160 = vmatprep.subr.bf16.mxu0 %v1745
  %4161 = vmatpush1.bf16.msra.mxu0 %v1744
  %4162 = vmatprep.subr.bf16.mxu0 %v1753
  %4163 = vmatpush1.bf16.msra.mxu0 %v1752
  %4164 = vmatprep.subr.bf16.mxu0 %v1761
  %4165 = vmatpush1.bf16.msra.mxu0 %v1760
  %4166 = vmatprep.subr.bf16.mxu0 %v1769
  %4167 = vmatpush1.bf16.msra.mxu0 %v1768
  %4168 = vmatprep.subr.bf16.mxu0 %v1777
  %4169 = vmatpush1.bf16.msra.mxu0 %v1776
  %4170 = vmatprep.subr.bf16.mxu0 %v1785
  %4171 = vmatpush1.bf16.msra.mxu0 %v1784
  %4172 = vmatprep.subr.bf16.mxu0 %v1793
  %4173 = vmatpush1.bf16.msra.mxu0 %v1792
  %4174 = vmatprep.subr.bf16.mxu0 %v1801
  %4175 = vmatpush1.bf16.msra.mxu0 %v1800
  %4176 = vmatprep.subr.bf16.mxu0 %v1809
  %4177 = vmatpush1.bf16.msra.mxu0 %v1808
  %4178 = vmatprep.subr.bf16.mxu0 %v1817
  %4179 = vmatpush1.bf16.msra.mxu0 %v1816
  %4180 = vmatprep.subr.bf16.mxu0 %v1825
  %4181 = vmatpush1.bf16.msra.mxu0 %v1824
  %4182 = vmatprep.subr.bf16.mxu0 %v1833
  %4183 = vmatpush1.bf16.msra.mxu0 %v1832
  %4184 = vmatprep.mubr.bf16.mxu0 %v4110
  %4185 = vmatmul.mubr.bf16.gmra.mrb[0].mxu0 %v4109
  %v4186 = vpop.f32.mrb[0].mxu0
  %v4187 = vadd.f32 0.0, %v4186
  %v4188 = vpop.f32.mrb[0].mxu0
  %v4189 = vadd.f32 0.0, %v4188
  %v4190 = vpop.f32.mrb[0].mxu0
  %v4191 = vpop.f32.mrb[0].mxu0
  %4192 = vdwg.mxu0
  %4193 = vmatprep.subr.bf16.mxu0 %v1715
  %4194 = vmatpush1.bf16.msra.mxu0 %v1714
  %4195 = vmatprep.subr.bf16.mxu0 %v1723
  %4196 = vmatpush1.bf16.msra.mxu0 %v1722
  %4197 = vmatprep.subr.bf16.mxu0 %v1731
  %4198 = vmatpush1.bf16.msra.mxu0 %v1730
  %4199 = vmatprep.subr.bf16.mxu0 %v1739
  %4200 = vmatpush1.bf16.msra.mxu0 %v1738
  %4201 = vmatprep.subr.bf16.mxu0 %v1747
  %4202 = vmatpush1.bf16.msra.mxu0 %v1746
  %4203 = vmatprep.subr.bf16.mxu0 %v1755
  %4204 = vmatpush1.bf16.msra.mxu0 %v1754
  %4205 = vmatprep.subr.bf16.mxu0 %v1763
  %4206 = vmatpush1.bf16.msra.mxu0 %v1762
  %4207 = vmatprep.subr.bf16.mxu0 %v1771
  %4208 = vmatpush1.bf16.msra.mxu0 %v1770
  %4209 = vmatprep.subr.bf16.mxu0 %v1779
  %4210 = vmatpush1.bf16.msra.mxu0 %v1778
  %4211 = vmatprep.subr.bf16.mxu0 %v1787
  %4212 = vmatpush1.bf16.msra.mxu0 %v1786
  %4213 = vmatprep.subr.bf16.mxu0 %v1795
  %4214 = vmatpush1.bf16.msra.mxu0 %v1794
  %4215 = vmatprep.subr.bf16.mxu0 %v1803
  %4216 = vmatpush1.bf16.msra.mxu0 %v1802
  %4217 = vmatprep.subr.bf16.mxu0 %v1811
  %4218 = vmatpush1.bf16.msra.mxu0 %v1810
  %4219 = vmatprep.subr.bf16.mxu0 %v1819
  %4220 = vmatpush1.bf16.msra.mxu0 %v1818
  %4221 = vmatprep.subr.bf16.mxu0 %v1827
  %4222 = vmatpush1.bf16.msra.mxu0 %v1826
  %4223 = vmatprep.subr.bf16.mxu0 %v1835
  %4224 = vmatpush1.bf16.msra.mxu0 %v1834
  %4225 = vmatprep.mubr.bf16.mxu0 %v4110
  %4226 = vmatmul.mubr.bf16.gmra.mrb[0].mxu0 %v4109
  %v4227 = vpop.f32.mrb[0].mxu0
  %v4228 = vadd.f32 0.0, %v4227
  %v4229 = vpop.f32.mrb[0].mxu0
  %v4230 = vadd.f32 0.0, %v4229
  %v4231 = vpop.f32.mrb[0].mxu0
  %v4232 = vpop.f32.mrb[0].mxu0
  %4233 = vdwg.mxu0
  %4234 = vmatprep.subr.bf16.mxu0 %v1717
  %4235 = vmatpush1.bf16.msra.mxu0 %v1716
  %4236 = vmatprep.subr.bf16.mxu0 %v1725
  %4237 = vmatpush1.bf16.msra.mxu0 %v1724
  %4238 = vmatprep.subr.bf16.mxu0 %v1733
  %4239 = vmatpush1.bf16.msra.mxu0 %v1732
  %4240 = vmatprep.subr.bf16.mxu0 %v1741
  %4241 = vmatpush1.bf16.msra.mxu0 %v1740
  %4242 = vmatprep.subr.bf16.mxu0 %v1749
  %4243 = vmatpush1.bf16.msra.mxu0 %v1748
  %4244 = vmatprep.subr.bf16.mxu0 %v1757
  %4245 = vmatpush1.bf16.msra.mxu0 %v1756
  %4246 = vmatprep.subr.bf16.mxu0 %v1765
  %4247 = vmatpush1.bf16.msra.mxu0 %v1764
  %4248 = vmatprep.subr.bf16.mxu0 %v1773
  %4249 = vmatpush1.bf16.msra.mxu0 %v1772
  %4250 = vmatprep.subr.bf16.mxu0 %v1781
  %4251 = vmatpush1.bf16.msra.mxu0 %v1780
  %4252 = vmatprep.subr.bf16.mxu0 %v1789
  %4253 = vmatpush1.bf16.msra.mxu0 %v1788
  %4254 = vmatprep.subr.bf16.mxu0 %v1797
  %4255 = vmatpush1.bf16.msra.mxu0 %v1796
  %4256 = vmatprep.subr.bf16.mxu0 %v1805
  %4257 = vmatpush1.bf16.msra.mxu0 %v1804
  %4258 = vmatprep.subr.bf16.mxu0 %v1813
  %4259 = vmatpush1.bf16.msra.mxu0 %v1812
  %4260 = vmatprep.subr.bf16.mxu0 %v1821
  %4261 = vmatpush1.bf16.msra.mxu0 %v1820
  %4262 = vmatprep.subr.bf16.mxu0 %v1829
  %4263 = vmatpush1.bf16.msra.mxu0 %v1828
  %4264 = vmatprep.subr.bf16.mxu0 %v1837
  %4265 = vmatpush1.bf16.msra.mxu0 %v1836
  %4266 = vmatprep.mubr.bf16.mxu0 %v4110
  %4267 = vmatmul.mubr.bf16.gmra.mrb[0].mxu0 %v4109
  %v4268 = vpop.f32.mrb[0].mxu0
  %v4269 = vadd.f32 0.0, %v4268
  %v4270 = vpop.f32.mrb[0].mxu0
  %v4271 = vadd.f32 0.0, %v4270
  %v4272 = vpop.f32.mrb[0].mxu0
  %v4273 = vpop.f32.mrb[0].mxu0
  %4274 = vdwg.mxu0
  %v4283 = vcombine.low %v4146, %v4148
  %v4284 = vcombine.low %v4187, %v4189
  %v4285 = vcombine.low %v4228, %v4230
  %v4286 = vcombine.low %v4269, %v4271
  %v4288 = vunpack.c.l.s4 1966171168
  %v4289 = vunpack.c.0.s8 %v4288
  %v4290 = vlaneseq
  %v4291 = vshrl.u32 %v4290, 7
  %v4292 = vsub.s32 %v4289, %v4291
  %v4293 = vrot.slane %v4283, %v4292
  %v4295 = vunpack.c.l.s4 1966171168
  %v4296 = vunpack.c.0.s8 %v4295
  %v4297 = vlaneseq
  %v4298 = vshrl.u32 %v4297, 7
  %v4299 = vsub.s32 %v4296, %v4298
  %v4300 = vrot.slane %v4284, %v4299
  %v4302 = vunpack.c.l.s4 1966171168
  %v4303 = vunpack.c.0.s8 %v4302
  %v4304 = vlaneseq
  %v4305 = vshrl.u32 %v4304, 7
  %v4306 = vsub.s32 %v4303, %v4305
  %v4307 = vrot.slane %v4285, %v4306
  %v4309 = vunpack.c.l.s4 1966171168
  %v4310 = vunpack.c.0.s8 %v4309
  %v4311 = vlaneseq
  %v4312 = vshrl.u32 %v4311, 7
  %v4313 = vsub.s32 %v4310, %v4312
  %v4314 = vrot.slane %v4286, %v4313
  %v4315 = vcombine.low %v4293, %v4300
  %v4316 = vcombine.low %v4307, %v4314
  %v4318 = vunpack.c.l.s4 1966171168
  %v4319 = vunpack.c.0.s8 %v4318
  %v4320 = vlaneseq
  %v4321 = vshrl.u32 %v4320, 7
  %v4322 = vsub.s32 %v4319, %v4321
  %v4323 = vrot.slane %v4315, %v4322
  %v4325 = vunpack.c.l.s4 1966171168
  %v4326 = vunpack.c.0.s8 %v4325
  %v4327 = vlaneseq
  %v4328 = vshrl.u32 %v4327, 7
  %v4329 = vsub.s32 %v4326, %v4328
  %v4330 = vrot.slane %v4316, %v4329
  %v4331 = vcombine.low %v4323, %v4330
  %v4333 = vadd.f32 %v417, %v4331
  %v4335 = vlaneseq
  %v4336 = vshrl.u32 %v4335, 7
  %v4337 = vsub.s32 0, %v4336
  %v4338 = vrot.slane %v3841, %v4337
  %v4339 = vlaneseq
  %v4340 = vshrl.u32 %v4339, 7
  %v4341 = vsub.s32 1, %v4340
  %v4342 = vrot.slane %v3841, %v4341
  %v4345 = vpack.c.bf16 %v4338, %v4338
  %v4346 = vpack.c.bf16 %v4342, %v4342
  %4347 = vmatprep.subr.bf16.mxu0 %v2574
  %4348 = vmatpush1.bf16.msra.mxu0 %v2573
  %4349 = vmatprep.subr.bf16.mxu0 %v2582
  %4350 = vmatpush1.bf16.msra.mxu0 %v2581
  %4351 = vmatprep.subr.bf16.mxu0 %v2590
  %4352 = vmatpush1.bf16.msra.mxu0 %v2589
  %4353 = vmatprep.subr.bf16.mxu0 %v2598
  %4354 = vmatpush1.bf16.msra.mxu0 %v2597
  %4355 = vmatprep.subr.bf16.mxu0 %v2606
  %4356 = vmatpush1.bf16.msra.mxu0 %v2605
  %4357 = vmatprep.subr.bf16.mxu0 %v2614
  %4358 = vmatpush1.bf16.msra.mxu0 %v2613
  %4359 = vmatprep.subr.bf16.mxu0 %v2622
  %4360 = vmatpush1.bf16.msra.mxu0 %v2621
  %4361 = vmatprep.subr.bf16.mxu0 %v2630
  %4362 = vmatpush1.bf16.msra.mxu0 %v2629
  %4363 = vmatprep.subr.bf16.mxu0 %v2638
  %4364 = vmatpush1.bf16.msra.mxu0 %v2637
  %4365 = vmatprep.subr.bf16.mxu0 %v2646
  %4366 = vmatpush1.bf16.msra.mxu0 %v2645
  %4367 = vmatprep.subr.bf16.mxu0 %v2654
  %4368 = vmatpush1.bf16.msra.mxu0 %v2653
  %4369 = vmatprep.subr.bf16.mxu0 %v2662
  %4370 = vmatpush1.bf16.msra.mxu0 %v2661
  %4371 = vmatprep.subr.bf16.mxu0 %v2670
  %4372 = vmatpush1.bf16.msra.mxu0 %v2669
  %4373 = vmatprep.subr.bf16.mxu0 %v2678
  %4374 = vmatpush1.bf16.msra.mxu0 %v2677
  %4375 = vmatprep.subr.bf16.mxu0 %v2686
  %4376 = vmatpush1.bf16.msra.mxu0 %v2685
  %4377 = vmatprep.subr.bf16.mxu0 %v2694
  %4378 = vmatpush1.bf16.msra.mxu0 %v2693
  %4379 = vmatprep.mubr.bf16.mxu0 %v4346
  %4380 = vmatmul.mubr.bf16.gmra.mrb[0].mxu0 %v4345
  %v4381 = vpop.f32.mrb[0].mxu0
  %v4382 = vadd.f32 0.0, %v4381
  %v4383 = vpop.f32.mrb[0].mxu0
  %v4384 = vadd.f32 0.0, %v4383
  %v4385 = vpop.f32.mrb[0].mxu0
  %v4386 = vpop.f32.mrb[0].mxu0
  %4387 = vdwg.mxu0
  %4388 = vmatprep.subr.bf16.mxu0 %v2576
  %4389 = vmatpush1.bf16.msra.mxu0 %v2575
  %4390 = vmatprep.subr.bf16.mxu0 %v2584
  %4391 = vmatpush1.bf16.msra.mxu0 %v2583
  %4392 = vmatprep.subr.bf16.mxu0 %v2592
  %4393 = vmatpush1.bf16.msra.mxu0 %v2591
  %4394 = vmatprep.subr.bf16.mxu0 %v2600
  %4395 = vmatpush1.bf16.msra.mxu0 %v2599
  %4396 = vmatprep.subr.bf16.mxu0 %v2608
  %4397 = vmatpush1.bf16.msra.mxu0 %v2607
  %4398 = vmatprep.subr.bf16.mxu0 %v2616
  %4399 = vmatpush1.bf16.msra.mxu0 %v2615
  %4400 = vmatprep.subr.bf16.mxu0 %v2624
  %4401 = vmatpush1.bf16.msra.mxu0 %v2623
  %4402 = vmatprep.subr.bf16.mxu0 %v2632
  %4403 = vmatpush1.bf16.msra.mxu0 %v2631
  %4404 = vmatprep.subr.bf16.mxu0 %v2640
  %4405 = vmatpush1.bf16.msra.mxu0 %v2639
  %4406 = vmatprep.subr.bf16.mxu0 %v2648
  %4407 = vmatpush1.bf16.msra.mxu0 %v2647
  %4408 = vmatprep.subr.bf16.mxu0 %v2656
  %4409 = vmatpush1.bf16.msra.mxu0 %v2655
  %4410 = vmatprep.subr.bf16.mxu0 %v2664
  %4411 = vmatpush1.bf16.msra.mxu0 %v2663
  %4412 = vmatprep.subr.bf16.mxu0 %v2672
  %4413 = vmatpush1.bf16.msra.mxu0 %v2671
  %4414 = vmatprep.subr.bf16.mxu0 %v2680
  %4415 = vmatpush1.bf16.msra.mxu0 %v2679
  %4416 = vmatprep.subr.bf16.mxu0 %v2688
  %4417 = vmatpush1.bf16.msra.mxu0 %v2687
  %4418 = vmatprep.subr.bf16.mxu0 %v2696
  %4419 = vmatpush1.bf16.msra.mxu0 %v2695
  %4420 = vmatprep.mubr.bf16.mxu0 %v4346
  %4421 = vmatmul.mubr.bf16.gmra.mrb[0].mxu0 %v4345
  %v4422 = vpop.f32.mrb[0].mxu0
  %v4423 = vadd.f32 0.0, %v4422
  %v4424 = vpop.f32.mrb[0].mxu0
  %v4425 = vadd.f32 0.0, %v4424
  %v4426 = vpop.f32.mrb[0].mxu0
  %v4427 = vpop.f32.mrb[0].mxu0
  %4428 = vdwg.mxu0
  %4429 = vmatprep.subr.bf16.mxu0 %v2578
  %4430 = vmatpush1.bf16.msra.mxu0 %v2577
  %4431 = vmatprep.subr.bf16.mxu0 %v2586
  %4432 = vmatpush1.bf16.msra.mxu0 %v2585
  %4433 = vmatprep.subr.bf16.mxu0 %v2594
  %4434 = vmatpush1.bf16.msra.mxu0 %v2593
  %4435 = vmatprep.subr.bf16.mxu0 %v2602
  %4436 = vmatpush1.bf16.msra.mxu0 %v2601
  %4437 = vmatprep.subr.bf16.mxu0 %v2610
  %4438 = vmatpush1.bf16.msra.mxu0 %v2609
  %4439 = vmatprep.subr.bf16.mxu0 %v2618
  %4440 = vmatpush1.bf16.msra.mxu0 %v2617
  %4441 = vmatprep.subr.bf16.mxu0 %v2626
  %4442 = vmatpush1.bf16.msra.mxu0 %v2625
  %4443 = vmatprep.subr.bf16.mxu0 %v2634
  %4444 = vmatpush1.bf16.msra.mxu0 %v2633
  %4445 = vmatprep.subr.bf16.mxu0 %v2642
  %4446 = vmatpush1.bf16.msra.mxu0 %v2641
  %4447 = vmatprep.subr.bf16.mxu0 %v2650
  %4448 = vmatpush1.bf16.msra.mxu0 %v2649
  %4449 = vmatprep.subr.bf16.mxu0 %v2658
  %4450 = vmatpush1.bf16.msra.mxu0 %v2657
  %4451 = vmatprep.subr.bf16.mxu0 %v2666
  %4452 = vmatpush1.bf16.msra.mxu0 %v2665
  %4453 = vmatprep.subr.bf16.mxu0 %v2674
  %4454 = vmatpush1.bf16.msra.mxu0 %v2673
  %4455 = vmatprep.subr.bf16.mxu0 %v2682
  %4456 = vmatpush1.bf16.msra.mxu0 %v2681
  %4457 = vmatprep.subr.bf16.mxu0 %v2690
  %4458 = vmatpush1.bf16.msra.mxu0 %v2689
  %4459 = vmatprep.subr.bf16.mxu0 %v2698
  %4460 = vmatpush1.bf16.msra.mxu0 %v2697
  %4461 = vmatprep.mubr.bf16.mxu0 %v4346
  %4462 = vmatmul.mubr.bf16.gmra.mrb[0].mxu0 %v4345
  %v4463 = vpop.f32.mrb[0].mxu0
  %v4464 = vadd.f32 0.0, %v4463
  %v4465 = vpop.f32.mrb[0].mxu0
  %v4466 = vadd.f32 0.0, %v4465
  %v4467 = vpop.f32.mrb[0].mxu0
  %v4468 = vpop.f32.mrb[0].mxu0
  %4469 = vdwg.mxu0
  %4470 = vmatprep.subr.bf16.mxu0 %v2580
  %4471 = vmatpush1.bf16.msra.mxu0 %v2579
  %4472 = vmatprep.subr.bf16.mxu0 %v2588
  %4473 = vmatpush1.bf16.msra.mxu0 %v2587
  %4474 = vmatprep.subr.bf16.mxu0 %v2596
  %4475 = vmatpush1.bf16.msra.mxu0 %v2595
  %4476 = vmatprep.subr.bf16.mxu0 %v2604
  %4477 = vmatpush1.bf16.msra.mxu0 %v2603
  %4478 = vmatprep.subr.bf16.mxu0 %v2612
  %4479 = vmatpush1.bf16.msra.mxu0 %v2611
  %4480 = vmatprep.subr.bf16.mxu0 %v2620
  %4481 = vmatpush1.bf16.msra.mxu0 %v2619
  %4482 = vmatprep.subr.bf16.mxu0 %v2628
  %4483 = vmatpush1.bf16.msra.mxu0 %v2627
  %4484 = vmatprep.subr.bf16.mxu0 %v2636
  %4485 = vmatpush1.bf16.msra.mxu0 %v2635
  %4486 = vmatprep.subr.bf16.mxu0 %v2644
  %4487 = vmatpush1.bf16.msra.mxu0 %v2643
  %4488 = vmatprep.subr.bf16.mxu0 %v2652
  %4489 = vmatpush1.bf16.msra.mxu0 %v2651
  %4490 = vmatprep.subr.bf16.mxu0 %v2660
  %4491 = vmatpush1.bf16.msra.mxu0 %v2659
  %4492 = vmatprep.subr.bf16.mxu0 %v2668
  %4493 = vmatpush1.bf16.msra.mxu0 %v2667
  %4494 = vmatprep.subr.bf16.mxu0 %v2676
  %4495 = vmatpush1.bf16.msra.mxu0 %v2675
  %4496 = vmatprep.subr.bf16.mxu0 %v2684
  %4497 = vmatpush1.bf16.msra.mxu0 %v2683
  %4498 = vmatprep.subr.bf16.mxu0 %v2692
  %4499 = vmatpush1.bf16.msra.mxu0 %v2691
  %4500 = vmatprep.subr.bf16.mxu0 %v2700
  %4501 = vmatpush1.bf16.msra.mxu0 %v2699
  %4502 = vmatprep.mubr.bf16.mxu0 %v4346
  %4503 = vmatmul.mubr.bf16.gmra.mrb[0].mxu0 %v4345
  %v4504 = vpop.f32.mrb[0].mxu0
  %v4505 = vadd.f32 0.0, %v4504
  %v4506 = vpop.f32.mrb[0].mxu0
  %v4507 = vadd.f32 0.0, %v4506
  %v4508 = vpop.f32.mrb[0].mxu0
  %v4509 = vpop.f32.mrb[0].mxu0
  %4510 = vdwg.mxu0
  %v4519 = vcombine.low %v4382, %v4384
  %v4520 = vcombine.low %v4423, %v4425
  %v4521 = vcombine.low %v4464, %v4466
  %v4522 = vcombine.low %v4505, %v4507
  %v4524 = vunpack.c.l.s4 1966171168
  %v4525 = vunpack.c.0.s8 %v4524
  %v4526 = vlaneseq
  %v4527 = vshrl.u32 %v4526, 7
  %v4528 = vsub.s32 %v4525, %v4527
  %v4529 = vrot.slane %v4519, %v4528
  %v4531 = vunpack.c.l.s4 1966171168
  %v4532 = vunpack.c.0.s8 %v4531
  %v4533 = vlaneseq
  %v4534 = vshrl.u32 %v4533, 7
  %v4535 = vsub.s32 %v4532, %v4534
  %v4536 = vrot.slane %v4520, %v4535
  %v4538 = vunpack.c.l.s4 1966171168
  %v4539 = vunpack.c.0.s8 %v4538
  %v4540 = vlaneseq
  %v4541 = vshrl.u32 %v4540, 7
  %v4542 = vsub.s32 %v4539, %v4541
  %v4543 = vrot.slane %v4521, %v4542
  %v4545 = vunpack.c.l.s4 1966171168
  %v4546 = vunpack.c.0.s8 %v4545
  %v4547 = vlaneseq
  %v4548 = vshrl.u32 %v4547, 7
  %v4549 = vsub.s32 %v4546, %v4548
  %v4550 = vrot.slane %v4522, %v4549
  %v4551 = vcombine.low %v4529, %v4536
  %v4552 = vcombine.low %v4543, %v4550
  %v4554 = vunpack.c.l.s4 1966171168
  %v4555 = vunpack.c.0.s8 %v4554
  %v4556 = vlaneseq
  %v4557 = vshrl.u32 %v4556, 7
  %v4558 = vsub.s32 %v4555, %v4557
  %v4559 = vrot.slane %v4551, %v4558
  %v4561 = vunpack.c.l.s4 1966171168
  %v4562 = vunpack.c.0.s8 %v4561
  %v4563 = vlaneseq
  %v4564 = vshrl.u32 %v4563, 7
  %v4565 = vsub.s32 %v4562, %v4564
  %v4566 = vrot.slane %v4552, %v4565
  %v4567 = vcombine.low %v4559, %v4566
  %v4569 = vadd.f32 %v4333, %v4567
  %v4570 = vxor.u32 %v4569, 2147483648
  %v4571 = vmul.f32 %v4570, 1.442695
  %v4572 = vpow.pop %v4571
  %v4573 = vadd.f32 %v4572, 1.0
  %v4574 = vrcp.pop %v4573
  %v4575 = vmul.f32 1.0, %v4574
  %v4577 = vrot.slane %v4569, 2
  %v4579 = vxor.u32 %v4577, 2147483648
  %v4580 = vmul.f32 %v4579, 1.442695
  %v4581 = vpow.pop %v4580
  %v4582 = vadd.f32 %v4581, 1.0
  %v4583 = vrcp.pop %v4582
  %v4584 = vmul.f32 1.0, %v4583
  %v4585 = vrot.slane %v4569, 4
  %v4587 = vxor.u32 %v4585, 2147483648
  %v4588 = vmul.f32 %v4587, 1.442695
  %v4589 = vpow.pop %v4588
  %v4590 = vadd.f32 %v4589, 1.0
  %v4591 = vrcp.pop %v4590
  %v4592 = vmul.f32 1.0, %v4591
  %v4593 = vrot.slane %v4569, 6
  %v4595 = vtanh.pop %v4593
  %v4596 = vmul.f32 %v4584, %v3839
  %v4597 = vmul.f32 %v4575, %v4595
  %v4598 = vadd.f32 %v4596, %v4597
  %v4599 = vtanh.pop %v4598
  %v4600 = vmul.f32 %v4592, %v4599
  %s4601 = scalar_lea.vmem %s0, 24
  %v4602 = vld [vmem:[%s4601] sm:$0xff]
  %4603 = vmatprep.subr.bf16.mxu0 %v804
  %4604 = vmatpush1.bf16.msra.mxu0 %v803
  %4605 = vmatprep.subr.bf16.mxu0 %v812
  %4606 = vmatpush1.bf16.msra.mxu0 %v811
  %4607 = vmatprep.subr.bf16.mxu0 %v820
  %4608 = vmatpush1.bf16.msra.mxu0 %v819
  %4609 = vmatprep.subr.bf16.mxu0 %v828
  %4610 = vmatpush1.bf16.msra.mxu0 %v827
  %4611 = vmatprep.subr.bf16.mxu0 %v836
  %4612 = vmatpush1.bf16.msra.mxu0 %v835
  %4613 = vmatprep.subr.bf16.mxu0 %v844
  %4614 = vmatpush1.bf16.msra.mxu0 %v843
  %4615 = vmatprep.subr.bf16.mxu0 %v852
  %4616 = vmatpush1.bf16.msra.mxu0 %v851
  %4617 = vmatprep.subr.bf16.mxu0 %v860
  %4618 = vmatpush1.bf16.msra.mxu0 %v859
  %4619 = vmatprep.subr.bf16.mxu0 %v868
  %4620 = vmatpush1.bf16.msra.mxu0 %v867
  %4621 = vmatprep.subr.bf16.mxu0 %v876
  %4622 = vmatpush1.bf16.msra.mxu0 %v875
  %4623 = vmatprep.subr.bf16.mxu0 %v884
  %4624 = vmatpush1.bf16.msra.mxu0 %v883
  %4625 = vmatprep.subr.bf16.mxu0 %v892
  %4626 = vmatpush1.bf16.msra.mxu0 %v891
  %4627 = vmatprep.subr.bf16.mxu0 %v900
  %4628 = vmatpush1.bf16.msra.mxu0 %v899
  %4629 = vmatprep.subr.bf16.mxu0 %v908
  %4630 = vmatpush1.bf16.msra.mxu0 %v907
  %4631 = vmatprep.subr.bf16.mxu0 %v916
  %4632 = vmatpush1.bf16.msra.mxu0 %v915
  %4633 = vmatprep.subr.bf16.mxu0 %v924
  %4634 = vmatpush1.bf16.msra.mxu0 %v923
  %4635 = vmatprep.mubr.bf16.mxu0 %v4110
  %4636 = vmatmul.mubr.bf16.gmra.mrb[0].mxu0 %v4109
  %v4637 = vpop.f32.mrb[0].mxu0
  %v4638 = vadd.f32 0.0, %v4637
  %v4639 = vpop.f32.mrb[0].mxu0
  %v4640 = vadd.f32 0.0, %v4639
  %v4641 = vpop.f32.mrb[0].mxu0
  %v4642 = vpop.f32.mrb[0].mxu0
  %4643 = vdwg.mxu0
  %4644 = vmatprep.subr.bf16.mxu0 %v806
  %4645 = vmatpush1.bf16.msra.mxu0 %v805
  %4646 = vmatprep.subr.bf16.mxu0 %v814
  %4647 = vmatpush1.bf16.msra.mxu0 %v813
  %4648 = vmatprep.subr.bf16.mxu0 %v822
  %4649 = vmatpush1.bf16.msra.mxu0 %v821
  %4650 = vmatprep.subr.bf16.mxu0 %v830
  %4651 = vmatpush1.bf16.msra.mxu0 %v829
  %4652 = vmatprep.subr.bf16.mxu0 %v838
  %4653 = vmatpush1.bf16.msra.mxu0 %v837
  %4654 = vmatprep.subr.bf16.mxu0 %v846
  %4655 = vmatpush1.bf16.msra.mxu0 %v845
  %4656 = vmatprep.subr.bf16.mxu0 %v854
  %4657 = vmatpush1.bf16.msra.mxu0 %v853
  %4658 = vmatprep.subr.bf16.mxu0 %v862
  %4659 = vmatpush1.bf16.msra.mxu0 %v861
  %4660 = vmatprep.subr.bf16.mxu0 %v870
  %4661 = vmatpush1.bf16.msra.mxu0 %v869
  %4662 = vmatprep.subr.bf16.mxu0 %v878
  %4663 = vmatpush1.bf16.msra.mxu0 %v877
  %4664 = vmatprep.subr.bf16.mxu0 %v886
  %4665 = vmatpush1.bf16.msra.mxu0 %v885
  %4666 = vmatprep.subr.bf16.mxu0 %v894
  %4667 = vmatpush1.bf16.msra.mxu0 %v893
  %4668 = vmatprep.subr.bf16.mxu0 %v902
  %4669 = vmatpush1.bf16.msra.mxu0 %v901
  %4670 = vmatprep.subr.bf16.mxu0 %v910
  %4671 = vmatpush1.bf16.msra.mxu0 %v909
  %4672 = vmatprep.subr.bf16.mxu0 %v918
  %4673 = vmatpush1.bf16.msra.mxu0 %v917
  %4674 = vmatprep.subr.bf16.mxu0 %v926
  %4675 = vmatpush1.bf16.msra.mxu0 %v925
  %4676 = vmatprep.mubr.bf16.mxu0 %v4110
  %4677 = vmatmul.mubr.bf16.gmra.mrb[0].mxu0 %v4109
  %v4678 = vpop.f32.mrb[0].mxu0
  %v4679 = vadd.f32 0.0, %v4678
  %v4680 = vpop.f32.mrb[0].mxu0
  %v4681 = vadd.f32 0.0, %v4680
  %v4682 = vpop.f32.mrb[0].mxu0
  %v4683 = vpop.f32.mrb[0].mxu0
  %4684 = vdwg.mxu0
  %4685 = vmatprep.subr.bf16.mxu0 %v808
  %4686 = vmatpush1.bf16.msra.mxu0 %v807
  %4687 = vmatprep.subr.bf16.mxu0 %v816
  %4688 = vmatpush1.bf16.msra.mxu0 %v815
  %4689 = vmatprep.subr.bf16.mxu0 %v824
  %4690 = vmatpush1.bf16.msra.mxu0 %v823
  %4691 = vmatprep.subr.bf16.mxu0 %v832
  %4692 = vmatpush1.bf16.msra.mxu0 %v831
  %4693 = vmatprep.subr.bf16.mxu0 %v840
  %4694 = vmatpush1.bf16.msra.mxu0 %v839
  %4695 = vmatprep.subr.bf16.mxu0 %v848
  %4696 = vmatpush1.bf16.msra.mxu0 %v847
  %4697 = vmatprep.subr.bf16.mxu0 %v856
  %4698 = vmatpush1.bf16.msra.mxu0 %v855
  %4699 = vmatprep.subr.bf16.mxu0 %v864
  %4700 = vmatpush1.bf16.msra.mxu0 %v863
  %4701 = vmatprep.subr.bf16.mxu0 %v872
  %4702 = vmatpush1.bf16.msra.mxu0 %v871
  %4703 = vmatprep.subr.bf16.mxu0 %v880
  %4704 = vmatpush1.bf16.msra.mxu0 %v879
  %4705 = vmatprep.subr.bf16.mxu0 %v888
  %4706 = vmatpush1.bf16.msra.mxu0 %v887
  %4707 = vmatprep.subr.bf16.mxu0 %v896
  %4708 = vmatpush1.bf16.msra.mxu0 %v895
  %4709 = vmatprep.subr.bf16.mxu0 %v904
  %4710 = vmatpush1.bf16.msra.mxu0 %v903
  %4711 = vmatprep.subr.bf16.mxu0 %v912
  %4712 = vmatpush1.bf16.msra.mxu0 %v911
  %4713 = vmatprep.subr.bf16.mxu0 %v920
  %4714 = vmatpush1.bf16.msra.mxu0 %v919
  %4715 = vmatprep.subr.bf16.mxu0 %v928
  %4716 = vmatpush1.bf16.msra.mxu0 %v927
  %4717 = vmatprep.mubr.bf16.mxu0 %v4110
  %4718 = vmatmul.mubr.bf16.gmra.mrb[0].mxu0 %v4109
  %v4719 = vpop.f32.mrb[0].mxu0
  %v4720 = vadd.f32 0.0, %v4719
  %v4721 = vpop.f32.mrb[0].mxu0
  %v4722 = vadd.f32 0.0, %v4721
  %v4723 = vpop.f32.mrb[0].mxu0
  %v4724 = vpop.f32.mrb[0].mxu0
  %4725 = vdwg.mxu0
  %4726 = vmatprep.subr.bf16.mxu0 %v810
  %4727 = vmatpush1.bf16.msra.mxu0 %v809
  %4728 = vmatprep.subr.bf16.mxu0 %v818
  %4729 = vmatpush1.bf16.msra.mxu0 %v817
  %4730 = vmatprep.subr.bf16.mxu0 %v826
  %4731 = vmatpush1.bf16.msra.mxu0 %v825
  %4732 = vmatprep.subr.bf16.mxu0 %v834
  %4733 = vmatpush1.bf16.msra.mxu0 %v833
  %4734 = vmatprep.subr.bf16.mxu0 %v842
  %4735 = vmatpush1.bf16.msra.mxu0 %v841
  %4736 = vmatprep.subr.bf16.mxu0 %v850
  %4737 = vmatpush1.bf16.msra.mxu0 %v849
  %4738 = vmatprep.subr.bf16.mxu0 %v858
  %4739 = vmatpush1.bf16.msra.mxu0 %v857
  %4740 = vmatprep.subr.bf16.mxu0 %v866
  %4741 = vmatpush1.bf16.msra.mxu0 %v865
  %4742 = vmatprep.subr.bf16.mxu0 %v874
  %4743 = vmatpush1.bf16.msra.mxu0 %v873
  %4744 = vmatprep.subr.bf16.mxu0 %v882
  %4745 = vmatpush1.bf16.msra.mxu0 %v881
  %4746 = vmatprep.subr.bf16.mxu0 %v890
  %4747 = vmatpush1.bf16.msra.mxu0 %v889
  %4748 = vmatprep.subr.bf16.mxu0 %v898
  %4749 = vmatpush1.bf16.msra.mxu0 %v897
  %4750 = vmatprep.subr.bf16.mxu0 %v906
  %4751 = vmatpush1.bf16.msra.mxu0 %v905
  %4752 = vmatprep.subr.bf16.mxu0 %v914
  %4753 = vmatpush1.bf16.msra.mxu0 %v913
  %4754 = vmatprep.subr.bf16.mxu0 %v922
  %4755 = vmatpush1.bf16.msra.mxu0 %v921
  %4756 = vmatprep.subr.bf16.mxu0 %v930
  %4757 = vmatpush1.bf16.msra.mxu0 %v929
  %4758 = vmatprep.mubr.bf16.mxu0 %v4110
  %4759 = vmatmul.mubr.bf16.gmra.mrb[0].mxu0 %v4109
  %v4760 = vpop.f32.mrb[0].mxu0
  %v4761 = vadd.f32 0.0, %v4760
  %v4762 = vpop.f32.mrb[0].mxu0
  %v4763 = vadd.f32 0.0, %v4762
  %v4764 = vpop.f32.mrb[0].mxu0
  %v4765 = vpop.f32.mrb[0].mxu0
  %4766 = vdwg.mxu0
  %v4775 = vcombine.low %v4638, %v4640
  %v4776 = vcombine.low %v4679, %v4681
  %v4777 = vcombine.low %v4720, %v4722
  %v4778 = vcombine.low %v4761, %v4763
  %v4780 = vunpack.c.l.s4 1966171168
  %v4781 = vunpack.c.0.s8 %v4780
  %v4782 = vlaneseq
  %v4783 = vshrl.u32 %v4782, 7
  %v4784 = vsub.s32 %v4781, %v4783
  %v4785 = vrot.slane %v4775, %v4784
  %v4787 = vunpack.c.l.s4 1966171168
  %v4788 = vunpack.c.0.s8 %v4787
  %v4789 = vlaneseq
  %v4790 = vshrl.u32 %v4789, 7
  %v4791 = vsub.s32 %v4788, %v4790
  %v4792 = vrot.slane %v4776, %v4791
  %v4794 = vunpack.c.l.s4 1966171168
  %v4795 = vunpack.c.0.s8 %v4794
  %v4796 = vlaneseq
  %v4797 = vshrl.u32 %v4796, 7
  %v4798 = vsub.s32 %v4795, %v4797
  %v4799 = vrot.slane %v4777, %v4798
  %v4801 = vunpack.c.l.s4 1966171168
  %v4802 = vunpack.c.0.s8 %v4801
  %v4803 = vlaneseq
  %v4804 = vshrl.u32 %v4803, 7
  %v4805 = vsub.s32 %v4802, %v4804
  %v4806 = vrot.slane %v4778, %v4805
  %v4807 = vcombine.low %v4785, %v4792
  %v4808 = vcombine.low %v4799, %v4806
  %v4810 = vunpack.c.l.s4 1966171168
  %v4811 = vunpack.c.0.s8 %v4810
  %v4812 = vlaneseq
  %v4813 = vshrl.u32 %v4812, 7
  %v4814 = vsub.s32 %v4811, %v4813
  %v4815 = vrot.slane %v4807, %v4814
  %v4817 = vunpack.c.l.s4 1966171168
  %v4818 = vunpack.c.0.s8 %v4817
  %v4819 = vlaneseq
  %v4820 = vshrl.u32 %v4819, 7
  %v4821 = vsub.s32 %v4818, %v4820
  %v4822 = vrot.slane %v4808, %v4821
  %v4823 = vcombine.low %v4815, %v4822
  %v4825 = vadd.f32 %v4602, %v4823
  %v4826 = vxor.u32 %v4825, 2147483648
  %v4827 = vmul.f32 %v4826, 1.442695
  %v4828 = vpow.pop %v4827
  %v4829 = vadd.f32 %v4828, 1.0
  %v4830 = vrcp.pop %v4829
  %v4831 = vmul.f32 1.0, %v4830
  %v4833 = vrot.slane %v4825, 2
  %v4835 = vxor.u32 %v4833, 2147483648
  %v4836 = vmul.f32 %v4835, 1.442695
  %v4837 = vpow.pop %v4836
  %v4838 = vadd.f32 %v4837, 1.0
  %v4839 = vrcp.pop %v4838
  %v4840 = vmul.f32 1.0, %v4839
  %v4841 = vrot.slane %v4825, 4
  %v4843 = vxor.u32 %v4841, 2147483648
  %v4844 = vmul.f32 %v4843, 1.442695
  %v4845 = vpow.pop %v4844
  %v4846 = vadd.f32 %v4845, 1.0
  %v4847 = vrcp.pop %v4846
  %v4848 = vmul.f32 1.0, %v4847
  %v4849 = vrot.slane %v4825, 6
  %v4851 = vtanh.pop %v4849
  %v4852 = vmul.f32 %v4840, %v4095
  %v4853 = vmul.f32 %v4831, %v4851
  %v4854 = vadd.f32 %v4852, %v4853
  %v4855 = vtanh.pop %v4854
  %v4856 = vmul.f32 %v4848, %v4855
  %v4858 = vlaneseq
  %v4859 = vshrl.u32 %v4858, 7
  %v4860 = vsub.s32 0, %v4859
  %v4861 = vrot.slane %v4856, %v4860
  %v4862 = vlaneseq
  %v4863 = vshrl.u32 %v4862, 7
  %v4864 = vsub.s32 1, %v4863
  %v4865 = vrot.slane %v4856, %v4864
  %v4868 = vpack.c.bf16 %v4861, %v4861
  %v4869 = vpack.c.bf16 %v4865, %v4865
  %4870 = vmatprep.subr.bf16.mxu0 %v1711
  %4871 = vmatpush1.bf16.msra.mxu0 %v1710
  %4872 = vmatprep.subr.bf16.mxu0 %v1719
  %4873 = vmatpush1.bf16.msra.mxu0 %v1718
  %4874 = vmatprep.subr.bf16.mxu0 %v1727
  %4875 = vmatpush1.bf16.msra.mxu0 %v1726
  %4876 = vmatprep.subr.bf16.mxu0 %v1735
  %4877 = vmatpush1.bf16.msra.mxu0 %v1734
  %4878 = vmatprep.subr.bf16.mxu0 %v1743
  %4879 = vmatpush1.bf16.msra.mxu0 %v1742
  %4880 = vmatprep.subr.bf16.mxu0 %v1751
  %4881 = vmatpush1.bf16.msra.mxu0 %v1750
  %4882 = vmatprep.subr.bf16.mxu0 %v1759
  %4883 = vmatpush1.bf16.msra.mxu0 %v1758
  %4884 = vmatprep.subr.bf16.mxu0 %v1767
  %4885 = vmatpush1.bf16.msra.mxu0 %v1766
  %4886 = vmatprep.subr.bf16.mxu0 %v1775
  %4887 = vmatpush1.bf16.msra.mxu0 %v1774
  %4888 = vmatprep.subr.bf16.mxu0 %v1783
  %4889 = vmatpush1.bf16.msra.mxu0 %v1782
  %4890 = vmatprep.subr.bf16.mxu0 %v1791
  %4891 = vmatpush1.bf16.msra.mxu0 %v1790
  %4892 = vmatprep.subr.bf16.mxu0 %v1799
  %4893 = vmatpush1.bf16.msra.mxu0 %v1798
  %4894 = vmatprep.subr.bf16.mxu0 %v1807
  %4895 = vmatpush1.bf16.msra.mxu0 %v1806
  %4896 = vmatprep.subr.bf16.mxu0 %v1815
  %4897 = vmatpush1.bf16.msra.mxu0 %v1814
  %4898 = vmatprep.subr.bf16.mxu0 %v1823
  %4899 = vmatpush1.bf16.msra.mxu0 %v1822
  %4900 = vmatprep.subr.bf16.mxu0 %v1831
  %4901 = vmatpush1.bf16.msra.mxu0 %v1830
  %4902 = vmatprep.mubr.bf16.mxu0 %v4869
  %4903 = vmatmul.mubr.bf16.gmra.mrb[0].mxu0 %v4868
  %v4904 = vpop.f32.mrb[0].mxu0
  %v4905 = vadd.f32 0.0, %v4904
  %v4906 = vpop.f32.mrb[0].mxu0
  %v4907 = vadd.f32 0.0, %v4906
  %v4908 = vpop.f32.mrb[0].mxu0
  %v4909 = vpop.f32.mrb[0].mxu0
  %4910 = vdwg.mxu0
  %4911 = vmatprep.subr.bf16.mxu0 %v1713
  %4912 = vmatpush1.bf16.msra.mxu0 %v1712
  %4913 = vmatprep.subr.bf16.mxu0 %v1721
  %4914 = vmatpush1.bf16.msra.mxu0 %v1720
  %4915 = vmatprep.subr.bf16.mxu0 %v1729
  %4916 = vmatpush1.bf16.msra.mxu0 %v1728
  %4917 = vmatprep.subr.bf16.mxu0 %v1737
  %4918 = vmatpush1.bf16.msra.mxu0 %v1736
  %4919 = vmatprep.subr.bf16.mxu0 %v1745
  %4920 = vmatpush1.bf16.msra.mxu0 %v1744
  %4921 = vmatprep.subr.bf16.mxu0 %v1753
  %4922 = vmatpush1.bf16.msra.mxu0 %v1752
  %4923 = vmatprep.subr.bf16.mxu0 %v1761
  %4924 = vmatpush1.bf16.msra.mxu0 %v1760
  %4925 = vmatprep.subr.bf16.mxu0 %v1769
  %4926 = vmatpush1.bf16.msra.mxu0 %v1768
  %4927 = vmatprep.subr.bf16.mxu0 %v1777
  %4928 = vmatpush1.bf16.msra.mxu0 %v1776
  %4929 = vmatprep.subr.bf16.mxu0 %v1785
  %4930 = vmatpush1.bf16.msra.mxu0 %v1784
  %4931 = vmatprep.subr.bf16.mxu0 %v1793
  %4932 = vmatpush1.bf16.msra.mxu0 %v1792
  %4933 = vmatprep.subr.bf16.mxu0 %v1801
  %4934 = vmatpush1.bf16.msra.mxu0 %v1800
  %4935 = vmatprep.subr.bf16.mxu0 %v1809
  %4936 = vmatpush1.bf16.msra.mxu0 %v1808
  %4937 = vmatprep.subr.bf16.mxu0 %v1817
  %4938 = vmatpush1.bf16.msra.mxu0 %v1816
  %4939 = vmatprep.subr.bf16.mxu0 %v1825
  %4940 = vmatpush1.bf16.msra.mxu0 %v1824
  %4941 = vmatprep.subr.bf16.mxu0 %v1833
  %4942 = vmatpush1.bf16.msra.mxu0 %v1832
  %4943 = vmatprep.mubr.bf16.mxu0 %v4869
  %4944 = vmatmul.mubr.bf16.gmra.mrb[0].mxu0 %v4868
  %v4945 = vpop.f32.mrb[0].mxu0
  %v4946 = vadd.f32 0.0, %v4945
  %v4947 = vpop.f32.mrb[0].mxu0
  %v4948 = vadd.f32 0.0, %v4947
  %v4949 = vpop.f32.mrb[0].mxu0
  %v4950 = vpop.f32.mrb[0].mxu0
  %4951 = vdwg.mxu0
  %4952 = vmatprep.subr.bf16.mxu0 %v1715
  %4953 = vmatpush1.bf16.msra.mxu0 %v1714
  %4954 = vmatprep.subr.bf16.mxu0 %v1723
  %4955 = vmatpush1.bf16.msra.mxu0 %v1722
  %4956 = vmatprep.subr.bf16.mxu0 %v1731
  %4957 = vmatpush1.bf16.msra.mxu0 %v1730
  %4958 = vmatprep.subr.bf16.mxu0 %v1739
  %4959 = vmatpush1.bf16.msra.mxu0 %v1738
  %4960 = vmatprep.subr.bf16.mxu0 %v1747
  %4961 = vmatpush1.bf16.msra.mxu0 %v1746
  %4962 = vmatprep.subr.bf16.mxu0 %v1755
  %4963 = vmatpush1.bf16.msra.mxu0 %v1754
  %4964 = vmatprep.subr.bf16.mxu0 %v1763
  %4965 = vmatpush1.bf16.msra.mxu0 %v1762
  %4966 = vmatprep.subr.bf16.mxu0 %v1771
  %4967 = vmatpush1.bf16.msra.mxu0 %v1770
  %4968 = vmatprep.subr.bf16.mxu0 %v1779
  %4969 = vmatpush1.bf16.msra.mxu0 %v1778
  %4970 = vmatprep.subr.bf16.mxu0 %v1787
  %4971 = vmatpush1.bf16.msra.mxu0 %v1786
  %4972 = vmatprep.subr.bf16.mxu0 %v1795
  %4973 = vmatpush1.bf16.msra.mxu0 %v1794
  %4974 = vmatprep.subr.bf16.mxu0 %v1803
  %4975 = vmatpush1.bf16.msra.mxu0 %v1802
  %4976 = vmatprep.subr.bf16.mxu0 %v1811
  %4977 = vmatpush1.bf16.msra.mxu0 %v1810
  %4978 = vmatprep.subr.bf16.mxu0 %v1819
  %4979 = vmatpush1.bf16.msra.mxu0 %v1818
  %4980 = vmatprep.subr.bf16.mxu0 %v1827
  %4981 = vmatpush1.bf16.msra.mxu0 %v1826
  %4982 = vmatprep.subr.bf16.mxu0 %v1835
  %4983 = vmatpush1.bf16.msra.mxu0 %v1834
  %4984 = vmatprep.mubr.bf16.mxu0 %v4869
  %4985 = vmatmul.mubr.bf16.gmra.mrb[0].mxu0 %v4868
  %v4986 = vpop.f32.mrb[0].mxu0
  %v4987 = vadd.f32 0.0, %v4986
  %v4988 = vpop.f32.mrb[0].mxu0
  %v4989 = vadd.f32 0.0, %v4988
  %v4990 = vpop.f32.mrb[0].mxu0
  %v4991 = vpop.f32.mrb[0].mxu0
  %4992 = vdwg.mxu0
  %4993 = vmatprep.subr.bf16.mxu0 %v1717
  %4994 = vmatpush1.bf16.msra.mxu0 %v1716
  %4995 = vmatprep.subr.bf16.mxu0 %v1725
  %4996 = vmatpush1.bf16.msra.mxu0 %v1724
  %4997 = vmatprep.subr.bf16.mxu0 %v1733
  %4998 = vmatpush1.bf16.msra.mxu0 %v1732
  %4999 = vmatprep.subr.bf16.mxu0 %v1741
  %5000 = vmatpush1.bf16.msra.mxu0 %v1740
  %5001 = vmatprep.subr.bf16.mxu0 %v1749
  %5002 = vmatpush1.bf16.msra.mxu0 %v1748
  %5003 = vmatprep.subr.bf16.mxu0 %v1757
  %5004 = vmatpush1.bf16.msra.mxu0 %v1756
  %5005 = vmatprep.subr.bf16.mxu0 %v1765
  %5006 = vmatpush1.bf16.msra.mxu0 %v1764
  %5007 = vmatprep.subr.bf16.mxu0 %v1773
  %5008 = vmatpush1.bf16.msra.mxu0 %v1772
  %5009 = vmatprep.subr.bf16.mxu0 %v1781
  %5010 = vmatpush1.bf16.msra.mxu0 %v1780
  %5011 = vmatprep.subr.bf16.mxu0 %v1789
  %5012 = vmatpush1.bf16.msra.mxu0 %v1788
  %5013 = vmatprep.subr.bf16.mxu0 %v1797
  %5014 = vmatpush1.bf16.msra.mxu0 %v1796
  %5015 = vmatprep.subr.bf16.mxu0 %v1805
  %5016 = vmatpush1.bf16.msra.mxu0 %v1804
  %5017 = vmatprep.subr.bf16.mxu0 %v1813
  %5018 = vmatpush1.bf16.msra.mxu0 %v1812
  %5019 = vmatprep.subr.bf16.mxu0 %v1821
  %5020 = vmatpush1.bf16.msra.mxu0 %v1820
  %5021 = vmatprep.subr.bf16.mxu0 %v1829
  %5022 = vmatpush1.bf16.msra.mxu0 %v1828
  %5023 = vmatprep.subr.bf16.mxu0 %v1837
  %5024 = vmatpush1.bf16.msra.mxu0 %v1836
  %5025 = vmatprep.mubr.bf16.mxu0 %v4869
  %5026 = vmatmul.mubr.bf16.gmra.mrb[0].mxu0 %v4868
  %v5027 = vpop.f32.mrb[0].mxu0
  %v5028 = vadd.f32 0.0, %v5027
  %v5029 = vpop.f32.mrb[0].mxu0
  %v5030 = vadd.f32 0.0, %v5029
  %v5031 = vpop.f32.mrb[0].mxu0
  %v5032 = vpop.f32.mrb[0].mxu0
  %5033 = vdwg.mxu0
  %v5042 = vcombine.low %v4905, %v4907
  %v5043 = vcombine.low %v4946, %v4948
  %v5044 = vcombine.low %v4987, %v4989
  %v5045 = vcombine.low %v5028, %v5030
  %v5047 = vunpack.c.l.s4 1966171168
  %v5048 = vunpack.c.0.s8 %v5047
  %v5049 = vlaneseq
  %v5050 = vshrl.u32 %v5049, 7
  %v5051 = vsub.s32 %v5048, %v5050
  %v5052 = vrot.slane %v5042, %v5051
  %v5054 = vunpack.c.l.s4 1966171168
  %v5055 = vunpack.c.0.s8 %v5054
  %v5056 = vlaneseq
  %v5057 = vshrl.u32 %v5056, 7
  %v5058 = vsub.s32 %v5055, %v5057
  %v5059 = vrot.slane %v5043, %v5058
  %v5061 = vunpack.c.l.s4 1966171168
  %v5062 = vunpack.c.0.s8 %v5061
  %v5063 = vlaneseq
  %v5064 = vshrl.u32 %v5063, 7
  %v5065 = vsub.s32 %v5062, %v5064
  %v5066 = vrot.slane %v5044, %v5065
  %v5068 = vunpack.c.l.s4 1966171168
  %v5069 = vunpack.c.0.s8 %v5068
  %v5070 = vlaneseq
  %v5071 = vshrl.u32 %v5070, 7
  %v5072 = vsub.s32 %v5069, %v5071
  %v5073 = vrot.slane %v5045, %v5072
  %v5074 = vcombine.low %v5052, %v5059
  %v5075 = vcombine.low %v5066, %v5073
  %v5077 = vunpack.c.l.s4 1966171168
  %v5078 = vunpack.c.0.s8 %v5077
  %v5079 = vlaneseq
  %v5080 = vshrl.u32 %v5079, 7
  %v5081 = vsub.s32 %v5078, %v5080
  %v5082 = vrot.slane %v5074, %v5081
  %v5084 = vunpack.c.l.s4 1966171168
  %v5085 = vunpack.c.0.s8 %v5084
  %v5086 = vlaneseq
  %v5087 = vshrl.u32 %v5086, 7
  %v5088 = vsub.s32 %v5085, %v5087
  %v5089 = vrot.slane %v5075, %v5088
  %v5090 = vcombine.low %v5082, %v5089
  %v5092 = vadd.f32 %v417, %v5090
  %v5094 = vlaneseq
  %v5095 = vshrl.u32 %v5094, 7
  %v5096 = vsub.s32 0, %v5095
  %v5097 = vrot.slane %v4600, %v5096
  %v5098 = vlaneseq
  %v5099 = vshrl.u32 %v5098, 7
  %v5100 = vsub.s32 1, %v5099
  %v5101 = vrot.slane %v4600, %v5100
  %v5104 = vpack.c.bf16 %v5097, %v5097
  %v5105 = vpack.c.bf16 %v5101, %v5101
  %5106 = vmatprep.subr.bf16.mxu0 %v2574
  %5107 = vmatpush1.bf16.msra.mxu0 %v2573
  %5108 = vmatprep.subr.bf16.mxu0 %v2582
  %5109 = vmatpush1.bf16.msra.mxu0 %v2581
  %5110 = vmatprep.subr.bf16.mxu0 %v2590
  %5111 = vmatpush1.bf16.msra.mxu0 %v2589
  %5112 = vmatprep.subr.bf16.mxu0 %v2598
  %5113 = vmatpush1.bf16.msra.mxu0 %v2597
  %5114 = vmatprep.subr.bf16.mxu0 %v2606
  %5115 = vmatpush1.bf16.msra.mxu0 %v2605
  %5116 = vmatprep.subr.bf16.mxu0 %v2614
  %5117 = vmatpush1.bf16.msra.mxu0 %v2613
  %5118 = vmatprep.subr.bf16.mxu0 %v2622
  %5119 = vmatpush1.bf16.msra.mxu0 %v2621
  %5120 = vmatprep.subr.bf16.mxu0 %v2630
  %5121 = vmatpush1.bf16.msra.mxu0 %v2629
  %5122 = vmatprep.subr.bf16.mxu0 %v2638
  %5123 = vmatpush1.bf16.msra.mxu0 %v2637
  %5124 = vmatprep.subr.bf16.mxu0 %v2646
  %5125 = vmatpush1.bf16.msra.mxu0 %v2645
  %5126 = vmatprep.subr.bf16.mxu0 %v2654
  %5127 = vmatpush1.bf16.msra.mxu0 %v2653
  %5128 = vmatprep.subr.bf16.mxu0 %v2662
  %5129 = vmatpush1.bf16.msra.mxu0 %v2661
  %5130 = vmatprep.subr.bf16.mxu0 %v2670
  %5131 = vmatpush1.bf16.msra.mxu0 %v2669
  %5132 = vmatprep.subr.bf16.mxu0 %v2678
  %5133 = vmatpush1.bf16.msra.mxu0 %v2677
  %5134 = vmatprep.subr.bf16.mxu0 %v2686
  %5135 = vmatpush1.bf16.msra.mxu0 %v2685
  %5136 = vmatprep.subr.bf16.mxu0 %v2694
  %5137 = vmatpush1.bf16.msra.mxu0 %v2693
  %5138 = vmatprep.mubr.bf16.mxu0 %v5105
  %5139 = vmatmul.mubr.bf16.gmra.mrb[0].mxu0 %v5104
  %v5140 = vpop.f32.mrb[0].mxu0
  %v5141 = vadd.f32 0.0, %v5140
  %v5142 = vpop.f32.mrb[0].mxu0
  %v5143 = vadd.f32 0.0, %v5142
  %v5144 = vpop.f32.mrb[0].mxu0
  %v5145 = vpop.f32.mrb[0].mxu0
  %5146 = vdwg.mxu0
  %5147 = vmatprep.subr.bf16.mxu0 %v2576
  %5148 = vmatpush1.bf16.msra.mxu0 %v2575
  %5149 = vmatprep.subr.bf16.mxu0 %v2584
  %5150 = vmatpush1.bf16.msra.mxu0 %v2583
  %5151 = vmatprep.subr.bf16.mxu0 %v2592
  %5152 = vmatpush1.bf16.msra.mxu0 %v2591
  %5153 = vmatprep.subr.bf16.mxu0 %v2600
  %5154 = vmatpush1.bf16.msra.mxu0 %v2599
  %5155 = vmatprep.subr.bf16.mxu0 %v2608
  %5156 = vmatpush1.bf16.msra.mxu0 %v2607
  %5157 = vmatprep.subr.bf16.mxu0 %v2616
  %5158 = vmatpush1.bf16.msra.mxu0 %v2615
  %5159 = vmatprep.subr.bf16.mxu0 %v2624
  %5160 = vmatpush1.bf16.msra.mxu0 %v2623
  %5161 = vmatprep.subr.bf16.mxu0 %v2632
  %5162 = vmatpush1.bf16.msra.mxu0 %v2631
  %5163 = vmatprep.subr.bf16.mxu0 %v2640
  %5164 = vmatpush1.bf16.msra.mxu0 %v2639
  %5165 = vmatprep.subr.bf16.mxu0 %v2648
  %5166 = vmatpush1.bf16.msra.mxu0 %v2647
  %5167 = vmatprep.subr.bf16.mxu0 %v2656
  %5168 = vmatpush1.bf16.msra.mxu0 %v2655
  %5169 = vmatprep.subr.bf16.mxu0 %v2664
  %5170 = vmatpush1.bf16.msra.mxu0 %v2663
  %5171 = vmatprep.subr.bf16.mxu0 %v2672
  %5172 = vmatpush1.bf16.msra.mxu0 %v2671
  %5173 = vmatprep.subr.bf16.mxu0 %v2680
  %5174 = vmatpush1.bf16.msra.mxu0 %v2679
  %5175 = vmatprep.subr.bf16.mxu0 %v2688
  %5176 = vmatpush1.bf16.msra.mxu0 %v2687
  %5177 = vmatprep.subr.bf16.mxu0 %v2696
  %5178 = vmatpush1.bf16.msra.mxu0 %v2695
  %5179 = vmatprep.mubr.bf16.mxu0 %v5105
  %5180 = vmatmul.mubr.bf16.gmra.mrb[0].mxu0 %v5104
  %v5181 = vpop.f32.mrb[0].mxu0
  %v5182 = vadd.f32 0.0, %v5181
  %v5183 = vpop.f32.mrb[0].mxu0
  %v5184 = vadd.f32 0.0, %v5183
  %v5185 = vpop.f32.mrb[0].mxu0
  %v5186 = vpop.f32.mrb[0].mxu0
  %5187 = vdwg.mxu0
  %5188 = vmatprep.subr.bf16.mxu0 %v2578
  %5189 = vmatpush1.bf16.msra.mxu0 %v2577
  %5190 = vmatprep.subr.bf16.mxu0 %v2586
  %5191 = vmatpush1.bf16.msra.mxu0 %v2585
  %5192 = vmatprep.subr.bf16.mxu0 %v2594
  %5193 = vmatpush1.bf16.msra.mxu0 %v2593
  %5194 = vmatprep.subr.bf16.mxu0 %v2602
  %5195 = vmatpush1.bf16.msra.mxu0 %v2601
  %5196 = vmatprep.subr.bf16.mxu0 %v2610
  %5197 = vmatpush1.bf16.msra.mxu0 %v2609
  %5198 = vmatprep.subr.bf16.mxu0 %v2618
  %5199 = vmatpush1.bf16.msra.mxu0 %v2617
  %5200 = vmatprep.subr.bf16.mxu0 %v2626
  %5201 = vmatpush1.bf16.msra.mxu0 %v2625
  %5202 = vmatprep.subr.bf16.mxu0 %v2634
  %5203 = vmatpush1.bf16.msra.mxu0 %v2633
  %5204 = vmatprep.subr.bf16.mxu0 %v2642
  %5205 = vmatpush1.bf16.msra.mxu0 %v2641
  %5206 = vmatprep.subr.bf16.mxu0 %v2650
  %5207 = vmatpush1.bf16.msra.mxu0 %v2649
  %5208 = vmatprep.subr.bf16.mxu0 %v2658
  %5209 = vmatpush1.bf16.msra.mxu0 %v2657
  %5210 = vmatprep.subr.bf16.mxu0 %v2666
  %5211 = vmatpush1.bf16.msra.mxu0 %v2665
  %5212 = vmatprep.subr.bf16.mxu0 %v2674
  %5213 = vmatpush1.bf16.msra.mxu0 %v2673
  %5214 = vmatprep.subr.bf16.mxu0 %v2682
  %5215 = vmatpush1.bf16.msra.mxu0 %v2681
  %5216 = vmatprep.subr.bf16.mxu0 %v2690
  %5217 = vmatpush1.bf16.msra.mxu0 %v2689
  %5218 = vmatprep.subr.bf16.mxu0 %v2698
  %5219 = vmatpush1.bf16.msra.mxu0 %v2697
  %5220 = vmatprep.mubr.bf16.mxu0 %v5105
  %5221 = vmatmul.mubr.bf16.gmra.mrb[0].mxu0 %v5104
  %v5222 = vpop.f32.mrb[0].mxu0
  %v5223 = vadd.f32 0.0, %v5222
  %v5224 = vpop.f32.mrb[0].mxu0
  %v5225 = vadd.f32 0.0, %v5224
  %v5226 = vpop.f32.mrb[0].mxu0
  %v5227 = vpop.f32.mrb[0].mxu0
  %5228 = vdwg.mxu0
  %5229 = vmatprep.subr.bf16.mxu0 %v2580
  %5230 = vmatpush1.bf16.msra.mxu0 %v2579
  %5231 = vmatprep.subr.bf16.mxu0 %v2588
  %5232 = vmatpush1.bf16.msra.mxu0 %v2587
  %5233 = vmatprep.subr.bf16.mxu0 %v2596
  %5234 = vmatpush1.bf16.msra.mxu0 %v2595
  %5235 = vmatprep.subr.bf16.mxu0 %v2604
  %5236 = vmatpush1.bf16.msra.mxu0 %v2603
  %5237 = vmatprep.subr.bf16.mxu0 %v2612
  %5238 = vmatpush1.bf16.msra.mxu0 %v2611
  %5239 = vmatprep.subr.bf16.mxu0 %v2620
  %5240 = vmatpush1.bf16.msra.mxu0 %v2619
  %5241 = vmatprep.subr.bf16.mxu0 %v2628
  %5242 = vmatpush1.bf16.msra.mxu0 %v2627
  %5243 = vmatprep.subr.bf16.mxu0 %v2636
  %5244 = vmatpush1.bf16.msra.mxu0 %v2635
  %5245 = vmatprep.subr.bf16.mxu0 %v2644
  %5246 = vmatpush1.bf16.msra.mxu0 %v2643
  %5247 = vmatprep.subr.bf16.mxu0 %v2652
  %5248 = vmatpush1.bf16.msra.mxu0 %v2651
  %5249 = vmatprep.subr.bf16.mxu0 %v2660
  %5250 = vmatpush1.bf16.msra.mxu0 %v2659
  %5251 = vmatprep.subr.bf16.mxu0 %v2668
  %5252 = vmatpush1.bf16.msra.mxu0 %v2667
  %5253 = vmatprep.subr.bf16.mxu0 %v2676
  %5254 = vmatpush1.bf16.msra.mxu0 %v2675
  %5255 = vmatprep.subr.bf16.mxu0 %v2684
  %5256 = vmatpush1.bf16.msra.mxu0 %v2683
  %5257 = vmatprep.subr.bf16.mxu0 %v2692
  %5258 = vmatpush1.bf16.msra.mxu0 %v2691
  %5259 = vmatprep.subr.bf16.mxu0 %v2700
  %5260 = vmatpush1.bf16.msra.mxu0 %v2699
  %5261 = vmatprep.mubr.bf16.mxu0 %v5105
  %5262 = vmatmul.mubr.bf16.gmra.mrb[0].mxu0 %v5104
  %v5263 = vpop.f32.mrb[0].mxu0
  %v5264 = vadd.f32 0.0, %v5263
  %v5265 = vpop.f32.mrb[0].mxu0
  %v5266 = vadd.f32 0.0, %v5265
  %v5267 = vpop.f32.mrb[0].mxu0
  %v5268 = vpop.f32.mrb[0].mxu0
  %5269 = vdwg.mxu0
  %v5278 = vcombine.low %v5141, %v5143
  %v5279 = vcombine.low %v5182, %v5184
  %v5280 = vcombine.low %v5223, %v5225
  %v5281 = vcombine.low %v5264, %v5266
  %v5283 = vunpack.c.l.s4 1966171168
  %v5284 = vunpack.c.0.s8 %v5283
  %v5285 = vlaneseq
  %v5286 = vshrl.u32 %v5285, 7
  %v5287 = vsub.s32 %v5284, %v5286
  %v5288 = vrot.slane %v5278, %v5287
  %v5290 = vunpack.c.l.s4 1966171168
  %v5291 = vunpack.c.0.s8 %v5290
  %v5292 = vlaneseq
  %v5293 = vshrl.u32 %v5292, 7
  %v5294 = vsub.s32 %v5291, %v5293
  %v5295 = vrot.slane %v5279, %v5294
  %v5297 = vunpack.c.l.s4 1966171168
  %v5298 = vunpack.c.0.s8 %v5297
  %v5299 = vlaneseq
  %v5300 = vshrl.u32 %v5299, 7
  %v5301 = vsub.s32 %v5298, %v5300
  %v5302 = vrot.slane %v5280, %v5301
  %v5304 = vunpack.c.l.s4 1966171168
  %v5305 = vunpack.c.0.s8 %v5304
  %v5306 = vlaneseq
  %v5307 = vshrl.u32 %v5306, 7
  %v5308 = vsub.s32 %v5305, %v5307
  %v5309 = vrot.slane %v5281, %v5308
  %v5310 = vcombine.low %v5288, %v5295
  %v5311 = vcombine.low %v5302, %v5309
  %v5313 = vunpack.c.l.s4 1966171168
  %v5314 = vunpack.c.0.s8 %v5313
  %v5315 = vlaneseq
  %v5316 = vshrl.u32 %v5315, 7
  %v5317 = vsub.s32 %v5314, %v5316
  %v5318 = vrot.slane %v5310, %v5317
  %v5320 = vunpack.c.l.s4 1966171168
  %v5321 = vunpack.c.0.s8 %v5320
  %v5322 = vlaneseq
  %v5323 = vshrl.u32 %v5322, 7
  %v5324 = vsub.s32 %v5321, %v5323
  %v5325 = vrot.slane %v5311, %v5324
  %v5326 = vcombine.low %v5318, %v5325
  %v5328 = vadd.f32 %v5092, %v5326
  %v5329 = vxor.u32 %v5328, 2147483648
  %v5330 = vmul.f32 %v5329, 1.442695
  %v5331 = vpow.pop %v5330
  %v5332 = vadd.f32 %v5331, 1.0
  %v5333 = vrcp.pop %v5332
  %v5334 = vmul.f32 1.0, %v5333
  %v5336 = vrot.slane %v5328, 2
  %v5338 = vxor.u32 %v5336, 2147483648
  %v5339 = vmul.f32 %v5338, 1.442695
  %v5340 = vpow.pop %v5339
  %v5341 = vadd.f32 %v5340, 1.0
  %v5342 = vrcp.pop %v5341
  %v5343 = vmul.f32 1.0, %v5342
  %v5344 = vrot.slane %v5328, 4
  %v5346 = vxor.u32 %v5344, 2147483648
  %v5347 = vmul.f32 %v5346, 1.442695
  %v5348 = vpow.pop %v5347
  %v5349 = vadd.f32 %v5348, 1.0
  %v5350 = vrcp.pop %v5349
  %v5351 = vmul.f32 1.0, %v5350
  %v5352 = vrot.slane %v5328, 6
  %v5354 = vtanh.pop %v5352
  %v5355 = vmul.f32 %v5343, %v4598
  %v5356 = vmul.f32 %v5334, %v5354
  %v5357 = vadd.f32 %v5355, %v5356
  %v5358 = vtanh.pop %v5357
  %v5359 = vmul.f32 %v5351, %v5358
  %s5360 = scalar_lea.vmem %s0, 32
  %v5361 = vld [vmem:[%s5360] sm:$0xff]
  %5362 = vmatprep.subr.bf16.mxu0 %v804
  %5363 = vmatpush1.bf16.msra.mxu0 %v803
  %5364 = vmatprep.subr.bf16.mxu0 %v812
  %5365 = vmatpush1.bf16.msra.mxu0 %v811
  %5366 = vmatprep.subr.bf16.mxu0 %v820
  %5367 = vmatpush1.bf16.msra.mxu0 %v819
  %5368 = vmatprep.subr.bf16.mxu0 %v828
  %5369 = vmatpush1.bf16.msra.mxu0 %v827
  %5370 = vmatprep.subr.bf16.mxu0 %v836
  %5371 = vmatpush1.bf16.msra.mxu0 %v835
  %5372 = vmatprep.subr.bf16.mxu0 %v844
  %5373 = vmatpush1.bf16.msra.mxu0 %v843
  %5374 = vmatprep.subr.bf16.mxu0 %v852
  %5375 = vmatpush1.bf16.msra.mxu0 %v851
  %5376 = vmatprep.subr.bf16.mxu0 %v860
  %5377 = vmatpush1.bf16.msra.mxu0 %v859
  %5378 = vmatprep.subr.bf16.mxu0 %v868
  %5379 = vmatpush1.bf16.msra.mxu0 %v867
  %5380 = vmatprep.subr.bf16.mxu0 %v876
  %5381 = vmatpush1.bf16.msra.mxu0 %v875
  %5382 = vmatprep.subr.bf16.mxu0 %v884
  %5383 = vmatpush1.bf16.msra.mxu0 %v883
  %5384 = vmatprep.subr.bf16.mxu0 %v892
  %5385 = vmatpush1.bf16.msra.mxu0 %v891
  %5386 = vmatprep.subr.bf16.mxu0 %v900
  %5387 = vmatpush1.bf16.msra.mxu0 %v899
  %5388 = vmatprep.subr.bf16.mxu0 %v908
  %5389 = vmatpush1.bf16.msra.mxu0 %v907
  %5390 = vmatprep.subr.bf16.mxu0 %v916
  %5391 = vmatpush1.bf16.msra.mxu0 %v915
  %5392 = vmatprep.subr.bf16.mxu0 %v924
  %5393 = vmatpush1.bf16.msra.mxu0 %v923
  %5394 = vmatprep.mubr.bf16.mxu0 %v4869
  %5395 = vmatmul.mubr.bf16.gmra.mrb[0].mxu0 %v4868
  %v5396 = vpop.f32.mrb[0].mxu0
  %v5397 = vadd.f32 0.0, %v5396
  %v5398 = vpop.f32.mrb[0].mxu0
  %v5399 = vadd.f32 0.0, %v5398
  %v5400 = vpop.f32.mrb[0].mxu0
  %v5401 = vpop.f32.mrb[0].mxu0
  %5402 = vdwg.mxu0
  %5403 = vmatprep.subr.bf16.mxu0 %v806
  %5404 = vmatpush1.bf16.msra.mxu0 %v805
  %5405 = vmatprep.subr.bf16.mxu0 %v814
  %5406 = vmatpush1.bf16.msra.mxu0 %v813
  %5407 = vmatprep.subr.bf16.mxu0 %v822
  %5408 = vmatpush1.bf16.msra.mxu0 %v821
  %5409 = vmatprep.subr.bf16.mxu0 %v830
  %5410 = vmatpush1.bf16.msra.mxu0 %v829
  %5411 = vmatprep.subr.bf16.mxu0 %v838
  %5412 = vmatpush1.bf16.msra.mxu0 %v837
  %5413 = vmatprep.subr.bf16.mxu0 %v846
  %5414 = vmatpush1.bf16.msra.mxu0 %v845
  %5415 = vmatprep.subr.bf16.mxu0 %v854
  %5416 = vmatpush1.bf16.msra.mxu0 %v853
  %5417 = vmatprep.subr.bf16.mxu0 %v862
  %5418 = vmatpush1.bf16.msra.mxu0 %v861
  %5419 = vmatprep.subr.bf16.mxu0 %v870
  %5420 = vmatpush1.bf16.msra.mxu0 %v869
  %5421 = vmatprep.subr.bf16.mxu0 %v878
  %5422 = vmatpush1.bf16.msra.mxu0 %v877
  %5423 = vmatprep.subr.bf16.mxu0 %v886
  %5424 = vmatpush1.bf16.msra.mxu0 %v885
  %5425 = vmatprep.subr.bf16.mxu0 %v894
  %5426 = vmatpush1.bf16.msra.mxu0 %v893
  %5427 = vmatprep.subr.bf16.mxu0 %v902
  %5428 = vmatpush1.bf16.msra.mxu0 %v901
  %5429 = vmatprep.subr.bf16.mxu0 %v910
  %5430 = vmatpush1.bf16.msra.mxu0 %v909
  %5431 = vmatprep.subr.bf16.mxu0 %v918
  %5432 = vmatpush1.bf16.msra.mxu0 %v917
  %5433 = vmatprep.subr.bf16.mxu0 %v926
  %5434 = vmatpush1.bf16.msra.mxu0 %v925
  %5435 = vmatprep.mubr.bf16.mxu0 %v4869
  %5436 = vmatmul.mubr.bf16.gmra.mrb[0].mxu0 %v4868
  %v5437 = vpop.f32.mrb[0].mxu0
  %v5438 = vadd.f32 0.0, %v5437
  %v5439 = vpop.f32.mrb[0].mxu0
  %v5440 = vadd.f32 0.0, %v5439
  %v5441 = vpop.f32.mrb[0].mxu0
  %v5442 = vpop.f32.mrb[0].mxu0
  %5443 = vdwg.mxu0
  %5444 = vmatprep.subr.bf16.mxu0 %v808
  %5445 = vmatpush1.bf16.msra.mxu0 %v807
  %5446 = vmatprep.subr.bf16.mxu0 %v816
  %5447 = vmatpush1.bf16.msra.mxu0 %v815
  %5448 = vmatprep.subr.bf16.mxu0 %v824
  %5449 = vmatpush1.bf16.msra.mxu0 %v823
  %5450 = vmatprep.subr.bf16.mxu0 %v832
  %5451 = vmatpush1.bf16.msra.mxu0 %v831
  %5452 = vmatprep.subr.bf16.mxu0 %v840
  %5453 = vmatpush1.bf16.msra.mxu0 %v839
  %5454 = vmatprep.subr.bf16.mxu0 %v848
  %5455 = vmatpush1.bf16.msra.mxu0 %v847
  %5456 = vmatprep.subr.bf16.mxu0 %v856
  %5457 = vmatpush1.bf16.msra.mxu0 %v855
  %5458 = vmatprep.subr.bf16.mxu0 %v864
  %5459 = vmatpush1.bf16.msra.mxu0 %v863
  %5460 = vmatprep.subr.bf16.mxu0 %v872
  %5461 = vmatpush1.bf16.msra.mxu0 %v871
  %5462 = vmatprep.subr.bf16.mxu0 %v880
  %5463 = vmatpush1.bf16.msra.mxu0 %v879
  %5464 = vmatprep.subr.bf16.mxu0 %v888
  %5465 = vmatpush1.bf16.msra.mxu0 %v887
  %5466 = vmatprep.subr.bf16.mxu0 %v896
  %5467 = vmatpush1.bf16.msra.mxu0 %v895
  %5468 = vmatprep.subr.bf16.mxu0 %v904
  %5469 = vmatpush1.bf16.msra.mxu0 %v903
  %5470 = vmatprep.subr.bf16.mxu0 %v912
  %5471 = vmatpush1.bf16.msra.mxu0 %v911
  %5472 = vmatprep.subr.bf16.mxu0 %v920
  %5473 = vmatpush1.bf16.msra.mxu0 %v919
  %5474 = vmatprep.subr.bf16.mxu0 %v928
  %5475 = vmatpush1.bf16.msra.mxu0 %v927
  %5476 = vmatprep.mubr.bf16.mxu0 %v4869
  %5477 = vmatmul.mubr.bf16.gmra.mrb[0].mxu0 %v4868
  %v5478 = vpop.f32.mrb[0].mxu0
  %v5479 = vadd.f32 0.0, %v5478
  %v5480 = vpop.f32.mrb[0].mxu0
  %v5481 = vadd.f32 0.0, %v5480
  %v5482 = vpop.f32.mrb[0].mxu0
  %v5483 = vpop.f32.mrb[0].mxu0
  %5484 = vdwg.mxu0
  %5485 = vmatprep.subr.bf16.mxu0 %v810
  %5486 = vmatpush1.bf16.msra.mxu0 %v809
  %5487 = vmatprep.subr.bf16.mxu0 %v818
  %5488 = vmatpush1.bf16.msra.mxu0 %v817
  %5489 = vmatprep.subr.bf16.mxu0 %v826
  %5490 = vmatpush1.bf16.msra.mxu0 %v825
  %5491 = vmatprep.subr.bf16.mxu0 %v834
  %5492 = vmatpush1.bf16.msra.mxu0 %v833
  %5493 = vmatprep.subr.bf16.mxu0 %v842
  %5494 = vmatpush1.bf16.msra.mxu0 %v841
  %5495 = vmatprep.subr.bf16.mxu0 %v850
  %5496 = vmatpush1.bf16.msra.mxu0 %v849
  %5497 = vmatprep.subr.bf16.mxu0 %v858
  %5498 = vmatpush1.bf16.msra.mxu0 %v857
  %5499 = vmatprep.subr.bf16.mxu0 %v866
  %5500 = vmatpush1.bf16.msra.mxu0 %v865
  %5501 = vmatprep.subr.bf16.mxu0 %v874
  %5502 = vmatpush1.bf16.msra.mxu0 %v873
  %5503 = vmatprep.subr.bf16.mxu0 %v882
  %5504 = vmatpush1.bf16.msra.mxu0 %v881
  %5505 = vmatprep.subr.bf16.mxu0 %v890
  %5506 = vmatpush1.bf16.msra.mxu0 %v889
  %5507 = vmatprep.subr.bf16.mxu0 %v898
  %5508 = vmatpush1.bf16.msra.mxu0 %v897
  %5509 = vmatprep.subr.bf16.mxu0 %v906
  %5510 = vmatpush1.bf16.msra.mxu0 %v905
  %5511 = vmatprep.subr.bf16.mxu0 %v914
  %5512 = vmatpush1.bf16.msra.mxu0 %v913
  %5513 = vmatprep.subr.bf16.mxu0 %v922
  %5514 = vmatpush1.bf16.msra.mxu0 %v921
  %5515 = vmatprep.subr.bf16.mxu0 %v930
  %5516 = vmatpush1.bf16.msra.mxu0 %v929
  %5517 = vmatprep.mubr.bf16.mxu0 %v4869
  %5518 = vmatmul.mubr.bf16.gmra.mrb[0].mxu0 %v4868
  %v5519 = vpop.f32.mrb[0].mxu0
  %v5520 = vadd.f32 0.0, %v5519
  %v5521 = vpop.f32.mrb[0].mxu0
  %v5522 = vadd.f32 0.0, %v5521
  %v5523 = vpop.f32.mrb[0].mxu0
  %v5524 = vpop.f32.mrb[0].mxu0
  %5525 = vdwg.mxu0
  %v5534 = vcombine.low %v5397, %v5399
  %v5535 = vcombine.low %v5438, %v5440
  %v5536 = vcombine.low %v5479, %v5481
  %v5537 = vcombine.low %v5520, %v5522
  %v5539 = vunpack.c.l.s4 1966171168
  %v5540 = vunpack.c.0.s8 %v5539
  %v5541 = vlaneseq
  %v5542 = vshrl.u32 %v5541, 7
  %v5543 = vsub.s32 %v5540, %v5542
  %v5544 = vrot.slane %v5534, %v5543
  %v5546 = vunpack.c.l.s4 1966171168
  %v5547 = vunpack.c.0.s8 %v5546
  %v5548 = vlaneseq
  %v5549 = vshrl.u32 %v5548, 7
  %v5550 = vsub.s32 %v5547, %v5549
  %v5551 = vrot.slane %v5535, %v5550
  %v5553 = vunpack.c.l.s4 1966171168
  %v5554 = vunpack.c.0.s8 %v5553
  %v5555 = vlaneseq
  %v5556 = vshrl.u32 %v5555, 7
  %v5557 = vsub.s32 %v5554, %v5556
  %v5558 = vrot.slane %v5536, %v5557
  %v5560 = vunpack.c.l.s4 1966171168
  %v5561 = vunpack.c.0.s8 %v5560
  %v5562 = vlaneseq
  %v5563 = vshrl.u32 %v5562, 7
  %v5564 = vsub.s32 %v5561, %v5563
  %v5565 = vrot.slane %v5537, %v5564
  %v5566 = vcombine.low %v5544, %v5551
  %v5567 = vcombine.low %v5558, %v5565
  %v5569 = vunpack.c.l.s4 1966171168
  %v5570 = vunpack.c.0.s8 %v5569
  %v5571 = vlaneseq
  %v5572 = vshrl.u32 %v5571, 7
  %v5573 = vsub.s32 %v5570, %v5572
  %v5574 = vrot.slane %v5566, %v5573
  %v5576 = vunpack.c.l.s4 1966171168
  %v5577 = vunpack.c.0.s8 %v5576
  %v5578 = vlaneseq
  %v5579 = vshrl.u32 %v5578, 7
  %v5580 = vsub.s32 %v5577, %v5579
  %v5581 = vrot.slane %v5567, %v5580
  %v5582 = vcombine.low %v5574, %v5581
  %v5584 = vadd.f32 %v5361, %v5582
  %v5585 = vxor.u32 %v5584, 2147483648
  %v5586 = vmul.f32 %v5585, 1.442695
  %v5587 = vpow.pop %v5586
  %v5588 = vadd.f32 %v5587, 1.0
  %v5589 = vrcp.pop %v5588
  %v5590 = vmul.f32 1.0, %v5589
  %v5592 = vrot.slane %v5584, 2
  %v5594 = vxor.u32 %v5592, 2147483648
  %v5595 = vmul.f32 %v5594, 1.442695
  %v5596 = vpow.pop %v5595
  %v5597 = vadd.f32 %v5596, 1.0
  %v5598 = vrcp.pop %v5597
  %v5599 = vmul.f32 1.0, %v5598
  %v5600 = vrot.slane %v5584, 4
  %v5602 = vxor.u32 %v5600, 2147483648
  %v5603 = vmul.f32 %v5602, 1.442695
  %v5604 = vpow.pop %v5603
  %v5605 = vadd.f32 %v5604, 1.0
  %v5606 = vrcp.pop %v5605
  %v5607 = vmul.f32 1.0, %v5606
  %v5608 = vrot.slane %v5584, 6
  %v5610 = vtanh.pop %v5608
  %v5611 = vmul.f32 %v5599, %v4854
  %v5612 = vmul.f32 %v5590, %v5610
  %v5613 = vadd.f32 %v5611, %v5612
  %v5614 = vtanh.pop %v5613
  %v5615 = vmul.f32 %v5607, %v5614
  %v5617 = vlaneseq
  %v5618 = vshrl.u32 %v5617, 7
  %v5619 = vsub.s32 0, %v5618
  %v5620 = vrot.slane %v5615, %v5619
  %v5621 = vlaneseq
  %v5622 = vshrl.u32 %v5621, 7
  %v5623 = vsub.s32 1, %v5622
  %v5624 = vrot.slane %v5615, %v5623
  %v5627 = vpack.c.bf16 %v5620, %v5620
  %v5628 = vpack.c.bf16 %v5624, %v5624
  %5629 = vmatprep.subr.bf16.mxu0 %v1711
  %5630 = vmatpush1.bf16.msra.mxu0 %v1710
  %5631 = vmatprep.subr.bf16.mxu0 %v1719
  %5632 = vmatpush1.bf16.msra.mxu0 %v1718
  %5633 = vmatprep.subr.bf16.mxu0 %v1727
  %5634 = vmatpush1.bf16.msra.mxu0 %v1726
  %5635 = vmatprep.subr.bf16.mxu0 %v1735
  %5636 = vmatpush1.bf16.msra.mxu0 %v1734
  %5637 = vmatprep.subr.bf16.mxu0 %v1743
  %5638 = vmatpush1.bf16.msra.mxu0 %v1742
  %5639 = vmatprep.subr.bf16.mxu0 %v1751
  %5640 = vmatpush1.bf16.msra.mxu0 %v1750
  %5641 = vmatprep.subr.bf16.mxu0 %v1759
  %5642 = vmatpush1.bf16.msra.mxu0 %v1758
  %5643 = vmatprep.subr.bf16.mxu0 %v1767
  %5644 = vmatpush1.bf16.msra.mxu0 %v1766
  %5645 = vmatprep.subr.bf16.mxu0 %v1775
  %5646 = vmatpush1.bf16.msra.mxu0 %v1774
  %5647 = vmatprep.subr.bf16.mxu0 %v1783
  %5648 = vmatpush1.bf16.msra.mxu0 %v1782
  %5649 = vmatprep.subr.bf16.mxu0 %v1791
  %5650 = vmatpush1.bf16.msra.mxu0 %v1790
  %5651 = vmatprep.subr.bf16.mxu0 %v1799
  %5652 = vmatpush1.bf16.msra.mxu0 %v1798
  %5653 = vmatprep.subr.bf16.mxu0 %v1807
  %5654 = vmatpush1.bf16.msra.mxu0 %v1806
  %5655 = vmatprep.subr.bf16.mxu0 %v1815
  %5656 = vmatpush1.bf16.msra.mxu0 %v1814
  %5657 = vmatprep.subr.bf16.mxu0 %v1823
  %5658 = vmatpush1.bf16.msra.mxu0 %v1822
  %5659 = vmatprep.subr.bf16.mxu0 %v1831
  %5660 = vmatpush1.bf16.msra.mxu0 %v1830
  %5661 = vmatprep.mubr.bf16.mxu0 %v5628
  %5662 = vmatmul.mubr.bf16.gmra.mrb[0].mxu0 %v5627
  %v5663 = vpop.f32.mrb[0].mxu0
  %v5664 = vadd.f32 0.0, %v5663
  %v5665 = vpop.f32.mrb[0].mxu0
  %v5666 = vadd.f32 0.0, %v5665
  %v5667 = vpop.f32.mrb[0].mxu0
  %v5668 = vpop.f32.mrb[0].mxu0
  %5669 = vdwg.mxu0
  %5670 = vmatprep.subr.bf16.mxu0 %v1713
  %5671 = vmatpush1.bf16.msra.mxu0 %v1712
  %5672 = vmatprep.subr.bf16.mxu0 %v1721
  %5673 = vmatpush1.bf16.msra.mxu0 %v1720
  %5674 = vmatprep.subr.bf16.mxu0 %v1729
  %5675 = vmatpush1.bf16.msra.mxu0 %v1728
  %5676 = vmatprep.subr.bf16.mxu0 %v1737
  %5677 = vmatpush1.bf16.msra.mxu0 %v1736
  %5678 = vmatprep.subr.bf16.mxu0 %v1745
  %5679 = vmatpush1.bf16.msra.mxu0 %v1744
  %5680 = vmatprep.subr.bf16.mxu0 %v1753
  %5681 = vmatpush1.bf16.msra.mxu0 %v1752
  %5682 = vmatprep.subr.bf16.mxu0 %v1761
  %5683 = vmatpush1.bf16.msra.mxu0 %v1760
  %5684 = vmatprep.subr.bf16.mxu0 %v1769
  %5685 = vmatpush1.bf16.msra.mxu0 %v1768
  %5686 = vmatprep.subr.bf16.mxu0 %v1777
  %5687 = vmatpush1.bf16.msra.mxu0 %v1776
  %5688 = vmatprep.subr.bf16.mxu0 %v1785
  %5689 = vmatpush1.bf16.msra.mxu0 %v1784
  %5690 = vmatprep.subr.bf16.mxu0 %v1793
  %5691 = vmatpush1.bf16.msra.mxu0 %v1792
  %5692 = vmatprep.subr.bf16.mxu0 %v1801
  %5693 = vmatpush1.bf16.msra.mxu0 %v1800
  %5694 = vmatprep.subr.bf16.mxu0 %v1809
  %5695 = vmatpush1.bf16.msra.mxu0 %v1808
  %5696 = vmatprep.subr.bf16.mxu0 %v1817
  %5697 = vmatpush1.bf16.msra.mxu0 %v1816
  %5698 = vmatprep.subr.bf16.mxu0 %v1825
  %5699 = vmatpush1.bf16.msra.mxu0 %v1824
  %5700 = vmatprep.subr.bf16.mxu0 %v1833
  %5701 = vmatpush1.bf16.msra.mxu0 %v1832
  %5702 = vmatprep.mubr.bf16.mxu0 %v5628
  %5703 = vmatmul.mubr.bf16.gmra.mrb[0].mxu0 %v5627
  %v5704 = vpop.f32.mrb[0].mxu0
  %v5705 = vadd.f32 0.0, %v5704
  %v5706 = vpop.f32.mrb[0].mxu0
  %v5707 = vadd.f32 0.0, %v5706
  %v5708 = vpop.f32.mrb[0].mxu0
  %v5709 = vpop.f32.mrb[0].mxu0
  %5710 = vdwg.mxu0
  %5711 = vmatprep.subr.bf16.mxu0 %v1715
  %5712 = vmatpush1.bf16.msra.mxu0 %v1714
  %5713 = vmatprep.subr.bf16.mxu0 %v1723
  %5714 = vmatpush1.bf16.msra.mxu0 %v1722
  %5715 = vmatprep.subr.bf16.mxu0 %v1731
  %5716 = vmatpush1.bf16.msra.mxu0 %v1730
  %5717 = vmatprep.subr.bf16.mxu0 %v1739
  %5718 = vmatpush1.bf16.msra.mxu0 %v1738
  %5719 = vmatprep.subr.bf16.mxu0 %v1747
  %5720 = vmatpush1.bf16.msra.mxu0 %v1746
  %5721 = vmatprep.subr.bf16.mxu0 %v1755
  %5722 = vmatpush1.bf16.msra.mxu0 %v1754
  %5723 = vmatprep.subr.bf16.mxu0 %v1763
  %5724 = vmatpush1.bf16.msra.mxu0 %v1762
  %5725 = vmatprep.subr.bf16.mxu0 %v1771
  %5726 = vmatpush1.bf16.msra.mxu0 %v1770
  %5727 = vmatprep.subr.bf16.mxu0 %v1779
  %5728 = vmatpush1.bf16.msra.mxu0 %v1778
  %5729 = vmatprep.subr.bf16.mxu0 %v1787
  %5730 = vmatpush1.bf16.msra.mxu0 %v1786
  %5731 = vmatprep.subr.bf16.mxu0 %v1795
  %5732 = vmatpush1.bf16.msra.mxu0 %v1794
  %5733 = vmatprep.subr.bf16.mxu0 %v1803
  %5734 = vmatpush1.bf16.msra.mxu0 %v1802
  %5735 = vmatprep.subr.bf16.mxu0 %v1811
  %5736 = vmatpush1.bf16.msra.mxu0 %v1810
  %5737 = vmatprep.subr.bf16.mxu0 %v1819
  %5738 = vmatpush1.bf16.msra.mxu0 %v1818
  %5739 = vmatprep.subr.bf16.mxu0 %v1827
  %5740 = vmatpush1.bf16.msra.mxu0 %v1826
  %5741 = vmatprep.subr.bf16.mxu0 %v1835
  %5742 = vmatpush1.bf16.msra.mxu0 %v1834
  %5743 = vmatprep.mubr.bf16.mxu0 %v5628
  %5744 = vmatmul.mubr.bf16.gmra.mrb[0].mxu0 %v5627
  %v5745 = vpop.f32.mrb[0].mxu0
  %v5746 = vadd.f32 0.0, %v5745
  %v5747 = vpop.f32.mrb[0].mxu0
  %v5748 = vadd.f32 0.0, %v5747
  %v5749 = vpop.f32.mrb[0].mxu0
  %v5750 = vpop.f32.mrb[0].mxu0
  %5751 = vdwg.mxu0
  %5752 = vmatprep.subr.bf16.mxu0 %v1717
  %5753 = vmatpush1.bf16.msra.mxu0 %v1716
  %5754 = vmatprep.subr.bf16.mxu0 %v1725
  %5755 = vmatpush1.bf16.msra.mxu0 %v1724
  %5756 = vmatprep.subr.bf16.mxu0 %v1733
  %5757 = vmatpush1.bf16.msra.mxu0 %v1732
  %5758 = vmatprep.subr.bf16.mxu0 %v1741
  %5759 = vmatpush1.bf16.msra.mxu0 %v1740
  %5760 = vmatprep.subr.bf16.mxu0 %v1749
  %5761 = vmatpush1.bf16.msra.mxu0 %v1748
  %5762 = vmatprep.subr.bf16.mxu0 %v1757
  %5763 = vmatpush1.bf16.msra.mxu0 %v1756
  %5764 = vmatprep.subr.bf16.mxu0 %v1765
  %5765 = vmatpush1.bf16.msra.mxu0 %v1764
  %5766 = vmatprep.subr.bf16.mxu0 %v1773
  %5767 = vmatpush1.bf16.msra.mxu0 %v1772
  %5768 = vmatprep.subr.bf16.mxu0 %v1781
  %5769 = vmatpush1.bf16.msra.mxu0 %v1780
  %5770 = vmatprep.subr.bf16.mxu0 %v1789
  %5771 = vmatpush1.bf16.msra.mxu0 %v1788
  %5772 = vmatprep.subr.bf16.mxu0 %v1797
  %5773 = vmatpush1.bf16.msra.mxu0 %v1796
  %5774 = vmatprep.subr.bf16.mxu0 %v1805
  %5775 = vmatpush1.bf16.msra.mxu0 %v1804
  %5776 = vmatprep.subr.bf16.mxu0 %v1813
  %5777 = vmatpush1.bf16.msra.mxu0 %v1812
  %5778 = vmatprep.subr.bf16.mxu0 %v1821
  %5779 = vmatpush1.bf16.msra.mxu0 %v1820
  %5780 = vmatprep.subr.bf16.mxu0 %v1829
  %5781 = vmatpush1.bf16.msra.mxu0 %v1828
  %5782 = vmatprep.subr.bf16.mxu0 %v1837
  %5783 = vmatpush1.bf16.msra.mxu0 %v1836
  %5784 = vmatprep.mubr.bf16.mxu0 %v5628
  %5785 = vmatmul.mubr.bf16.gmra.mrb[0].mxu0 %v5627
  %v5786 = vpop.f32.mrb[0].mxu0
  %v5787 = vadd.f32 0.0, %v5786
  %v5788 = vpop.f32.mrb[0].mxu0
  %v5789 = vadd.f32 0.0, %v5788
  %v5790 = vpop.f32.mrb[0].mxu0
  %v5791 = vpop.f32.mrb[0].mxu0
  %5792 = vdwg.mxu0
  %v5801 = vcombine.low %v5664, %v5666
  %v5802 = vcombine.low %v5705, %v5707
  %v5803 = vcombine.low %v5746, %v5748
  %v5804 = vcombine.low %v5787, %v5789
  %v5806 = vunpack.c.l.s4 1966171168
  %v5807 = vunpack.c.0.s8 %v5806
  %v5808 = vlaneseq
  %v5809 = vshrl.u32 %v5808, 7
  %v5810 = vsub.s32 %v5807, %v5809
  %v5811 = vrot.slane %v5801, %v5810
  %v5813 = vunpack.c.l.s4 1966171168
  %v5814 = vunpack.c.0.s8 %v5813
  %v5815 = vlaneseq
  %v5816 = vshrl.u32 %v5815, 7
  %v5817 = vsub.s32 %v5814, %v5816
  %v5818 = vrot.slane %v5802, %v5817
  %v5820 = vunpack.c.l.s4 1966171168
  %v5821 = vunpack.c.0.s8 %v5820
  %v5822 = vlaneseq
  %v5823 = vshrl.u32 %v5822, 7
  %v5824 = vsub.s32 %v5821, %v5823
  %v5825 = vrot.slane %v5803, %v5824
  %v5827 = vunpack.c.l.s4 1966171168
  %v5828 = vunpack.c.0.s8 %v5827
  %v5829 = vlaneseq
  %v5830 = vshrl.u32 %v5829, 7
  %v5831 = vsub.s32 %v5828, %v5830
  %v5832 = vrot.slane %v5804, %v5831
  %v5833 = vcombine.low %v5811, %v5818
  %v5834 = vcombine.low %v5825, %v5832
  %v5836 = vunpack.c.l.s4 1966171168
  %v5837 = vunpack.c.0.s8 %v5836
  %v5838 = vlaneseq
  %v5839 = vshrl.u32 %v5838, 7
  %v5840 = vsub.s32 %v5837, %v5839
  %v5841 = vrot.slane %v5833, %v5840
  %v5843 = vunpack.c.l.s4 1966171168
  %v5844 = vunpack.c.0.s8 %v5843
  %v5845 = vlaneseq
  %v5846 = vshrl.u32 %v5845, 7
  %v5847 = vsub.s32 %v5844, %v5846
  %v5848 = vrot.slane %v5834, %v5847
  %v5849 = vcombine.low %v5841, %v5848
  %v5851 = vadd.f32 %v417, %v5849
  %v5853 = vlaneseq
  %v5854 = vshrl.u32 %v5853, 7
  %v5855 = vsub.s32 0, %v5854
  %v5856 = vrot.slane %v5359, %v5855
  %v5857 = vlaneseq
  %v5858 = vshrl.u32 %v5857, 7
  %v5859 = vsub.s32 1, %v5858
  %v5860 = vrot.slane %v5359, %v5859
  %v5863 = vpack.c.bf16 %v5856, %v5856
  %v5864 = vpack.c.bf16 %v5860, %v5860
  %5865 = vmatprep.subr.bf16.mxu0 %v2574
  %5866 = vmatpush1.bf16.msra.mxu0 %v2573
  %5867 = vmatprep.subr.bf16.mxu0 %v2582
  %5868 = vmatpush1.bf16.msra.mxu0 %v2581
  %5869 = vmatprep.subr.bf16.mxu0 %v2590
  %5870 = vmatpush1.bf16.msra.mxu0 %v2589
  %5871 = vmatprep.subr.bf16.mxu0 %v2598
  %5872 = vmatpush1.bf16.msra.mxu0 %v2597
  %5873 = vmatprep.subr.bf16.mxu0 %v2606
  %5874 = vmatpush1.bf16.msra.mxu0 %v2605
  %5875 = vmatprep.subr.bf16.mxu0 %v2614
  %5876 = vmatpush1.bf16.msra.mxu0 %v2613
  %5877 = vmatprep.subr.bf16.mxu0 %v2622
  %5878 = vmatpush1.bf16.msra.mxu0 %v2621
  %5879 = vmatprep.subr.bf16.mxu0 %v2630
  %5880 = vmatpush1.bf16.msra.mxu0 %v2629
  %5881 = vmatprep.subr.bf16.mxu0 %v2638
  %5882 = vmatpush1.bf16.msra.mxu0 %v2637
  %5883 = vmatprep.subr.bf16.mxu0 %v2646
  %5884 = vmatpush1.bf16.msra.mxu0 %v2645
  %5885 = vmatprep.subr.bf16.mxu0 %v2654
  %5886 = vmatpush1.bf16.msra.mxu0 %v2653
  %5887 = vmatprep.subr.bf16.mxu0 %v2662
  %5888 = vmatpush1.bf16.msra.mxu0 %v2661
  %5889 = vmatprep.subr.bf16.mxu0 %v2670
  %5890 = vmatpush1.bf16.msra.mxu0 %v2669
  %5891 = vmatprep.subr.bf16.mxu0 %v2678
  %5892 = vmatpush1.bf16.msra.mxu0 %v2677
  %5893 = vmatprep.subr.bf16.mxu0 %v2686
  %5894 = vmatpush1.bf16.msra.mxu0 %v2685
  %5895 = vmatprep.subr.bf16.mxu0 %v2694
  %5896 = vmatpush1.bf16.msra.mxu0 %v2693
  %5897 = vmatprep.mubr.bf16.mxu0 %v5864
  %5898 = vmatmul.mubr.bf16.gmra.mrb[0].mxu0 %v5863
  %v5899 = vpop.f32.mrb[0].mxu0
  %v5900 = vadd.f32 0.0, %v5899
  %v5901 = vpop.f32.mrb[0].mxu0
  %v5902 = vadd.f32 0.0, %v5901
  %v5903 = vpop.f32.mrb[0].mxu0
  %v5904 = vpop.f32.mrb[0].mxu0
  %5905 = vdwg.mxu0
  %5906 = vmatprep.subr.bf16.mxu0 %v2576
  %5907 = vmatpush1.bf16.msra.mxu0 %v2575
  %5908 = vmatprep.subr.bf16.mxu0 %v2584
  %5909 = vmatpush1.bf16.msra.mxu0 %v2583
  %5910 = vmatprep.subr.bf16.mxu0 %v2592
  %5911 = vmatpush1.bf16.msra.mxu0 %v2591
  %5912 = vmatprep.subr.bf16.mxu0 %v2600
  %5913 = vmatpush1.bf16.msra.mxu0 %v2599
  %5914 = vmatprep.subr.bf16.mxu0 %v2608
  %5915 = vmatpush1.bf16.msra.mxu0 %v2607
  %5916 = vmatprep.subr.bf16.mxu0 %v2616
  %5917 = vmatpush1.bf16.msra.mxu0 %v2615
  %5918 = vmatprep.subr.bf16.mxu0 %v2624
  %5919 = vmatpush1.bf16.msra.mxu0 %v2623
  %5920 = vmatprep.subr.bf16.mxu0 %v2632
  %5921 = vmatpush1.bf16.msra.mxu0 %v2631
  %5922 = vmatprep.subr.bf16.mxu0 %v2640
  %5923 = vmatpush1.bf16.msra.mxu0 %v2639
  %5924 = vmatprep.subr.bf16.mxu0 %v2648
  %5925 = vmatpush1.bf16.msra.mxu0 %v2647
  %5926 = vmatprep.subr.bf16.mxu0 %v2656
  %5927 = vmatpush1.bf16.msra.mxu0 %v2655
  %5928 = vmatprep.subr.bf16.mxu0 %v2664
  %5929 = vmatpush1.bf16.msra.mxu0 %v2663
  %5930 = vmatprep.subr.bf16.mxu0 %v2672
  %5931 = vmatpush1.bf16.msra.mxu0 %v2671
  %5932 = vmatprep.subr.bf16.mxu0 %v2680
  %5933 = vmatpush1.bf16.msra.mxu0 %v2679
  %5934 = vmatprep.subr.bf16.mxu0 %v2688
  %5935 = vmatpush1.bf16.msra.mxu0 %v2687
  %5936 = vmatprep.subr.bf16.mxu0 %v2696
  %5937 = vmatpush1.bf16.msra.mxu0 %v2695
  %5938 = vmatprep.mubr.bf16.mxu0 %v5864
  %5939 = vmatmul.mubr.bf16.gmra.mrb[0].mxu0 %v5863
  %v5940 = vpop.f32.mrb[0].mxu0
  %v5941 = vadd.f32 0.0, %v5940
  %v5942 = vpop.f32.mrb[0].mxu0
  %v5943 = vadd.f32 0.0, %v5942
  %v5944 = vpop.f32.mrb[0].mxu0
  %v5945 = vpop.f32.mrb[0].mxu0
  %5946 = vdwg.mxu0
  %5947 = vmatprep.subr.bf16.mxu0 %v2578
  %5948 = vmatpush1.bf16.msra.mxu0 %v2577
  %5949 = vmatprep.subr.bf16.mxu0 %v2586
  %5950 = vmatpush1.bf16.msra.mxu0 %v2585
  %5951 = vmatprep.subr.bf16.mxu0 %v2594
  %5952 = vmatpush1.bf16.msra.mxu0 %v2593
  %5953 = vmatprep.subr.bf16.mxu0 %v2602
  %5954 = vmatpush1.bf16.msra.mxu0 %v2601
  %5955 = vmatprep.subr.bf16.mxu0 %v2610
  %5956 = vmatpush1.bf16.msra.mxu0 %v2609
  %5957 = vmatprep.subr.bf16.mxu0 %v2618
  %5958 = vmatpush1.bf16.msra.mxu0 %v2617
  %5959 = vmatprep.subr.bf16.mxu0 %v2626
  %5960 = vmatpush1.bf16.msra.mxu0 %v2625
  %5961 = vmatprep.subr.bf16.mxu0 %v2634
  %5962 = vmatpush1.bf16.msra.mxu0 %v2633
  %5963 = vmatprep.subr.bf16.mxu0 %v2642
  %5964 = vmatpush1.bf16.msra.mxu0 %v2641
  %5965 = vmatprep.subr.bf16.mxu0 %v2650
  %5966 = vmatpush1.bf16.msra.mxu0 %v2649
  %5967 = vmatprep.subr.bf16.mxu0 %v2658
  %5968 = vmatpush1.bf16.msra.mxu0 %v2657
  %5969 = vmatprep.subr.bf16.mxu0 %v2666
  %5970 = vmatpush1.bf16.msra.mxu0 %v2665
  %5971 = vmatprep.subr.bf16.mxu0 %v2674
  %5972 = vmatpush1.bf16.msra.mxu0 %v2673
  %5973 = vmatprep.subr.bf16.mxu0 %v2682
  %5974 = vmatpush1.bf16.msra.mxu0 %v2681
  %5975 = vmatprep.subr.bf16.mxu0 %v2690
  %5976 = vmatpush1.bf16.msra.mxu0 %v2689
  %5977 = vmatprep.subr.bf16.mxu0 %v2698
  %5978 = vmatpush1.bf16.msra.mxu0 %v2697
  %5979 = vmatprep.mubr.bf16.mxu0 %v5864
  %5980 = vmatmul.mubr.bf16.gmra.mrb[0].mxu0 %v5863
  %v5981 = vpop.f32.mrb[0].mxu0
  %v5982 = vadd.f32 0.0, %v5981
  %v5983 = vpop.f32.mrb[0].mxu0
  %v5984 = vadd.f32 0.0, %v5983
  %v5985 = vpop.f32.mrb[0].mxu0
  %v5986 = vpop.f32.mrb[0].mxu0
  %5987 = vdwg.mxu0
  %5988 = vmatprep.subr.bf16.mxu0 %v2580
  %5989 = vmatpush1.bf16.msra.mxu0 %v2579
  %5990 = vmatprep.subr.bf16.mxu0 %v2588
  %5991 = vmatpush1.bf16.msra.mxu0 %v2587
  %5992 = vmatprep.subr.bf16.mxu0 %v2596
  %5993 = vmatpush1.bf16.msra.mxu0 %v2595
  %5994 = vmatprep.subr.bf16.mxu0 %v2604
  %5995 = vmatpush1.bf16.msra.mxu0 %v2603
  %5996 = vmatprep.subr.bf16.mxu0 %v2612
  %5997 = vmatpush1.bf16.msra.mxu0 %v2611
  %5998 = vmatprep.subr.bf16.mxu0 %v2620
  %5999 = vmatpush1.bf16.msra.mxu0 %v2619
  %6000 = vmatprep.subr.bf16.mxu0 %v2628
  %6001 = vmatpush1.bf16.msra.mxu0 %v2627
  %6002 = vmatprep.subr.bf16.mxu0 %v2636
  %6003 = vmatpush1.bf16.msra.mxu0 %v2635
  %6004 = vmatprep.subr.bf16.mxu0 %v2644
  %6005 = vmatpush1.bf16.msra.mxu0 %v2643
  %6006 = vmatprep.subr.bf16.mxu0 %v2652
  %6007 = vmatpush1.bf16.msra.mxu0 %v2651
  %6008 = vmatprep.subr.bf16.mxu0 %v2660
  %6009 = vmatpush1.bf16.msra.mxu0 %v2659
  %6010 = vmatprep.subr.bf16.mxu0 %v2668
  %6011 = vmatpush1.bf16.msra.mxu0 %v2667
  %6012 = vmatprep.subr.bf16.mxu0 %v2676
  %6013 = vmatpush1.bf16.msra.mxu0 %v2675
  %6014 = vmatprep.subr.bf16.mxu0 %v2684
  %6015 = vmatpush1.bf16.msra.mxu0 %v2683
  %6016 = vmatprep.subr.bf16.mxu0 %v2692
  %6017 = vmatpush1.bf16.msra.mxu0 %v2691
  %6018 = vmatprep.subr.bf16.mxu0 %v2700
  %6019 = vmatpush1.bf16.msra.mxu0 %v2699
  %6020 = vmatprep.mubr.bf16.mxu0 %v5864
  %6021 = vmatmul.mubr.bf16.gmra.mrb[0].mxu0 %v5863
  %v6022 = vpop.f32.mrb[0].mxu0
  %v6023 = vadd.f32 0.0, %v6022
  %v6024 = vpop.f32.mrb[0].mxu0
  %v6025 = vadd.f32 0.0, %v6024
  %v6026 = vpop.f32.mrb[0].mxu0
  %v6027 = vpop.f32.mrb[0].mxu0
  %6028 = vdwg.mxu0
  %v6037 = vcombine.low %v5900, %v5902
  %v6038 = vcombine.low %v5941, %v5943
  %v6039 = vcombine.low %v5982, %v5984
  %v6040 = vcombine.low %v6023, %v6025
  %v6042 = vunpack.c.l.s4 1966171168
  %v6043 = vunpack.c.0.s8 %v6042
  %v6044 = vlaneseq
  %v6045 = vshrl.u32 %v6044, 7
  %v6046 = vsub.s32 %v6043, %v6045
  %v6047 = vrot.slane %v6037, %v6046
  %v6049 = vunpack.c.l.s4 1966171168
  %v6050 = vunpack.c.0.s8 %v6049
  %v6051 = vlaneseq
  %v6052 = vshrl.u32 %v6051, 7
  %v6053 = vsub.s32 %v6050, %v6052
  %v6054 = vrot.slane %v6038, %v6053
  %v6056 = vunpack.c.l.s4 1966171168
  %v6057 = vunpack.c.0.s8 %v6056
  %v6058 = vlaneseq
  %v6059 = vshrl.u32 %v6058, 7
  %v6060 = vsub.s32 %v6057, %v6059
  %v6061 = vrot.slane %v6039, %v6060
  %v6063 = vunpack.c.l.s4 1966171168
  %v6064 = vunpack.c.0.s8 %v6063
  %v6065 = vlaneseq
  %v6066 = vshrl.u32 %v6065, 7
  %v6067 = vsub.s32 %v6064, %v6066
  %v6068 = vrot.slane %v6040, %v6067
  %v6069 = vcombine.low %v6047, %v6054
  %v6070 = vcombine.low %v6061, %v6068
  %v6072 = vunpack.c.l.s4 1966171168
  %v6073 = vunpack.c.0.s8 %v6072
  %v6074 = vlaneseq
  %v6075 = vshrl.u32 %v6074, 7
  %v6076 = vsub.s32 %v6073, %v6075
  %v6077 = vrot.slane %v6069, %v6076
  %v6079 = vunpack.c.l.s4 1966171168
  %v6080 = vunpack.c.0.s8 %v6079
  %v6081 = vlaneseq
  %v6082 = vshrl.u32 %v6081, 7
  %v6083 = vsub.s32 %v6080, %v6082
  %v6084 = vrot.slane %v6070, %v6083
  %v6085 = vcombine.low %v6077, %v6084
  %v6087 = vadd.f32 %v5851, %v6085
  %v6088 = vxor.u32 %v6087, 2147483648
  %v6089 = vmul.f32 %v6088, 1.442695
  %v6090 = vpow.pop %v6089
  %v6091 = vadd.f32 %v6090, 1.0
  %v6092 = vrcp.pop %v6091
  %v6093 = vmul.f32 1.0, %v6092
  %v6095 = vrot.slane %v6087, 2
  %v6097 = vxor.u32 %v6095, 2147483648
  %v6098 = vmul.f32 %v6097, 1.442695
  %v6099 = vpow.pop %v6098
  %v6100 = vadd.f32 %v6099, 1.0
  %v6101 = vrcp.pop %v6100
  %v6102 = vmul.f32 1.0, %v6101
  %v6103 = vrot.slane %v6087, 4
  %v6105 = vxor.u32 %v6103, 2147483648
  %v6106 = vmul.f32 %v6105, 1.442695
  %v6107 = vpow.pop %v6106
  %v6108 = vadd.f32 %v6107, 1.0
  %v6109 = vrcp.pop %v6108
  %v6110 = vmul.f32 1.0, %v6109
  %v6111 = vrot.slane %v6087, 6
  %v6113 = vtanh.pop %v6111
  %v6114 = vmul.f32 %v6102, %v5357
  %v6115 = vmul.f32 %v6093, %v6113
  %v6116 = vadd.f32 %v6114, %v6115
  %v6117 = vtanh.pop %v6116
  %v6118 = vmul.f32 %v6110, %v6117
  %s6119 = scalar_lea.vmem %s0, 40
  %v6120 = vld [vmem:[%s6119] sm:$0xff]
  %6121 = vmatprep.subr.bf16.mxu0 %v804
  %6122 = vmatpush1.bf16.msra.mxu0 %v803
  %6123 = vmatprep.subr.bf16.mxu0 %v812
  %6124 = vmatpush1.bf16.msra.mxu0 %v811
  %6125 = vmatprep.subr.bf16.mxu0 %v820
  %6126 = vmatpush1.bf16.msra.mxu0 %v819
  %6127 = vmatprep.subr.bf16.mxu0 %v828
  %6128 = vmatpush1.bf16.msra.mxu0 %v827
  %6129 = vmatprep.subr.bf16.mxu0 %v836
  %6130 = vmatpush1.bf16.msra.mxu0 %v835
  %6131 = vmatprep.subr.bf16.mxu0 %v844
  %6132 = vmatpush1.bf16.msra.mxu0 %v843
  %6133 = vmatprep.subr.bf16.mxu0 %v852
  %6134 = vmatpush1.bf16.msra.mxu0 %v851
  %6135 = vmatprep.subr.bf16.mxu0 %v860
  %6136 = vmatpush1.bf16.msra.mxu0 %v859
  %6137 = vmatprep.subr.bf16.mxu0 %v868
  %6138 = vmatpush1.bf16.msra.mxu0 %v867
  %6139 = vmatprep.subr.bf16.mxu0 %v876
  %6140 = vmatpush1.bf16.msra.mxu0 %v875
  %6141 = vmatprep.subr.bf16.mxu0 %v884
  %6142 = vmatpush1.bf16.msra.mxu0 %v883
  %6143 = vmatprep.subr.bf16.mxu0 %v892
  %6144 = vmatpush1.bf16.msra.mxu0 %v891
  %6145 = vmatprep.subr.bf16.mxu0 %v900
  %6146 = vmatpush1.bf16.msra.mxu0 %v899
  %6147 = vmatprep.subr.bf16.mxu0 %v908
  %6148 = vmatpush1.bf16.msra.mxu0 %v907
  %6149 = vmatprep.subr.bf16.mxu0 %v916
  %6150 = vmatpush1.bf16.msra.mxu0 %v915
  %6151 = vmatprep.subr.bf16.mxu0 %v924
  %6152 = vmatpush1.bf16.msra.mxu0 %v923
  %6153 = vmatprep.mubr.bf16.mxu0 %v5628
  %6154 = vmatmul.mubr.bf16.gmra.mrb[0].mxu0 %v5627
  %v6155 = vpop.f32.mrb[0].mxu0
  %v6156 = vadd.f32 0.0, %v6155
  %v6157 = vpop.f32.mrb[0].mxu0
  %v6158 = vadd.f32 0.0, %v6157
  %v6159 = vpop.f32.mrb[0].mxu0
  %v6160 = vpop.f32.mrb[0].mxu0
  %6161 = vdwg.mxu0
  %6162 = vmatprep.subr.bf16.mxu0 %v806
  %6163 = vmatpush1.bf16.msra.mxu0 %v805
  %6164 = vmatprep.subr.bf16.mxu0 %v814
  %6165 = vmatpush1.bf16.msra.mxu0 %v813
  %6166 = vmatprep.subr.bf16.mxu0 %v822
  %6167 = vmatpush1.bf16.msra.mxu0 %v821
  %6168 = vmatprep.subr.bf16.mxu0 %v830
  %6169 = vmatpush1.bf16.msra.mxu0 %v829
  %6170 = vmatprep.subr.bf16.mxu0 %v838
  %6171 = vmatpush1.bf16.msra.mxu0 %v837
  %6172 = vmatprep.subr.bf16.mxu0 %v846
  %6173 = vmatpush1.bf16.msra.mxu0 %v845
  %6174 = vmatprep.subr.bf16.mxu0 %v854
  %6175 = vmatpush1.bf16.msra.mxu0 %v853
  %6176 = vmatprep.subr.bf16.mxu0 %v862
  %6177 = vmatpush1.bf16.msra.mxu0 %v861
  %6178 = vmatprep.subr.bf16.mxu0 %v870
  %6179 = vmatpush1.bf16.msra.mxu0 %v869
  %6180 = vmatprep.subr.bf16.mxu0 %v878
  %6181 = vmatpush1.bf16.msra.mxu0 %v877
  %6182 = vmatprep.subr.bf16.mxu0 %v886
  %6183 = vmatpush1.bf16.msra.mxu0 %v885
  %6184 = vmatprep.subr.bf16.mxu0 %v894
  %6185 = vmatpush1.bf16.msra.mxu0 %v893
  %6186 = vmatprep.subr.bf16.mxu0 %v902
  %6187 = vmatpush1.bf16.msra.mxu0 %v901
  %6188 = vmatprep.subr.bf16.mxu0 %v910
  %6189 = vmatpush1.bf16.msra.mxu0 %v909
  %6190 = vmatprep.subr.bf16.mxu0 %v918
  %6191 = vmatpush1.bf16.msra.mxu0 %v917
  %6192 = vmatprep.subr.bf16.mxu0 %v926
  %6193 = vmatpush1.bf16.msra.mxu0 %v925
  %6194 = vmatprep.mubr.bf16.mxu0 %v5628
  %6195 = vmatmul.mubr.bf16.gmra.mrb[0].mxu0 %v5627
  %v6196 = vpop.f32.mrb[0].mxu0
  %v6197 = vadd.f32 0.0, %v6196
  %v6198 = vpop.f32.mrb[0].mxu0
  %v6199 = vadd.f32 0.0, %v6198
  %v6200 = vpop.f32.mrb[0].mxu0
  %v6201 = vpop.f32.mrb[0].mxu0
  %6202 = vdwg.mxu0
  %6203 = vmatprep.subr.bf16.mxu0 %v808
  %6204 = vmatpush1.bf16.msra.mxu0 %v807
  %6205 = vmatprep.subr.bf16.mxu0 %v816
  %6206 = vmatpush1.bf16.msra.mxu0 %v815
  %6207 = vmatprep.subr.bf16.mxu0 %v824
  %6208 = vmatpush1.bf16.msra.mxu0 %v823
  %6209 = vmatprep.subr.bf16.mxu0 %v832
  %6210 = vmatpush1.bf16.msra.mxu0 %v831
  %6211 = vmatprep.subr.bf16.mxu0 %v840
  %6212 = vmatpush1.bf16.msra.mxu0 %v839
  %6213 = vmatprep.subr.bf16.mxu0 %v848
  %6214 = vmatpush1.bf16.msra.mxu0 %v847
  %6215 = vmatprep.subr.bf16.mxu0 %v856
  %6216 = vmatpush1.bf16.msra.mxu0 %v855
  %6217 = vmatprep.subr.bf16.mxu0 %v864
  %6218 = vmatpush1.bf16.msra.mxu0 %v863
  %6219 = vmatprep.subr.bf16.mxu0 %v872
  %6220 = vmatpush1.bf16.msra.mxu0 %v871
  %6221 = vmatprep.subr.bf16.mxu0 %v880
  %6222 = vmatpush1.bf16.msra.mxu0 %v879
  %6223 = vmatprep.subr.bf16.mxu0 %v888
  %6224 = vmatpush1.bf16.msra.mxu0 %v887
  %6225 = vmatprep.subr.bf16.mxu0 %v896
  %6226 = vmatpush1.bf16.msra.mxu0 %v895
  %6227 = vmatprep.subr.bf16.mxu0 %v904
  %6228 = vmatpush1.bf16.msra.mxu0 %v903
  %6229 = vmatprep.subr.bf16.mxu0 %v912
  %6230 = vmatpush1.bf16.msra.mxu0 %v911
  %6231 = vmatprep.subr.bf16.mxu0 %v920
  %6232 = vmatpush1.bf16.msra.mxu0 %v919
  %6233 = vmatprep.subr.bf16.mxu0 %v928
  %6234 = vmatpush1.bf16.msra.mxu0 %v927
  %6235 = vmatprep.mubr.bf16.mxu0 %v5628
  %6236 = vmatmul.mubr.bf16.gmra.mrb[0].mxu0 %v5627
  %v6237 = vpop.f32.mrb[0].mxu0
  %v6238 = vadd.f32 0.0, %v6237
  %v6239 = vpop.f32.mrb[0].mxu0
  %v6240 = vadd.f32 0.0, %v6239
  %v6241 = vpop.f32.mrb[0].mxu0
  %v6242 = vpop.f32.mrb[0].mxu0
  %6243 = vdwg.mxu0
  %6244 = vmatprep.subr.bf16.mxu0 %v810
  %6245 = vmatpush1.bf16.msra.mxu0 %v809
  %6246 = vmatprep.subr.bf16.mxu0 %v818
  %6247 = vmatpush1.bf16.msra.mxu0 %v817
  %6248 = vmatprep.subr.bf16.mxu0 %v826
  %6249 = vmatpush1.bf16.msra.mxu0 %v825
  %6250 = vmatprep.subr.bf16.mxu0 %v834
  %6251 = vmatpush1.bf16.msra.mxu0 %v833
  %6252 = vmatprep.subr.bf16.mxu0 %v842
  %6253 = vmatpush1.bf16.msra.mxu0 %v841
  %6254 = vmatprep.subr.bf16.mxu0 %v850
  %6255 = vmatpush1.bf16.msra.mxu0 %v849
  %6256 = vmatprep.subr.bf16.mxu0 %v858
  %6257 = vmatpush1.bf16.msra.mxu0 %v857
  %6258 = vmatprep.subr.bf16.mxu0 %v866
  %6259 = vmatpush1.bf16.msra.mxu0 %v865
  %6260 = vmatprep.subr.bf16.mxu0 %v874
  %6261 = vmatpush1.bf16.msra.mxu0 %v873
  %6262 = vmatprep.subr.bf16.mxu0 %v882
  %6263 = vmatpush1.bf16.msra.mxu0 %v881
  %6264 = vmatprep.subr.bf16.mxu0 %v890
  %6265 = vmatpush1.bf16.msra.mxu0 %v889
  %6266 = vmatprep.subr.bf16.mxu0 %v898
  %6267 = vmatpush1.bf16.msra.mxu0 %v897
  %6268 = vmatprep.subr.bf16.mxu0 %v906
  %6269 = vmatpush1.bf16.msra.mxu0 %v905
  %6270 = vmatprep.subr.bf16.mxu0 %v914
  %6271 = vmatpush1.bf16.msra.mxu0 %v913
  %6272 = vmatprep.subr.bf16.mxu0 %v922
  %6273 = vmatpush1.bf16.msra.mxu0 %v921
  %6274 = vmatprep.subr.bf16.mxu0 %v930
  %6275 = vmatpush1.bf16.msra.mxu0 %v929
  %6276 = vmatprep.mubr.bf16.mxu0 %v5628
  %6277 = vmatmul.mubr.bf16.gmra.mrb[0].mxu0 %v5627
  %v6278 = vpop.f32.mrb[0].mxu0
  %v6279 = vadd.f32 0.0, %v6278
  %v6280 = vpop.f32.mrb[0].mxu0
  %v6281 = vadd.f32 0.0, %v6280
  %v6282 = vpop.f32.mrb[0].mxu0
  %v6283 = vpop.f32.mrb[0].mxu0
  %6284 = vdwg.mxu0
  %v6293 = vcombine.low %v6156, %v6158
  %v6294 = vcombine.low %v6197, %v6199
  %v6295 = vcombine.low %v6238, %v6240
  %v6296 = vcombine.low %v6279, %v6281
  %v6298 = vunpack.c.l.s4 1966171168
  %v6299 = vunpack.c.0.s8 %v6298
  %v6300 = vlaneseq
  %v6301 = vshrl.u32 %v6300, 7
  %v6302 = vsub.s32 %v6299, %v6301
  %v6303 = vrot.slane %v6293, %v6302
  %v6305 = vunpack.c.l.s4 1966171168
  %v6306 = vunpack.c.0.s8 %v6305
  %v6307 = vlaneseq
  %v6308 = vshrl.u32 %v6307, 7
  %v6309 = vsub.s32 %v6306, %v6308
  %v6310 = vrot.slane %v6294, %v6309
  %v6312 = vunpack.c.l.s4 1966171168
  %v6313 = vunpack.c.0.s8 %v6312
  %v6314 = vlaneseq
  %v6315 = vshrl.u32 %v6314, 7
  %v6316 = vsub.s32 %v6313, %v6315
  %v6317 = vrot.slane %v6295, %v6316
  %v6319 = vunpack.c.l.s4 1966171168
  %v6320 = vunpack.c.0.s8 %v6319
  %v6321 = vlaneseq
  %v6322 = vshrl.u32 %v6321, 7
  %v6323 = vsub.s32 %v6320, %v6322
  %v6324 = vrot.slane %v6296, %v6323
  %v6325 = vcombine.low %v6303, %v6310
  %v6326 = vcombine.low %v6317, %v6324
  %v6328 = vunpack.c.l.s4 1966171168
  %v6329 = vunpack.c.0.s8 %v6328
  %v6330 = vlaneseq
  %v6331 = vshrl.u32 %v6330, 7
  %v6332 = vsub.s32 %v6329, %v6331
  %v6333 = vrot.slane %v6325, %v6332
  %v6335 = vunpack.c.l.s4 1966171168
  %v6336 = vunpack.c.0.s8 %v6335
  %v6337 = vlaneseq
  %v6338 = vshrl.u32 %v6337, 7
  %v6339 = vsub.s32 %v6336, %v6338
  %v6340 = vrot.slane %v6326, %v6339
  %v6341 = vcombine.low %v6333, %v6340
  %v6343 = vadd.f32 %v6120, %v6341
  %v6344 = vxor.u32 %v6343, 2147483648
  %v6345 = vmul.f32 %v6344, 1.442695
  %v6346 = vpow.pop %v6345
  %v6347 = vadd.f32 %v6346, 1.0
  %v6348 = vrcp.pop %v6347
  %v6349 = vmul.f32 1.0, %v6348
  %v6351 = vrot.slane %v6343, 2
  %v6353 = vxor.u32 %v6351, 2147483648
  %v6354 = vmul.f32 %v6353, 1.442695
  %v6355 = vpow.pop %v6354
  %v6356 = vadd.f32 %v6355, 1.0
  %v6357 = vrcp.pop %v6356
  %v6358 = vmul.f32 1.0, %v6357
  %v6359 = vrot.slane %v6343, 4
  %v6361 = vxor.u32 %v6359, 2147483648
  %v6362 = vmul.f32 %v6361, 1.442695
  %v6363 = vpow.pop %v6362
  %v6364 = vadd.f32 %v6363, 1.0
  %v6365 = vrcp.pop %v6364
  %v6366 = vmul.f32 1.0, %v6365
  %v6367 = vrot.slane %v6343, 6
  %v6369 = vtanh.pop %v6367
  %v6370 = vmul.f32 %v6358, %v5613
  %v6371 = vmul.f32 %v6349, %v6369
  %v6372 = vadd.f32 %v6370, %v6371
  %v6373 = vtanh.pop %v6372
  %v6374 = vmul.f32 %v6366, %v6373
  %v6376 = vlaneseq
  %v6377 = vshrl.u32 %v6376, 7
  %v6378 = vsub.s32 0, %v6377
  %v6379 = vrot.slane %v6374, %v6378
  %v6380 = vlaneseq
  %v6381 = vshrl.u32 %v6380, 7
  %v6382 = vsub.s32 1, %v6381
  %v6383 = vrot.slane %v6374, %v6382
  %v6386 = vpack.c.bf16 %v6379, %v6379
  %v6387 = vpack.c.bf16 %v6383, %v6383
  %6388 = vmatprep.subr.bf16.mxu0 %v1711
  %6389 = vmatpush1.bf16.msra.mxu0 %v1710
  %6390 = vmatprep.subr.bf16.mxu0 %v1719
  %6391 = vmatpush1.bf16.msra.mxu0 %v1718
  %6392 = vmatprep.subr.bf16.mxu0 %v1727
  %6393 = vmatpush1.bf16.msra.mxu0 %v1726
  %6394 = vmatprep.subr.bf16.mxu0 %v1735
  %6395 = vmatpush1.bf16.msra.mxu0 %v1734
  %6396 = vmatprep.subr.bf16.mxu0 %v1743
  %6397 = vmatpush1.bf16.msra.mxu0 %v1742
  %6398 = vmatprep.subr.bf16.mxu0 %v1751
  %6399 = vmatpush1.bf16.msra.mxu0 %v1750
  %6400 = vmatprep.subr.bf16.mxu0 %v1759
  %6401 = vmatpush1.bf16.msra.mxu0 %v1758
  %6402 = vmatprep.subr.bf16.mxu0 %v1767
  %6403 = vmatpush1.bf16.msra.mxu0 %v1766
  %6404 = vmatprep.subr.bf16.mxu0 %v1775
  %6405 = vmatpush1.bf16.msra.mxu0 %v1774
  %6406 = vmatprep.subr.bf16.mxu0 %v1783
  %6407 = vmatpush1.bf16.msra.mxu0 %v1782
  %6408 = vmatprep.subr.bf16.mxu0 %v1791
  %6409 = vmatpush1.bf16.msra.mxu0 %v1790
  %6410 = vmatprep.subr.bf16.mxu0 %v1799
  %6411 = vmatpush1.bf16.msra.mxu0 %v1798
  %6412 = vmatprep.subr.bf16.mxu0 %v1807
  %6413 = vmatpush1.bf16.msra.mxu0 %v1806
  %6414 = vmatprep.subr.bf16.mxu0 %v1815
  %6415 = vmatpush1.bf16.msra.mxu0 %v1814
  %6416 = vmatprep.subr.bf16.mxu0 %v1823
  %6417 = vmatpush1.bf16.msra.mxu0 %v1822
  %6418 = vmatprep.subr.bf16.mxu0 %v1831
  %6419 = vmatpush1.bf16.msra.mxu0 %v1830
  %6420 = vmatprep.mubr.bf16.mxu0 %v6387
  %6421 = vmatmul.mubr.bf16.gmra.mrb[0].mxu0 %v6386
  %v6422 = vpop.f32.mrb[0].mxu0
  %v6423 = vadd.f32 0.0, %v6422
  %v6424 = vpop.f32.mrb[0].mxu0
  %v6425 = vadd.f32 0.0, %v6424
  %v6426 = vpop.f32.mrb[0].mxu0
  %v6427 = vpop.f32.mrb[0].mxu0
  %6428 = vdwg.mxu0
  %6429 = vmatprep.subr.bf16.mxu0 %v1713
  %6430 = vmatpush1.bf16.msra.mxu0 %v1712
  %6431 = vmatprep.subr.bf16.mxu0 %v1721
  %6432 = vmatpush1.bf16.msra.mxu0 %v1720
  %6433 = vmatprep.subr.bf16.mxu0 %v1729
  %6434 = vmatpush1.bf16.msra.mxu0 %v1728
  %6435 = vmatprep.subr.bf16.mxu0 %v1737
  %6436 = vmatpush1.bf16.msra.mxu0 %v1736
  %6437 = vmatprep.subr.bf16.mxu0 %v1745
  %6438 = vmatpush1.bf16.msra.mxu0 %v1744
  %6439 = vmatprep.subr.bf16.mxu0 %v1753
  %6440 = vmatpush1.bf16.msra.mxu0 %v1752
  %6441 = vmatprep.subr.bf16.mxu0 %v1761
  %6442 = vmatpush1.bf16.msra.mxu0 %v1760
  %6443 = vmatprep.subr.bf16.mxu0 %v1769
  %6444 = vmatpush1.bf16.msra.mxu0 %v1768
  %6445 = vmatprep.subr.bf16.mxu0 %v1777
  %6446 = vmatpush1.bf16.msra.mxu0 %v1776
  %6447 = vmatprep.subr.bf16.mxu0 %v1785
  %6448 = vmatpush1.bf16.msra.mxu0 %v1784
  %6449 = vmatprep.subr.bf16.mxu0 %v1793
  %6450 = vmatpush1.bf16.msra.mxu0 %v1792
  %6451 = vmatprep.subr.bf16.mxu0 %v1801
  %6452 = vmatpush1.bf16.msra.mxu0 %v1800
  %6453 = vmatprep.subr.bf16.mxu0 %v1809
  %6454 = vmatpush1.bf16.msra.mxu0 %v1808
  %6455 = vmatprep.subr.bf16.mxu0 %v1817
  %6456 = vmatpush1.bf16.msra.mxu0 %v1816
  %6457 = vmatprep.subr.bf16.mxu0 %v1825
  %6458 = vmatpush1.bf16.msra.mxu0 %v1824
  %6459 = vmatprep.subr.bf16.mxu0 %v1833
  %6460 = vmatpush1.bf16.msra.mxu0 %v1832
  %6461 = vmatprep.mubr.bf16.mxu0 %v6387
  %6462 = vmatmul.mubr.bf16.gmra.mrb[0].mxu0 %v6386
  %v6463 = vpop.f32.mrb[0].mxu0
  %v6464 = vadd.f32 0.0, %v6463
  %v6465 = vpop.f32.mrb[0].mxu0
  %v6466 = vadd.f32 0.0, %v6465
  %v6467 = vpop.f32.mrb[0].mxu0
  %v6468 = vpop.f32.mrb[0].mxu0
  %6469 = vdwg.mxu0
  %6470 = vmatprep.subr.bf16.mxu0 %v1715
  %6471 = vmatpush1.bf16.msra.mxu0 %v1714
  %6472 = vmatprep.subr.bf16.mxu0 %v1723
  %6473 = vmatpush1.bf16.msra.mxu0 %v1722
  %6474 = vmatprep.subr.bf16.mxu0 %v1731
  %6475 = vmatpush1.bf16.msra.mxu0 %v1730
  %6476 = vmatprep.subr.bf16.mxu0 %v1739
  %6477 = vmatpush1.bf16.msra.mxu0 %v1738
  %6478 = vmatprep.subr.bf16.mxu0 %v1747
  %6479 = vmatpush1.bf16.msra.mxu0 %v1746
  %6480 = vmatprep.subr.bf16.mxu0 %v1755
  %6481 = vmatpush1.bf16.msra.mxu0 %v1754
  %6482 = vmatprep.subr.bf16.mxu0 %v1763
  %6483 = vmatpush1.bf16.msra.mxu0 %v1762
  %6484 = vmatprep.subr.bf16.mxu0 %v1771
  %6485 = vmatpush1.bf16.msra.mxu0 %v1770
  %6486 = vmatprep.subr.bf16.mxu0 %v1779
  %6487 = vmatpush1.bf16.msra.mxu0 %v1778
  %6488 = vmatprep.subr.bf16.mxu0 %v1787
  %6489 = vmatpush1.bf16.msra.mxu0 %v1786
  %6490 = vmatprep.subr.bf16.mxu0 %v1795
  %6491 = vmatpush1.bf16.msra.mxu0 %v1794
  %6492 = vmatprep.subr.bf16.mxu0 %v1803
  %6493 = vmatpush1.bf16.msra.mxu0 %v1802
  %6494 = vmatprep.subr.bf16.mxu0 %v1811
  %6495 = vmatpush1.bf16.msra.mxu0 %v1810
  %6496 = vmatprep.subr.bf16.mxu0 %v1819
  %6497 = vmatpush1.bf16.msra.mxu0 %v1818
  %6498 = vmatprep.subr.bf16.mxu0 %v1827
  %6499 = vmatpush1.bf16.msra.mxu0 %v1826
  %6500 = vmatprep.subr.bf16.mxu0 %v1835
  %6501 = vmatpush1.bf16.msra.mxu0 %v1834
  %6502 = vmatprep.mubr.bf16.mxu0 %v6387
  %6503 = vmatmul.mubr.bf16.gmra.mrb[0].mxu0 %v6386
  %v6504 = vpop.f32.mrb[0].mxu0
  %v6505 = vadd.f32 0.0, %v6504
  %v6506 = vpop.f32.mrb[0].mxu0
  %v6507 = vadd.f32 0.0, %v6506
  %v6508 = vpop.f32.mrb[0].mxu0
  %v6509 = vpop.f32.mrb[0].mxu0
  %6510 = vdwg.mxu0
  %6511 = vmatprep.subr.bf16.mxu0 %v1717
  %6512 = vmatpush1.bf16.msra.mxu0 %v1716
  %6513 = vmatprep.subr.bf16.mxu0 %v1725
  %6514 = vmatpush1.bf16.msra.mxu0 %v1724
  %6515 = vmatprep.subr.bf16.mxu0 %v1733
  %6516 = vmatpush1.bf16.msra.mxu0 %v1732
  %6517 = vmatprep.subr.bf16.mxu0 %v1741
  %6518 = vmatpush1.bf16.msra.mxu0 %v1740
  %6519 = vmatprep.subr.bf16.mxu0 %v1749
  %6520 = vmatpush1.bf16.msra.mxu0 %v1748
  %6521 = vmatprep.subr.bf16.mxu0 %v1757
  %6522 = vmatpush1.bf16.msra.mxu0 %v1756
  %6523 = vmatprep.subr.bf16.mxu0 %v1765
  %6524 = vmatpush1.bf16.msra.mxu0 %v1764
  %6525 = vmatprep.subr.bf16.mxu0 %v1773
  %6526 = vmatpush1.bf16.msra.mxu0 %v1772
  %6527 = vmatprep.subr.bf16.mxu0 %v1781
  %6528 = vmatpush1.bf16.msra.mxu0 %v1780
  %6529 = vmatprep.subr.bf16.mxu0 %v1789
  %6530 = vmatpush1.bf16.msra.mxu0 %v1788
  %6531 = vmatprep.subr.bf16.mxu0 %v1797
  %6532 = vmatpush1.bf16.msra.mxu0 %v1796
  %6533 = vmatprep.subr.bf16.mxu0 %v1805
  %6534 = vmatpush1.bf16.msra.mxu0 %v1804
  %6535 = vmatprep.subr.bf16.mxu0 %v1813
  %6536 = vmatpush1.bf16.msra.mxu0 %v1812
  %6537 = vmatprep.subr.bf16.mxu0 %v1821
  %6538 = vmatpush1.bf16.msra.mxu0 %v1820
  %6539 = vmatprep.subr.bf16.mxu0 %v1829
  %6540 = vmatpush1.bf16.msra.mxu0 %v1828
  %6541 = vmatprep.subr.bf16.mxu0 %v1837
  %6542 = vmatpush1.bf16.msra.mxu0 %v1836
  %6543 = vmatprep.mubr.bf16.mxu0 %v6387
  %6544 = vmatmul.mubr.bf16.gmra.mrb[0].mxu0 %v6386
  %v6545 = vpop.f32.mrb[0].mxu0
  %v6546 = vadd.f32 0.0, %v6545
  %v6547 = vpop.f32.mrb[0].mxu0
  %v6548 = vadd.f32 0.0, %v6547
  %v6549 = vpop.f32.mrb[0].mxu0
  %v6550 = vpop.f32.mrb[0].mxu0
  %6551 = vdwg.mxu0
  %v6560 = vcombine.low %v6423, %v6425
  %v6561 = vcombine.low %v6464, %v6466
  %v6562 = vcombine.low %v6505, %v6507
  %v6563 = vcombine.low %v6546, %v6548
  %v6565 = vunpack.c.l.s4 1966171168
  %v6566 = vunpack.c.0.s8 %v6565
  %v6567 = vlaneseq
  %v6568 = vshrl.u32 %v6567, 7
  %v6569 = vsub.s32 %v6566, %v6568
  %v6570 = vrot.slane %v6560, %v6569
  %v6572 = vunpack.c.l.s4 1966171168
  %v6573 = vunpack.c.0.s8 %v6572
  %v6574 = vlaneseq
  %v6575 = vshrl.u32 %v6574, 7
  %v6576 = vsub.s32 %v6573, %v6575
  %v6577 = vrot.slane %v6561, %v6576
  %v6579 = vunpack.c.l.s4 1966171168
  %v6580 = vunpack.c.0.s8 %v6579
  %v6581 = vlaneseq
  %v6582 = vshrl.u32 %v6581, 7
  %v6583 = vsub.s32 %v6580, %v6582
  %v6584 = vrot.slane %v6562, %v6583
  %v6586 = vunpack.c.l.s4 1966171168
  %v6587 = vunpack.c.0.s8 %v6586
  %v6588 = vlaneseq
  %v6589 = vshrl.u32 %v6588, 7
  %v6590 = vsub.s32 %v6587, %v6589
  %v6591 = vrot.slane %v6563, %v6590
  %v6592 = vcombine.low %v6570, %v6577
  %v6593 = vcombine.low %v6584, %v6591
  %v6595 = vunpack.c.l.s4 1966171168
  %v6596 = vunpack.c.0.s8 %v6595
  %v6597 = vlaneseq
  %v6598 = vshrl.u32 %v6597, 7
  %v6599 = vsub.s32 %v6596, %v6598
  %v6600 = vrot.slane %v6592, %v6599
  %v6602 = vunpack.c.l.s4 1966171168
  %v6603 = vunpack.c.0.s8 %v6602
  %v6604 = vlaneseq
  %v6605 = vshrl.u32 %v6604, 7
  %v6606 = vsub.s32 %v6603, %v6605
  %v6607 = vrot.slane %v6593, %v6606
  %v6608 = vcombine.low %v6600, %v6607
  %v6610 = vadd.f32 %v417, %v6608
  %v6612 = vlaneseq
  %v6613 = vshrl.u32 %v6612, 7
  %v6614 = vsub.s32 0, %v6613
  %v6615 = vrot.slane %v6118, %v6614
  %v6616 = vlaneseq
  %v6617 = vshrl.u32 %v6616, 7
  %v6618 = vsub.s32 1, %v6617
  %v6619 = vrot.slane %v6118, %v6618
  %v6622 = vpack.c.bf16 %v6615, %v6615
  %v6623 = vpack.c.bf16 %v6619, %v6619
  %6624 = vmatprep.subr.bf16.mxu0 %v2574
  %6625 = vmatpush1.bf16.msra.mxu0 %v2573
  %6626 = vmatprep.subr.bf16.mxu0 %v2582
  %6627 = vmatpush1.bf16.msra.mxu0 %v2581
  %6628 = vmatprep.subr.bf16.mxu0 %v2590
  %6629 = vmatpush1.bf16.msra.mxu0 %v2589
  %6630 = vmatprep.subr.bf16.mxu0 %v2598
  %6631 = vmatpush1.bf16.msra.mxu0 %v2597
  %6632 = vmatprep.subr.bf16.mxu0 %v2606
  %6633 = vmatpush1.bf16.msra.mxu0 %v2605
  %6634 = vmatprep.subr.bf16.mxu0 %v2614
  %6635 = vmatpush1.bf16.msra.mxu0 %v2613
  %6636 = vmatprep.subr.bf16.mxu0 %v2622
  %6637 = vmatpush1.bf16.msra.mxu0 %v2621
  %6638 = vmatprep.subr.bf16.mxu0 %v2630
  %6639 = vmatpush1.bf16.msra.mxu0 %v2629
  %6640 = vmatprep.subr.bf16.mxu0 %v2638
  %6641 = vmatpush1.bf16.msra.mxu0 %v2637
  %6642 = vmatprep.subr.bf16.mxu0 %v2646
  %6643 = vmatpush1.bf16.msra.mxu0 %v2645
  %6644 = vmatprep.subr.bf16.mxu0 %v2654
  %6645 = vmatpush1.bf16.msra.mxu0 %v2653
  %6646 = vmatprep.subr.bf16.mxu0 %v2662
  %6647 = vmatpush1.bf16.msra.mxu0 %v2661
  %6648 = vmatprep.subr.bf16.mxu0 %v2670
  %6649 = vmatpush1.bf16.msra.mxu0 %v2669
  %6650 = vmatprep.subr.bf16.mxu0 %v2678
  %6651 = vmatpush1.bf16.msra.mxu0 %v2677
  %6652 = vmatprep.subr.bf16.mxu0 %v2686
  %6653 = vmatpush1.bf16.msra.mxu0 %v2685
  %6654 = vmatprep.subr.bf16.mxu0 %v2694
  %6655 = vmatpush1.bf16.msra.mxu0 %v2693
  %6656 = vmatprep.mubr.bf16.mxu0 %v6623
  %6657 = vmatmul.mubr.bf16.gmra.mrb[0].mxu0 %v6622
  %v6658 = vpop.f32.mrb[0].mxu0
  %v6659 = vadd.f32 0.0, %v6658
  %v6660 = vpop.f32.mrb[0].mxu0
  %v6661 = vadd.f32 0.0, %v6660
  %v6662 = vpop.f32.mrb[0].mxu0
  %v6663 = vpop.f32.mrb[0].mxu0
  %6664 = vdwg.mxu0
  %6665 = vmatprep.subr.bf16.mxu0 %v2576
  %6666 = vmatpush1.bf16.msra.mxu0 %v2575
  %6667 = vmatprep.subr.bf16.mxu0 %v2584
  %6668 = vmatpush1.bf16.msra.mxu0 %v2583
  %6669 = vmatprep.subr.bf16.mxu0 %v2592
  %6670 = vmatpush1.bf16.msra.mxu0 %v2591
  %6671 = vmatprep.subr.bf16.mxu0 %v2600
  %6672 = vmatpush1.bf16.msra.mxu0 %v2599
  %6673 = vmatprep.subr.bf16.mxu0 %v2608
  %6674 = vmatpush1.bf16.msra.mxu0 %v2607
  %6675 = vmatprep.subr.bf16.mxu0 %v2616
  %6676 = vmatpush1.bf16.msra.mxu0 %v2615
  %6677 = vmatprep.subr.bf16.mxu0 %v2624
  %6678 = vmatpush1.bf16.msra.mxu0 %v2623
  %6679 = vmatprep.subr.bf16.mxu0 %v2632
  %6680 = vmatpush1.bf16.msra.mxu0 %v2631
  %6681 = vmatprep.subr.bf16.mxu0 %v2640
  %6682 = vmatpush1.bf16.msra.mxu0 %v2639
  %6683 = vmatprep.subr.bf16.mxu0 %v2648
  %6684 = vmatpush1.bf16.msra.mxu0 %v2647
  %6685 = vmatprep.subr.bf16.mxu0 %v2656
  %6686 = vmatpush1.bf16.msra.mxu0 %v2655
  %6687 = vmatprep.subr.bf16.mxu0 %v2664
  %6688 = vmatpush1.bf16.msra.mxu0 %v2663
  %6689 = vmatprep.subr.bf16.mxu0 %v2672
  %6690 = vmatpush1.bf16.msra.mxu0 %v2671
  %6691 = vmatprep.subr.bf16.mxu0 %v2680
  %6692 = vmatpush1.bf16.msra.mxu0 %v2679
  %6693 = vmatprep.subr.bf16.mxu0 %v2688
  %6694 = vmatpush1.bf16.msra.mxu0 %v2687
  %6695 = vmatprep.subr.bf16.mxu0 %v2696
  %6696 = vmatpush1.bf16.msra.mxu0 %v2695
  %6697 = vmatprep.mubr.bf16.mxu0 %v6623
  %6698 = vmatmul.mubr.bf16.gmra.mrb[0].mxu0 %v6622
  %v6699 = vpop.f32.mrb[0].mxu0
  %v6700 = vadd.f32 0.0, %v6699
  %v6701 = vpop.f32.mrb[0].mxu0
  %v6702 = vadd.f32 0.0, %v6701
  %v6703 = vpop.f32.mrb[0].mxu0
  %v6704 = vpop.f32.mrb[0].mxu0
  %6705 = vdwg.mxu0
  %6706 = vmatprep.subr.bf16.mxu0 %v2578
  %6707 = vmatpush1.bf16.msra.mxu0 %v2577
  %6708 = vmatprep.subr.bf16.mxu0 %v2586
  %6709 = vmatpush1.bf16.msra.mxu0 %v2585
  %6710 = vmatprep.subr.bf16.mxu0 %v2594
  %6711 = vmatpush1.bf16.msra.mxu0 %v2593
  %6712 = vmatprep.subr.bf16.mxu0 %v2602
  %6713 = vmatpush1.bf16.msra.mxu0 %v2601
  %6714 = vmatprep.subr.bf16.mxu0 %v2610
  %6715 = vmatpush1.bf16.msra.mxu0 %v2609
  %6716 = vmatprep.subr.bf16.mxu0 %v2618
  %6717 = vmatpush1.bf16.msra.mxu0 %v2617
  %6718 = vmatprep.subr.bf16.mxu0 %v2626
  %6719 = vmatpush1.bf16.msra.mxu0 %v2625
  %6720 = vmatprep.subr.bf16.mxu0 %v2634
  %6721 = vmatpush1.bf16.msra.mxu0 %v2633
  %6722 = vmatprep.subr.bf16.mxu0 %v2642
  %6723 = vmatpush1.bf16.msra.mxu0 %v2641
  %6724 = vmatprep.subr.bf16.mxu0 %v2650
  %6725 = vmatpush1.bf16.msra.mxu0 %v2649
  %6726 = vmatprep.subr.bf16.mxu0 %v2658
  %6727 = vmatpush1.bf16.msra.mxu0 %v2657
  %6728 = vmatprep.subr.bf16.mxu0 %v2666
  %6729 = vmatpush1.bf16.msra.mxu0 %v2665
  %6730 = vmatprep.subr.bf16.mxu0 %v2674
  %6731 = vmatpush1.bf16.msra.mxu0 %v2673
  %6732 = vmatprep.subr.bf16.mxu0 %v2682
  %6733 = vmatpush1.bf16.msra.mxu0 %v2681
  %6734 = vmatprep.subr.bf16.mxu0 %v2690
  %6735 = vmatpush1.bf16.msra.mxu0 %v2689
  %6736 = vmatprep.subr.bf16.mxu0 %v2698
  %6737 = vmatpush1.bf16.msra.mxu0 %v2697
  %6738 = vmatprep.mubr.bf16.mxu0 %v6623
  %6739 = vmatmul.mubr.bf16.gmra.mrb[0].mxu0 %v6622
  %v6740 = vpop.f32.mrb[0].mxu0
  %v6741 = vadd.f32 0.0, %v6740
  %v6742 = vpop.f32.mrb[0].mxu0
  %v6743 = vadd.f32 0.0, %v6742
  %v6744 = vpop.f32.mrb[0].mxu0
  %v6745 = vpop.f32.mrb[0].mxu0
  %6746 = vdwg.mxu0
  %6747 = vmatprep.subr.bf16.mxu0 %v2580
  %6748 = vmatpush1.bf16.msra.mxu0 %v2579
  %6749 = vmatprep.subr.bf16.mxu0 %v2588
  %6750 = vmatpush1.bf16.msra.mxu0 %v2587
  %6751 = vmatprep.subr.bf16.mxu0 %v2596
  %6752 = vmatpush1.bf16.msra.mxu0 %v2595
  %6753 = vmatprep.subr.bf16.mxu0 %v2604
  %6754 = vmatpush1.bf16.msra.mxu0 %v2603
  %6755 = vmatprep.subr.bf16.mxu0 %v2612
  %6756 = vmatpush1.bf16.msra.mxu0 %v2611
  %6757 = vmatprep.subr.bf16.mxu0 %v2620
  %6758 = vmatpush1.bf16.msra.mxu0 %v2619
  %6759 = vmatprep.subr.bf16.mxu0 %v2628
  %6760 = vmatpush1.bf16.msra.mxu0 %v2627
  %6761 = vmatprep.subr.bf16.mxu0 %v2636
  %6762 = vmatpush1.bf16.msra.mxu0 %v2635
  %6763 = vmatprep.subr.bf16.mxu0 %v2644
  %6764 = vmatpush1.bf16.msra.mxu0 %v2643
  %6765 = vmatprep.subr.bf16.mxu0 %v2652
  %6766 = vmatpush1.bf16.msra.mxu0 %v2651
  %6767 = vmatprep.subr.bf16.mxu0 %v2660
  %6768 = vmatpush1.bf16.msra.mxu0 %v2659
  %6769 = vmatprep.subr.bf16.mxu0 %v2668
  %6770 = vmatpush1.bf16.msra.mxu0 %v2667
  %6771 = vmatprep.subr.bf16.mxu0 %v2676
  %6772 = vmatpush1.bf16.msra.mxu0 %v2675
  %6773 = vmatprep.subr.bf16.mxu0 %v2684
  %6774 = vmatpush1.bf16.msra.mxu0 %v2683
  %6775 = vmatprep.subr.bf16.mxu0 %v2692
  %6776 = vmatpush1.bf16.msra.mxu0 %v2691
  %6777 = vmatprep.subr.bf16.mxu0 %v2700
  %6778 = vmatpush1.bf16.msra.mxu0 %v2699
  %6779 = vmatprep.mubr.bf16.mxu0 %v6623
  %6780 = vmatmul.mubr.bf16.gmra.mrb[0].mxu0 %v6622
  %v6781 = vpop.f32.mrb[0].mxu0
  %v6782 = vadd.f32 0.0, %v6781
  %v6783 = vpop.f32.mrb[0].mxu0
  %v6784 = vadd.f32 0.0, %v6783
  %v6785 = vpop.f32.mrb[0].mxu0
  %v6786 = vpop.f32.mrb[0].mxu0
  %6787 = vdwg.mxu0
  %v6796 = vcombine.low %v6659, %v6661
  %v6797 = vcombine.low %v6700, %v6702
  %v6798 = vcombine.low %v6741, %v6743
  %v6799 = vcombine.low %v6782, %v6784
  %v6801 = vunpack.c.l.s4 1966171168
  %v6802 = vunpack.c.0.s8 %v6801
  %v6803 = vlaneseq
  %v6804 = vshrl.u32 %v6803, 7
  %v6805 = vsub.s32 %v6802, %v6804
  %v6806 = vrot.slane %v6796, %v6805
  %v6808 = vunpack.c.l.s4 1966171168
  %v6809 = vunpack.c.0.s8 %v6808
  %v6810 = vlaneseq
  %v6811 = vshrl.u32 %v6810, 7
  %v6812 = vsub.s32 %v6809, %v6811
  %v6813 = vrot.slane %v6797, %v6812
  %v6815 = vunpack.c.l.s4 1966171168
  %v6816 = vunpack.c.0.s8 %v6815
  %v6817 = vlaneseq
  %v6818 = vshrl.u32 %v6817, 7
  %v6819 = vsub.s32 %v6816, %v6818
  %v6820 = vrot.slane %v6798, %v6819
  %v6822 = vunpack.c.l.s4 1966171168
  %v6823 = vunpack.c.0.s8 %v6822
  %v6824 = vlaneseq
  %v6825 = vshrl.u32 %v6824, 7
  %v6826 = vsub.s32 %v6823, %v6825
  %v6827 = vrot.slane %v6799, %v6826
  %v6828 = vcombine.low %v6806, %v6813
  %v6829 = vcombine.low %v6820, %v6827
  %v6831 = vunpack.c.l.s4 1966171168
  %v6832 = vunpack.c.0.s8 %v6831
  %v6833 = vlaneseq
  %v6834 = vshrl.u32 %v6833, 7
  %v6835 = vsub.s32 %v6832, %v6834
  %v6836 = vrot.slane %v6828, %v6835
  %v6838 = vunpack.c.l.s4 1966171168
  %v6839 = vunpack.c.0.s8 %v6838
  %v6840 = vlaneseq
  %v6841 = vshrl.u32 %v6840, 7
  %v6842 = vsub.s32 %v6839, %v6841
  %v6843 = vrot.slane %v6829, %v6842
  %v6844 = vcombine.low %v6836, %v6843
  %v6846 = vadd.f32 %v6610, %v6844
  %v6847 = vxor.u32 %v6846, 2147483648
  %v6848 = vmul.f32 %v6847, 1.442695
  %v6849 = vpow.pop %v6848
  %v6850 = vadd.f32 %v6849, 1.0
  %v6851 = vrcp.pop %v6850
  %v6852 = vmul.f32 1.0, %v6851
  %v6854 = vrot.slane %v6846, 2
  %v6856 = vxor.u32 %v6854, 2147483648
  %v6857 = vmul.f32 %v6856, 1.442695
  %v6858 = vpow.pop %v6857
  %v6859 = vadd.f32 %v6858, 1.0
  %v6860 = vrcp.pop %v6859
  %v6861 = vmul.f32 1.0, %v6860
  %v6862 = vrot.slane %v6846, 4
  %v6864 = vxor.u32 %v6862, 2147483648
  %v6865 = vmul.f32 %v6864, 1.442695
  %v6866 = vpow.pop %v6865
  %v6867 = vadd.f32 %v6866, 1.0
  %v6868 = vrcp.pop %v6867
  %v6869 = vmul.f32 1.0, %v6868
  %v6870 = vrot.slane %v6846, 6
  %v6872 = vtanh.pop %v6870
  %v6873 = vmul.f32 %v6861, %v6116
  %v6874 = vmul.f32 %v6852, %v6872
  %v6875 = vadd.f32 %v6873, %v6874
  %v6876 = vtanh.pop %v6875
  %v6877 = vmul.f32 %v6869, %v6876
  %s6878 = scalar_lea.vmem %s0, 48
  %v6879 = vld [vmem:[%s6878] sm:$0xff]
  %6880 = vmatprep.subr.bf16.mxu0 %v804
  %6881 = vmatpush1.bf16.msra.mxu0 %v803
  %6882 = vmatprep.subr.bf16.mxu0 %v812
  %6883 = vmatpush1.bf16.msra.mxu0 %v811
  %6884 = vmatprep.subr.bf16.mxu0 %v820
  %6885 = vmatpush1.bf16.msra.mxu0 %v819
  %6886 = vmatprep.subr.bf16.mxu0 %v828
  %6887 = vmatpush1.bf16.msra.mxu0 %v827
  %6888 = vmatprep.subr.bf16.mxu0 %v836
  %6889 = vmatpush1.bf16.msra.mxu0 %v835
  %6890 = vmatprep.subr.bf16.mxu0 %v844
  %6891 = vmatpush1.bf16.msra.mxu0 %v843
  %6892 = vmatprep.subr.bf16.mxu0 %v852
  %6893 = vmatpush1.bf16.msra.mxu0 %v851
  %6894 = vmatprep.subr.bf16.mxu0 %v860
  %6895 = vmatpush1.bf16.msra.mxu0 %v859
  %6896 = vmatprep.subr.bf16.mxu0 %v868
  %6897 = vmatpush1.bf16.msra.mxu0 %v867
  %6898 = vmatprep.subr.bf16.mxu0 %v876
  %6899 = vmatpush1.bf16.msra.mxu0 %v875
  %6900 = vmatprep.subr.bf16.mxu0 %v884
  %6901 = vmatpush1.bf16.msra.mxu0 %v883
  %6902 = vmatprep.subr.bf16.mxu0 %v892
  %6903 = vmatpush1.bf16.msra.mxu0 %v891
  %6904 = vmatprep.subr.bf16.mxu0 %v900
  %6905 = vmatpush1.bf16.msra.mxu0 %v899
  %6906 = vmatprep.subr.bf16.mxu0 %v908
  %6907 = vmatpush1.bf16.msra.mxu0 %v907
  %6908 = vmatprep.subr.bf16.mxu0 %v916
  %6909 = vmatpush1.bf16.msra.mxu0 %v915
  %6910 = vmatprep.subr.bf16.mxu0 %v924
  %6911 = vmatpush1.bf16.msra.mxu0 %v923
  %6912 = vmatprep.mubr.bf16.mxu0 %v6387
  %6913 = vmatmul.mubr.bf16.gmra.mrb[0].mxu0 %v6386
  %v6914 = vpop.f32.mrb[0].mxu0
  %v6915 = vadd.f32 0.0, %v6914
  %v6916 = vpop.f32.mrb[0].mxu0
  %v6917 = vadd.f32 0.0, %v6916
  %v6918 = vpop.f32.mrb[0].mxu0
  %v6919 = vpop.f32.mrb[0].mxu0
  %6920 = vdwg.mxu0
  %6921 = vmatprep.subr.bf16.mxu0 %v806
  %6922 = vmatpush1.bf16.msra.mxu0 %v805
  %6923 = vmatprep.subr.bf16.mxu0 %v814
  %6924 = vmatpush1.bf16.msra.mxu0 %v813
  %6925 = vmatprep.subr.bf16.mxu0 %v822
  %6926 = vmatpush1.bf16.msra.mxu0 %v821
  %6927 = vmatprep.subr.bf16.mxu0 %v830
  %6928 = vmatpush1.bf16.msra.mxu0 %v829
  %6929 = vmatprep.subr.bf16.mxu0 %v838
  %6930 = vmatpush1.bf16.msra.mxu0 %v837
  %6931 = vmatprep.subr.bf16.mxu0 %v846
  %6932 = vmatpush1.bf16.msra.mxu0 %v845
  %6933 = vmatprep.subr.bf16.mxu0 %v854
  %6934 = vmatpush1.bf16.msra.mxu0 %v853
  %6935 = vmatprep.subr.bf16.mxu0 %v862
  %6936 = vmatpush1.bf16.msra.mxu0 %v861
  %6937 = vmatprep.subr.bf16.mxu0 %v870
  %6938 = vmatpush1.bf16.msra.mxu0 %v869
  %6939 = vmatprep.subr.bf16.mxu0 %v878
  %6940 = vmatpush1.bf16.msra.mxu0 %v877
  %6941 = vmatprep.subr.bf16.mxu0 %v886
  %6942 = vmatpush1.bf16.msra.mxu0 %v885
  %6943 = vmatprep.subr.bf16.mxu0 %v894
  %6944 = vmatpush1.bf16.msra.mxu0 %v893
  %6945 = vmatprep.subr.bf16.mxu0 %v902
  %6946 = vmatpush1.bf16.msra.mxu0 %v901
  %6947 = vmatprep.subr.bf16.mxu0 %v910
  %6948 = vmatpush1.bf16.msra.mxu0 %v909
  %6949 = vmatprep.subr.bf16.mxu0 %v918
  %6950 = vmatpush1.bf16.msra.mxu0 %v917
  %6951 = vmatprep.subr.bf16.mxu0 %v926
  %6952 = vmatpush1.bf16.msra.mxu0 %v925
  %6953 = vmatprep.mubr.bf16.mxu0 %v6387
  %6954 = vmatmul.mubr.bf16.gmra.mrb[0].mxu0 %v6386
  %v6955 = vpop.f32.mrb[0].mxu0
  %v6956 = vadd.f32 0.0, %v6955
  %v6957 = vpop.f32.mrb[0].mxu0
  %v6958 = vadd.f32 0.0, %v6957
  %v6959 = vpop.f32.mrb[0].mxu0
  %v6960 = vpop.f32.mrb[0].mxu0
  %6961 = vdwg.mxu0
  %6962 = vmatprep.subr.bf16.mxu0 %v808
  %6963 = vmatpush1.bf16.msra.mxu0 %v807
  %6964 = vmatprep.subr.bf16.mxu0 %v816
  %6965 = vmatpush1.bf16.msra.mxu0 %v815
  %6966 = vmatprep.subr.bf16.mxu0 %v824
  %6967 = vmatpush1.bf16.msra.mxu0 %v823
  %6968 = vmatprep.subr.bf16.mxu0 %v832
  %6969 = vmatpush1.bf16.msra.mxu0 %v831
  %6970 = vmatprep.subr.bf16.mxu0 %v840
  %6971 = vmatpush1.bf16.msra.mxu0 %v839
  %6972 = vmatprep.subr.bf16.mxu0 %v848
  %6973 = vmatpush1.bf16.msra.mxu0 %v847
  %6974 = vmatprep.subr.bf16.mxu0 %v856
  %6975 = vmatpush1.bf16.msra.mxu0 %v855
  %6976 = vmatprep.subr.bf16.mxu0 %v864
  %6977 = vmatpush1.bf16.msra.mxu0 %v863
  %6978 = vmatprep.subr.bf16.mxu0 %v872
  %6979 = vmatpush1.bf16.msra.mxu0 %v871
  %6980 = vmatprep.subr.bf16.mxu0 %v880
  %6981 = vmatpush1.bf16.msra.mxu0 %v879
  %6982 = vmatprep.subr.bf16.mxu0 %v888
  %6983 = vmatpush1.bf16.msra.mxu0 %v887
  %6984 = vmatprep.subr.bf16.mxu0 %v896
  %6985 = vmatpush1.bf16.msra.mxu0 %v895
  %6986 = vmatprep.subr.bf16.mxu0 %v904
  %6987 = vmatpush1.bf16.msra.mxu0 %v903
  %6988 = vmatprep.subr.bf16.mxu0 %v912
  %6989 = vmatpush1.bf16.msra.mxu0 %v911
  %6990 = vmatprep.subr.bf16.mxu0 %v920
  %6991 = vmatpush1.bf16.msra.mxu0 %v919
  %6992 = vmatprep.subr.bf16.mxu0 %v928
  %6993 = vmatpush1.bf16.msra.mxu0 %v927
  %6994 = vmatprep.mubr.bf16.mxu0 %v6387
  %6995 = vmatmul.mubr.bf16.gmra.mrb[0].mxu0 %v6386
  %v6996 = vpop.f32.mrb[0].mxu0
  %v6997 = vadd.f32 0.0, %v6996
  %v6998 = vpop.f32.mrb[0].mxu0
  %v6999 = vadd.f32 0.0, %v6998
  %v7000 = vpop.f32.mrb[0].mxu0
  %v7001 = vpop.f32.mrb[0].mxu0
  %7002 = vdwg.mxu0
  %7003 = vmatprep.subr.bf16.mxu0 %v810
  %7004 = vmatpush1.bf16.msra.mxu0 %v809
  %7005 = vmatprep.subr.bf16.mxu0 %v818
  %7006 = vmatpush1.bf16.msra.mxu0 %v817
  %7007 = vmatprep.subr.bf16.mxu0 %v826
  %7008 = vmatpush1.bf16.msra.mxu0 %v825
  %7009 = vmatprep.subr.bf16.mxu0 %v834
  %7010 = vmatpush1.bf16.msra.mxu0 %v833
  %7011 = vmatprep.subr.bf16.mxu0 %v842
  %7012 = vmatpush1.bf16.msra.mxu0 %v841
  %7013 = vmatprep.subr.bf16.mxu0 %v850
  %7014 = vmatpush1.bf16.msra.mxu0 %v849
  %7015 = vmatprep.subr.bf16.mxu0 %v858
  %7016 = vmatpush1.bf16.msra.mxu0 %v857
  %7017 = vmatprep.subr.bf16.mxu0 %v866
  %7018 = vmatpush1.bf16.msra.mxu0 %v865
  %7019 = vmatprep.subr.bf16.mxu0 %v874
  %7020 = vmatpush1.bf16.msra.mxu0 %v873
  %7021 = vmatprep.subr.bf16.mxu0 %v882
  %7022 = vmatpush1.bf16.msra.mxu0 %v881
  %7023 = vmatprep.subr.bf16.mxu0 %v890
  %7024 = vmatpush1.bf16.msra.mxu0 %v889
  %7025 = vmatprep.subr.bf16.mxu0 %v898
  %7026 = vmatpush1.bf16.msra.mxu0 %v897
  %7027 = vmatprep.subr.bf16.mxu0 %v906
  %7028 = vmatpush1.bf16.msra.mxu0 %v905
  %7029 = vmatprep.subr.bf16.mxu0 %v914
  %7030 = vmatpush1.bf16.msra.mxu0 %v913
  %7031 = vmatprep.subr.bf16.mxu0 %v922
  %7032 = vmatpush1.bf16.msra.mxu0 %v921
  %7033 = vmatprep.subr.bf16.mxu0 %v930
  %7034 = vmatpush1.bf16.msra.mxu0 %v929
  %7035 = vmatprep.mubr.bf16.mxu0 %v6387
  %7036 = vmatmul.mubr.bf16.gmra.mrb[0].mxu0 %v6386
  %v7037 = vpop.f32.mrb[0].mxu0
  %v7038 = vadd.f32 0.0, %v7037
  %v7039 = vpop.f32.mrb[0].mxu0
  %v7040 = vadd.f32 0.0, %v7039
  %v7041 = vpop.f32.mrb[0].mxu0
  %v7042 = vpop.f32.mrb[0].mxu0
  %7043 = vdwg.mxu0
  %v7052 = vcombine.low %v6915, %v6917
  %v7053 = vcombine.low %v6956, %v6958
  %v7054 = vcombine.low %v6997, %v6999
  %v7055 = vcombine.low %v7038, %v7040
  %v7057 = vunpack.c.l.s4 1966171168
  %v7058 = vunpack.c.0.s8 %v7057
  %v7059 = vlaneseq
  %v7060 = vshrl.u32 %v7059, 7
  %v7061 = vsub.s32 %v7058, %v7060
  %v7062 = vrot.slane %v7052, %v7061
  %v7064 = vunpack.c.l.s4 1966171168
  %v7065 = vunpack.c.0.s8 %v7064
  %v7066 = vlaneseq
  %v7067 = vshrl.u32 %v7066, 7
  %v7068 = vsub.s32 %v7065, %v7067
  %v7069 = vrot.slane %v7053, %v7068
  %v7071 = vunpack.c.l.s4 1966171168
  %v7072 = vunpack.c.0.s8 %v7071
  %v7073 = vlaneseq
  %v7074 = vshrl.u32 %v7073, 7
  %v7075 = vsub.s32 %v7072, %v7074
  %v7076 = vrot.slane %v7054, %v7075
  %v7078 = vunpack.c.l.s4 1966171168
  %v7079 = vunpack.c.0.s8 %v7078
  %v7080 = vlaneseq
  %v7081 = vshrl.u32 %v7080, 7
  %v7082 = vsub.s32 %v7079, %v7081
  %v7083 = vrot.slane %v7055, %v7082
  %v7084 = vcombine.low %v7062, %v7069
  %v7085 = vcombine.low %v7076, %v7083
  %v7087 = vunpack.c.l.s4 1966171168
  %v7088 = vunpack.c.0.s8 %v7087
  %v7089 = vlaneseq
  %v7090 = vshrl.u32 %v7089, 7
  %v7091 = vsub.s32 %v7088, %v7090
  %v7092 = vrot.slane %v7084, %v7091
  %v7094 = vunpack.c.l.s4 1966171168
  %v7095 = vunpack.c.0.s8 %v7094
  %v7096 = vlaneseq
  %v7097 = vshrl.u32 %v7096, 7
  %v7098 = vsub.s32 %v7095, %v7097
  %v7099 = vrot.slane %v7085, %v7098
  %v7100 = vcombine.low %v7092, %v7099
  %v7102 = vadd.f32 %v6879, %v7100
  %v7103 = vxor.u32 %v7102, 2147483648
  %v7104 = vmul.f32 %v7103, 1.442695
  %v7105 = vpow.pop %v7104
  %v7106 = vadd.f32 %v7105, 1.0
  %v7107 = vrcp.pop %v7106
  %v7108 = vmul.f32 1.0, %v7107
  %v7110 = vrot.slane %v7102, 2
  %v7112 = vxor.u32 %v7110, 2147483648
  %v7113 = vmul.f32 %v7112, 1.442695
  %v7114 = vpow.pop %v7113
  %v7115 = vadd.f32 %v7114, 1.0
  %v7116 = vrcp.pop %v7115
  %v7117 = vmul.f32 1.0, %v7116
  %v7118 = vrot.slane %v7102, 4
  %v7120 = vxor.u32 %v7118, 2147483648
  %v7121 = vmul.f32 %v7120, 1.442695
  %v7122 = vpow.pop %v7121
  %v7123 = vadd.f32 %v7122, 1.0
  %v7124 = vrcp.pop %v7123
  %v7125 = vmul.f32 1.0, %v7124
  %v7126 = vrot.slane %v7102, 6
  %v7128 = vtanh.pop %v7126
  %v7129 = vmul.f32 %v7117, %v6372
  %v7130 = vmul.f32 %v7108, %v7128
  %v7131 = vadd.f32 %v7129, %v7130
  %v7132 = vtanh.pop %v7131
  %v7133 = vmul.f32 %v7125, %v7132
  %v7135 = vlaneseq
  %v7136 = vshrl.u32 %v7135, 7
  %v7137 = vsub.s32 0, %v7136
  %v7138 = vrot.slane %v7133, %v7137
  %v7139 = vlaneseq
  %v7140 = vshrl.u32 %v7139, 7
  %v7141 = vsub.s32 1, %v7140
  %v7142 = vrot.slane %v7133, %v7141
  %v7145 = vpack.c.bf16 %v7138, %v7138
  %v7146 = vpack.c.bf16 %v7142, %v7142
  %7147 = vmatprep.subr.bf16.mxu0 %v1711
  %7148 = vmatpush1.bf16.msra.mxu0 %v1710
  %7149 = vmatprep.subr.bf16.mxu0 %v1719
  %7150 = vmatpush1.bf16.msra.mxu0 %v1718
  %7151 = vmatprep.subr.bf16.mxu0 %v1727
  %7152 = vmatpush1.bf16.msra.mxu0 %v1726
  %7153 = vmatprep.subr.bf16.mxu0 %v1735
  %7154 = vmatpush1.bf16.msra.mxu0 %v1734
  %7155 = vmatprep.subr.bf16.mxu0 %v1743
  %7156 = vmatpush1.bf16.msra.mxu0 %v1742
  %7157 = vmatprep.subr.bf16.mxu0 %v1751
  %7158 = vmatpush1.bf16.msra.mxu0 %v1750
  %7159 = vmatprep.subr.bf16.mxu0 %v1759
  %7160 = vmatpush1.bf16.msra.mxu0 %v1758
  %7161 = vmatprep.subr.bf16.mxu0 %v1767
  %7162 = vmatpush1.bf16.msra.mxu0 %v1766
  %7163 = vmatprep.subr.bf16.mxu0 %v1775
  %7164 = vmatpush1.bf16.msra.mxu0 %v1774
  %7165 = vmatprep.subr.bf16.mxu0 %v1783
  %7166 = vmatpush1.bf16.msra.mxu0 %v1782
  %7167 = vmatprep.subr.bf16.mxu0 %v1791
  %7168 = vmatpush1.bf16.msra.mxu0 %v1790
  %7169 = vmatprep.subr.bf16.mxu0 %v1799
  %7170 = vmatpush1.bf16.msra.mxu0 %v1798
  %7171 = vmatprep.subr.bf16.mxu0 %v1807
  %7172 = vmatpush1.bf16.msra.mxu0 %v1806
  %7173 = vmatprep.subr.bf16.mxu0 %v1815
  %7174 = vmatpush1.bf16.msra.mxu0 %v1814
  %7175 = vmatprep.subr.bf16.mxu0 %v1823
  %7176 = vmatpush1.bf16.msra.mxu0 %v1822
  %7177 = vmatprep.subr.bf16.mxu0 %v1831
  %7178 = vmatpush1.bf16.msra.mxu0 %v1830
  %7179 = vmatprep.mubr.bf16.mxu0 %v7146
  %7180 = vmatmul.mubr.bf16.gmra.mrb[0].mxu0 %v7145
  %v7181 = vpop.f32.mrb[0].mxu0
  %v7182 = vadd.f32 0.0, %v7181
  %v7183 = vpop.f32.mrb[0].mxu0
  %v7184 = vadd.f32 0.0, %v7183
  %v7185 = vpop.f32.mrb[0].mxu0
  %v7186 = vpop.f32.mrb[0].mxu0
  %7187 = vdwg.mxu0
  %7188 = vmatprep.subr.bf16.mxu0 %v1713
  %7189 = vmatpush1.bf16.msra.mxu0 %v1712
  %7190 = vmatprep.subr.bf16.mxu0 %v1721
  %7191 = vmatpush1.bf16.msra.mxu0 %v1720
  %7192 = vmatprep.subr.bf16.mxu0 %v1729
  %7193 = vmatpush1.bf16.msra.mxu0 %v1728
  %7194 = vmatprep.subr.bf16.mxu0 %v1737
  %7195 = vmatpush1.bf16.msra.mxu0 %v1736
  %7196 = vmatprep.subr.bf16.mxu0 %v1745
  %7197 = vmatpush1.bf16.msra.mxu0 %v1744
  %7198 = vmatprep.subr.bf16.mxu0 %v1753
  %7199 = vmatpush1.bf16.msra.mxu0 %v1752
  %7200 = vmatprep.subr.bf16.mxu0 %v1761
  %7201 = vmatpush1.bf16.msra.mxu0 %v1760
  %7202 = vmatprep.subr.bf16.mxu0 %v1769
  %7203 = vmatpush1.bf16.msra.mxu0 %v1768
  %7204 = vmatprep.subr.bf16.mxu0 %v1777
  %7205 = vmatpush1.bf16.msra.mxu0 %v1776
  %7206 = vmatprep.subr.bf16.mxu0 %v1785
  %7207 = vmatpush1.bf16.msra.mxu0 %v1784
  %7208 = vmatprep.subr.bf16.mxu0 %v1793
  %7209 = vmatpush1.bf16.msra.mxu0 %v1792
  %7210 = vmatprep.subr.bf16.mxu0 %v1801
  %7211 = vmatpush1.bf16.msra.mxu0 %v1800
  %7212 = vmatprep.subr.bf16.mxu0 %v1809
  %7213 = vmatpush1.bf16.msra.mxu0 %v1808
  %7214 = vmatprep.subr.bf16.mxu0 %v1817
  %7215 = vmatpush1.bf16.msra.mxu0 %v1816
  %7216 = vmatprep.subr.bf16.mxu0 %v1825
  %7217 = vmatpush1.bf16.msra.mxu0 %v1824
  %7218 = vmatprep.subr.bf16.mxu0 %v1833
  %7219 = vmatpush1.bf16.msra.mxu0 %v1832
  %7220 = vmatprep.mubr.bf16.mxu0 %v7146
  %7221 = vmatmul.mubr.bf16.gmra.mrb[0].mxu0 %v7145
  %v7222 = vpop.f32.mrb[0].mxu0
  %v7223 = vadd.f32 0.0, %v7222
  %v7224 = vpop.f32.mrb[0].mxu0
  %v7225 = vadd.f32 0.0, %v7224
  %v7226 = vpop.f32.mrb[0].mxu0
  %v7227 = vpop.f32.mrb[0].mxu0
  %7228 = vdwg.mxu0
  %7229 = vmatprep.subr.bf16.mxu0 %v1715
  %7230 = vmatpush1.bf16.msra.mxu0 %v1714
  %7231 = vmatprep.subr.bf16.mxu0 %v1723
  %7232 = vmatpush1.bf16.msra.mxu0 %v1722
  %7233 = vmatprep.subr.bf16.mxu0 %v1731
  %7234 = vmatpush1.bf16.msra.mxu0 %v1730
  %7235 = vmatprep.subr.bf16.mxu0 %v1739
  %7236 = vmatpush1.bf16.msra.mxu0 %v1738
  %7237 = vmatprep.subr.bf16.mxu0 %v1747
  %7238 = vmatpush1.bf16.msra.mxu0 %v1746
  %7239 = vmatprep.subr.bf16.mxu0 %v1755
  %7240 = vmatpush1.bf16.msra.mxu0 %v1754
  %7241 = vmatprep.subr.bf16.mxu0 %v1763
  %7242 = vmatpush1.bf16.msra.mxu0 %v1762
  %7243 = vmatprep.subr.bf16.mxu0 %v1771
  %7244 = vmatpush1.bf16.msra.mxu0 %v1770
  %7245 = vmatprep.subr.bf16.mxu0 %v1779
  %7246 = vmatpush1.bf16.msra.mxu0 %v1778
  %7247 = vmatprep.subr.bf16.mxu0 %v1787
  %7248 = vmatpush1.bf16.msra.mxu0 %v1786
  %7249 = vmatprep.subr.bf16.mxu0 %v1795
  %7250 = vmatpush1.bf16.msra.mxu0 %v1794
  %7251 = vmatprep.subr.bf16.mxu0 %v1803
  %7252 = vmatpush1.bf16.msra.mxu0 %v1802
  %7253 = vmatprep.subr.bf16.mxu0 %v1811
  %7254 = vmatpush1.bf16.msra.mxu0 %v1810
  %7255 = vmatprep.subr.bf16.mxu0 %v1819
  %7256 = vmatpush1.bf16.msra.mxu0 %v1818
  %7257 = vmatprep.subr.bf16.mxu0 %v1827
  %7258 = vmatpush1.bf16.msra.mxu0 %v1826
  %7259 = vmatprep.subr.bf16.mxu0 %v1835
  %7260 = vmatpush1.bf16.msra.mxu0 %v1834
  %7261 = vmatprep.mubr.bf16.mxu0 %v7146
  %7262 = vmatmul.mubr.bf16.gmra.mrb[0].mxu0 %v7145
  %v7263 = vpop.f32.mrb[0].mxu0
  %v7264 = vadd.f32 0.0, %v7263
  %v7265 = vpop.f32.mrb[0].mxu0
  %v7266 = vadd.f32 0.0, %v7265
  %v7267 = vpop.f32.mrb[0].mxu0
  %v7268 = vpop.f32.mrb[0].mxu0
  %7269 = vdwg.mxu0
  %7270 = vmatprep.subr.bf16.mxu0 %v1717
  %7271 = vmatpush1.bf16.msra.mxu0 %v1716
  %7272 = vmatprep.subr.bf16.mxu0 %v1725
  %7273 = vmatpush1.bf16.msra.mxu0 %v1724
  %7274 = vmatprep.subr.bf16.mxu0 %v1733
  %7275 = vmatpush1.bf16.msra.mxu0 %v1732
  %7276 = vmatprep.subr.bf16.mxu0 %v1741
  %7277 = vmatpush1.bf16.msra.mxu0 %v1740
  %7278 = vmatprep.subr.bf16.mxu0 %v1749
  %7279 = vmatpush1.bf16.msra.mxu0 %v1748
  %7280 = vmatprep.subr.bf16.mxu0 %v1757
  %7281 = vmatpush1.bf16.msra.mxu0 %v1756
  %7282 = vmatprep.subr.bf16.mxu0 %v1765
  %7283 = vmatpush1.bf16.msra.mxu0 %v1764
  %7284 = vmatprep.subr.bf16.mxu0 %v1773
  %7285 = vmatpush1.bf16.msra.mxu0 %v1772
  %7286 = vmatprep.subr.bf16.mxu0 %v1781
  %7287 = vmatpush1.bf16.msra.mxu0 %v1780
  %7288 = vmatprep.subr.bf16.mxu0 %v1789
  %7289 = vmatpush1.bf16.msra.mxu0 %v1788
  %7290 = vmatprep.subr.bf16.mxu0 %v1797
  %7291 = vmatpush1.bf16.msra.mxu0 %v1796
  %7292 = vmatprep.subr.bf16.mxu0 %v1805
  %7293 = vmatpush1.bf16.msra.mxu0 %v1804
  %7294 = vmatprep.subr.bf16.mxu0 %v1813
  %7295 = vmatpush1.bf16.msra.mxu0 %v1812
  %7296 = vmatprep.subr.bf16.mxu0 %v1821
  %7297 = vmatpush1.bf16.msra.mxu0 %v1820
  %7298 = vmatprep.subr.bf16.mxu0 %v1829
  %7299 = vmatpush1.bf16.msra.mxu0 %v1828
  %7300 = vmatprep.subr.bf16.mxu0 %v1837
  %7301 = vmatpush1.bf16.msra.mxu0 %v1836
  %7302 = vmatprep.mubr.bf16.mxu0 %v7146
  %7303 = vmatmul.mubr.bf16.gmra.mrb[0].mxu0 %v7145
  %v7304 = vpop.f32.mrb[0].mxu0
  %v7305 = vadd.f32 0.0, %v7304
  %v7306 = vpop.f32.mrb[0].mxu0
  %v7307 = vadd.f32 0.0, %v7306
  %v7308 = vpop.f32.mrb[0].mxu0
  %v7309 = vpop.f32.mrb[0].mxu0
  %7310 = vdwg.mxu0
  %v7319 = vcombine.low %v7182, %v7184
  %v7320 = vcombine.low %v7223, %v7225
  %v7321 = vcombine.low %v7264, %v7266
  %v7322 = vcombine.low %v7305, %v7307
  %v7324 = vunpack.c.l.s4 1966171168
  %v7325 = vunpack.c.0.s8 %v7324
  %v7326 = vlaneseq
  %v7327 = vshrl.u32 %v7326, 7
  %v7328 = vsub.s32 %v7325, %v7327
  %v7329 = vrot.slane %v7319, %v7328
  %v7331 = vunpack.c.l.s4 1966171168
  %v7332 = vunpack.c.0.s8 %v7331
  %v7333 = vlaneseq
  %v7334 = vshrl.u32 %v7333, 7
  %v7335 = vsub.s32 %v7332, %v7334
  %v7336 = vrot.slane %v7320, %v7335
  %v7338 = vunpack.c.l.s4 1966171168
  %v7339 = vunpack.c.0.s8 %v7338
  %v7340 = vlaneseq
  %v7341 = vshrl.u32 %v7340, 7
  %v7342 = vsub.s32 %v7339, %v7341
  %v7343 = vrot.slane %v7321, %v7342
  %v7345 = vunpack.c.l.s4 1966171168
  %v7346 = vunpack.c.0.s8 %v7345
  %v7347 = vlaneseq
  %v7348 = vshrl.u32 %v7347, 7
  %v7349 = vsub.s32 %v7346, %v7348
  %v7350 = vrot.slane %v7322, %v7349
  %v7351 = vcombine.low %v7329, %v7336
  %v7352 = vcombine.low %v7343, %v7350
  %v7354 = vunpack.c.l.s4 1966171168
  %v7355 = vunpack.c.0.s8 %v7354
  %v7356 = vlaneseq
  %v7357 = vshrl.u32 %v7356, 7
  %v7358 = vsub.s32 %v7355, %v7357
  %v7359 = vrot.slane %v7351, %v7358
  %v7361 = vunpack.c.l.s4 1966171168
  %v7362 = vunpack.c.0.s8 %v7361
  %v7363 = vlaneseq
  %v7364 = vshrl.u32 %v7363, 7
  %v7365 = vsub.s32 %v7362, %v7364
  %v7366 = vrot.slane %v7352, %v7365
  %v7367 = vcombine.low %v7359, %v7366
  %v7369 = vadd.f32 %v417, %v7367
  %v7371 = vlaneseq
  %v7372 = vshrl.u32 %v7371, 7
  %v7373 = vsub.s32 0, %v7372
  %v7374 = vrot.slane %v6877, %v7373
  %v7375 = vlaneseq
  %v7376 = vshrl.u32 %v7375, 7
  %v7377 = vsub.s32 1, %v7376
  %v7378 = vrot.slane %v6877, %v7377
  %v7381 = vpack.c.bf16 %v7374, %v7374
  %v7382 = vpack.c.bf16 %v7378, %v7378
  %7383 = vmatprep.subr.bf16.mxu0 %v2574
  %7384 = vmatpush1.bf16.msra.mxu0 %v2573
  %7385 = vmatprep.subr.bf16.mxu0 %v2582
  %7386 = vmatpush1.bf16.msra.mxu0 %v2581
  %7387 = vmatprep.subr.bf16.mxu0 %v2590
  %7388 = vmatpush1.bf16.msra.mxu0 %v2589
  %7389 = vmatprep.subr.bf16.mxu0 %v2598
  %7390 = vmatpush1.bf16.msra.mxu0 %v2597
  %7391 = vmatprep.subr.bf16.mxu0 %v2606
  %7392 = vmatpush1.bf16.msra.mxu0 %v2605
  %7393 = vmatprep.subr.bf16.mxu0 %v2614
  %7394 = vmatpush1.bf16.msra.mxu0 %v2613
  %7395 = vmatprep.subr.bf16.mxu0 %v2622
  %7396 = vmatpush1.bf16.msra.mxu0 %v2621
  %7397 = vmatprep.subr.bf16.mxu0 %v2630
  %7398 = vmatpush1.bf16.msra.mxu0 %v2629
  %7399 = vmatprep.subr.bf16.mxu0 %v2638
  %7400 = vmatpush1.bf16.msra.mxu0 %v2637
  %7401 = vmatprep.subr.bf16.mxu0 %v2646
  %7402 = vmatpush1.bf16.msra.mxu0 %v2645
  %7403 = vmatprep.subr.bf16.mxu0 %v2654
  %7404 = vmatpush1.bf16.msra.mxu0 %v2653
  %7405 = vmatprep.subr.bf16.mxu0 %v2662
  %7406 = vmatpush1.bf16.msra.mxu0 %v2661
  %7407 = vmatprep.subr.bf16.mxu0 %v2670
  %7408 = vmatpush1.bf16.msra.mxu0 %v2669
  %7409 = vmatprep.subr.bf16.mxu0 %v2678
  %7410 = vmatpush1.bf16.msra.mxu0 %v2677
  %7411 = vmatprep.subr.bf16.mxu0 %v2686
  %7412 = vmatpush1.bf16.msra.mxu0 %v2685
  %7413 = vmatprep.subr.bf16.mxu0 %v2694
  %7414 = vmatpush1.bf16.msra.mxu0 %v2693
  %7415 = vmatprep.mubr.bf16.mxu0 %v7382
  %7416 = vmatmul.mubr.bf16.gmra.mrb[0].mxu0 %v7381
  %v7417 = vpop.f32.mrb[0].mxu0
  %v7418 = vadd.f32 0.0, %v7417
  %v7419 = vpop.f32.mrb[0].mxu0
  %v7420 = vadd.f32 0.0, %v7419
  %v7421 = vpop.f32.mrb[0].mxu0
  %v7422 = vpop.f32.mrb[0].mxu0
  %7423 = vdwg.mxu0
  %7424 = vmatprep.subr.bf16.mxu0 %v2576
  %7425 = vmatpush1.bf16.msra.mxu0 %v2575
  %7426 = vmatprep.subr.bf16.mxu0 %v2584
  %7427 = vmatpush1.bf16.msra.mxu0 %v2583
  %7428 = vmatprep.subr.bf16.mxu0 %v2592
  %7429 = vmatpush1.bf16.msra.mxu0 %v2591
  %7430 = vmatprep.subr.bf16.mxu0 %v2600
  %7431 = vmatpush1.bf16.msra.mxu0 %v2599
  %7432 = vmatprep.subr.bf16.mxu0 %v2608
  %7433 = vmatpush1.bf16.msra.mxu0 %v2607
  %7434 = vmatprep.subr.bf16.mxu0 %v2616
  %7435 = vmatpush1.bf16.msra.mxu0 %v2615
  %7436 = vmatprep.subr.bf16.mxu0 %v2624
  %7437 = vmatpush1.bf16.msra.mxu0 %v2623
  %7438 = vmatprep.subr.bf16.mxu0 %v2632
  %7439 = vmatpush1.bf16.msra.mxu0 %v2631
  %7440 = vmatprep.subr.bf16.mxu0 %v2640
  %7441 = vmatpush1.bf16.msra.mxu0 %v2639
  %7442 = vmatprep.subr.bf16.mxu0 %v2648
  %7443 = vmatpush1.bf16.msra.mxu0 %v2647
  %7444 = vmatprep.subr.bf16.mxu0 %v2656
  %7445 = vmatpush1.bf16.msra.mxu0 %v2655
  %7446 = vmatprep.subr.bf16.mxu0 %v2664
  %7447 = vmatpush1.bf16.msra.mxu0 %v2663
  %7448 = vmatprep.subr.bf16.mxu0 %v2672
  %7449 = vmatpush1.bf16.msra.mxu0 %v2671
  %7450 = vmatprep.subr.bf16.mxu0 %v2680
  %7451 = vmatpush1.bf16.msra.mxu0 %v2679
  %7452 = vmatprep.subr.bf16.mxu0 %v2688
  %7453 = vmatpush1.bf16.msra.mxu0 %v2687
  %7454 = vmatprep.subr.bf16.mxu0 %v2696
  %7455 = vmatpush1.bf16.msra.mxu0 %v2695
  %7456 = vmatprep.mubr.bf16.mxu0 %v7382
  %7457 = vmatmul.mubr.bf16.gmra.mrb[0].mxu0 %v7381
  %v7458 = vpop.f32.mrb[0].mxu0
  %v7459 = vadd.f32 0.0, %v7458
  %v7460 = vpop.f32.mrb[0].mxu0
  %v7461 = vadd.f32 0.0, %v7460
  %v7462 = vpop.f32.mrb[0].mxu0
  %v7463 = vpop.f32.mrb[0].mxu0
  %7464 = vdwg.mxu0
  %7465 = vmatprep.subr.bf16.mxu0 %v2578
  %7466 = vmatpush1.bf16.msra.mxu0 %v2577
  %7467 = vmatprep.subr.bf16.mxu0 %v2586
  %7468 = vmatpush1.bf16.msra.mxu0 %v2585
  %7469 = vmatprep.subr.bf16.mxu0 %v2594
  %7470 = vmatpush1.bf16.msra.mxu0 %v2593
  %7471 = vmatprep.subr.bf16.mxu0 %v2602
  %7472 = vmatpush1.bf16.msra.mxu0 %v2601
  %7473 = vmatprep.subr.bf16.mxu0 %v2610
  %7474 = vmatpush1.bf16.msra.mxu0 %v2609
  %7475 = vmatprep.subr.bf16.mxu0 %v2618
  %7476 = vmatpush1.bf16.msra.mxu0 %v2617
  %7477 = vmatprep.subr.bf16.mxu0 %v2626
  %7478 = vmatpush1.bf16.msra.mxu0 %v2625
  %7479 = vmatprep.subr.bf16.mxu0 %v2634
  %7480 = vmatpush1.bf16.msra.mxu0 %v2633
  %7481 = vmatprep.subr.bf16.mxu0 %v2642
  %7482 = vmatpush1.bf16.msra.mxu0 %v2641
  %7483 = vmatprep.subr.bf16.mxu0 %v2650
  %7484 = vmatpush1.bf16.msra.mxu0 %v2649
  %7485 = vmatprep.subr.bf16.mxu0 %v2658
  %7486 = vmatpush1.bf16.msra.mxu0 %v2657
  %7487 = vmatprep.subr.bf16.mxu0 %v2666
  %7488 = vmatpush1.bf16.msra.mxu0 %v2665
  %7489 = vmatprep.subr.bf16.mxu0 %v2674
  %7490 = vmatpush1.bf16.msra.mxu0 %v2673
  %7491 = vmatprep.subr.bf16.mxu0 %v2682
  %7492 = vmatpush1.bf16.msra.mxu0 %v2681
  %7493 = vmatprep.subr.bf16.mxu0 %v2690
  %7494 = vmatpush1.bf16.msra.mxu0 %v2689
  %7495 = vmatprep.subr.bf16.mxu0 %v2698
  %7496 = vmatpush1.bf16.msra.mxu0 %v2697
  %7497 = vmatprep.mubr.bf16.mxu0 %v7382
  %7498 = vmatmul.mubr.bf16.gmra.mrb[0].mxu0 %v7381
  %v7499 = vpop.f32.mrb[0].mxu0
  %v7500 = vadd.f32 0.0, %v7499
  %v7501 = vpop.f32.mrb[0].mxu0
  %v7502 = vadd.f32 0.0, %v7501
  %v7503 = vpop.f32.mrb[0].mxu0
  %v7504 = vpop.f32.mrb[0].mxu0
  %7505 = vdwg.mxu0
  %7506 = vmatprep.subr.bf16.mxu0 %v2580
  %7507 = vmatpush1.bf16.msra.mxu0 %v2579
  %7508 = vmatprep.subr.bf16.mxu0 %v2588
  %7509 = vmatpush1.bf16.msra.mxu0 %v2587
  %7510 = vmatprep.subr.bf16.mxu0 %v2596
  %7511 = vmatpush1.bf16.msra.mxu0 %v2595
  %7512 = vmatprep.subr.bf16.mxu0 %v2604
  %7513 = vmatpush1.bf16.msra.mxu0 %v2603
  %7514 = vmatprep.subr.bf16.mxu0 %v2612
  %7515 = vmatpush1.bf16.msra.mxu0 %v2611
  %7516 = vmatprep.subr.bf16.mxu0 %v2620
  %7517 = vmatpush1.bf16.msra.mxu0 %v2619
  %7518 = vmatprep.subr.bf16.mxu0 %v2628
  %7519 = vmatpush1.bf16.msra.mxu0 %v2627
  %7520 = vmatprep.subr.bf16.mxu0 %v2636
  %7521 = vmatpush1.bf16.msra.mxu0 %v2635
  %7522 = vmatprep.subr.bf16.mxu0 %v2644
  %7523 = vmatpush1.bf16.msra.mxu0 %v2643
  %7524 = vmatprep.subr.bf16.mxu0 %v2652
  %7525 = vmatpush1.bf16.msra.mxu0 %v2651
  %7526 = vmatprep.subr.bf16.mxu0 %v2660
  %7527 = vmatpush1.bf16.msra.mxu0 %v2659
  %7528 = vmatprep.subr.bf16.mxu0 %v2668
  %7529 = vmatpush1.bf16.msra.mxu0 %v2667
  %7530 = vmatprep.subr.bf16.mxu0 %v2676
  %7531 = vmatpush1.bf16.msra.mxu0 %v2675
  %7532 = vmatprep.subr.bf16.mxu0 %v2684
  %7533 = vmatpush1.bf16.msra.mxu0 %v2683
  %7534 = vmatprep.subr.bf16.mxu0 %v2692
  %7535 = vmatpush1.bf16.msra.mxu0 %v2691
  %7536 = vmatprep.subr.bf16.mxu0 %v2700
  %7537 = vmatpush1.bf16.msra.mxu0 %v2699
  %7538 = vmatprep.mubr.bf16.mxu0 %v7382
  %7539 = vmatmul.mubr.bf16.gmra.mrb[0].mxu0 %v7381
  %v7540 = vpop.f32.mrb[0].mxu0
  %v7541 = vadd.f32 0.0, %v7540
  %v7542 = vpop.f32.mrb[0].mxu0
  %v7543 = vadd.f32 0.0, %v7542
  %v7544 = vpop.f32.mrb[0].mxu0
  %v7545 = vpop.f32.mrb[0].mxu0
  %7546 = vdwg.mxu0
  %v7555 = vcombine.low %v7418, %v7420
  %v7556 = vcombine.low %v7459, %v7461
  %v7557 = vcombine.low %v7500, %v7502
  %v7558 = vcombine.low %v7541, %v7543
  %v7560 = vunpack.c.l.s4 1966171168
  %v7561 = vunpack.c.0.s8 %v7560
  %v7562 = vlaneseq
  %v7563 = vshrl.u32 %v7562, 7
  %v7564 = vsub.s32 %v7561, %v7563
  %v7565 = vrot.slane %v7555, %v7564
  %v7567 = vunpack.c.l.s4 1966171168
  %v7568 = vunpack.c.0.s8 %v7567
  %v7569 = vlaneseq
  %v7570 = vshrl.u32 %v7569, 7
  %v7571 = vsub.s32 %v7568, %v7570
  %v7572 = vrot.slane %v7556, %v7571
  %v7574 = vunpack.c.l.s4 1966171168
  %v7575 = vunpack.c.0.s8 %v7574
  %v7576 = vlaneseq
  %v7577 = vshrl.u32 %v7576, 7
  %v7578 = vsub.s32 %v7575, %v7577
  %v7579 = vrot.slane %v7557, %v7578
  %v7581 = vunpack.c.l.s4 1966171168
  %v7582 = vunpack.c.0.s8 %v7581
  %v7583 = vlaneseq
  %v7584 = vshrl.u32 %v7583, 7
  %v7585 = vsub.s32 %v7582, %v7584
  %v7586 = vrot.slane %v7558, %v7585
  %v7587 = vcombine.low %v7565, %v7572
  %v7588 = vcombine.low %v7579, %v7586
  %v7590 = vunpack.c.l.s4 1966171168
  %v7591 = vunpack.c.0.s8 %v7590
  %v7592 = vlaneseq
  %v7593 = vshrl.u32 %v7592, 7
  %v7594 = vsub.s32 %v7591, %v7593
  %v7595 = vrot.slane %v7587, %v7594
  %v7597 = vunpack.c.l.s4 1966171168
  %v7598 = vunpack.c.0.s8 %v7597
  %v7599 = vlaneseq
  %v7600 = vshrl.u32 %v7599, 7
  %v7601 = vsub.s32 %v7598, %v7600
  %v7602 = vrot.slane %v7588, %v7601
  %v7603 = vcombine.low %v7595, %v7602
  %v7605 = vadd.f32 %v7369, %v7603
  %v7606 = vxor.u32 %v7605, 2147483648
  %v7607 = vmul.f32 %v7606, 1.442695
  %v7608 = vpow.pop %v7607
  %v7609 = vadd.f32 %v7608, 1.0
  %v7610 = vrcp.pop %v7609
  %v7611 = vmul.f32 1.0, %v7610
  %v7613 = vrot.slane %v7605, 2
  %v7615 = vxor.u32 %v7613, 2147483648
  %v7616 = vmul.f32 %v7615, 1.442695
  %v7617 = vpow.pop %v7616
  %v7618 = vadd.f32 %v7617, 1.0
  %v7619 = vrcp.pop %v7618
  %v7620 = vmul.f32 1.0, %v7619
  %v7621 = vrot.slane %v7605, 4
  %v7623 = vxor.u32 %v7621, 2147483648
  %v7624 = vmul.f32 %v7623, 1.442695
  %v7625 = vpow.pop %v7624
  %v7626 = vadd.f32 %v7625, 1.0
  %v7627 = vrcp.pop %v7626
  %v7628 = vmul.f32 1.0, %v7627
  %v7629 = vrot.slane %v7605, 6
  %v7631 = vtanh.pop %v7629
  %v7632 = vmul.f32 %v7620, %v6875
  %v7633 = vmul.f32 %v7611, %v7631
  %v7634 = vadd.f32 %v7632, %v7633
  %v7635 = vtanh.pop %v7634
  %v7636 = vmul.f32 %v7628, %v7635
  %s7637 = scalar_lea.vmem %s0, 56
  %v7638 = vld [vmem:[%s7637] sm:$0xff]
  %7639 = vmatprep.subr.bf16.mxu0 %v804
  %7640 = vmatpush1.bf16.msra.mxu0 %v803
  %7641 = vmatprep.subr.bf16.mxu0 %v812
  %7642 = vmatpush1.bf16.msra.mxu0 %v811
  %7643 = vmatprep.subr.bf16.mxu0 %v820
  %7644 = vmatpush1.bf16.msra.mxu0 %v819
  %7645 = vmatprep.subr.bf16.mxu0 %v828
  %7646 = vmatpush1.bf16.msra.mxu0 %v827
  %7647 = vmatprep.subr.bf16.mxu0 %v836
  %7648 = vmatpush1.bf16.msra.mxu0 %v835
  %7649 = vmatprep.subr.bf16.mxu0 %v844
  %7650 = vmatpush1.bf16.msra.mxu0 %v843
  %7651 = vmatprep.subr.bf16.mxu0 %v852
  %7652 = vmatpush1.bf16.msra.mxu0 %v851
  %7653 = vmatprep.subr.bf16.mxu0 %v860
  %7654 = vmatpush1.bf16.msra.mxu0 %v859
  %7655 = vmatprep.subr.bf16.mxu0 %v868
  %7656 = vmatpush1.bf16.msra.mxu0 %v867
  %7657 = vmatprep.subr.bf16.mxu0 %v876
  %7658 = vmatpush1.bf16.msra.mxu0 %v875
  %7659 = vmatprep.subr.bf16.mxu0 %v884
  %7660 = vmatpush1.bf16.msra.mxu0 %v883
  %7661 = vmatprep.subr.bf16.mxu0 %v892
  %7662 = vmatpush1.bf16.msra.mxu0 %v891
  %7663 = vmatprep.subr.bf16.mxu0 %v900
  %7664 = vmatpush1.bf16.msra.mxu0 %v899
  %7665 = vmatprep.subr.bf16.mxu0 %v908
  %7666 = vmatpush1.bf16.msra.mxu0 %v907
  %7667 = vmatprep.subr.bf16.mxu0 %v916
  %7668 = vmatpush1.bf16.msra.mxu0 %v915
  %7669 = vmatprep.subr.bf16.mxu0 %v924
  %7670 = vmatpush1.bf16.msra.mxu0 %v923
  %7671 = vmatprep.mubr.bf16.mxu0 %v7146
  %7672 = vmatmul.mubr.bf16.gmra.mrb[0].mxu0 %v7145
  %v7673 = vpop.f32.mrb[0].mxu0
  %v7674 = vadd.f32 0.0, %v7673
  %v7675 = vpop.f32.mrb[0].mxu0
  %v7676 = vadd.f32 0.0, %v7675
  %v7677 = vpop.f32.mrb[0].mxu0
  %v7678 = vpop.f32.mrb[0].mxu0
  %7679 = vdwg.mxu0
  %7680 = vmatprep.subr.bf16.mxu0 %v806
  %7681 = vmatpush1.bf16.msra.mxu0 %v805
  %7682 = vmatprep.subr.bf16.mxu0 %v814
  %7683 = vmatpush1.bf16.msra.mxu0 %v813
  %7684 = vmatprep.subr.bf16.mxu0 %v822
  %7685 = vmatpush1.bf16.msra.mxu0 %v821
  %7686 = vmatprep.subr.bf16.mxu0 %v830
  %7687 = vmatpush1.bf16.msra.mxu0 %v829
  %7688 = vmatprep.subr.bf16.mxu0 %v838
  %7689 = vmatpush1.bf16.msra.mxu0 %v837
  %7690 = vmatprep.subr.bf16.mxu0 %v846
  %7691 = vmatpush1.bf16.msra.mxu0 %v845
  %7692 = vmatprep.subr.bf16.mxu0 %v854
  %7693 = vmatpush1.bf16.msra.mxu0 %v853
  %7694 = vmatprep.subr.bf16.mxu0 %v862
  %7695 = vmatpush1.bf16.msra.mxu0 %v861
  %7696 = vmatprep.subr.bf16.mxu0 %v870
  %7697 = vmatpush1.bf16.msra.mxu0 %v869
  %7698 = vmatprep.subr.bf16.mxu0 %v878
  %7699 = vmatpush1.bf16.msra.mxu0 %v877
  %7700 = vmatprep.subr.bf16.mxu0 %v886
  %7701 = vmatpush1.bf16.msra.mxu0 %v885
  %7702 = vmatprep.subr.bf16.mxu0 %v894
  %7703 = vmatpush1.bf16.msra.mxu0 %v893
  %7704 = vmatprep.subr.bf16.mxu0 %v902
  %7705 = vmatpush1.bf16.msra.mxu0 %v901
  %7706 = vmatprep.subr.bf16.mxu0 %v910
  %7707 = vmatpush1.bf16.msra.mxu0 %v909
  %7708 = vmatprep.subr.bf16.mxu0 %v918
  %7709 = vmatpush1.bf16.msra.mxu0 %v917
  %7710 = vmatprep.subr.bf16.mxu0 %v926
  %7711 = vmatpush1.bf16.msra.mxu0 %v925
  %7712 = vmatprep.mubr.bf16.mxu0 %v7146
  %7713 = vmatmul.mubr.bf16.gmra.mrb[0].mxu0 %v7145
  %v7714 = vpop.f32.mrb[0].mxu0
  %v7715 = vadd.f32 0.0, %v7714
  %v7716 = vpop.f32.mrb[0].mxu0
  %v7717 = vadd.f32 0.0, %v7716
  %v7718 = vpop.f32.mrb[0].mxu0
  %v7719 = vpop.f32.mrb[0].mxu0
  %7720 = vdwg.mxu0
  %7721 = vmatprep.subr.bf16.mxu0 %v808
  %7722 = vmatpush1.bf16.msra.mxu0 %v807
  %7723 = vmatprep.subr.bf16.mxu0 %v816
  %7724 = vmatpush1.bf16.msra.mxu0 %v815
  %7725 = vmatprep.subr.bf16.mxu0 %v824
  %7726 = vmatpush1.bf16.msra.mxu0 %v823
  %7727 = vmatprep.subr.bf16.mxu0 %v832
  %7728 = vmatpush1.bf16.msra.mxu0 %v831
  %7729 = vmatprep.subr.bf16.mxu0 %v840
  %7730 = vmatpush1.bf16.msra.mxu0 %v839
  %7731 = vmatprep.subr.bf16.mxu0 %v848
  %7732 = vmatpush1.bf16.msra.mxu0 %v847
  %7733 = vmatprep.subr.bf16.mxu0 %v856
  %7734 = vmatpush1.bf16.msra.mxu0 %v855
  %7735 = vmatprep.subr.bf16.mxu0 %v864
  %7736 = vmatpush1.bf16.msra.mxu0 %v863
  %7737 = vmatprep.subr.bf16.mxu0 %v872
  %7738 = vmatpush1.bf16.msra.mxu0 %v871
  %7739 = vmatprep.subr.bf16.mxu0 %v880
  %7740 = vmatpush1.bf16.msra.mxu0 %v879
  %7741 = vmatprep.subr.bf16.mxu0 %v888
  %7742 = vmatpush1.bf16.msra.mxu0 %v887
  %7743 = vmatprep.subr.bf16.mxu0 %v896
  %7744 = vmatpush1.bf16.msra.mxu0 %v895
  %7745 = vmatprep.subr.bf16.mxu0 %v904
  %7746 = vmatpush1.bf16.msra.mxu0 %v903
  %7747 = vmatprep.subr.bf16.mxu0 %v912
  %7748 = vmatpush1.bf16.msra.mxu0 %v911
  %7749 = vmatprep.subr.bf16.mxu0 %v920
  %7750 = vmatpush1.bf16.msra.mxu0 %v919
  %7751 = vmatprep.subr.bf16.mxu0 %v928
  %7752 = vmatpush1.bf16.msra.mxu0 %v927
  %7753 = vmatprep.mubr.bf16.mxu0 %v7146
  %7754 = vmatmul.mubr.bf16.gmra.mrb[0].mxu0 %v7145
  %v7755 = vpop.f32.mrb[0].mxu0
  %v7756 = vadd.f32 0.0, %v7755
  %v7757 = vpop.f32.mrb[0].mxu0
  %v7758 = vadd.f32 0.0, %v7757
  %v7759 = vpop.f32.mrb[0].mxu0
  %v7760 = vpop.f32.mrb[0].mxu0
  %7761 = vdwg.mxu0
  %7762 = vmatprep.subr.bf16.mxu0 %v810
  %7763 = vmatpush1.bf16.msra.mxu0 %v809
  %7764 = vmatprep.subr.bf16.mxu0 %v818
  %7765 = vmatpush1.bf16.msra.mxu0 %v817
  %7766 = vmatprep.subr.bf16.mxu0 %v826
  %7767 = vmatpush1.bf16.msra.mxu0 %v825
  %7768 = vmatprep.subr.bf16.mxu0 %v834
  %7769 = vmatpush1.bf16.msra.mxu0 %v833
  %7770 = vmatprep.subr.bf16.mxu0 %v842
  %7771 = vmatpush1.bf16.msra.mxu0 %v841
  %7772 = vmatprep.subr.bf16.mxu0 %v850
  %7773 = vmatpush1.bf16.msra.mxu0 %v849
  %7774 = vmatprep.subr.bf16.mxu0 %v858
  %7775 = vmatpush1.bf16.msra.mxu0 %v857
  %7776 = vmatprep.subr.bf16.mxu0 %v866
  %7777 = vmatpush1.bf16.msra.mxu0 %v865
  %7778 = vmatprep.subr.bf16.mxu0 %v874
  %7779 = vmatpush1.bf16.msra.mxu0 %v873
  %7780 = vmatprep.subr.bf16.mxu0 %v882
  %7781 = vmatpush1.bf16.msra.mxu0 %v881
  %7782 = vmatprep.subr.bf16.mxu0 %v890
  %7783 = vmatpush1.bf16.msra.mxu0 %v889
  %7784 = vmatprep.subr.bf16.mxu0 %v898
  %7785 = vmatpush1.bf16.msra.mxu0 %v897
  %7786 = vmatprep.subr.bf16.mxu0 %v906
  %7787 = vmatpush1.bf16.msra.mxu0 %v905
  %7788 = vmatprep.subr.bf16.mxu0 %v914
  %7789 = vmatpush1.bf16.msra.mxu0 %v913
  %7790 = vmatprep.subr.bf16.mxu0 %v922
  %7791 = vmatpush1.bf16.msra.mxu0 %v921
  %7792 = vmatprep.subr.bf16.mxu0 %v930
  %7793 = vmatpush1.bf16.msra.mxu0 %v929
  %7794 = vmatprep.mubr.bf16.mxu0 %v7146
  %7795 = vmatmul.mubr.bf16.gmra.mrb[0].mxu0 %v7145
  %v7796 = vpop.f32.mrb[0].mxu0
  %v7797 = vadd.f32 0.0, %v7796
  %v7798 = vpop.f32.mrb[0].mxu0
  %v7799 = vadd.f32 0.0, %v7798
  %v7800 = vpop.f32.mrb[0].mxu0
  %v7801 = vpop.f32.mrb[0].mxu0
  %7802 = vdwg.mxu0
  %v7811 = vcombine.low %v7674, %v7676
  %v7812 = vcombine.low %v7715, %v7717
  %v7813 = vcombine.low %v7756, %v7758
  %v7814 = vcombine.low %v7797, %v7799
  %v7816 = vunpack.c.l.s4 1966171168
  %v7817 = vunpack.c.0.s8 %v7816
  %v7818 = vlaneseq
  %v7819 = vshrl.u32 %v7818, 7
  %v7820 = vsub.s32 %v7817, %v7819
  %v7821 = vrot.slane %v7811, %v7820
  %v7823 = vunpack.c.l.s4 1966171168
  %v7824 = vunpack.c.0.s8 %v7823
  %v7825 = vlaneseq
  %v7826 = vshrl.u32 %v7825, 7
  %v7827 = vsub.s32 %v7824, %v7826
  %v7828 = vrot.slane %v7812, %v7827
  %v7830 = vunpack.c.l.s4 1966171168
  %v7831 = vunpack.c.0.s8 %v7830
  %v7832 = vlaneseq
  %v7833 = vshrl.u32 %v7832, 7
  %v7834 = vsub.s32 %v7831, %v7833
  %v7835 = vrot.slane %v7813, %v7834
  %v7837 = vunpack.c.l.s4 1966171168
  %v7838 = vunpack.c.0.s8 %v7837
  %v7839 = vlaneseq
  %v7840 = vshrl.u32 %v7839, 7
  %v7841 = vsub.s32 %v7838, %v7840
  %v7842 = vrot.slane %v7814, %v7841
  %v7843 = vcombine.low %v7821, %v7828
  %v7844 = vcombine.low %v7835, %v7842
  %v7846 = vunpack.c.l.s4 1966171168
  %v7847 = vunpack.c.0.s8 %v7846
  %v7848 = vlaneseq
  %v7849 = vshrl.u32 %v7848, 7
  %v7850 = vsub.s32 %v7847, %v7849
  %v7851 = vrot.slane %v7843, %v7850
  %v7853 = vunpack.c.l.s4 1966171168
  %v7854 = vunpack.c.0.s8 %v7853
  %v7855 = vlaneseq
  %v7856 = vshrl.u32 %v7855, 7
  %v7857 = vsub.s32 %v7854, %v7856
  %v7858 = vrot.slane %v7844, %v7857
  %v7859 = vcombine.low %v7851, %v7858
  %v7861 = vadd.f32 %v7638, %v7859
  %v7862 = vxor.u32 %v7861, 2147483648
  %v7863 = vmul.f32 %v7862, 1.442695
  %v7864 = vpow.pop %v7863
  %v7865 = vadd.f32 %v7864, 1.0
  %v7866 = vrcp.pop %v7865
  %v7867 = vmul.f32 1.0, %v7866
  %v7869 = vrot.slane %v7861, 2
  %v7871 = vxor.u32 %v7869, 2147483648
  %v7872 = vmul.f32 %v7871, 1.442695
  %v7873 = vpow.pop %v7872
  %v7874 = vadd.f32 %v7873, 1.0
  %v7875 = vrcp.pop %v7874
  %v7876 = vmul.f32 1.0, %v7875
  %v7877 = vrot.slane %v7861, 4
  %v7879 = vxor.u32 %v7877, 2147483648
  %v7880 = vmul.f32 %v7879, 1.442695
  %v7881 = vpow.pop %v7880
  %v7882 = vadd.f32 %v7881, 1.0
  %v7883 = vrcp.pop %v7882
  %v7884 = vmul.f32 1.0, %v7883
  %v7885 = vrot.slane %v7861, 6
  %v7887 = vtanh.pop %v7885
  %v7888 = vmul.f32 %v7876, %v7131
  %v7889 = vmul.f32 %v7867, %v7887
  %v7890 = vadd.f32 %v7888, %v7889
  %v7891 = vtanh.pop %v7890
  %v7892 = vmul.f32 %v7884, %v7891
  %v7894 = vlaneseq
  %v7895 = vshrl.u32 %v7894, 7
  %v7896 = vsub.s32 0, %v7895
  %v7897 = vrot.slane %v7892, %v7896
  %v7898 = vlaneseq
  %v7899 = vshrl.u32 %v7898, 7
  %v7900 = vsub.s32 1, %v7899
  %v7901 = vrot.slane %v7892, %v7900
  %v7904 = vpack.c.bf16 %v7897, %v7897
  %v7905 = vpack.c.bf16 %v7901, %v7901
  %7906 = vmatprep.subr.bf16.mxu0 %v1711
  %7907 = vmatpush1.bf16.msra.mxu0 %v1710
  %7908 = vmatprep.subr.bf16.mxu0 %v1719
  %7909 = vmatpush1.bf16.msra.mxu0 %v1718
  %7910 = vmatprep.subr.bf16.mxu0 %v1727
  %7911 = vmatpush1.bf16.msra.mxu0 %v1726
  %7912 = vmatprep.subr.bf16.mxu0 %v1735
  %7913 = vmatpush1.bf16.msra.mxu0 %v1734
  %7914 = vmatprep.subr.bf16.mxu0 %v1743
  %7915 = vmatpush1.bf16.msra.mxu0 %v1742
  %7916 = vmatprep.subr.bf16.mxu0 %v1751
  %7917 = vmatpush1.bf16.msra.mxu0 %v1750
  %7918 = vmatprep.subr.bf16.mxu0 %v1759
  %7919 = vmatpush1.bf16.msra.mxu0 %v1758
  %7920 = vmatprep.subr.bf16.mxu0 %v1767
  %7921 = vmatpush1.bf16.msra.mxu0 %v1766
  %7922 = vmatprep.subr.bf16.mxu0 %v1775
  %7923 = vmatpush1.bf16.msra.mxu0 %v1774
  %7924 = vmatprep.subr.bf16.mxu0 %v1783
  %7925 = vmatpush1.bf16.msra.mxu0 %v1782
  %7926 = vmatprep.subr.bf16.mxu0 %v1791
  %7927 = vmatpush1.bf16.msra.mxu0 %v1790
  %7928 = vmatprep.subr.bf16.mxu0 %v1799
  %7929 = vmatpush1.bf16.msra.mxu0 %v1798
  %7930 = vmatprep.subr.bf16.mxu0 %v1807
  %7931 = vmatpush1.bf16.msra.mxu0 %v1806
  %7932 = vmatprep.subr.bf16.mxu0 %v1815
  %7933 = vmatpush1.bf16.msra.mxu0 %v1814
  %7934 = vmatprep.subr.bf16.mxu0 %v1823
  %7935 = vmatpush1.bf16.msra.mxu0 %v1822
  %7936 = vmatprep.subr.bf16.mxu0 %v1831
  %7937 = vmatpush1.bf16.msra.mxu0 %v1830
  %7938 = vmatprep.mubr.bf16.mxu0 %v7905
  %7939 = vmatmul.mubr.bf16.gmra.mrb[0].mxu0 %v7904
  %v7940 = vpop.f32.mrb[0].mxu0
  %v7941 = vadd.f32 0.0, %v7940
  %v7942 = vpop.f32.mrb[0].mxu0
  %v7943 = vadd.f32 0.0, %v7942
  %v7944 = vpop.f32.mrb[0].mxu0
  %v7945 = vpop.f32.mrb[0].mxu0
  %7946 = vdwg.mxu0
  %7947 = vmatprep.subr.bf16.mxu0 %v1713
  %7948 = vmatpush1.bf16.msra.mxu0 %v1712
  %7949 = vmatprep.subr.bf16.mxu0 %v1721
  %7950 = vmatpush1.bf16.msra.mxu0 %v1720
  %7951 = vmatprep.subr.bf16.mxu0 %v1729
  %7952 = vmatpush1.bf16.msra.mxu0 %v1728
  %7953 = vmatprep.subr.bf16.mxu0 %v1737
  %7954 = vmatpush1.bf16.msra.mxu0 %v1736
  %7955 = vmatprep.subr.bf16.mxu0 %v1745
  %7956 = vmatpush1.bf16.msra.mxu0 %v1744
  %7957 = vmatprep.subr.bf16.mxu0 %v1753
  %7958 = vmatpush1.bf16.msra.mxu0 %v1752
  %7959 = vmatprep.subr.bf16.mxu0 %v1761
  %7960 = vmatpush1.bf16.msra.mxu0 %v1760
  %7961 = vmatprep.subr.bf16.mxu0 %v1769
  %7962 = vmatpush1.bf16.msra.mxu0 %v1768
  %7963 = vmatprep.subr.bf16.mxu0 %v1777
  %7964 = vmatpush1.bf16.msra.mxu0 %v1776
  %7965 = vmatprep.subr.bf16.mxu0 %v1785
  %7966 = vmatpush1.bf16.msra.mxu0 %v1784
  %7967 = vmatprep.subr.bf16.mxu0 %v1793
  %7968 = vmatpush1.bf16.msra.mxu0 %v1792
  %7969 = vmatprep.subr.bf16.mxu0 %v1801
  %7970 = vmatpush1.bf16.msra.mxu0 %v1800
  %7971 = vmatprep.subr.bf16.mxu0 %v1809
  %7972 = vmatpush1.bf16.msra.mxu0 %v1808
  %7973 = vmatprep.subr.bf16.mxu0 %v1817
  %7974 = vmatpush1.bf16.msra.mxu0 %v1816
  %7975 = vmatprep.subr.bf16.mxu0 %v1825
  %7976 = vmatpush1.bf16.msra.mxu0 %v1824
  %7977 = vmatprep.subr.bf16.mxu0 %v1833
  %7978 = vmatpush1.bf16.msra.mxu0 %v1832
  %7979 = vmatprep.mubr.bf16.mxu0 %v7905
  %7980 = vmatmul.mubr.bf16.gmra.mrb[0].mxu0 %v7904
  %v7981 = vpop.f32.mrb[0].mxu0
  %v7982 = vadd.f32 0.0, %v7981
  %v7983 = vpop.f32.mrb[0].mxu0
  %v7984 = vadd.f32 0.0, %v7983
  %v7985 = vpop.f32.mrb[0].mxu0
  %v7986 = vpop.f32.mrb[0].mxu0
  %7987 = vdwg.mxu0
  %7988 = vmatprep.subr.bf16.mxu0 %v1715
  %7989 = vmatpush1.bf16.msra.mxu0 %v1714
  %7990 = vmatprep.subr.bf16.mxu0 %v1723
  %7991 = vmatpush1.bf16.msra.mxu0 %v1722
  %7992 = vmatprep.subr.bf16.mxu0 %v1731
  %7993 = vmatpush1.bf16.msra.mxu0 %v1730
  %7994 = vmatprep.subr.bf16.mxu0 %v1739
  %7995 = vmatpush1.bf16.msra.mxu0 %v1738
  %7996 = vmatprep.subr.bf16.mxu0 %v1747
  %7997 = vmatpush1.bf16.msra.mxu0 %v1746
  %7998 = vmatprep.subr.bf16.mxu0 %v1755
  %7999 = vmatpush1.bf16.msra.mxu0 %v1754
  %8000 = vmatprep.subr.bf16.mxu0 %v1763
  %8001 = vmatpush1.bf16.msra.mxu0 %v1762
  %8002 = vmatprep.subr.bf16.mxu0 %v1771
  %8003 = vmatpush1.bf16.msra.mxu0 %v1770
  %8004 = vmatprep.subr.bf16.mxu0 %v1779
  %8005 = vmatpush1.bf16.msra.mxu0 %v1778
  %8006 = vmatprep.subr.bf16.mxu0 %v1787
  %8007 = vmatpush1.bf16.msra.mxu0 %v1786
  %8008 = vmatprep.subr.bf16.mxu0 %v1795
  %8009 = vmatpush1.bf16.msra.mxu0 %v1794
  %8010 = vmatprep.subr.bf16.mxu0 %v1803
  %8011 = vmatpush1.bf16.msra.mxu0 %v1802
  %8012 = vmatprep.subr.bf16.mxu0 %v1811
  %8013 = vmatpush1.bf16.msra.mxu0 %v1810
  %8014 = vmatprep.subr.bf16.mxu0 %v1819
  %8015 = vmatpush1.bf16.msra.mxu0 %v1818
  %8016 = vmatprep.subr.bf16.mxu0 %v1827
  %8017 = vmatpush1.bf16.msra.mxu0 %v1826
  %8018 = vmatprep.subr.bf16.mxu0 %v1835
  %8019 = vmatpush1.bf16.msra.mxu0 %v1834
  %8020 = vmatprep.mubr.bf16.mxu0 %v7905
  %8021 = vmatmul.mubr.bf16.gmra.mrb[0].mxu0 %v7904
  %v8022 = vpop.f32.mrb[0].mxu0
  %v8023 = vadd.f32 0.0, %v8022
  %v8024 = vpop.f32.mrb[0].mxu0
  %v8025 = vadd.f32 0.0, %v8024
  %v8026 = vpop.f32.mrb[0].mxu0
  %v8027 = vpop.f32.mrb[0].mxu0
  %8028 = vdwg.mxu0
  %8029 = vmatprep.subr.bf16.mxu0 %v1717
  %8030 = vmatpush1.bf16.msra.mxu0 %v1716
  %8031 = vmatprep.subr.bf16.mxu0 %v1725
  %8032 = vmatpush1.bf16.msra.mxu0 %v1724
  %8033 = vmatprep.subr.bf16.mxu0 %v1733
  %8034 = vmatpush1.bf16.msra.mxu0 %v1732
  %8035 = vmatprep.subr.bf16.mxu0 %v1741
  %8036 = vmatpush1.bf16.msra.mxu0 %v1740
  %8037 = vmatprep.subr.bf16.mxu0 %v1749
  %8038 = vmatpush1.bf16.msra.mxu0 %v1748
  %8039 = vmatprep.subr.bf16.mxu0 %v1757
  %8040 = vmatpush1.bf16.msra.mxu0 %v1756
  %8041 = vmatprep.subr.bf16.mxu0 %v1765
  %8042 = vmatpush1.bf16.msra.mxu0 %v1764
  %8043 = vmatprep.subr.bf16.mxu0 %v1773
  %8044 = vmatpush1.bf16.msra.mxu0 %v1772
  %8045 = vmatprep.subr.bf16.mxu0 %v1781
  %8046 = vmatpush1.bf16.msra.mxu0 %v1780
  %8047 = vmatprep.subr.bf16.mxu0 %v1789
  %8048 = vmatpush1.bf16.msra.mxu0 %v1788
  %8049 = vmatprep.subr.bf16.mxu0 %v1797
  %8050 = vmatpush1.bf16.msra.mxu0 %v1796
  %8051 = vmatprep.subr.bf16.mxu0 %v1805
  %8052 = vmatpush1.bf16.msra.mxu0 %v1804
  %8053 = vmatprep.subr.bf16.mxu0 %v1813
  %8054 = vmatpush1.bf16.msra.mxu0 %v1812
  %8055 = vmatprep.subr.bf16.mxu0 %v1821
  %8056 = vmatpush1.bf16.msra.mxu0 %v1820
  %8057 = vmatprep.subr.bf16.mxu0 %v1829
  %8058 = vmatpush1.bf16.msra.mxu0 %v1828
  %8059 = vmatprep.subr.bf16.mxu0 %v1837
  %8060 = vmatpush1.bf16.msra.mxu0 %v1836
  %8061 = vmatprep.mubr.bf16.mxu0 %v7905
  %8062 = vmatmul.mubr.bf16.gmra.mrb[0].mxu0 %v7904
  %v8063 = vpop.f32.mrb[0].mxu0
  %v8064 = vadd.f32 0.0, %v8063
  %v8065 = vpop.f32.mrb[0].mxu0
  %v8066 = vadd.f32 0.0, %v8065
  %v8067 = vpop.f32.mrb[0].mxu0
  %v8068 = vpop.f32.mrb[0].mxu0
  %8069 = vdwg.mxu0
  %v8078 = vcombine.low %v7941, %v7943
  %v8079 = vcombine.low %v7982, %v7984
  %v8080 = vcombine.low %v8023, %v8025
  %v8081 = vcombine.low %v8064, %v8066
  %v8083 = vunpack.c.l.s4 1966171168
  %v8084 = vunpack.c.0.s8 %v8083
  %v8085 = vlaneseq
  %v8086 = vshrl.u32 %v8085, 7
  %v8087 = vsub.s32 %v8084, %v8086
  %v8088 = vrot.slane %v8078, %v8087
  %v8090 = vunpack.c.l.s4 1966171168
  %v8091 = vunpack.c.0.s8 %v8090
  %v8092 = vlaneseq
  %v8093 = vshrl.u32 %v8092, 7
  %v8094 = vsub.s32 %v8091, %v8093
  %v8095 = vrot.slane %v8079, %v8094
  %v8097 = vunpack.c.l.s4 1966171168
  %v8098 = vunpack.c.0.s8 %v8097
  %v8099 = vlaneseq
  %v8100 = vshrl.u32 %v8099, 7
  %v8101 = vsub.s32 %v8098, %v8100
  %v8102 = vrot.slane %v8080, %v8101
  %v8104 = vunpack.c.l.s4 1966171168
  %v8105 = vunpack.c.0.s8 %v8104
  %v8106 = vlaneseq
  %v8107 = vshrl.u32 %v8106, 7
  %v8108 = vsub.s32 %v8105, %v8107
  %v8109 = vrot.slane %v8081, %v8108
  %v8110 = vcombine.low %v8088, %v8095
  %v8111 = vcombine.low %v8102, %v8109
  %v8113 = vunpack.c.l.s4 1966171168
  %v8114 = vunpack.c.0.s8 %v8113
  %v8115 = vlaneseq
  %v8116 = vshrl.u32 %v8115, 7
  %v8117 = vsub.s32 %v8114, %v8116
  %v8118 = vrot.slane %v8110, %v8117
  %v8120 = vunpack.c.l.s4 1966171168
  %v8121 = vunpack.c.0.s8 %v8120
  %v8122 = vlaneseq
  %v8123 = vshrl.u32 %v8122, 7
  %v8124 = vsub.s32 %v8121, %v8123
  %v8125 = vrot.slane %v8111, %v8124
  %v8126 = vcombine.low %v8118, %v8125
  %v8128 = vadd.f32 %v417, %v8126
  %v8130 = vlaneseq
  %v8131 = vshrl.u32 %v8130, 7
  %v8132 = vsub.s32 0, %v8131
  %v8133 = vrot.slane %v7636, %v8132
  %v8134 = vlaneseq
  %v8135 = vshrl.u32 %v8134, 7
  %v8136 = vsub.s32 1, %v8135
  %v8137 = vrot.slane %v7636, %v8136
  %v8140 = vpack.c.bf16 %v8133, %v8133
  %v8141 = vpack.c.bf16 %v8137, %v8137
  %8142 = vmatprep.subr.bf16.mxu0 %v2574
  %8143 = vmatpush1.bf16.msra.mxu0 %v2573
  %8144 = vmatprep.subr.bf16.mxu0 %v2582
  %8145 = vmatpush1.bf16.msra.mxu0 %v2581
  %8146 = vmatprep.subr.bf16.mxu0 %v2590
  %8147 = vmatpush1.bf16.msra.mxu0 %v2589
  %8148 = vmatprep.subr.bf16.mxu0 %v2598
  %8149 = vmatpush1.bf16.msra.mxu0 %v2597
  %8150 = vmatprep.subr.bf16.mxu0 %v2606
  %8151 = vmatpush1.bf16.msra.mxu0 %v2605
  %8152 = vmatprep.subr.bf16.mxu0 %v2614
  %8153 = vmatpush1.bf16.msra.mxu0 %v2613
  %8154 = vmatprep.subr.bf16.mxu0 %v2622
  %8155 = vmatpush1.bf16.msra.mxu0 %v2621
  %8156 = vmatprep.subr.bf16.mxu0 %v2630
  %8157 = vmatpush1.bf16.msra.mxu0 %v2629
  %8158 = vmatprep.subr.bf16.mxu0 %v2638
  %8159 = vmatpush1.bf16.msra.mxu0 %v2637
  %8160 = vmatprep.subr.bf16.mxu0 %v2646
  %8161 = vmatpush1.bf16.msra.mxu0 %v2645
  %8162 = vmatprep.subr.bf16.mxu0 %v2654
  %8163 = vmatpush1.bf16.msra.mxu0 %v2653
  %8164 = vmatprep.subr.bf16.mxu0 %v2662
  %8165 = vmatpush1.bf16.msra.mxu0 %v2661
  %8166 = vmatprep.subr.bf16.mxu0 %v2670
  %8167 = vmatpush1.bf16.msra.mxu0 %v2669
  %8168 = vmatprep.subr.bf16.mxu0 %v2678
  %8169 = vmatpush1.bf16.msra.mxu0 %v2677
  %8170 = vmatprep.subr.bf16.mxu0 %v2686
  %8171 = vmatpush1.bf16.msra.mxu0 %v2685
  %8172 = vmatprep.subr.bf16.mxu0 %v2694
  %8173 = vmatpush1.bf16.msra.mxu0 %v2693
  %8174 = vmatprep.mubr.bf16.mxu0 %v8141
  %8175 = vmatmul.mubr.bf16.gmra.mrb[0].mxu0 %v8140
  %v8176 = vpop.f32.mrb[0].mxu0
  %v8177 = vadd.f32 0.0, %v8176
  %v8178 = vpop.f32.mrb[0].mxu0
  %v8179 = vadd.f32 0.0, %v8178
  %v8180 = vpop.f32.mrb[0].mxu0
  %v8181 = vpop.f32.mrb[0].mxu0
  %8182 = vdwg.mxu0
  %8183 = vmatprep.subr.bf16.mxu0 %v2576
  %8184 = vmatpush1.bf16.msra.mxu0 %v2575
  %8185 = vmatprep.subr.bf16.mxu0 %v2584
  %8186 = vmatpush1.bf16.msra.mxu0 %v2583
  %8187 = vmatprep.subr.bf16.mxu0 %v2592
  %8188 = vmatpush1.bf16.msra.mxu0 %v2591
  %8189 = vmatprep.subr.bf16.mxu0 %v2600
  %8190 = vmatpush1.bf16.msra.mxu0 %v2599
  %8191 = vmatprep.subr.bf16.mxu0 %v2608
  %8192 = vmatpush1.bf16.msra.mxu0 %v2607
  %8193 = vmatprep.subr.bf16.mxu0 %v2616
  %8194 = vmatpush1.bf16.msra.mxu0 %v2615
  %8195 = vmatprep.subr.bf16.mxu0 %v2624
  %8196 = vmatpush1.bf16.msra.mxu0 %v2623
  %8197 = vmatprep.subr.bf16.mxu0 %v2632
  %8198 = vmatpush1.bf16.msra.mxu0 %v2631
  %8199 = vmatprep.subr.bf16.mxu0 %v2640
  %8200 = vmatpush1.bf16.msra.mxu0 %v2639
  %8201 = vmatprep.subr.bf16.mxu0 %v2648
  %8202 = vmatpush1.bf16.msra.mxu0 %v2647
  %8203 = vmatprep.subr.bf16.mxu0 %v2656
  %8204 = vmatpush1.bf16.msra.mxu0 %v2655
  %8205 = vmatprep.subr.bf16.mxu0 %v2664
  %8206 = vmatpush1.bf16.msra.mxu0 %v2663
  %8207 = vmatprep.subr.bf16.mxu0 %v2672
  %8208 = vmatpush1.bf16.msra.mxu0 %v2671
  %8209 = vmatprep.subr.bf16.mxu0 %v2680
  %8210 = vmatpush1.bf16.msra.mxu0 %v2679
  %8211 = vmatprep.subr.bf16.mxu0 %v2688
  %8212 = vmatpush1.bf16.msra.mxu0 %v2687
  %8213 = vmatprep.subr.bf16.mxu0 %v2696
  %8214 = vmatpush1.bf16.msra.mxu0 %v2695
  %8215 = vmatprep.mubr.bf16.mxu0 %v8141
  %8216 = vmatmul.mubr.bf16.gmra.mrb[0].mxu0 %v8140
  %v8217 = vpop.f32.mrb[0].mxu0
  %v8218 = vadd.f32 0.0, %v8217
  %v8219 = vpop.f32.mrb[0].mxu0
  %v8220 = vadd.f32 0.0, %v8219
  %v8221 = vpop.f32.mrb[0].mxu0
  %v8222 = vpop.f32.mrb[0].mxu0
  %8223 = vdwg.mxu0
  %8224 = vmatprep.subr.bf16.mxu0 %v2578
  %8225 = vmatpush1.bf16.msra.mxu0 %v2577
  %8226 = vmatprep.subr.bf16.mxu0 %v2586
  %8227 = vmatpush1.bf16.msra.mxu0 %v2585
  %8228 = vmatprep.subr.bf16.mxu0 %v2594
  %8229 = vmatpush1.bf16.msra.mxu0 %v2593
  %8230 = vmatprep.subr.bf16.mxu0 %v2602
  %8231 = vmatpush1.bf16.msra.mxu0 %v2601
  %8232 = vmatprep.subr.bf16.mxu0 %v2610
  %8233 = vmatpush1.bf16.msra.mxu0 %v2609
  %8234 = vmatprep.subr.bf16.mxu0 %v2618
  %8235 = vmatpush1.bf16.msra.mxu0 %v2617
  %8236 = vmatprep.subr.bf16.mxu0 %v2626
  %8237 = vmatpush1.bf16.msra.mxu0 %v2625
  %8238 = vmatprep.subr.bf16.mxu0 %v2634
  %8239 = vmatpush1.bf16.msra.mxu0 %v2633
  %8240 = vmatprep.subr.bf16.mxu0 %v2642
  %8241 = vmatpush1.bf16.msra.mxu0 %v2641
  %8242 = vmatprep.subr.bf16.mxu0 %v2650
  %8243 = vmatpush1.bf16.msra.mxu0 %v2649
  %8244 = vmatprep.subr.bf16.mxu0 %v2658
  %8245 = vmatpush1.bf16.msra.mxu0 %v2657
  %8246 = vmatprep.subr.bf16.mxu0 %v2666
  %8247 = vmatpush1.bf16.msra.mxu0 %v2665
  %8248 = vmatprep.subr.bf16.mxu0 %v2674
  %8249 = vmatpush1.bf16.msra.mxu0 %v2673
  %8250 = vmatprep.subr.bf16.mxu0 %v2682
  %8251 = vmatpush1.bf16.msra.mxu0 %v2681
  %8252 = vmatprep.subr.bf16.mxu0 %v2690
  %8253 = vmatpush1.bf16.msra.mxu0 %v2689
  %8254 = vmatprep.subr.bf16.mxu0 %v2698
  %8255 = vmatpush1.bf16.msra.mxu0 %v2697
  %8256 = vmatprep.mubr.bf16.mxu0 %v8141
  %8257 = vmatmul.mubr.bf16.gmra.mrb[0].mxu0 %v8140
  %v8258 = vpop.f32.mrb[0].mxu0
  %v8259 = vadd.f32 0.0, %v8258
  %v8260 = vpop.f32.mrb[0].mxu0
  %v8261 = vadd.f32 0.0, %v8260
  %v8262 = vpop.f32.mrb[0].mxu0
  %v8263 = vpop.f32.mrb[0].mxu0
  %8264 = vdwg.mxu0
  %8265 = vmatprep.subr.bf16.mxu0 %v2580
  %8266 = vmatpush1.bf16.msra.mxu0 %v2579
  %8267 = vmatprep.subr.bf16.mxu0 %v2588
  %8268 = vmatpush1.bf16.msra.mxu0 %v2587
  %8269 = vmatprep.subr.bf16.mxu0 %v2596
  %8270 = vmatpush1.bf16.msra.mxu0 %v2595
  %8271 = vmatprep.subr.bf16.mxu0 %v2604
  %8272 = vmatpush1.bf16.msra.mxu0 %v2603
  %8273 = vmatprep.subr.bf16.mxu0 %v2612
  %8274 = vmatpush1.bf16.msra.mxu0 %v2611
  %8275 = vmatprep.subr.bf16.mxu0 %v2620
  %8276 = vmatpush1.bf16.msra.mxu0 %v2619
  %8277 = vmatprep.subr.bf16.mxu0 %v2628
  %8278 = vmatpush1.bf16.msra.mxu0 %v2627
  %8279 = vmatprep.subr.bf16.mxu0 %v2636
  %8280 = vmatpush1.bf16.msra.mxu0 %v2635
  %8281 = vmatprep.subr.bf16.mxu0 %v2644
  %8282 = vmatpush1.bf16.msra.mxu0 %v2643
  %8283 = vmatprep.subr.bf16.mxu0 %v2652
  %8284 = vmatpush1.bf16.msra.mxu0 %v2651
  %8285 = vmatprep.subr.bf16.mxu0 %v2660
  %8286 = vmatpush1.bf16.msra.mxu0 %v2659
  %8287 = vmatprep.subr.bf16.mxu0 %v2668
  %8288 = vmatpush1.bf16.msra.mxu0 %v2667
  %8289 = vmatprep.subr.bf16.mxu0 %v2676
  %8290 = vmatpush1.bf16.msra.mxu0 %v2675
  %8291 = vmatprep.subr.bf16.mxu0 %v2684
  %8292 = vmatpush1.bf16.msra.mxu0 %v2683
  %8293 = vmatprep.subr.bf16.mxu0 %v2692
  %8294 = vmatpush1.bf16.msra.mxu0 %v2691
  %8295 = vmatprep.subr.bf16.mxu0 %v2700
  %8296 = vmatpush1.bf16.msra.mxu0 %v2699
  %8297 = vmatprep.mubr.bf16.mxu0 %v8141
  %8298 = vmatmul.mubr.bf16.gmra.mrb[0].mxu0 %v8140
  %v8299 = vpop.f32.mrb[0].mxu0
  %v8300 = vadd.f32 0.0, %v8299
  %v8301 = vpop.f32.mrb[0].mxu0
  %v8302 = vadd.f32 0.0, %v8301
  %v8303 = vpop.f32.mrb[0].mxu0
  %v8304 = vpop.f32.mrb[0].mxu0
  %8305 = vdwg.mxu0
  %v8314 = vcombine.low %v8177, %v8179
  %v8315 = vcombine.low %v8218, %v8220
  %v8316 = vcombine.low %v8259, %v8261
  %v8317 = vcombine.low %v8300, %v8302
  %v8319 = vunpack.c.l.s4 1966171168
  %v8320 = vunpack.c.0.s8 %v8319
  %v8321 = vlaneseq
  %v8322 = vshrl.u32 %v8321, 7
  %v8323 = vsub.s32 %v8320, %v8322
  %v8324 = vrot.slane %v8314, %v8323
  %v8326 = vunpack.c.l.s4 1966171168
  %v8327 = vunpack.c.0.s8 %v8326
  %v8328 = vlaneseq
  %v8329 = vshrl.u32 %v8328, 7
  %v8330 = vsub.s32 %v8327, %v8329
  %v8331 = vrot.slane %v8315, %v8330
  %v8333 = vunpack.c.l.s4 1966171168
  %v8334 = vunpack.c.0.s8 %v8333
  %v8335 = vlaneseq
  %v8336 = vshrl.u32 %v8335, 7
  %v8337 = vsub.s32 %v8334, %v8336
  %v8338 = vrot.slane %v8316, %v8337
  %v8340 = vunpack.c.l.s4 1966171168
  %v8341 = vunpack.c.0.s8 %v8340
  %v8342 = vlaneseq
  %v8343 = vshrl.u32 %v8342, 7
  %v8344 = vsub.s32 %v8341, %v8343
  %v8345 = vrot.slane %v8317, %v8344
  %v8346 = vcombine.low %v8324, %v8331
  %v8347 = vcombine.low %v8338, %v8345
  %v8349 = vunpack.c.l.s4 1966171168
  %v8350 = vunpack.c.0.s8 %v8349
  %v8351 = vlaneseq
  %v8352 = vshrl.u32 %v8351, 7
  %v8353 = vsub.s32 %v8350, %v8352
  %v8354 = vrot.slane %v8346, %v8353
  %v8356 = vunpack.c.l.s4 1966171168
  %v8357 = vunpack.c.0.s8 %v8356
  %v8358 = vlaneseq
  %v8359 = vshrl.u32 %v8358, 7
  %v8360 = vsub.s32 %v8357, %v8359
  %v8361 = vrot.slane %v8347, %v8360
  %v8362 = vcombine.low %v8354, %v8361
  %v8364 = vadd.f32 %v8128, %v8362
  %v8365 = vxor.u32 %v8364, 2147483648
  %v8366 = vmul.f32 %v8365, 1.442695
  %v8367 = vpow.pop %v8366
  %v8368 = vadd.f32 %v8367, 1.0
  %v8369 = vrcp.pop %v8368
  %v8370 = vmul.f32 1.0, %v8369
  %v8372 = vrot.slane %v8364, 2
  %v8374 = vxor.u32 %v8372, 2147483648
  %v8375 = vmul.f32 %v8374, 1.442695
  %v8376 = vpow.pop %v8375
  %v8377 = vadd.f32 %v8376, 1.0
  %v8378 = vrcp.pop %v8377
  %v8379 = vmul.f32 1.0, %v8378
  %v8380 = vrot.slane %v8364, 4
  %v8382 = vxor.u32 %v8380, 2147483648
  %v8383 = vmul.f32 %v8382, 1.442695
  %v8384 = vpow.pop %v8383
  %v8385 = vadd.f32 %v8384, 1.0
  %v8386 = vrcp.pop %v8385
  %v8387 = vmul.f32 1.0, %v8386
  %v8388 = vrot.slane %v8364, 6
  %v8390 = vtanh.pop %v8388
  %v8391 = vmul.f32 %v8379, %v7634
  %v8392 = vmul.f32 %v8370, %v8390
  %v8393 = vadd.f32 %v8391, %v8392
  %v8394 = vtanh.pop %v8393
  %v8395 = vmul.f32 %v8387, %v8394
  %v8396 = vld [vmem:[%s5] sm:$0xf]
  %v8397 = vld [vmem:[%s5 + $0x4] sm:$0xf]
  %v8398 = vld [vmem:[%s5 + $0x8] sm:$0xf]
  %v8399 = vld [vmem:[%s5 + $0xc] sm:$0xf]
  %v8400 = vld [vmem:[%s5 + $0x10] sm:$0xf]
  %v8401 = vld [vmem:[%s5 + $0x14] sm:$0xf]
  %v8402 = vld [vmem:[%s5 + $0x18] sm:$0xf]
  %v8403 = vld [vmem:[%s5 + $0x1c] sm:$0xf]
  %v8404 = vld [vmem:[%s5 + $0x20] sm:$0xf]
  %v8405 = vld [vmem:[%s5 + $0x24] sm:$0xf]
  %v8406 = vld [vmem:[%s5 + $0x28] sm:$0xf]
  %v8407 = vld [vmem:[%s5 + $0x2c] sm:$0xf]
  %v8408 = vld [vmem:[%s5 + $0x30] sm:$0xf]
  %v8409 = vld [vmem:[%s5 + $0x34] sm:$0xf]
  %v8410 = vld [vmem:[%s5 + $0x38] sm:$0xf]
  %v8411 = vld [vmem:[%s5 + $0x3c] sm:$0xf]
  %v8412 = vld [vmem:[%s5 + $0x40] sm:$0xf]
  %v8413 = vld [vmem:[%s5 + $0x44] sm:$0xf]
  %v8414 = vld [vmem:[%s5 + $0x48] sm:$0xf]
  %v8415 = vld [vmem:[%s5 + $0x4c] sm:$0xf]
  %v8416 = vld [vmem:[%s5 + $0x50] sm:$0xf]
  %v8417 = vld [vmem:[%s5 + $0x54] sm:$0xf]
  %v8418 = vld [vmem:[%s5 + $0x58] sm:$0xf]
  %v8419 = vld [vmem:[%s5 + $0x5c] sm:$0xf]
  %v8420 = vld [vmem:[%s5 + $0x60] sm:$0xf]
  %v8421 = vld [vmem:[%s5 + $0x64] sm:$0xf]
  %v8422 = vld [vmem:[%s5 + $0x68] sm:$0xf]
  %v8423 = vld [vmem:[%s5 + $0x6c] sm:$0xf]
  %v8424 = vld [vmem:[%s5 + $0x70] sm:$0xf]
  %v8425 = vld [vmem:[%s5 + $0x74] sm:$0xf]
  %v8426 = vld [vmem:[%s5 + $0x78] sm:$0xf]
  %v8427 = vld [vmem:[%s5 + $0x7c] sm:$0xf]
  %v8429 = vlaneseq
  %v8430 = vshrl.u32 %v8429, 7
  %v8431 = vsub.s32 0, %v8430
  %v8432 = vrot.slane %v8395, %v8431
  %v8433 = vlaneseq
  %v8434 = vshrl.u32 %v8433, 7
  %v8435 = vsub.s32 1, %v8434
  %v8436 = vrot.slane %v8395, %v8435
  %v8439 = vpack.c.bf16 %v8432, %v8432
  %v8440 = vpack.c.bf16 %v8436, %v8436
  %v8441 = vld [vmem:[%s6] sm:$0x1]
  %v8474 = vunpack.c.l.b16 %v8396
  %v8475 = vunpack.c.l.b16 %v8397
  %v8476 = vunpack.c.l.b16 %v8398
  %v8477 = vunpack.c.l.b16 %v8399
  %v8478 = vunpack.c.l.b16 %v8400
  %v8479 = vunpack.c.l.b16 %v8401
  %v8480 = vunpack.c.l.b16 %v8402
  %v8481 = vunpack.c.l.b16 %v8403
  %v8482 = vunpack.c.l.b16 %v8404
  %v8483 = vunpack.c.l.b16 %v8405
  %v8484 = vunpack.c.l.b16 %v8406
  %v8485 = vunpack.c.l.b16 %v8407
  %v8486 = vunpack.c.l.b16 %v8408
  %v8487 = vunpack.c.l.b16 %v8409
  %v8488 = vunpack.c.l.b16 %v8410
  %v8489 = vunpack.c.l.b16 %v8411
  %v8490 = vunpack.c.l.b16 %v8412
  %v8491 = vunpack.c.l.b16 %v8413
  %v8492 = vunpack.c.l.b16 %v8414
  %v8493 = vunpack.c.l.b16 %v8415
  %v8494 = vunpack.c.l.b16 %v8416
  %v8495 = vunpack.c.l.b16 %v8417
  %v8496 = vunpack.c.l.b16 %v8418
  %v8497 = vunpack.c.l.b16 %v8419
  %v8498 = vunpack.c.l.b16 %v8420
  %v8499 = vunpack.c.l.b16 %v8421
  %v8500 = vunpack.c.l.b16 %v8422
  %v8501 = vunpack.c.l.b16 %v8423
  %v8502 = vunpack.c.l.b16 %v8424
  %v8503 = vunpack.c.l.b16 %v8425
  %v8504 = vunpack.c.l.b16 %v8426
  %v8505 = vunpack.c.l.b16 %v8427
  %v8506 = vpack.c.b16 %v8475, %v8474
  %v8507 = vpack.c.b16 %v8477, %v8476
  %v8508 = vpack.c.b16 %v8479, %v8478
  %v8509 = vpack.c.b16 %v8481, %v8480
  %v8510 = vpack.c.b16 %v8483, %v8482
  %v8511 = vpack.c.b16 %v8485, %v8484
  %v8512 = vpack.c.b16 %v8487, %v8486
  %v8513 = vpack.c.b16 %v8489, %v8488
  %v8514 = vpack.c.b16 %v8491, %v8490
  %v8515 = vpack.c.b16 %v8493, %v8492
  %v8516 = vpack.c.b16 %v8495, %v8494
  %v8517 = vpack.c.b16 %v8497, %v8496
  %v8518 = vpack.c.b16 %v8499, %v8498
  %v8519 = vpack.c.b16 %v8501, %v8500
  %v8520 = vpack.c.b16 %v8503, %v8502
  %v8521 = vpack.c.b16 %v8505, %v8504
  %8538 = vmatprep.subr.bf16.mxu0 0
  %8539 = vmatpush1.bf16.msra.mxu0 %v8506
  %8540 = vmatprep.subr.bf16.mxu0 0
  %8541 = vmatpush1.bf16.msra.mxu0 %v8507
  %8542 = vmatprep.subr.bf16.mxu0 0
  %8543 = vmatpush1.bf16.msra.mxu0 %v8508
  %8544 = vmatprep.subr.bf16.mxu0 0
  %8545 = vmatpush1.bf16.msra.mxu0 %v8509
  %8546 = vmatprep.subr.bf16.mxu0 0
  %8547 = vmatpush1.bf16.msra.mxu0 %v8510
  %8548 = vmatprep.subr.bf16.mxu0 0
  %8549 = vmatpush1.bf16.msra.mxu0 %v8511
  %8550 = vmatprep.subr.bf16.mxu0 0
  %8551 = vmatpush1.bf16.msra.mxu0 %v8512
  %8552 = vmatprep.subr.bf16.mxu0 0
  %8553 = vmatpush1.bf16.msra.mxu0 %v8513
  %8554 = vmatprep.subr.bf16.mxu0 0
  %8555 = vmatpush1.bf16.msra.mxu0 %v8514
  %8556 = vmatprep.subr.bf16.mxu0 0
  %8557 = vmatpush1.bf16.msra.mxu0 %v8515
  %8558 = vmatprep.subr.bf16.mxu0 0
  %8559 = vmatpush1.bf16.msra.mxu0 %v8516
  %8560 = vmatprep.subr.bf16.mxu0 0
  %8561 = vmatpush1.bf16.msra.mxu0 %v8517
  %8562 = vmatprep.subr.bf16.mxu0 0
  %8563 = vmatpush1.bf16.msra.mxu0 %v8518
  %8564 = vmatprep.subr.bf16.mxu0 0
  %8565 = vmatpush1.bf16.msra.mxu0 %v8519
  %8566 = vmatprep.subr.bf16.mxu0 0
  %8567 = vmatpush1.bf16.msra.mxu0 %v8520
  %8568 = vmatprep.subr.bf16.mxu0 0
  %8569 = vmatpush1.bf16.msra.mxu0 %v8521
  %8570 = vmatprep.mubr.bf16.mxu0 %v8440
  %8571 = vmatmul.mubr.bf16.gmra.mrb[0].mxu0 %v8439
  %v8572 = vpop.f32.mrb[0].mxu0
  %v8573 = vadd.f32 %v8441, %v8572
  %v8574 = vpop.f32.mrb[0].mxu0
  %v8575 = vpop.f32.mrb[0].mxu0
  %v8576 = vpop.f32.mrb[0].mxu0
  %8577 = vdwg.mxu0
  %v8578 = vmax.f32 %v8573, 0.0
  %v8579 = vld [vmem:[%s7] sm:$0xf]
  %v8580 = vld [vmem:[%s7 + $0x4] sm:$0xf]
  %v8581 = vld [vmem:[%s7 + $0x8] sm:$0xf]
  %v8582 = vld [vmem:[%s7 + $0xc] sm:$0xf]
  %v8583 = vld [vmem:[%s7 + $0x10] sm:$0xf]
  %v8584 = vld [vmem:[%s7 + $0x14] sm:$0xf]
  %v8585 = vld [vmem:[%s7 + $0x18] sm:$0xf]
  %v8586 = vld [vmem:[%s7 + $0x1c] sm:$0xf]
  %v8587 = vld [vmem:[%s7 + $0x20] sm:$0xf]
  %v8588 = vld [vmem:[%s7 + $0x24] sm:$0xf]
  %v8589 = vld [vmem:[%s7 + $0x28] sm:$0xf]
  %v8590 = vld [vmem:[%s7 + $0x2c] sm:$0xf]
  %v8591 = vld [vmem:[%s7 + $0x30] sm:$0xf]
  %v8592 = vld [vmem:[%s7 + $0x34] sm:$0xf]
  %v8593 = vld [vmem:[%s7 + $0x38] sm:$0xf]
  %v8594 = vld [vmem:[%s7 + $0x3c] sm:$0xf]
  %v8595 = vpack.c.bf16 %v8578, %v8578
  %v8596 = vld [vmem:[%s8] sm:$0x1]
  %v8613 = vunpack.c.l.b16 %v8579
  %v8614 = vunpack.c.l.b16 %v8580
  %v8615 = vunpack.c.l.b16 %v8581
  %v8616 = vunpack.c.l.b16 %v8582
  %v8617 = vunpack.c.l.b16 %v8583
  %v8618 = vunpack.c.l.b16 %v8584
  %v8619 = vunpack.c.l.b16 %v8585
  %v8620 = vunpack.c.l.b16 %v8586
  %v8621 = vunpack.c.l.b16 %v8587
  %v8622 = vunpack.c.l.b16 %v8588
  %v8623 = vunpack.c.l.b16 %v8589
  %v8624 = vunpack.c.l.b16 %v8590
  %v8625 = vunpack.c.l.b16 %v8591
  %v8626 = vunpack.c.l.b16 %v8592
  %v8627 = vunpack.c.l.b16 %v8593
  %v8628 = vunpack.c.l.b16 %v8594
  %v8629 = vpack.c.b16 %v8614, %v8613
  %v8630 = vpack.c.b16 %v8616, %v8615
  %v8631 = vpack.c.b16 %v8618, %v8617
  %v8632 = vpack.c.b16 %v8620, %v8619
  %v8633 = vpack.c.b16 %v8622, %v8621
  %v8634 = vpack.c.b16 %v8624, %v8623
  %v8635 = vpack.c.b16 %v8626, %v8625
  %v8636 = vpack.c.b16 %v8628, %v8627
  %8645 = vmatprep.subr.bf16.mxu0 0
  %8646 = vmatpush1.bf16.msra.mxu0 %v8629
  %8647 = vmatprep.subr.bf16.mxu0 0
  %8648 = vmatpush1.bf16.msra.mxu0 %v8630
  %8649 = vmatprep.subr.bf16.mxu0 0
  %8650 = vmatpush1.bf16.msra.mxu0 %v8631
  %8651 = vmatprep.subr.bf16.mxu0 0
  %8652 = vmatpush1.bf16.msra.mxu0 %v8632
  %8653 = vmatprep.subr.bf16.mxu0 0
  %8654 = vmatpush1.bf16.msra.mxu0 %v8633
  %8655 = vmatprep.subr.bf16.mxu0 0
  %8656 = vmatpush1.bf16.msra.mxu0 %v8634
  %8657 = vmatprep.subr.bf16.mxu0 0
  %8658 = vmatpush1.bf16.msra.mxu0 %v8635
  %8659 = vmatprep.subr.bf16.mxu0 0
  %8660 = vmatpush1.bf16.msra.mxu0 %v8636
  %8661 = vmatprep.subr.bf16.mxu0 0
  %8662 = vmatpush1.bf16.msra.mxu0 0
  %8663 = vmatprep.subr.bf16.mxu0 0
  %8664 = vmatpush1.bf16.msra.mxu0 0
  %8665 = vmatprep.subr.bf16.mxu0 0
  %8666 = vmatpush1.bf16.msra.mxu0 0
  %8667 = vmatprep.subr.bf16.mxu0 0
  %8668 = vmatpush1.bf16.msra.mxu0 0
  %8669 = vmatprep.subr.bf16.mxu0 0
  %8670 = vmatpush1.bf16.msra.mxu0 0
  %8671 = vmatprep.subr.bf16.mxu0 0
  %8672 = vmatpush1.bf16.msra.mxu0 0
  %8673 = vmatprep.subr.bf16.mxu0 0
  %8674 = vmatpush1.bf16.msra.mxu0 0
  %8675 = vmatprep.subr.bf16.mxu0 0
  %8676 = vmatpush1.bf16.msra.mxu0 0
  %8677 = vmatprep.mubr.bf16.mxu0 0
  %8678 = vmatmul.mubr.bf16.gmra.mrb[0].mxu0 %v8595
  %v8679 = vpop.f32.mrb[0].mxu0
  %v8680 = vadd.f32 %v8596, %v8679
  %v8681 = vpop.f32.mrb[0].mxu0
  %v8682 = vpop.f32.mrb[0].mxu0
  %v8683 = vpop.f32.mrb[0].mxu0
  %8684 = vdwg.mxu0
  %v8685 = vmax.f32 %v8680, 0.0
  %8686 = vst [vmem:[%s9] sm:$0x1] %v8685
  // Predicated region
  $region38: #{vanilla_convlstm_fc.1} parent=0 // pred_check
    _
  $region39: #{vanilla_convlstm_fc.1} parent=0 // pred_check_branch
    %8688 = sbr.rel (0) target = $region41
  $region40: #{vanilla_convlstm_fc.1} parent=0 // pred_region
    _
  $region41: #{vanilla_convlstm_fc.1} parent=0 // pred_fallthru
    _
  // Predicated region
  $region42: #{vanilla_convlstm_fc.1} parent=0 // pred_check
    _
  $region43: #{vanilla_convlstm_fc.1} parent=0 // pred_check_branch
    %8690 = sbr.rel (0) target = $region45
  $region44: #{vanilla_convlstm_fc.1} parent=0 // pred_region
    _
  $region45: #{vanilla_convlstm_fc.1} parent=0 // pred_fallthru
    _

</llo_original>
